<compile_context>
chip_gen: v5e
topology: v5e:2x2
jax: 0.10.0
libtpu: 0.0.40
codegen_flags: <defaults>
</compile_context>

<pallas_src>
import functools

import numpy as np
import jax
import jax.numpy as jnp
from jax.experimental import pallas as pl
from jax.experimental.pallas import tpu as pltpu


_VMEM_LIMIT = 48 * 1024 * 1024   # safe on v5e/v6e (128 MiB VMEM) and v7x (64 MiB)


# ----------------------------- small helpers ---------------------------------


def _round_up(x, m):
    return (x + m - 1) // m * m


def _gelu_tanh(x):
    # tanh-approximate GELU (single EUP tanh); |err| vs exact erf GELU ~3e-4,
    # well inside the test tolerance.
    c = 0.7978845608028654  # sqrt(2/pi)
    return 0.5 * x * (1.0 + jnp.tanh(c * (x + 0.044715 * x * x * x)))


def _layernorm(x, g, b, eps):
    mu = jnp.mean(x, axis=-1, keepdims=True)
    xc = x - mu
    var = jnp.mean(xc * xc, axis=-1, keepdims=True)
    return xc * jax.lax.rsqrt(var + eps) * g + b


def _relative_position_index(ws):
    coords = np.stack(np.meshgrid(np.arange(ws), np.arange(ws), indexing="ij"))
    flat = coords.reshape(2, -1)
    rel = flat[:, :, None] - flat[:, None, :]
    rel = rel.transpose(1, 2, 0).copy()
    rel[:, :, 0] += ws - 1
    rel[:, :, 1] += ws - 1
    rel[:, :, 0] *= 2 * ws - 1
    return rel.sum(-1)  # [ws*ws, ws*ws]


# ------------------- fused QKV projection + window attention ------------------


def _swin_attn_kernel(lab_ref, abs_ref, wa_ref, wb_ref, bq_ref, m_ref,
                      ke_ref, qe_ref, ve_ref, o_ref, *,
                      scale, P, N, num_heads, head_dim, dim):
    """Per grid step = one (image, window) pair.

    lab/abs: [ws, ws, N, C]   (image-layout window block)
    wa/wb:   [C, 3*dim] bf16  (resident qkv weights, column-split)
    bq:      [1, 3*dim]
    mask:    [L, L]  (finite float32)
    ke/ve:   [heads, P, L, head_dim] bf16  (column-expanded RPE, resident)
    qe:      [heads, P, L, head_dim] f32
    out:     [ws, ws, N, dim]
    """
    bf16 = jnp.bfloat16
    f32 = jnp.float32
    L = P * N
    Ca = abs_ref.shape[-1]

    lab = lab_ref[...].reshape(L, dim)
    ab = abs_ref[...].reshape(L, Ca)
    mask = m_ref[...]

    # fused qkv projection (bf16 MXU operands, f32 accumulation, f32 bias add)
    x = jnp.dot(lab.astype(bf16), wa_ref[...], preferred_element_type=f32)
    x = x + jnp.dot(ab.astype(bf16), wb_ref[...], preferred_element_type=f32)
    x = x + bq_ref[...]                                               # [L, 3*dim]

    outs = []
    for h in range(num_heads):
        q = x[:, h * head_dim:(h + 1) * head_dim]                     # [L, D] f32
        k = x[:, dim + h * head_dim: dim + (h + 1) * head_dim]
        v = x[:, 2 * dim + h * head_dim: 2 * dim + (h + 1) * head_dim]
        qb, kb, vb = q.astype(bf16), k.astype(bf16), v.astype(bf16)

        # content-content logits
        qk = jax.lax.dot_general(qb, kb, (((1,), (1,)), ((), ())),
                                 preferred_element_type=f32)          # [L, L]

        # content -> position: q grouped by spatial position vs column-expanded ke
        q_g = q.reshape(P, N, head_dim).astype(bf16)                  # [P, N, D]
        qr_g = jax.lax.dot_general(q_g, ke_ref[h], (((2,), (2,)), ((0,), (0,))),
                                   preferred_element_type=f32)        # [P, N, L]

        # position -> content: depends on the query row only via its spatial
        # position -> tiny [P, L] VPU multiply-reduce, broadcast over candidates.
        krc = jnp.sum(qe_ref[h] * k[None, :, :], axis=-1)             # [P, L] f32

        rel = (qr_g + krc[:, None, :]).reshape(L, L)
        logits = (qk + rel) * scale + mask
        logits = logits - jnp.max(logits, axis=-1, keepdims=True)
        p = jnp.exp(logits)
        p = p * pl.reciprocal(jnp.sum(p, axis=-1, keepdims=True), approx=True)

        pb = p.astype(bf16)
        pv = jnp.dot(pb, vb, preferred_element_type=f32)              # [L, D]
        p_g = p.reshape(P, N, L).astype(bf16)
        oe_g = jax.lax.dot_general(p_g, ve_ref[h], (((2,), (1,)), ((0,), (0,))),
                                   preferred_element_type=f32)        # [P, N, D]
        outs.append(pv + oe_g.reshape(L, head_dim))

    out = jnp.concatenate(outs, axis=-1)                              # [L, dim]
    o_ref[...] = out.reshape(o_ref.shape)


# ------------------ fused proj + LN + MLP + LN epilogue kernel -----------------


def _post_kernel(msg_ref, sc_ref, wpT_ref, bp_ref, g1_ref, be1_ref,
                 w1T_ref, b1_ref, w2T_ref, b2_ref, g2_ref, be2_ref, o_ref, *, eps):
    bf16 = jnp.bfloat16
    f32 = jnp.float32
    # forward_post: x = shortcut + proj(msg); x = norm1(x); x = x + mlp(x); norm2
    t = (sc_ref[...]
         + jnp.dot(msg_ref[...].astype(bf16), wpT_ref[...], preferred_element_type=f32)
         + bp_ref[...])
    t = _layernorm(t, g1_ref[...], be1_ref[...], eps)
    h = jnp.dot(t.astype(bf16), w1T_ref[...], preferred_element_type=f32) + b1_ref[...]
    h = _gelu_tanh(h)
    t = t + jnp.dot(h.astype(bf16), w2T_ref[...], preferred_element_type=f32) + b2_ref[...]
    o_ref[...] = _layernorm(t, g2_ref[...], be2_ref[...], eps)


def post_pallas(msg, shortcut, params, *, eps=1e-5, tile_rows=256):
    """Fused proj + residual + LayerNorm + MLP + residual + LayerNorm, row-tiled."""
    T, C = msg.shape
    Hd = params["w_mlp1"].shape[0]
    TT = min(tile_rows, _round_up(T, 8))
    Tp = _round_up(T, TT)
    if Tp != T:
        msg = jnp.pad(msg, ((0, Tp - T), (0, 0)))
        shortcut = jnp.pad(shortcut, ((0, Tp - T), (0, 0)))

    bf16 = jnp.bfloat16
    row = lambda i: (i, 0)
    const = lambda i: (0, 0)
    args = [
        msg, shortcut,
        params["w_proj"].T.astype(bf16), params["b_proj"].reshape(1, C),
        params["g1"].reshape(1, C), params["be1"].reshape(1, C),
        params["w_mlp1"].T.astype(bf16), params["b_mlp1"].reshape(1, Hd),
        params["w_mlp2"].T.astype(bf16), params["b_mlp2"].reshape(1, C),
        params["g2"].reshape(1, C), params["be2"].reshape(1, C),
    ]
    in_specs = ([pl.BlockSpec((TT, C), row), pl.BlockSpec((TT, C), row)]
                + [pl.BlockSpec(a.shape, const) for a in args[2:]])
    out = pl.pallas_call(
        functools.partial(_post_kernel, eps=eps),
        out_shape=jax.ShapeDtypeStruct((Tp, C), jnp.float32),
        grid=(Tp // TT,),
        in_specs=in_specs,
        out_specs=pl.BlockSpec((TT, C), row),
        compiler_params=pltpu.CompilerParams(
            dimension_semantics=("parallel",),
            vmem_limit_bytes=_VMEM_LIMIT),
    )(*args)
    return out[:T]


# ----------------------------- glue (plain JAX) -------------------------------


def swin_nmp_forward(params, label_rep, abs_encoding, attn_mask, *, B, H, W,
                     window_size, shift_size, num_heads, eps=1e-5):
    M, N, dim = label_rep.shape
    Ca = abs_encoding.shape[-1]
    head_dim = dim // num_heads
    scale = head_dim ** (-0.5)
    ws = window_size
    P = ws * ws
    L = P * N
    nwr, nwc = H // ws, W // ws
    assert M == B * H * W and H % ws == 0 and W % ws == 0
    assert L % 8 == 0

    shortcut = label_rep.reshape(M * N, dim)

    # image-layout views (free reshapes, no transposes); roll for shifted windows
    lab5 = label_rep.reshape(B, H, W, N, dim)
    ab5 = abs_encoding.reshape(B, H, W, N, Ca)
    if shift_size > 0:
        lab5 = jnp.roll(lab5, (-shift_size, -shift_size), axis=(1, 2))
        ab5 = jnp.roll(ab5, (-shift_size, -shift_size), axis=(1, 2))

    bf16 = jnp.bfloat16
    # qkv weights, column-split (avoids the concat) and pre-cast to bf16
    wa = params["w_qkv"][:, :dim].T.astype(bf16)          # [dim, 3*dim]
    wb = params["w_qkv"][:, dim:].T.astype(bf16)          # [Ca,  3*dim]
    bq = params["b_qkv"].reshape(1, 3 * dim)

    # compact RPE tables, column-expanded once (pj -> j = pj*N + nj)
    idx = _relative_position_index(ws).reshape(-1)
    rpe = params["rpe_table"][jnp.asarray(idx)].reshape(P, P, num_heads, 3 * head_dim)

    def expand(t):  # [P, P, heads, D] -> [heads, P, L, D]
        t = jnp.transpose(t, (2, 0, 1, 3))
        return jnp.repeat(t, N, axis=2)

    qe_e = expand(rpe[..., :head_dim])                               # f32 (VPU path)
    ke_e = expand(rpe[..., head_dim:2 * head_dim]).astype(bf16)      # MXU operand
    ve_e = expand(rpe[..., 2 * head_dim:]).astype(bf16)              # MXU operand

    # clamp -inf to a large finite negative (NaN-robust; exp still underflows to 0)
    mask = jnp.maximum(attn_mask.astype(jnp.float32), jnp.float32(-1e30))
    if shift_size == 0 or mask.shape[0] == 1:
        mask = mask[:1]
        m_spec = pl.BlockSpec((None, L, L), lambda b, i, j: (0, 0, 0))
    else:
        m_spec = pl.BlockSpec((None, L, L), lambda b, i, j: (i * nwc + j, 0, 0))

    blk = lambda b, i, j: (b, i, j, 0, 0)
    cst2 = lambda b, i, j: (0, 0)
    cst4 = lambda b, i, j: (0, 0, 0, 0)

    out5 = pl.pallas_call(
        functools.partial(_swin_attn_kernel, scale=scale, P=P, N=N,
                          num_heads=num_heads, head_dim=head_dim, dim=dim),
        out_shape=jax.ShapeDtypeStruct((B, H, W, N, dim), jnp.float32),
        grid=(B, nwr, nwc),
        in_specs=[
            pl.BlockSpec((None, ws, ws, N, dim), blk),
            pl.BlockSpec((None, ws, ws, N, Ca), blk),
            pl.BlockSpec((dim, 3 * dim), cst2),
            pl.BlockSpec((Ca, 3 * dim), cst2),
            pl.BlockSpec((1, 3 * dim), cst2),
            m_spec,
            pl.BlockSpec((num_heads, P, L, head_dim), cst4),
            pl.BlockSpec((num_heads, P, L, head_dim), cst4),
            pl.BlockSpec((num_heads, P, L, head_dim), cst4),
        ],
        out_specs=pl.BlockSpec((None, ws, ws, N, dim), blk),
        compiler_params=pltpu.CompilerParams(
            dimension_semantics=("parallel", "parallel", "parallel"),
            vmem_limit_bytes=_VMEM_LIMIT),
    )(lab5, ab5, wa, wb, bq, mask, ke_e, qe_e, ve_e)

    if shift_size > 0:
        out5 = jnp.roll(out5, (shift_size, shift_size), axis=(1, 2))
    msg = out5.reshape(M * N, dim)

    # proj + residual + norm1 + MLP + residual + norm2 (fused, row-tiled)
    y = post_pallas(msg, shortcut, params, eps=eps)
    return y.reshape(M, N, dim)


# ----------------------------- pure-JAX reference -----------------------------


def swin_nmp_reference(params, label_rep, abs_encoding, attn_mask, *, B, H, W,
                       window_size, shift_size, num_heads, eps=1e-5):
    M, N, dim = label_rep.shape
    head_dim = dim // num_heads
    scale = head_dim ** (-0.5)
    ws = window_size
    L = ws * ws * N
    nW = (H // ws) * (W // ws)

    shortcut = label_rep
    x = jnp.concatenate([label_rep, abs_encoding], axis=-1)
    qkv = x @ params["w_qkv"].T + params["b_qkv"]
    qkv = qkv.reshape(B, H, W, N, 3 * dim)
    if shift_size > 0:
        qkv = jnp.roll(qkv, (-shift_size, -shift_size), axis=(1, 2))

    def partition(t):
        t = t.reshape(B, H // ws, ws, W // ws, ws, N, num_heads, head_dim)
        return t.transpose(0, 1, 3, 6, 2, 4, 5, 7).reshape(B * nW, num_heads, L, head_dim)

    q = partition(qkv[..., :dim]) * scale
    k = partition(qkv[..., dim:2 * dim])
    v = partition(qkv[..., 2 * dim:])

    idx = _relative_position_index(ws).reshape(-1)
    rpe = params["rpe_table"][idx].reshape(ws * ws, ws * ws, num_heads, 3 * head_dim)
    rpe = jnp.repeat(jnp.repeat(rpe, N, axis=0), N, axis=1)
    qe = rpe[..., :head_dim] * scale
    ke = rpe[..., head_dim:2 * head_dim]
    ve = rpe[..., 2 * head_dim:]

    qk = jnp.einsum("bhic,bhjc->bhij", q, k)
    qr = jnp.einsum("bhic,ijhc->bhij", q, ke)
    kr = jnp.einsum("bhjc,ijhc->bhij", k, qe)
    attn = qk + qr + kr
    attn = attn.reshape(B, nW, num_heads, L, L) + attn_mask[None, :, None, :, :]
    attn = jax.nn.softmax(attn.reshape(B * nW, num_heads, L, L), axis=-1)
    out = jnp.einsum("bhij,bhjc->bhic", attn, v) + jnp.einsum("bhij,ijhc->bhic", attn, ve)

    out = out.reshape(B, H // ws, W // ws, num_heads, ws, ws, N, head_dim)
    out = out.transpose(0, 1, 4, 2, 5, 6, 3, 7).reshape(B, H, W, N, dim)
    if shift_size > 0:
        out = jnp.roll(out, (shift_size, shift_size), axis=(1, 2))
    msg = out.reshape(M, N, dim)

    def ln(z, g, b):
        mu = z.mean(-1, keepdims=True)
        var = ((z - mu) ** 2).mean(-1, keepdims=True)
        return (z - mu) / jnp.sqrt(var + eps) * g + b

    msg = msg @ params["w_proj"].T + params["b_proj"]
    t = shortcut + msg
    t = ln(t, params["g1"], params["be1"])
    hdn = jax.nn.gelu(t @ params["w_mlp1"].T + params["b_mlp1"], approximate=False)
    t = t + hdn @ params["w_mlp2"].T + params["b_mlp2"]
    return ln(t, params["g2"], params["be2"])


# ----------------------------- main -------------------------------------------

if __name__ == "__main__":
    B, H, W, N = 2, 8, 8, 4
    dim, qkv_dim, num_heads = 64, 96, 2
    window_size, shift_size = 4, 0
    mlp_hidden = int(dim * 4.0)
    ws = window_size
    P = ws * ws
    L = P * N
    nW = (H // ws) * (W // ws)
    M = B * H * W
    f32 = jnp.float32

    key = jax.random.PRNGKey(0)
    ks = jax.random.split(key, 16)
    params = {
        "w_qkv": 0.1 * jax.random.normal(ks[0], (3 * dim, qkv_dim), f32),
        "b_qkv": 0.05 * jax.random.normal(ks[1], (3 * dim,), f32),
        "rpe_table": 0.1 * jax.random.normal(ks[2], ((2 * ws - 1) ** 2, 3 * dim), f32),
        "w_proj": 0.1 * jax.random.normal(ks[3], (dim, dim), f32),
        "b_proj": 0.05 * jax.random.normal(ks[4], (dim,), f32),
        "g1": 1.0 + 0.1 * jax.random.normal(ks[5], (dim,), f32),
        "be1": 0.05 * jax.random.normal(ks[6], (dim,), f32),
        "w_mlp1": 0.1 * jax.random.normal(ks[7], (mlp_hidden, dim), f32),
        "b_mlp1": 0.05 * jax.random.normal(ks[8], (mlp_hidden,), f32),
        "w_mlp2": 0.1 * jax.random.normal(ks[9], (dim, mlp_hidden), f32),
        "b_mlp2": 0.05 * jax.random.normal(ks[10], (dim,), f32),
        "g2": 1.0 + 0.1 * jax.random.normal(ks[11], (dim,), f32),
        "be2": 0.05 * jax.random.normal(ks[12], (dim,), f32),
    }

    label_rep = jax.random.normal(ks[13], (M, N, dim), f32)
    abs_encoding = jax.random.normal(ks[14], (M, N, qkv_dim - dim), f32)

    # attention mask preventing message passing along self edges
    # (WindowAttention.gen_window_attn_mask, broadcast over windows; shift=0)
    idxs = np.repeat(np.arange(P), N)
    diff = idxs[:, None] - idxs[None, :]
    m = np.where(diff == 0, -np.inf, 0.0).astype(np.float32)
    np.fill_diagonal(m, 0.0)
    attn_mask = jnp.asarray(np.broadcast_to(m, (nW, L, L)).copy())

    out = swin_nmp_forward(params, label_rep, abs_encoding, attn_mask,
                           B=B, H=H, W=W, window_size=window_size,
                           shift_size=shift_size, num_heads=num_heads)
    out = jax.block_until_ready(out)

    with jax.default_matmul_precision("highest"):
        ref = jax.block_until_ready(
            swin_nmp_reference(params, label_rep, abs_encoding, attn_mask,
                               B=B, H=H, W=W, window_size=window_size,
                               shift_size=shift_size, num_heads=num_heads))

    assert out.shape == (M, N, dim)
    assert bool(jnp.all(jnp.isfinite(out)))
    max_err = float(jnp.max(jnp.abs(out - ref)))
    assert bool(jnp.allclose(out, ref, atol=5e-2, rtol=5e-2)), max_err
    print("KERNEL_OK")
</pallas_src>

<mosaic_0001>
module attributes {stable_mosaic.version = 11 : i64} {
  func.func @_swin_attn_kernel(%arg0: i32, %arg1: i32, %arg2: i32, %arg3: memref<1x4x4x4x64xf32, #tpu.memory_space<vmem>>, %arg4: memref<1x4x4x4x32xf32, #tpu.memory_space<vmem>>, %arg5: memref<64x192xbf16, #tpu.memory_space<vmem>>, %arg6: memref<32x192xbf16, #tpu.memory_space<vmem>>, %arg7: memref<1x192xf32, #tpu.memory_space<vmem>>, %arg8: memref<1x64x64xf32, #tpu.memory_space<vmem>>, %arg9: memref<2x16x64x32xbf16, #tpu.memory_space<vmem>>, %arg10: memref<2x16x64x32xf32, #tpu.memory_space<vmem>>, %arg11: memref<2x16x64x32xbf16, #tpu.memory_space<vmem>>, %arg12: memref<1x4x4x4x64xf32, #tpu.memory_space<vmem>>) attributes {dimension_semantics = [#tpu.dimension_semantics<parallel>, #tpu.dimension_semantics<parallel>, #tpu.dimension_semantics<parallel>], iteration_bounds = array<i64: 2, 2, 2>, scalar_prefetch = 0 : i64, scratch_operands = 0 : i64, tpu.core_type = #tpu.core_type<tc>, window_params = [{transform_indices = @transform_0, window_bounds = array<i64: 1, 4, 4, 4, 64>}, {transform_indices = @transform_1, window_bounds = array<i64: 1, 4, 4, 4, 32>}, {pipeline_mode = #tpu.pipeline_mode<synchronous>, transform_indices = @transform_2, window_bounds = array<i64: 64, 192>}, {pipeline_mode = #tpu.pipeline_mode<synchronous>, transform_indices = @transform_3, window_bounds = array<i64: 32, 192>}, {pipeline_mode = #tpu.pipeline_mode<synchronous>, transform_indices = @transform_4, window_bounds = array<i64: 1, 192>}, {pipeline_mode = #tpu.pipeline_mode<synchronous>, transform_indices = @transform_5, window_bounds = array<i64: 1, 64, 64>}, {pipeline_mode = #tpu.pipeline_mode<synchronous>, transform_indices = @transform_6, window_bounds = array<i64: 2, 16, 64, 32>}, {pipeline_mode = #tpu.pipeline_mode<synchronous>, transform_indices = @transform_7, window_bounds = array<i64: 2, 16, 64, 32>}, {pipeline_mode = #tpu.pipeline_mode<synchronous>, transform_indices = @transform_8, window_bounds = array<i64: 2, 16, 64, 32>}, {transform_indices = @transform_9, window_bounds = array<i64: 1, 4, 4, 4, 64>}]} {
    %c0 = arith.constant 0 : index
    %c0_0 = arith.constant 0 : index
    %c0_1 = arith.constant 0 : index
    %c0_2 = arith.constant 0 : index
    %c0_3 = arith.constant 0 : index
    %0 = vector.load %arg3[%c0, %c0_0, %c0_1, %c0_2, %c0_3] : memref<1x4x4x4x64xf32, #tpu.memory_space<vmem>>, vector<1x4x4x4x64xf32>
    %1 = vector.shape_cast %0 : vector<1x4x4x4x64xf32> to vector<4x4x4x64xf32>
    %2 = vector.shape_cast %1 : vector<4x4x4x64xf32> to vector<64x64xf32>
    %c0_4 = arith.constant 0 : index
    %c0_5 = arith.constant 0 : index
    %c0_6 = arith.constant 0 : index
    %c0_7 = arith.constant 0 : index
    %c0_8 = arith.constant 0 : index
    %3 = vector.load %arg4[%c0_4, %c0_5, %c0_6, %c0_7, %c0_8] : memref<1x4x4x4x32xf32, #tpu.memory_space<vmem>>, vector<1x4x4x4x32xf32>
    %4 = vector.shape_cast %3 : vector<1x4x4x4x32xf32> to vector<4x4x4x32xf32>
    %5 = vector.shape_cast %4 : vector<4x4x4x32xf32> to vector<64x32xf32>
    %c0_9 = arith.constant 0 : index
    %c0_10 = arith.constant 0 : index
    %c0_11 = arith.constant 0 : index
    %6 = vector.load %arg8[%c0_9, %c0_10, %c0_11] : memref<1x64x64xf32, #tpu.memory_space<vmem>>, vector<1x64x64xf32>
    %7 = vector.shape_cast %6 : vector<1x64x64xf32> to vector<64x64xf32>
    %8 = arith.truncf %2 : vector<64x64xf32> to vector<64x64xbf16>
    %c0_12 = arith.constant 0 : index
    %c0_13 = arith.constant 0 : index
    %9 = vector.load %arg5[%c0_12, %c0_13] : memref<64x192xbf16, #tpu.memory_space<vmem>>, vector<64x192xbf16>
    %cst = arith.constant dense<0.000000e+00> : vector<64x192xf32>
    %10 = tpu.matmul %8, %9, %cst {dimension_numbers = #tpu.dot_dimension_numbers<[1], [0], [0], [1], [0, 0, 1, 1], [], []>} : vector<64x64xbf16>, vector<64x192xbf16>, vector<64x192xf32> -> vector<64x192xf32>
    %11 = arith.truncf %5 : vector<64x32xf32> to vector<64x32xbf16>
    %c0_14 = arith.constant 0 : index
    %c0_15 = arith.constant 0 : index
    %12 = vector.load %arg6[%c0_14, %c0_15] : memref<32x192xbf16, #tpu.memory_space<vmem>>, vector<32x192xbf16>
    %cst_16 = arith.constant dense<0.000000e+00> : vector<64x192xf32>
    %13 = tpu.matmul %11, %12, %cst_16 {dimension_numbers = #tpu.dot_dimension_numbers<[1], [0], [0], [1], [0, 0, 1, 1], [], []>} : vector<64x32xbf16>, vector<32x192xbf16>, vector<64x192xf32> -> vector<64x192xf32>
    %14 = arith.addf %10, %13 : vector<64x192xf32>
    %c0_17 = arith.constant 0 : index
    %c0_18 = arith.constant 0 : index
    %15 = vector.load %arg7[%c0_17, %c0_18] : memref<1x192xf32, #tpu.memory_space<vmem>>, vector<1x192xf32>
    %16 = vector.broadcast %15 : vector<1x192xf32> to vector<64x192xf32>
    %17 = arith.addf %14, %16 : vector<64x192xf32>
    %18 = vector.extract_strided_slice %17 {offsets = [0, 0], sizes = [64, 32], strides = [1, 1]} : vector<64x192xf32> to vector<64x32xf32>
    %19 = vector.extract_strided_slice %17 {offsets = [0, 64], sizes = [64, 32], strides = [1, 1]} : vector<64x192xf32> to vector<64x32xf32>
    %20 = vector.extract_strided_slice %17 {offsets = [0, 128], sizes = [64, 32], strides = [1, 1]} : vector<64x192xf32> to vector<64x32xf32>
    %21 = arith.truncf %18 : vector<64x32xf32> to vector<64x32xbf16>
    %22 = arith.truncf %19 : vector<64x32xf32> to vector<64x32xbf16>
    %23 = arith.truncf %20 : vector<64x32xf32> to vector<64x32xbf16>
    %cst_19 = arith.constant dense<0.000000e+00> : vector<64x64xf32>
    %24 = tpu.matmul %21, %22, %cst_19 {dimension_numbers = #tpu.dot_dimension_numbers<[1], [1], [0], [0], [0, 0, 1, 0], [], []>} : vector<64x32xbf16>, vector<64x32xbf16>, vector<64x64xf32> -> vector<64x64xf32>
    %25 = vector.shape_cast %18 : vector<64x32xf32> to vector<16x4x32xf32>
    %26 = arith.truncf %25 : vector<16x4x32xf32> to vector<16x4x32xbf16>
    %c0_20 = arith.constant 0 : index
    %c0_21 = arith.constant 0 : index
    %c0_22 = arith.constant 0 : index
    %c0_23 = arith.constant 0 : index
    %27 = vector.load %arg9[%c0_20, %c0_21, %c0_22, %c0_23] : memref<2x16x64x32xbf16, #tpu.memory_space<vmem>>, vector<1x16x64x32xbf16>
    %28 = vector.shape_cast %27 : vector<1x16x64x32xbf16> to vector<16x64x32xbf16>
    %cst_24 = arith.constant dense<0.000000e+00> : vector<16x4x64xf32>
    %29 = tpu.matmul %26, %28, %cst_24 {dimension_numbers = #tpu.dot_dimension_numbers<[2], [2], [1], [1], [0, 0, 0, 1, 1, 1], [0], [0]>} : vector<16x4x32xbf16>, vector<16x64x32xbf16>, vector<16x4x64xf32> -> vector<16x4x64xf32>
    %c0_25 = arith.constant 0 : index
    %c0_26 = arith.constant 0 : index
    %c0_27 = arith.constant 0 : index
    %c0_28 = arith.constant 0 : index
    %30 = vector.load %arg10[%c0_25, %c0_26, %c0_27, %c0_28] : memref<2x16x64x32xf32, #tpu.memory_space<vmem>>, vector<1x16x64x32xf32>
    %31 = vector.shape_cast %30 : vector<1x16x64x32xf32> to vector<16x64x32xf32>
    %32 = vector.shape_cast %19 : vector<64x32xf32> to vector<1x64x32xf32>
    %33 = vector.broadcast %32 : vector<1x64x32xf32> to vector<16x64x32xf32>
    %34 = arith.mulf %31, %33 : vector<16x64x32xf32>
    %cst_29 = arith.constant dense<0.000000e+00> : vector<16x64xf32>
    %35 = vector.multi_reduction <add>, %34, %cst_29 [2] : vector<16x64x32xf32> to vector<16x64xf32>
    %36 = vector.shape_cast %35 : vector<16x64xf32> to vector<16x1x64xf32>
    %37 = vector.broadcast %36 : vector<16x1x64xf32> to vector<16x4x64xf32>
    %38 = arith.addf %29, %37 : vector<16x4x64xf32>
    %39 = vector.shape_cast %38 : vector<16x4x64xf32> to vector<64x64xf32>
    %40 = arith.addf %24, %39 : vector<64x64xf32>
    %cst_30 = arith.constant 0.176776692 : f32
    %41 = vector.broadcast %cst_30 : f32 to vector<64x64xf32>
    %42 = arith.mulf %40, %41 : vector<64x64xf32>
    %43 = arith.addf %42, %7 : vector<64x64xf32>
    %cst_31 = arith.constant dense<0xFF800000> : vector<64xf32>
    %44 = vector.multi_reduction <maximumf>, %43, %cst_31 [1] : vector<64x64xf32> to vector<64xf32>
    %45 = vector.shape_cast %44 : vector<64xf32> to vector<64x1xf32>
    %46 = vector.broadcast %45 : vector<64x1xf32> to vector<64x64xf32>
    %47 = arith.subf %43, %46 : vector<64x64xf32>
    %48 = math.exp %47 : vector<64x64xf32>
    %cst_32 = arith.constant dense<0.000000e+00> : vector<64xf32>
    %49 = vector.multi_reduction <add>, %48, %cst_32 [1] : vector<64x64xf32> to vector<64xf32>
    %50 = vector.shape_cast %49 : vector<64xf32> to vector<64x1xf32>
    %51 = tpu.reciprocal %50 {approx = true} : vector<64x1xf32> -> vector<64x1xf32>
    %52 = vector.broadcast %51 : vector<64x1xf32> to vector<64x64xf32>
    %53 = arith.mulf %48, %52 : vector<64x64xf32>
    %54 = arith.truncf %53 : vector<64x64xf32> to vector<64x64xbf16>
    %cst_33 = arith.constant dense<0.000000e+00> : vector<64x32xf32>
    %55 = tpu.matmul %54, %23, %cst_33 {dimension_numbers = #tpu.dot_dimension_numbers<[1], [0], [0], [1], [0, 0, 1, 1], [], []>} : vector<64x64xbf16>, vector<64x32xbf16>, vector<64x32xf32> -> vector<64x32xf32>
    %56 = vector.shape_cast %53 : vector<64x64xf32> to vector<16x4x64xf32>
    %57 = arith.truncf %56 : vector<16x4x64xf32> to vector<16x4x64xbf16>
    %c0_34 = arith.constant 0 : index
    %c0_35 = arith.constant 0 : index
    %c0_36 = arith.constant 0 : index
    %c0_37 = arith.constant 0 : index
    %58 = vector.load %arg11[%c0_34, %c0_35, %c0_36, %c0_37] : memref<2x16x64x32xbf16, #tpu.memory_space<vmem>>, vector<1x16x64x32xbf16>
    %59 = vector.shape_cast %58 : vector<1x16x64x32xbf16> to vector<16x64x32xbf16>
    %cst_38 = arith.constant dense<0.000000e+00> : vector<16x4x32xf32>
    %60 = tpu.matmul %57, %59, %cst_38 {dimension_numbers = #tpu.dot_dimension_numbers<[2], [1], [1], [2], [0, 0, 0, 1, 1, 2], [0], [0]>} : vector<16x4x64xbf16>, vector<16x64x32xbf16>, vector<16x4x32xf32> -> vector<16x4x32xf32>
    %61 = vector.shape_cast %60 : vector<16x4x32xf32> to vector<64x32xf32>
    %62 = arith.addf %55, %61 : vector<64x32xf32>
    %63 = vector.extract_strided_slice %17 {offsets = [0, 32], sizes = [64, 32], strides = [1, 1]} : vector<64x192xf32> to vector<64x32xf32>
    %64 = vector.extract_strided_slice %17 {offsets = [0, 96], sizes = [64, 32], strides = [1, 1]} : vector<64x192xf32> to vector<64x32xf32>
    %65 = vector.extract_strided_slice %17 {offsets = [0, 160], sizes = [64, 32], strides = [1, 1]} : vector<64x192xf32> to vector<64x32xf32>
    %66 = arith.truncf %63 : vector<64x32xf32> to vector<64x32xbf16>
    %67 = arith.truncf %64 : vector<64x32xf32> to vector<64x32xbf16>
    %68 = arith.truncf %65 : vector<64x32xf32> to vector<64x32xbf16>
    %cst_39 = arith.constant dense<0.000000e+00> : vector<64x64xf32>
    %69 = tpu.matmul %66, %67, %cst_39 {dimension_numbers = #tpu.dot_dimension_numbers<[1], [1], [0], [0], [0, 0, 1, 0], [], []>} : vector<64x32xbf16>, vector<64x32xbf16>, vector<64x64xf32> -> vector<64x64xf32>
    %70 = vector.shape_cast %63 : vector<64x32xf32> to vector<16x4x32xf32>
    %71 = arith.truncf %70 : vector<16x4x32xf32> to vector<16x4x32xbf16>
    %c1 = arith.constant 1 : index
    %c0_40 = arith.constant 0 : index
    %c0_41 = arith.constant 0 : index
    %c0_42 = arith.constant 0 : index
    %72 = vector.load %arg9[%c1, %c0_40, %c0_41, %c0_42] : memref<2x16x64x32xbf16, #tpu.memory_space<vmem>>, vector<1x16x64x32xbf16>
    %73 = vector.shape_cast %72 : vector<1x16x64x32xbf16> to vector<16x64x32xbf16>
    %cst_43 = arith.constant dense<0.000000e+00> : vector<16x4x64xf32>
    %74 = tpu.matmul %71, %73, %cst_43 {dimension_numbers = #tpu.dot_dimension_numbers<[2], [2], [1], [1], [0, 0, 0, 1, 1, 1], [0], [0]>} : vector<16x4x32xbf16>, vector<16x64x32xbf16>, vector<16x4x64xf32> -> vector<16x4x64xf32>
    %c1_44 = arith.constant 1 : index
    %c0_45 = arith.constant 0 : index
    %c0_46 = arith.constant 0 : index
    %c0_47 = arith.constant 0 : index
    %75 = vector.load %arg10[%c1_44, %c0_45, %c0_46, %c0_47] : memref<2x16x64x32xf32, #tpu.memory_space<vmem>>, vector<1x16x64x32xf32>
    %76 = vector.shape_cast %75 : vector<1x16x64x32xf32> to vector<16x64x32xf32>
    %77 = vector.shape_cast %64 : vector<64x32xf32> to vector<1x64x32xf32>
    %78 = vector.broadcast %77 : vector<1x64x32xf32> to vector<16x64x32xf32>
    %79 = arith.mulf %76, %78 : vector<16x64x32xf32>
    %cst_48 = arith.constant dense<0.000000e+00> : vector<16x64xf32>
    %80 = vector.multi_reduction <add>, %79, %cst_48 [2] : vector<16x64x32xf32> to vector<16x64xf32>
    %81 = vector.shape_cast %80 : vector<16x64xf32> to vector<16x1x64xf32>
    %82 = vector.broadcast %81 : vector<16x1x64xf32> to vector<16x4x64xf32>
    %83 = arith.addf %74, %82 : vector<16x4x64xf32>
    %84 = vector.shape_cast %83 : vector<16x4x64xf32> to vector<64x64xf32>
    %85 = arith.addf %69, %84 : vector<64x64xf32>
    %cst_49 = arith.constant 0.176776692 : f32
    %86 = vector.broadcast %cst_49 : f32 to vector<64x64xf32>
    %87 = arith.mulf %85, %86 : vector<64x64xf32>
    %88 = arith.addf %87, %7 : vector<64x64xf32>
    %cst_50 = arith.constant dense<0xFF800000> : vector<64xf32>
    %89 = vector.multi_reduction <maximumf>, %88, %cst_50 [1] : vector<64x64xf32> to vector<64xf32>
    %90 = vector.shape_cast %89 : vector<64xf32> to vector<64x1xf32>
    %91 = vector.broadcast %90 : vector<64x1xf32> to vector<64x64xf32>
    %92 = arith.subf %88, %91 : vector<64x64xf32>
    %93 = math.exp %92 : vector<64x64xf32>
    %cst_51 = arith.constant dense<0.000000e+00> : vector<64xf32>
    %94 = vector.multi_reduction <add>, %93, %cst_51 [1] : vector<64x64xf32> to vector<64xf32>
    %95 = vector.shape_cast %94 : vector<64xf32> to vector<64x1xf32>
    %96 = tpu.reciprocal %95 {approx = true} : vector<64x1xf32> -> vector<64x1xf32>
    %97 = vector.broadcast %96 : vector<64x1xf32> to vector<64x64xf32>
    %98 = arith.mulf %93, %97 : vector<64x64xf32>
    %99 = arith.truncf %98 : vector<64x64xf32> to vector<64x64xbf16>
    %cst_52 = arith.constant dense<0.000000e+00> : vector<64x32xf32>
    %100 = tpu.matmul %99, %68, %cst_52 {dimension_numbers = #tpu.dot_dimension_numbers<[1], [0], [0], [1], [0, 0, 1, 1], [], []>} : vector<64x64xbf16>, vector<64x32xbf16>, vector<64x32xf32> -> vector<64x32xf32>
    %101 = vector.shape_cast %98 : vector<64x64xf32> to vector<16x4x64xf32>
    %102 = arith.truncf %101 : vector<16x4x64xf32> to vector<16x4x64xbf16>
    %c1_53 = arith.constant 1 : index
    %c0_54 = arith.constant 0 : index
    %c0_55 = arith.constant 0 : index
    %c0_56 = arith.constant 0 : index
    %103 = vector.load %arg11[%c1_53, %c0_54, %c0_55, %c0_56] : memref<2x16x64x32xbf16, #tpu.memory_space<vmem>>, vector<1x16x64x32xbf16>
    %104 = vector.shape_cast %103 : vector<1x16x64x32xbf16> to vector<16x64x32xbf16>
    %cst_57 = arith.constant dense<0.000000e+00> : vector<16x4x32xf32>
    %105 = tpu.matmul %102, %104, %cst_57 {dimension_numbers = #tpu.dot_dimension_numbers<[2], [1], [1], [2], [0, 0, 0, 1, 1, 2], [0], [0]>} : vector<16x4x64xbf16>, vector<16x64x32xbf16>, vector<16x4x32xf32> -> vector<16x4x32xf32>
    %106 = vector.shape_cast %105 : vector<16x4x32xf32> to vector<64x32xf32>
    %107 = arith.addf %100, %106 : vector<64x32xf32>
    %108 = tpu.concatenate %62, %107 in 1 : vector<64x32xf32>, vector<64x32xf32> -> vector<64x64xf32>
    %109 = vector.shape_cast %108 : vector<64x64xf32> to vector<4x4x4x64xf32>
    %c0_58 = arith.constant 0 : index
    %c0_59 = arith.constant 0 : index
    %c0_60 = arith.constant 0 : index
    %c0_61 = arith.constant 0 : index
    %c0_62 = arith.constant 0 : index
    %110 = vector.load %arg12[%c0_58, %c0_59, %c0_60, %c0_61, %c0_62] : memref<1x4x4x4x64xf32, #tpu.memory_space<vmem>>, vector<1x4x4x4x64xf32>
    %111 = vector.shape_cast %110 : vector<1x4x4x4x64xf32> to vector<4x4x4x64xf32>
    %112 = vector.shape_cast %109 : vector<4x4x4x64xf32> to vector<1x4x4x4x64xf32>
    tpu.vector_store %arg12[%c0_58, %c0_59, %c0_60, %c0_61, %c0_62], %112 {strides = array<i32>} : memref<1x4x4x4x64xf32, #tpu.memory_space<vmem>>, vector<1x4x4x4x64xf32>,
    return
  }
  func.func @transform_0(%arg0: i32, %arg1: i32, %arg2: i32) -> (i32, i32, i32, i32, i32) {
    %c0_i32 = arith.constant 0 : i32
    %c0_i32_0 = arith.constant 0 : i32
    %c0_i32_1 = arith.constant 0 : i32
    return %arg0, %arg1, %arg2, %c0_i32, %c0_i32_0 : i32, i32, i32, i32, i32
  }
  func.func @transform_1(%arg0: i32, %arg1: i32, %arg2: i32) -> (i32, i32, i32, i32, i32) {
    %c0_i32 = arith.constant 0 : i32
    %c0_i32_0 = arith.constant 0 : i32
    %c0_i32_1 = arith.constant 0 : i32
    return %arg0, %arg1, %arg2, %c0_i32, %c0_i32_0 : i32, i32, i32, i32, i32
  }
  func.func @transform_2(%arg0: i32, %arg1: i32, %arg2: i32) -> (i32, i32) {
    %c0_i32 = arith.constant 0 : i32
    %c0_i32_0 = arith.constant 0 : i32
    %c0_i32_1 = arith.constant 0 : i32
    return %c0_i32, %c0_i32_0 : i32, i32
  }
  func.func @transform_3(%arg0: i32, %arg1: i32, %arg2: i32) -> (i32, i32) {
    %c0_i32 = arith.constant 0 : i32
    %c0_i32_0 = arith.constant 0 : i32
    %c0_i32_1 = arith.constant 0 : i32
    return %c0_i32, %c0_i32_0 : i32, i32
  }
  func.func @transform_4(%arg0: i32, %arg1: i32, %arg2: i32) -> (i32, i32) {
    %c0_i32 = arith.constant 0 : i32
    %c0_i32_0 = arith.constant 0 : i32
    %c0_i32_1 = arith.constant 0 : i32
    return %c0_i32, %c0_i32_0 : i32, i32
  }
  func.func @transform_5(%arg0: i32, %arg1: i32, %arg2: i32) -> (i32, i32, i32) {
    %c0_i32 = arith.constant 0 : i32
    %c0_i32_0 = arith.constant 0 : i32
    %c0_i32_1 = arith.constant 0 : i32
    %c0_i32_2 = arith.constant 0 : i32
    return %c0_i32, %c0_i32_0, %c0_i32_1 : i32, i32, i32
  }
  func.func @transform_6(%arg0: i32, %arg1: i32, %arg2: i32) -> (i32, i32, i32, i32) {
    %c0_i32 = arith.constant 0 : i32
    %c0_i32_0 = arith.constant 0 : i32
    %c0_i32_1 = arith.constant 0 : i32
    %c0_i32_2 = arith.constant 0 : i32
    %c0_i32_3 = arith.constant 0 : i32
    return %c0_i32, %c0_i32_0, %c0_i32_1, %c0_i32_2 : i32, i32, i32, i32
  }
  func.func @transform_7(%arg0: i32, %arg1: i32, %arg2: i32) -> (i32, i32, i32, i32) {
    %c0_i32 = arith.constant 0 : i32
    %c0_i32_0 = arith.constant 0 : i32
    %c0_i32_1 = arith.constant 0 : i32
    %c0_i32_2 = arith.constant 0 : i32
    %c0_i32_3 = arith.constant 0 : i32
    return %c0_i32, %c0_i32_0, %c0_i32_1, %c0_i32_2 : i32, i32, i32, i32
  }
  func.func @transform_8(%arg0: i32, %arg1: i32, %arg2: i32) -> (i32, i32, i32, i32) {
    %c0_i32 = arith.constant 0 : i32
    %c0_i32_0 = arith.constant 0 : i32
    %c0_i32_1 = arith.constant 0 : i32
    %c0_i32_2 = arith.constant 0 : i32
    %c0_i32_3 = arith.constant 0 : i32
    return %c0_i32, %c0_i32_0, %c0_i32_1, %c0_i32_2 : i32, i32, i32, i32
  }
  func.func @transform_9(%arg0: i32, %arg1: i32, %arg2: i32) -> (i32, i32, i32, i32, i32) {
    %c0_i32 = arith.constant 0 : i32
    %c0_i32_0 = arith.constant 0 : i32
    %c0_i32_1 = arith.constant 0 : i32
    return %arg0, %arg1, %arg2, %c0_i32, %c0_i32_0 : i32, i32, i32, i32, i32
  }
}

</mosaic_0001>

<llo_original>
// kernel: tpu_custom_call.1
$region0: #{tpu_custom_call.1}
  #allocation0 [shape = 'u32[]', space=smem, size = 0x4, offset = 0x4, fixed_abs, tag = 'smem constant byte address 0x4 - core index']
  #allocation1 [shape = 'u32[72,128]{1,0:T(1,128)}', space=vmem, size = 0x9000, scoped, tag = 'internal scratch']
  #allocation6 [shape = 's32[]', space=sflag, size = 0x4, offset = 0, fixed_abs, tag = 'sflag constant byte address 0x0 - dummy sync flag']
  %s0 = inlined_call_operand.vmem [shape: f32[2,8,8,4,64], index: 0, kind: input, shape index: {}]
  %s1 = inlined_call_operand.vmem [shape: f32[2,8,8,4,32], index: 1, kind: input, shape index: {}]
  %s2 = inlined_call_operand.vmem [shape: bf16[64,192], index: 2, kind: input, shape index: {}]
  %s3 = inlined_call_operand.vmem [shape: bf16[32,192], index: 3, kind: input, shape index: {}]
  %s4 = inlined_call_operand.vmem [shape: f32[1,192], index: 4, kind: input, shape index: {}]
  %s5 = inlined_call_operand.vmem [shape: f32[1,64,64], index: 5, kind: input, shape index: {}]
  %s6 = inlined_call_operand.vmem [shape: bf16[2,16,64,32], index: 6, kind: input, shape index: {}]
  %s7 = inlined_call_operand.vmem [shape: f32[2,16,64,32], index: 7, kind: input, shape index: {}]
  %s8 = inlined_call_operand.vmem [shape: bf16[2,16,64,32], index: 8, kind: input, shape index: {}]
  %s9 = inlined_call_operand.hbm [shape: f32[2,8,8,4,64], index: 9, kind: output, shape index: {}]
  %s10 = sld [smem:[#allocation0]]
  $region151: #{tpu_custom_call.1} parent=0
    _
  %s12 = ssub.s32 1, %s10
  %s13 = scalar_select 0, %s12, %s10
  $region1: #{tpu_custom_call.1} parent=0
    #allocation2 [shape = 'u8[65536]{0}', space=vmem, size = 0x10000, scoped, tag = 'input window, operand 0']
    #allocation3 [shape = 'u8[65536]{0}', space=vmem, size = 0x10000, scoped, tag = 'input window, operand 1']
    #allocation4 [shape = 'u8[65536]{0}', space=vmem, size = 0x10000, scoped, tag = 'output window, operand 0']
    #allocation5 [shape = 's32[2]{0}', space=sflag, size = 0x8, scoped, tag = 'scoped memory for tpu_custom_call.1']
    %14 = vsyncpa [#allocation5], 0
    %s15 = scalar_lea.sflag [#allocation5], 1
    %16 = vsyncpa %s15, 0
    loop: start=0, step=1, limit=10
    $region2: #{tpu_custom_call.1} parent=1 // loop_pre_header
      _
    $region3: #{tpu_custom_call.1} parent=1 // loop_header
      %s18 = sphi 0, %s22
      %p19 = scmp.ge.s32.totalorder %s18, 10
      %s25 = sphi 0, %s44
      %s26 = sphi 0, %s40
      %s27 = sphi 0, %s36
      %s28 = sphi 0, %s25
      %s29 = sphi 0, %s26
      %s30 = sphi 0, %s27
      %s31 = sphi 0, %s28
      %s32 = sphi 0, %s29
      %s33 = sphi 0, %s30
      %s51 = sphi 0, %s53
      %s54 = sphi 0, %s51
      %s55 = sphi 0, %s54
      %s71 = sphi 0, %s55
      %s81 = sphi 0, %s83
      %s84 = sphi 0, %s81
      %s85 = sphi 0, %s84
      %s101 = sphi 0, %s85
      %s105 = sphi 0, %s105
      %s107 = sphi 0, %s105
      %s108 = sphi 0, %s107
      %s122 = sphi 0, %s108
      %s126 = sphi 0, %s126
      %s128 = sphi 0, %s126
      %s129 = sphi 0, %s128
      %s143 = sphi 0, %s129
      %s147 = sphi 0, %s147
      %s149 = sphi 0, %s147
      %s150 = sphi 0, %s149
      %s164 = sphi 0, %s150
      %s168 = sphi 0, %s168
      %s170 = sphi 0, %s168
      %s171 = sphi 0, %s170
      %s185 = sphi 0, %s171
      %s189 = sphi 0, %s189
      %s191 = sphi 0, %s189
      %s192 = sphi 0, %s191
      %s206 = sphi 0, %s192
      %s210 = sphi 0, %s210
      %s212 = sphi 0, %s210
      %s213 = sphi 0, %s212
      %s227 = sphi 0, %s213
      %s231 = sphi 0, %s231
      %s233 = sphi 0, %s231
      %s234 = sphi 0, %s233
      %s248 = sphi 0, %s234
      %s258 = sphi 0, %s260
      %s261 = sphi 0, %s258
      %s262 = sphi 0, %s261
      %s278 = sphi 0, %s262
    $region4: #{tpu_custom_call.1} parent=1 // loop_header_branch
      %21 = sbr.rel (%p19) target = $region8
    $region5: #{tpu_custom_call.1} parent=1 // loop_body
      %s23 = ssub.s32 %s18, 1
      %s24 = ssub.s32 %s18, 2
      %s34 = sadd.s32 1, %s27
      %p35 = scmp.ge.s32.totalorder %s34, 2
      %s36 = scalar_select %p35, 0, %s34
      %s37 = sadd.s32 1, %s26
      %s38 = scalar_select %p35, %s37, %s26
      %p39 = scmp.ge.s32.totalorder %s38, 2
      %s40 = scalar_select %p39, 0, %s38
      %s41 = sadd.s32 1, %s25
      %s42 = scalar_select %p39, %s41, %s25
      %p43 = scmp.ge.s32.totalorder %s42, 2
      %s44 = scalar_select %p43, 0, %s42
      %s45 = ssub.s32 %s25, %s44
      %s46 = ssub.s32 %s26, %s40
      %s47 = sor.u32 %s45, %s46
      %s48 = ssub.s32 %s27, %s36
      %s49 = sor.u32 %s47, %s48
      %p50 = scmp.eq.s32.totalorder %s49, 0
      %s52 = sadd.s32 %s51, 1
      %s53 = scalar_select %p50, %s51, %s52
      %p56 = pneg %p50
      %p57 = scmp.eq.s32.totalorder %s18, 7
      %p58 = por %p56, %p57
      %p59 = scmp.ne.s32.totalorder %s51, %s54
      %p60 = scmp.eq.s32.totalorder %s18, 0
      %p61 = por %p59, %p60
      %p62 = scmp.ne.s32.totalorder %s51, %s54
      %p63 = scmp.eq.s32.totalorder %s23, 7
      %p64 = por %p62, %p63
      %p65 = scmp.ne.s32.totalorder %s54, %s55
      %p66 = scmp.eq.s32.totalorder %s23, 0
      %p67 = por %p65, %p66
      %p68 = scmp.ne.s32.totalorder %s54, %s55
      %p69 = scmp.eq.s32.totalorder %s24, 7
      %p70 = por %p68, %p69
      %p72 = scmp.ne.s32.totalorder %s55, %s71
      %p73 = scmp.eq.s32.totalorder %s24, 0
      %p74 = por %p72, %p73
      %s75 = ssub.s32 %s25, %s44
      %s76 = ssub.s32 %s26, %s40
      %s77 = sor.u32 %s75, %s76
      %s78 = ssub.s32 %s27, %s36
      %s79 = sor.u32 %s77, %s78
      %p80 = scmp.eq.s32.totalorder %s79, 0
      %s82 = sadd.s32 %s81, 1
      %s83 = scalar_select %p80, %s81, %s82
      %p86 = pneg %p80
      %p87 = scmp.eq.s32.totalorder %s18, 7
      %p88 = por %p86, %p87
      %p89 = scmp.ne.s32.totalorder %s81, %s84
      %p90 = scmp.eq.s32.totalorder %s18, 0
      %p91 = por %p89, %p90
      %p92 = scmp.ne.s32.totalorder %s81, %s84
      %p93 = scmp.eq.s32.totalorder %s23, 7
      %p94 = por %p92, %p93
      %p95 = scmp.ne.s32.totalorder %s84, %s85
      %p96 = scmp.eq.s32.totalorder %s23, 0
      %p97 = por %p95, %p96
      %p98 = scmp.ne.s32.totalorder %s84, %s85
      %p99 = scmp.eq.s32.totalorder %s24, 7
      %p100 = por %p98, %p99
      %p102 = scmp.ne.s32.totalorder %s85, %s101
      %p103 = scmp.eq.s32.totalorder %s24, 0
      %p104 = por %p102, %p103
      %s106 = sadd.s32 %s105, 1
      %p109 = scmp.eq.s32.totalorder %s18, 7
      %p110 = scmp.ne.s32.totalorder %s105, %s107
      %p111 = scmp.eq.s32.totalorder %s18, 0
      %p112 = por %p110, %p111
      %p113 = scmp.ne.s32.totalorder %s105, %s107
      %p114 = scmp.eq.s32.totalorder %s23, 7
      %p115 = por %p113, %p114
      %p116 = scmp.ne.s32.totalorder %s107, %s108
      %p117 = scmp.eq.s32.totalorder %s23, 0
      %p118 = por %p116, %p117
      %p119 = scmp.ne.s32.totalorder %s107, %s108
      %p120 = scmp.eq.s32.totalorder %s24, 7
      %p121 = por %p119, %p120
      %p123 = scmp.ne.s32.totalorder %s108, %s122
      %p124 = scmp.eq.s32.totalorder %s24, 0
      %p125 = por %p123, %p124
      %s127 = sadd.s32 %s126, 1
      %p130 = scmp.eq.s32.totalorder %s18, 7
      %p131 = scmp.ne.s32.totalorder %s126, %s128
      %p132 = scmp.eq.s32.totalorder %s18, 0
      %p133 = por %p131, %p132
      %p134 = scmp.ne.s32.totalorder %s126, %s128
      %p135 = scmp.eq.s32.totalorder %s23, 7
      %p136 = por %p134, %p135
      %p137 = scmp.ne.s32.totalorder %s128, %s129
      %p138 = scmp.eq.s32.totalorder %s23, 0
      %p139 = por %p137, %p138
      %p140 = scmp.ne.s32.totalorder %s128, %s129
      %p141 = scmp.eq.s32.totalorder %s24, 7
      %p142 = por %p140, %p141
      %p144 = scmp.ne.s32.totalorder %s129, %s143
      %p145 = scmp.eq.s32.totalorder %s24, 0
      %p146 = por %p144, %p145
      %s148 = sadd.s32 %s147, 1
      %p151 = scmp.eq.s32.totalorder %s18, 7
      %p152 = scmp.ne.s32.totalorder %s147, %s149
      %p153 = scmp.eq.s32.totalorder %s18, 0
      %p154 = por %p152, %p153
      %p155 = scmp.ne.s32.totalorder %s147, %s149
      %p156 = scmp.eq.s32.totalorder %s23, 7
      %p157 = por %p155, %p156
      %p158 = scmp.ne.s32.totalorder %s149, %s150
      %p159 = scmp.eq.s32.totalorder %s23, 0
      %p160 = por %p158, %p159
      %p161 = scmp.ne.s32.totalorder %s149, %s150
      %p162 = scmp.eq.s32.totalorder %s24, 7
      %p163 = por %p161, %p162
      %p165 = scmp.ne.s32.totalorder %s150, %s164
      %p166 = scmp.eq.s32.totalorder %s24, 0
      %p167 = por %p165, %p166
      %s169 = sadd.s32 %s168, 1
      %p172 = scmp.eq.s32.totalorder %s18, 7
      %p173 = scmp.ne.s32.totalorder %s168, %s170
      %p174 = scmp.eq.s32.totalorder %s18, 0
      %p175 = por %p173, %p174
      %p176 = scmp.ne.s32.totalorder %s168, %s170
      %p177 = scmp.eq.s32.totalorder %s23, 7
      %p178 = por %p176, %p177
      %p179 = scmp.ne.s32.totalorder %s170, %s171
      %p180 = scmp.eq.s32.totalorder %s23, 0
      %p181 = por %p179, %p180
      %p182 = scmp.ne.s32.totalorder %s170, %s171
      %p183 = scmp.eq.s32.totalorder %s24, 7
      %p184 = por %p182, %p183
      %p186 = scmp.ne.s32.totalorder %s171, %s185
      %p187 = scmp.eq.s32.totalorder %s24, 0
      %p188 = por %p186, %p187
      %s190 = sadd.s32 %s189, 1
      %p193 = scmp.eq.s32.totalorder %s18, 7
      %p194 = scmp.ne.s32.totalorder %s189, %s191
      %p195 = scmp.eq.s32.totalorder %s18, 0
      %p196 = por %p194, %p195
      %p197 = scmp.ne.s32.totalorder %s189, %s191
      %p198 = scmp.eq.s32.totalorder %s23, 7
      %p199 = por %p197, %p198
      %p200 = scmp.ne.s32.totalorder %s191, %s192
      %p201 = scmp.eq.s32.totalorder %s23, 0
      %p202 = por %p200, %p201
      %p203 = scmp.ne.s32.totalorder %s191, %s192
      %p204 = scmp.eq.s32.totalorder %s24, 7
      %p205 = por %p203, %p204
      %p207 = scmp.ne.s32.totalorder %s192, %s206
      %p208 = scmp.eq.s32.totalorder %s24, 0
      %p209 = por %p207, %p208
      %s211 = sadd.s32 %s210, 1
      %p214 = scmp.eq.s32.totalorder %s18, 7
      %p215 = scmp.ne.s32.totalorder %s210, %s212
      %p216 = scmp.eq.s32.totalorder %s18, 0
      %p217 = por %p215, %p216
      %p218 = scmp.ne.s32.totalorder %s210, %s212
      %p219 = scmp.eq.s32.totalorder %s23, 7
      %p220 = por %p218, %p219
      %p221 = scmp.ne.s32.totalorder %s212, %s213
      %p222 = scmp.eq.s32.totalorder %s23, 0
      %p223 = por %p221, %p222
      %p224 = scmp.ne.s32.totalorder %s212, %s213
      %p225 = scmp.eq.s32.totalorder %s24, 7
      %p226 = por %p224, %p225
      %p228 = scmp.ne.s32.totalorder %s213, %s227
      %p229 = scmp.eq.s32.totalorder %s24, 0
      %p230 = por %p228, %p229
      %s232 = sadd.s32 %s231, 1
      %p235 = scmp.eq.s32.totalorder %s18, 7
      %p236 = scmp.ne.s32.totalorder %s231, %s233
      %p237 = scmp.eq.s32.totalorder %s18, 0
      %p238 = por %p236, %p237
      %p239 = scmp.ne.s32.totalorder %s231, %s233
      %p240 = scmp.eq.s32.totalorder %s23, 7
      %p241 = por %p239, %p240
      %p242 = scmp.ne.s32.totalorder %s233, %s234
      %p243 = scmp.eq.s32.totalorder %s23, 0
      %p244 = por %p242, %p243
      %p245 = scmp.ne.s32.totalorder %s233, %s234
      %p246 = scmp.eq.s32.totalorder %s24, 7
      %p247 = por %p245, %p246
      %p249 = scmp.ne.s32.totalorder %s234, %s248
      %p250 = scmp.eq.s32.totalorder %s24, 0
      %p251 = por %p249, %p250
      %s252 = ssub.s32 %s25, %s44
      %s253 = ssub.s32 %s26, %s40
      %s254 = sor.u32 %s252, %s253
      %s255 = ssub.s32 %s27, %s36
      %s256 = sor.u32 %s254, %s255
      %p257 = scmp.eq.s32.totalorder %s256, 0
      %s259 = sadd.s32 %s258, 1
      %s260 = scalar_select %p257, %s258, %s259
      %p263 = pneg %p257
      %p264 = scmp.eq.s32.totalorder %s18, 7
      %p265 = por %p263, %p264
      %p266 = scmp.ne.s32.totalorder %s258, %s261
      %p267 = scmp.eq.s32.totalorder %s18, 0
      %p268 = por %p266, %p267
      %p269 = scmp.ne.s32.totalorder %s258, %s261
      %p270 = scmp.eq.s32.totalorder %s23, 7
      %p271 = por %p269, %p270
      %p272 = scmp.ne.s32.totalorder %s261, %s262
      %p273 = scmp.eq.s32.totalorder %s23, 0
      %p274 = por %p272, %p273
      %p275 = scmp.ne.s32.totalorder %s261, %s262
      %p276 = scmp.eq.s32.totalorder %s24, 7
      %p277 = por %p275, %p276
      %p279 = scmp.ne.s32.totalorder %s262, %s278
      %p280 = scmp.eq.s32.totalorder %s24, 0
      %p281 = por %p279, %p280
      %p282 = scmp.le.s32.totalorder 1, %s18
      %p283 = scmp.lt.s32.totalorder %s18, 9
      %p284 = pnand %p282, %p283
      %p285 = pneg %p284
      // Predicated region
      $region9: #{tpu_custom_call.1} parent=5 // pred_check
        _
      $region10: #{tpu_custom_call.1} parent=5 // pred_check_branch
        %287 = sbr.rel (%p284) target = $region12
      $region11: #{tpu_custom_call.1} parent=5 // pred_region
        %s288 = ssub.s32 %s18, 1
        // Predicated region
        $region13: #{tpu_custom_call.1} parent=11 // pred_check
          %p289 = pneg %p118
        $region14: #{tpu_custom_call.1} parent=11 // pred_check_branch
          %291 = sbr.rel (%p289) target = $region16
        $region15: #{tpu_custom_call.1} parent=11 // pred_region
          _
        $region16: #{tpu_custom_call.1} parent=11 // pred_fallthru
          _
        // Predicated region
        $region17: #{tpu_custom_call.1} parent=11 // pred_check
          %p292 = pneg %p139
        $region18: #{tpu_custom_call.1} parent=11 // pred_check_branch
          %294 = sbr.rel (%p292) target = $region20
        $region19: #{tpu_custom_call.1} parent=11 // pred_region
          _
        $region20: #{tpu_custom_call.1} parent=11 // pred_fallthru
          _
        // Predicated region
        $region21: #{tpu_custom_call.1} parent=11 // pred_check
          %p295 = pneg %p160
        $region22: #{tpu_custom_call.1} parent=11 // pred_check_branch
          %297 = sbr.rel (%p295) target = $region24
        $region23: #{tpu_custom_call.1} parent=11 // pred_region
          _
        $region24: #{tpu_custom_call.1} parent=11 // pred_fallthru
          _
        // Predicated region
        $region25: #{tpu_custom_call.1} parent=11 // pred_check
          %p298 = pneg %p181
        $region26: #{tpu_custom_call.1} parent=11 // pred_check_branch
          %300 = sbr.rel (%p298) target = $region28
        $region27: #{tpu_custom_call.1} parent=11 // pred_region
          _
        $region28: #{tpu_custom_call.1} parent=11 // pred_fallthru
          _
        // Predicated region
        $region29: #{tpu_custom_call.1} parent=11 // pred_check
          %p301 = pneg %p202
        $region30: #{tpu_custom_call.1} parent=11 // pred_check_branch
          %303 = sbr.rel (%p301) target = $region32
        $region31: #{tpu_custom_call.1} parent=11 // pred_region
          _
        $region32: #{tpu_custom_call.1} parent=11 // pred_fallthru
          _
        // Predicated region
        $region33: #{tpu_custom_call.1} parent=11 // pred_check
          %p304 = pneg %p223
        $region34: #{tpu_custom_call.1} parent=11 // pred_check_branch
          %306 = sbr.rel (%p304) target = $region36
        $region35: #{tpu_custom_call.1} parent=11 // pred_region
          _
        $region36: #{tpu_custom_call.1} parent=11 // pred_fallthru
          _
        // Predicated region
        $region37: #{tpu_custom_call.1} parent=11 // pred_check
          %p307 = pneg %p244
        $region38: #{tpu_custom_call.1} parent=11 // pred_check_branch
          %309 = sbr.rel (%p307) target = $region40
        $region39: #{tpu_custom_call.1} parent=11 // pred_region
          _
        $region40: #{tpu_custom_call.1} parent=11 // pred_fallthru
          _
      $region12: #{tpu_custom_call.1} parent=5 // pred_fallthru
        _
      %p310 = scmp.lt.s32.totalorder %s18, 8
      // Predicated region
      $region41: #{tpu_custom_call.1} parent=5 // pred_check
        %p311 = pneg %p310
      $region42: #{tpu_custom_call.1} parent=5 // pred_check_branch
        %313 = sbr.rel (%p311) target = $region44
      $region43: #{tpu_custom_call.1} parent=5 // pred_region
        // Predicated region
        $region45: #{tpu_custom_call.1} parent=43 // pred_check
          %p314 = pneg %p61
        $region46: #{tpu_custom_call.1} parent=43 // pred_check_branch
          %316 = sbr.rel (%p314) target = $region48
        $region47: #{tpu_custom_call.1} parent=43 // pred_region
          %s317 = sand.u32 %s51, 1
          %s318 = sand.u32 %s51, 1
          %s319 = smul.addr %s318, 64
          %s320 = scalar_lea.vmem [#allocation2], %s319
          %s321 = smul.u32 4, %s26
          %s322 = smul.u32 4, %s27
          %s323 = smul.addr %s321, 8
          %s324 = sadd.s32 %s322, %s323
          %s325 = smul.addr %s25, 64
          %s326 = sadd.s32 %s324, %s325
          %s327 = smul.addr %s326, 4
          %s328 = scalar_lea.vmem %s0, %s327
          // Predicated region
          $region49: #{tpu_custom_call.1} parent=47 // pred_check
            _
          $region50: #{tpu_custom_call.1} parent=47 // pred_check_branch
            %330 = sbr.rel (0) target = $region52
          $region51: #{tpu_custom_call.1} parent=47 // pred_region
            // Predicated region
            $region53: #{tpu_custom_call.1} parent=51 // pred_check
              _
            $region54: #{tpu_custom_call.1} parent=51 // pred_check_branch
              %332 = sbr.rel target = $region56
            $region55: #{tpu_custom_call.1} parent=51 // pred_region
              // Predicated region
              $region68: #{tpu_custom_call.1} parent=55 // pred_check
                _
              $region69: #{tpu_custom_call.1} parent=55 // pred_check_branch
                %378 = sbr.rel (0) target = $region71
              $region70: #{tpu_custom_call.1} parent=55 // pred_region
                loop: start=0, step=1, limit=1
                $region72: #{tpu_custom_call.1} parent=70 // loop_pre_header
                  _
                $region73: #{tpu_custom_call.1} parent=70 // loop_header
                  %s380 = sphi 0, %s384
                  %p381 = scmp.ge.s32.totalorder %s380, 1
                  %s385 = sphi %s328, %s328
                  %s386 = sphi %s320, %s320
                $region74: #{tpu_custom_call.1} parent=70 // loop_header_branch
                  %383 = sbr.rel (%p381) target = $region78
                $region75: #{tpu_custom_call.1} parent=70 // loop_body
                  _
                $region76: #{tpu_custom_call.1} parent=70 // loop_footer
                  %s384 = sadd.s32 1, %s380
                $region77: #{tpu_custom_call.1} parent=70 // loop_footer_branch
                  %379 = sbr.rel target = $region73
                $region78: #{tpu_custom_call.1} parent=70 // loop_exit
                  _
                %s388 = ssub.s32 16, 1
                loop: start=0, step=1, limit=1
                $region79: #{tpu_custom_call.1} parent=70 // loop_pre_header
                  _
                $region80: #{tpu_custom_call.1} parent=70 // loop_header
                  %s390 = sphi 0, %s394
                  %p391 = scmp.ge.s32.totalorder %s390, 1
                  %s395 = sphi %s328, %s328
                  %s396 = sphi %s320, %s320
                $region81: #{tpu_custom_call.1} parent=70 // loop_header_branch
                  %393 = sbr.rel (%p391) target = $region85
                $region82: #{tpu_custom_call.1} parent=70 // loop_body
                  %v397 = vld [vmem:[%s395] sm:%s388]
                  %398 = vst [vmem:[%s396] sm:%s388] %v397
                  %v399 = vld [vmem:[%s395 + $0x4] sm:%s388]
                  %400 = vst [vmem:[%s396 + $0x4] sm:%s388] %v399
                  %v401 = vld [vmem:[%s395 + $0x8] sm:%s388]
                  %402 = vst [vmem:[%s396 + $0x8] sm:%s388] %v401
                  %v403 = vld [vmem:[%s395 + $0xc] sm:%s388]
                  %404 = vst [vmem:[%s396 + $0xc] sm:%s388] %v403
                  %v405 = vld [vmem:[%s395 + $0x20] sm:%s388]
                  %406 = vst [vmem:[%s396 + $0x10] sm:%s388] %v405
                  %v407 = vld [vmem:[%s395 + $0x24] sm:%s388]
                  %408 = vst [vmem:[%s396 + $0x14] sm:%s388] %v407
                  %v409 = vld [vmem:[%s395 + $0x28] sm:%s388]
                  %410 = vst [vmem:[%s396 + $0x18] sm:%s388] %v409
                  %v411 = vld [vmem:[%s395 + $0x2c] sm:%s388]
                  %412 = vst [vmem:[%s396 + $0x1c] sm:%s388] %v411
                  %v413 = vld [vmem:[%s395 + $0x40] sm:%s388]
                  %414 = vst [vmem:[%s396 + $0x20] sm:%s388] %v413
                  %v415 = vld [vmem:[%s395 + $0x44] sm:%s388]
                  %416 = vst [vmem:[%s396 + $0x24] sm:%s388] %v415
                  %v417 = vld [vmem:[%s395 + $0x48] sm:%s388]
                  %418 = vst [vmem:[%s396 + $0x28] sm:%s388] %v417
                  %v419 = vld [vmem:[%s395 + $0x4c] sm:%s388]
                  %420 = vst [vmem:[%s396 + $0x2c] sm:%s388] %v419
                  %v421 = vld [vmem:[%s395 + $0x60] sm:%s388]
                  %422 = vst [vmem:[%s396 + $0x30] sm:%s388] %v421
                  %v423 = vld [vmem:[%s395 + $0x64] sm:%s388]
                  %424 = vst [vmem:[%s396 + $0x34] sm:%s388] %v423
                  %v425 = vld [vmem:[%s395 + $0x68] sm:%s388]
                  %426 = vst [vmem:[%s396 + $0x38] sm:%s388] %v425
                  %v427 = vld [vmem:[%s395 + $0x6c] sm:%s388]
                  %428 = vst [vmem:[%s396 + $0x3c] sm:%s388] %v427
                $region83: #{tpu_custom_call.1} parent=70 // loop_footer
                  %s394 = sadd.s32 1, %s390
                $region84: #{tpu_custom_call.1} parent=70 // loop_footer_branch
                  %389 = sbr.rel target = $region80
                $region85: #{tpu_custom_call.1} parent=70 // loop_exit
                  _
              $region71: #{tpu_custom_call.1} parent=55 // pred_fallthru
                _
            $region56: #{tpu_custom_call.1} parent=51 // pred_fallthru
              _
            // Predicated region
            $region57: #{tpu_custom_call.1} parent=51 // pred_check
              _
            $region58: #{tpu_custom_call.1} parent=51 // pred_check_branch
              %334 = sbr.rel (0) target = $region60
            $region59: #{tpu_custom_call.1} parent=51 // pred_region
              %s336 = ssub.s32 16, 1
              loop: start=0, step=1, limit=1
              $region61: #{tpu_custom_call.1} parent=59 // loop_pre_header
                _
              $region62: #{tpu_custom_call.1} parent=59 // loop_header
                %s338 = sphi 0, %s342
                %p339 = scmp.ge.s32.totalorder %s338, 1
                %s343 = sphi %s328, %s328
                %s344 = sphi %s320, %s320
              $region63: #{tpu_custom_call.1} parent=59 // loop_header_branch
                %341 = sbr.rel (%p339) target = $region67
              $region64: #{tpu_custom_call.1} parent=59 // loop_body
                %v345 = vld [vmem:[%s343] sm:%s336]
                %346 = vst [vmem:[%s344] sm:%s336] %v345
                %v347 = vld [vmem:[%s343 + $0x4] sm:%s336]
                %348 = vst [vmem:[%s344 + $0x4] sm:%s336] %v347
                %v349 = vld [vmem:[%s343 + $0x8] sm:%s336]
                %350 = vst [vmem:[%s344 + $0x8] sm:%s336] %v349
                %v351 = vld [vmem:[%s343 + $0xc] sm:%s336]
                %352 = vst [vmem:[%s344 + $0xc] sm:%s336] %v351
                %v353 = vld [vmem:[%s343 + $0x20] sm:%s336]
                %354 = vst [vmem:[%s344 + $0x10] sm:%s336] %v353
                %v355 = vld [vmem:[%s343 + $0x24] sm:%s336]
                %356 = vst [vmem:[%s344 + $0x14] sm:%s336] %v355
                %v357 = vld [vmem:[%s343 + $0x28] sm:%s336]
                %358 = vst [vmem:[%s344 + $0x18] sm:%s336] %v357
                %v359 = vld [vmem:[%s343 + $0x2c] sm:%s336]
                %360 = vst [vmem:[%s344 + $0x1c] sm:%s336] %v359
                %v361 = vld [vmem:[%s343 + $0x40] sm:%s336]
                %362 = vst [vmem:[%s344 + $0x20] sm:%s336] %v361
                %v363 = vld [vmem:[%s343 + $0x44] sm:%s336]
                %364 = vst [vmem:[%s344 + $0x24] sm:%s336] %v363
                %v365 = vld [vmem:[%s343 + $0x48] sm:%s336]
                %366 = vst [vmem:[%s344 + $0x28] sm:%s336] %v365
                %v367 = vld [vmem:[%s343 + $0x4c] sm:%s336]
                %368 = vst [vmem:[%s344 + $0x2c] sm:%s336] %v367
                %v369 = vld [vmem:[%s343 + $0x60] sm:%s336]
                %370 = vst [vmem:[%s344 + $0x30] sm:%s336] %v369
                %v371 = vld [vmem:[%s343 + $0x64] sm:%s336]
                %372 = vst [vmem:[%s344 + $0x34] sm:%s336] %v371
                %v373 = vld [vmem:[%s343 + $0x68] sm:%s336]
                %374 = vst [vmem:[%s344 + $0x38] sm:%s336] %v373
                %v375 = vld [vmem:[%s343 + $0x6c] sm:%s336]
                %376 = vst [vmem:[%s344 + $0x3c] sm:%s336] %v375
              $region65: #{tpu_custom_call.1} parent=59 // loop_footer
                %s342 = sadd.s32 1, %s338
              $region66: #{tpu_custom_call.1} parent=59 // loop_footer_branch
                %337 = sbr.rel target = $region62
              $region67: #{tpu_custom_call.1} parent=59 // loop_exit
                _
            $region60: #{tpu_custom_call.1} parent=51 // pred_fallthru
              _
          $region52: #{tpu_custom_call.1} parent=47 // pred_fallthru
            _
          %429 = vnop
        $region48: #{tpu_custom_call.1} parent=43 // pred_fallthru
          _
        // Predicated region
        $region86: #{tpu_custom_call.1} parent=43 // pred_check
          %p430 = pneg %p91
        $region87: #{tpu_custom_call.1} parent=43 // pred_check_branch
          %432 = sbr.rel (%p430) target = $region89
        $region88: #{tpu_custom_call.1} parent=43 // pred_region
          %s433 = sand.u32 %s81, 1
          %s434 = sand.u32 %s81, 1
          %s435 = smul.addr %s434, 64
          %s436 = scalar_lea.vmem [#allocation3], %s435
          %s437 = smul.u32 4, %s26
          %s438 = smul.u32 4, %s27
          %s439 = smul.addr %s437, 8
          %s440 = sadd.s32 %s438, %s439
          %s441 = smul.addr %s25, 64
          %s442 = sadd.s32 %s440, %s441
          %s443 = smul.addr %s442, 4
          %s444 = scalar_lea.vmem %s1, %s443
          // Predicated region
          $region90: #{tpu_custom_call.1} parent=88 // pred_check
            _
          $region91: #{tpu_custom_call.1} parent=88 // pred_check_branch
            %446 = sbr.rel (0) target = $region93
          $region92: #{tpu_custom_call.1} parent=88 // pred_region
            // Predicated region
            $region94: #{tpu_custom_call.1} parent=92 // pred_check
              _
            $region95: #{tpu_custom_call.1} parent=92 // pred_check_branch
              %448 = sbr.rel target = $region97
            $region96: #{tpu_custom_call.1} parent=92 // pred_region
              // Predicated region
              $region109: #{tpu_custom_call.1} parent=96 // pred_check
                _
              $region110: #{tpu_custom_call.1} parent=96 // pred_check_branch
                %494 = sbr.rel (0) target = $region112
              $region111: #{tpu_custom_call.1} parent=96 // pred_region
                loop: start=0, step=1, limit=1
                $region113: #{tpu_custom_call.1} parent=111 // loop_pre_header
                  _
                $region114: #{tpu_custom_call.1} parent=111 // loop_header
                  %s496 = sphi 0, %s500
                  %p497 = scmp.ge.s32.totalorder %s496, 1
                  %s501 = sphi %s444, %s444
                  %s502 = sphi %s436, %s436
                $region115: #{tpu_custom_call.1} parent=111 // loop_header_branch
                  %499 = sbr.rel (%p497) target = $region119
                $region116: #{tpu_custom_call.1} parent=111 // loop_body
                  _
                $region117: #{tpu_custom_call.1} parent=111 // loop_footer
                  %s500 = sadd.s32 1, %s496
                $region118: #{tpu_custom_call.1} parent=111 // loop_footer_branch
                  %495 = sbr.rel target = $region114
                $region119: #{tpu_custom_call.1} parent=111 // loop_exit
                  _
                %s504 = ssub.s32 16, 1
                loop: start=0, step=1, limit=1
                $region120: #{tpu_custom_call.1} parent=111 // loop_pre_header
                  _
                $region121: #{tpu_custom_call.1} parent=111 // loop_header
                  %s506 = sphi 0, %s510
                  %p507 = scmp.ge.s32.totalorder %s506, 1
                  %s511 = sphi %s444, %s444
                  %s512 = sphi %s436, %s436
                $region122: #{tpu_custom_call.1} parent=111 // loop_header_branch
                  %509 = sbr.rel (%p507) target = $region126
                $region123: #{tpu_custom_call.1} parent=111 // loop_body
                  %v513 = vld [vmem:[%s511] sm:%s504]
                  %514 = vst [vmem:[%s512] sm:%s504] %v513
                  %v515 = vld [vmem:[%s511 + $0x4] sm:%s504]
                  %516 = vst [vmem:[%s512 + $0x4] sm:%s504] %v515
                  %v517 = vld [vmem:[%s511 + $0x8] sm:%s504]
                  %518 = vst [vmem:[%s512 + $0x8] sm:%s504] %v517
                  %v519 = vld [vmem:[%s511 + $0xc] sm:%s504]
                  %520 = vst [vmem:[%s512 + $0xc] sm:%s504] %v519
                  %v521 = vld [vmem:[%s511 + $0x20] sm:%s504]
                  %522 = vst [vmem:[%s512 + $0x10] sm:%s504] %v521
                  %v523 = vld [vmem:[%s511 + $0x24] sm:%s504]
                  %524 = vst [vmem:[%s512 + $0x14] sm:%s504] %v523
                  %v525 = vld [vmem:[%s511 + $0x28] sm:%s504]
                  %526 = vst [vmem:[%s512 + $0x18] sm:%s504] %v525
                  %v527 = vld [vmem:[%s511 + $0x2c] sm:%s504]
                  %528 = vst [vmem:[%s512 + $0x1c] sm:%s504] %v527
                  %v529 = vld [vmem:[%s511 + $0x40] sm:%s504]
                  %530 = vst [vmem:[%s512 + $0x20] sm:%s504] %v529
                  %v531 = vld [vmem:[%s511 + $0x44] sm:%s504]
                  %532 = vst [vmem:[%s512 + $0x24] sm:%s504] %v531
                  %v533 = vld [vmem:[%s511 + $0x48] sm:%s504]
                  %534 = vst [vmem:[%s512 + $0x28] sm:%s504] %v533
                  %v535 = vld [vmem:[%s511 + $0x4c] sm:%s504]
                  %536 = vst [vmem:[%s512 + $0x2c] sm:%s504] %v535
                  %v537 = vld [vmem:[%s511 + $0x60] sm:%s504]
                  %538 = vst [vmem:[%s512 + $0x30] sm:%s504] %v537
                  %v539 = vld [vmem:[%s511 + $0x64] sm:%s504]
                  %540 = vst [vmem:[%s512 + $0x34] sm:%s504] %v539
                  %v541 = vld [vmem:[%s511 + $0x68] sm:%s504]
                  %542 = vst [vmem:[%s512 + $0x38] sm:%s504] %v541
                  %v543 = vld [vmem:[%s511 + $0x6c] sm:%s504]
                  %544 = vst [vmem:[%s512 + $0x3c] sm:%s504] %v543
                $region124: #{tpu_custom_call.1} parent=111 // loop_footer
                  %s510 = sadd.s32 1, %s506
                $region125: #{tpu_custom_call.1} parent=111 // loop_footer_branch
                  %505 = sbr.rel target = $region121
                $region126: #{tpu_custom_call.1} parent=111 // loop_exit
                  _
              $region112: #{tpu_custom_call.1} parent=96 // pred_fallthru
                _
            $region97: #{tpu_custom_call.1} parent=92 // pred_fallthru
              _
            // Predicated region
            $region98: #{tpu_custom_call.1} parent=92 // pred_check
              _
            $region99: #{tpu_custom_call.1} parent=92 // pred_check_branch
              %450 = sbr.rel (0) target = $region101
            $region100: #{tpu_custom_call.1} parent=92 // pred_region
              %s452 = ssub.s32 16, 1
              loop: start=0, step=1, limit=1
              $region102: #{tpu_custom_call.1} parent=100 // loop_pre_header
                _
              $region103: #{tpu_custom_call.1} parent=100 // loop_header
                %s454 = sphi 0, %s458
                %p455 = scmp.ge.s32.totalorder %s454, 1
                %s459 = sphi %s444, %s444
                %s460 = sphi %s436, %s436
              $region104: #{tpu_custom_call.1} parent=100 // loop_header_branch
                %457 = sbr.rel (%p455) target = $region108
              $region105: #{tpu_custom_call.1} parent=100 // loop_body
                %v461 = vld [vmem:[%s459] sm:%s452]
                %462 = vst [vmem:[%s460] sm:%s452] %v461
                %v463 = vld [vmem:[%s459 + $0x4] sm:%s452]
                %464 = vst [vmem:[%s460 + $0x4] sm:%s452] %v463
                %v465 = vld [vmem:[%s459 + $0x8] sm:%s452]
                %466 = vst [vmem:[%s460 + $0x8] sm:%s452] %v465
                %v467 = vld [vmem:[%s459 + $0xc] sm:%s452]
                %468 = vst [vmem:[%s460 + $0xc] sm:%s452] %v467
                %v469 = vld [vmem:[%s459 + $0x20] sm:%s452]
                %470 = vst [vmem:[%s460 + $0x10] sm:%s452] %v469
                %v471 = vld [vmem:[%s459 + $0x24] sm:%s452]
                %472 = vst [vmem:[%s460 + $0x14] sm:%s452] %v471
                %v473 = vld [vmem:[%s459 + $0x28] sm:%s452]
                %474 = vst [vmem:[%s460 + $0x18] sm:%s452] %v473
                %v475 = vld [vmem:[%s459 + $0x2c] sm:%s452]
                %476 = vst [vmem:[%s460 + $0x1c] sm:%s452] %v475
                %v477 = vld [vmem:[%s459 + $0x40] sm:%s452]
                %478 = vst [vmem:[%s460 + $0x20] sm:%s452] %v477
                %v479 = vld [vmem:[%s459 + $0x44] sm:%s452]
                %480 = vst [vmem:[%s460 + $0x24] sm:%s452] %v479
                %v481 = vld [vmem:[%s459 + $0x48] sm:%s452]
                %482 = vst [vmem:[%s460 + $0x28] sm:%s452] %v481
                %v483 = vld [vmem:[%s459 + $0x4c] sm:%s452]
                %484 = vst [vmem:[%s460 + $0x2c] sm:%s452] %v483
                %v485 = vld [vmem:[%s459 + $0x60] sm:%s452]
                %486 = vst [vmem:[%s460 + $0x30] sm:%s452] %v485
                %v487 = vld [vmem:[%s459 + $0x64] sm:%s452]
                %488 = vst [vmem:[%s460 + $0x34] sm:%s452] %v487
                %v489 = vld [vmem:[%s459 + $0x68] sm:%s452]
                %490 = vst [vmem:[%s460 + $0x38] sm:%s452] %v489
                %v491 = vld [vmem:[%s459 + $0x6c] sm:%s452]
                %492 = vst [vmem:[%s460 + $0x3c] sm:%s452] %v491
              $region106: #{tpu_custom_call.1} parent=100 // loop_footer
                %s458 = sadd.s32 1, %s454
              $region107: #{tpu_custom_call.1} parent=100 // loop_footer_branch
                %453 = sbr.rel target = $region103
              $region108: #{tpu_custom_call.1} parent=100 // loop_exit
                _
            $region101: #{tpu_custom_call.1} parent=92 // pred_fallthru
              _
          $region93: #{tpu_custom_call.1} parent=88 // pred_fallthru
            _
          %545 = vnop
        $region89: #{tpu_custom_call.1} parent=43 // pred_fallthru
          _
      $region44: #{tpu_custom_call.1} parent=5 // pred_fallthru
        _
      %p546 = scmp.le.s32.totalorder 1, %s18
      %p547 = scmp.lt.s32.totalorder %s18, 9
      %p548 = pnand %p546, %p547
      %p549 = pneg %p548
      // Predicated region
      $region127: #{tpu_custom_call.1} parent=5 // pred_check
        _
      $region128: #{tpu_custom_call.1} parent=5 // pred_check_branch
        %551 = sbr.rel (%p548) target = $region130
      $region129: #{tpu_custom_call.1} parent=5 // pred_region
        %s552 = ssub.s32 %s18, 1
        %s553 = sand.u32 %s54, 1
        %s554 = sand.u32 %s54, 1
        %s555 = smul.addr %s554, 64
        %s556 = scalar_lea.vmem [#allocation2], %s555
        // Predicated region
        $region131: #{tpu_custom_call.1} parent=129 // pred_check
          %p557 = pneg %p67
        $region132: #{tpu_custom_call.1} parent=129 // pred_check_branch
          %559 = sbr.rel (%p557) target = $region134
        $region133: #{tpu_custom_call.1} parent=129 // pred_region
          _
        $region134: #{tpu_custom_call.1} parent=129 // pred_fallthru
          _
        %s560 = sand.u32 %s84, 1
        %s561 = sand.u32 %s84, 1
        %s562 = smul.addr %s561, 64
        %s563 = scalar_lea.vmem [#allocation3], %s562
        // Predicated region
        $region135: #{tpu_custom_call.1} parent=129 // pred_check
          %p564 = pneg %p97
        $region136: #{tpu_custom_call.1} parent=129 // pred_check_branch
          %566 = sbr.rel (%p564) target = $region138
        $region137: #{tpu_custom_call.1} parent=129 // pred_region
          _
        $region138: #{tpu_custom_call.1} parent=129 // pred_fallthru
          _
        %s567 = sand.u32 %s54, 1
        %s568 = sand.u32 %s54, 1
        %s569 = smul.addr %s568, 64
        %s570 = scalar_lea.vmem [#allocation2], %s569
        %p571 = pneg %p67
        %p572 = pneg %p64
        %s573 = sand.u32 %s84, 1
        %s574 = sand.u32 %s84, 1
        %s575 = smul.addr %s574, 64
        %s576 = scalar_lea.vmem [#allocation3], %s575
        %p577 = pneg %p97
        %p578 = pneg %p94
        %p579 = pneg %p118
        %p580 = pneg %p115
        %p581 = pneg %p139
        %p582 = pneg %p136
        %p583 = pneg %p160
        %p584 = pneg %p157
        %p585 = pneg %p181
        %p586 = pneg %p178
        %p587 = pneg %p202
        %p588 = pneg %p199
        %p589 = pneg %p223
        %p590 = pneg %p220
        %p591 = pneg %p244
        %p592 = pneg %p241
        %p593 = pneg %p274
        %p594 = pneg %p271
        %s595 = sand.u32 %s261, 1
        %s596 = scalar_lea.sflag [#allocation5], %s595
        %s597 = sand.u32 %s261, 1
        %s598 = smul.addr %s597, 64
        %s599 = scalar_lea.vmem [#allocation4], %s598
        %s600 = smul.u32 4, %s29
        %s601 = smul.u32 4, %s30
        %s602 = smul.u32 4, %s29
        %s603 = smul.u32 4, %s30
        %s604 = smul.u32 4, %s29
        %s605 = smul.u32 4, %s30
        %v607 = vld [vmem:[%s556] sm:$0xf]
        %v608 = vld [vmem:[%s556 + $0x4] sm:$0xf]
        %v609 = vld [vmem:[%s556 + $0x8] sm:$0xf]
        %v610 = vld [vmem:[%s556 + $0xc] sm:$0xf]
        %v611 = vld [vmem:[%s556 + $0x10] sm:$0xf]
        %v612 = vld [vmem:[%s556 + $0x14] sm:$0xf]
        %v613 = vld [vmem:[%s556 + $0x18] sm:$0xf]
        %v614 = vld [vmem:[%s556 + $0x1c] sm:$0xf]
        %v615 = vld [vmem:[%s556 + $0x20] sm:$0xf]
        %v616 = vld [vmem:[%s556 + $0x24] sm:$0xf]
        %v617 = vld [vmem:[%s556 + $0x28] sm:$0xf]
        %v618 = vld [vmem:[%s556 + $0x2c] sm:$0xf]
        %v619 = vld [vmem:[%s556 + $0x30] sm:$0xf]
        %v620 = vld [vmem:[%s556 + $0x34] sm:$0xf]
        %v621 = vld [vmem:[%s556 + $0x38] sm:$0xf]
        %v622 = vld [vmem:[%s556 + $0x3c] sm:$0xf]
        %v623 = vld [vmem:[%s563] sm:$0xf]
        %v624 = vld [vmem:[%s563 + $0x4] sm:$0xf]
        %v625 = vld [vmem:[%s563 + $0x8] sm:$0xf]
        %v626 = vld [vmem:[%s563 + $0xc] sm:$0xf]
        %v627 = vld [vmem:[%s563 + $0x10] sm:$0xf]
        %v628 = vld [vmem:[%s563 + $0x14] sm:$0xf]
        %v629 = vld [vmem:[%s563 + $0x18] sm:$0xf]
        %v630 = vld [vmem:[%s563 + $0x1c] sm:$0xf]
        %v631 = vld [vmem:[%s563 + $0x20] sm:$0xf]
        %v632 = vld [vmem:[%s563 + $0x24] sm:$0xf]
        %v633 = vld [vmem:[%s563 + $0x28] sm:$0xf]
        %v634 = vld [vmem:[%s563 + $0x2c] sm:$0xf]
        %v635 = vld [vmem:[%s563 + $0x30] sm:$0xf]
        %v636 = vld [vmem:[%s563 + $0x34] sm:$0xf]
        %v637 = vld [vmem:[%s563 + $0x38] sm:$0xf]
        %v638 = vld [vmem:[%s563 + $0x3c] sm:$0xf]
        %v639 = vld [vmem:[%s5] sm:$0xff]
        %v640 = vld [vmem:[%s5 + $0x8] sm:$0xff]
        %v641 = vld [vmem:[%s5 + $0x10] sm:$0xff]
        %v642 = vld [vmem:[%s5 + $0x18] sm:$0xff]
        %v643 = vld [vmem:[%s5 + $0x20] sm:$0xff]
        %v644 = vld [vmem:[%s5 + $0x28] sm:$0xff]
        %v645 = vld [vmem:[%s5 + $0x30] sm:$0xff]
        %v646 = vld [vmem:[%s5 + $0x38] sm:$0xff]
        %663 = vst [vmem:[#allocation1] ss:$2 sm:$0xff] %v607
        %s664 = scalar_lea.vmem [#allocation1], 1
        %665 = vst [vmem:[%s664] ss:$2 sm:$0xff] %v608
        %s666 = scalar_lea.vmem [#allocation1], 16
        %667 = vst [vmem:[%s666] ss:$2 sm:$0xff] %v609
        %s668 = scalar_lea.vmem [#allocation1], 17
        %669 = vst [vmem:[%s668] ss:$2 sm:$0xff] %v610
        %s670 = scalar_lea.vmem [#allocation1], 32
        %671 = vst [vmem:[%s670] ss:$2 sm:$0xff] %v611
        %s672 = scalar_lea.vmem [#allocation1], 33
        %673 = vst [vmem:[%s672] ss:$2 sm:$0xff] %v612
        %s674 = scalar_lea.vmem [#allocation1], 48
        %675 = vst [vmem:[%s674] ss:$2 sm:$0xff] %v613
        %s676 = scalar_lea.vmem [#allocation1], 49
        %677 = vst [vmem:[%s676] ss:$2 sm:$0xff] %v614
        %v678 = vld.sshfl [vmem:[#allocation1] sm:$0xff pattern:$0x75316420]
        %v679 = vld.sshfl [vmem:[#allocation1 + $0x10] sm:$0xff pattern:$0x75316420]
        %v680 = vld.sshfl [vmem:[#allocation1 + $0x20] sm:$0xff pattern:$0x75316420]
        %v681 = vld.sshfl [vmem:[#allocation1 + $0x30] sm:$0xff pattern:$0x75316420]
        %682 = vst [vmem:[#allocation1] ss:$2 sm:$0xff] %v615
        %683 = vst [vmem:[%s664] ss:$2 sm:$0xff] %v616
        %684 = vst [vmem:[%s666] ss:$2 sm:$0xff] %v617
        %685 = vst [vmem:[%s668] ss:$2 sm:$0xff] %v618
        %686 = vst [vmem:[%s670] ss:$2 sm:$0xff] %v619
        %687 = vst [vmem:[%s672] ss:$2 sm:$0xff] %v620
        %688 = vst [vmem:[%s674] ss:$2 sm:$0xff] %v621
        %689 = vst [vmem:[%s676] ss:$2 sm:$0xff] %v622
        %v690 = vld.sshfl [vmem:[#allocation1] sm:$0xff pattern:$0x75316420]
        %v691 = vld.sshfl [vmem:[#allocation1 + $0x10] sm:$0xff pattern:$0x75316420]
        %v692 = vld.sshfl [vmem:[#allocation1 + $0x20] sm:$0xff pattern:$0x75316420]
        %v693 = vld.sshfl [vmem:[#allocation1 + $0x30] sm:$0xff pattern:$0x75316420]
        %v702 = vpack.c.bf16 %v679, %v678
        %v703 = vpack.c.bf16 %v681, %v680
        %v704 = vpack.c.bf16 %v691, %v690
        %v705 = vpack.c.bf16 %v693, %v692
        %v706 = vld [vmem:[%s2] sm:$0xff]
        %v707 = vld [vmem:[%s2 + $0x8] sm:$0xff]
        %v708 = vld [vmem:[%s2 + $0x10] sm:$0xff]
        %v709 = vld [vmem:[%s2 + $0x18] sm:$0xff]
        %v710 = vld [vmem:[%s2 + $0x20] sm:$0xff]
        %v711 = vld [vmem:[%s2 + $0x28] sm:$0xff]
        %v712 = vld [vmem:[%s2 + $0x30] sm:$0xff]
        %v713 = vld [vmem:[%s2 + $0x38] sm:$0xff]
        %730 = vst [vmem:[#allocation1] ss:$2 sm:$0xff] %v623
        %s731 = scalar_lea.vmem [#allocation1], 1
        %732 = vst [vmem:[%s731] ss:$2 sm:$0xff] %v624
        %s733 = scalar_lea.vmem [#allocation1], 16
        %734 = vst [vmem:[%s733] ss:$2 sm:$0xff] %v625
        %s735 = scalar_lea.vmem [#allocation1], 17
        %736 = vst [vmem:[%s735] ss:$2 sm:$0xff] %v626
        %s737 = scalar_lea.vmem [#allocation1], 32
        %738 = vst [vmem:[%s737] ss:$2 sm:$0xff] %v627
        %s739 = scalar_lea.vmem [#allocation1], 33
        %740 = vst [vmem:[%s739] ss:$2 sm:$0xff] %v628
        %s741 = scalar_lea.vmem [#allocation1], 48
        %742 = vst [vmem:[%s741] ss:$2 sm:$0xff] %v629
        %s743 = scalar_lea.vmem [#allocation1], 49
        %744 = vst [vmem:[%s743] ss:$2 sm:$0xff] %v630
        %v745 = vld.sshfl [vmem:[#allocation1] sm:$0xff pattern:$0x75316420]
        %v746 = vld.sshfl [vmem:[#allocation1 + $0x10] sm:$0xff pattern:$0x75316420]
        %v747 = vld.sshfl [vmem:[#allocation1 + $0x20] sm:$0xff pattern:$0x75316420]
        %v748 = vld.sshfl [vmem:[#allocation1 + $0x30] sm:$0xff pattern:$0x75316420]
        %749 = vst [vmem:[#allocation1] ss:$2 sm:$0xff] %v631
        %750 = vst [vmem:[%s731] ss:$2 sm:$0xff] %v632
        %751 = vst [vmem:[%s733] ss:$2 sm:$0xff] %v633
        %752 = vst [vmem:[%s735] ss:$2 sm:$0xff] %v634
        %753 = vst [vmem:[%s737] ss:$2 sm:$0xff] %v635
        %754 = vst [vmem:[%s739] ss:$2 sm:$0xff] %v636
        %755 = vst [vmem:[%s741] ss:$2 sm:$0xff] %v637
        %756 = vst [vmem:[%s743] ss:$2 sm:$0xff] %v638
        %v757 = vld.sshfl [vmem:[#allocation1] sm:$0xff pattern:$0x75316420]
        %v758 = vld.sshfl [vmem:[#allocation1 + $0x10] sm:$0xff pattern:$0x75316420]
        %v759 = vld.sshfl [vmem:[#allocation1 + $0x20] sm:$0xff pattern:$0x75316420]
        %v760 = vld.sshfl [vmem:[#allocation1 + $0x30] sm:$0xff pattern:$0x75316420]
        %v769 = vpack.c.bf16 %v746, %v745
        %v770 = vpack.c.bf16 %v748, %v747
        %v771 = vpack.c.bf16 %v758, %v757
        %v772 = vpack.c.bf16 %v760, %v759
        %v773 = vld [vmem:[%s3] sm:$0xff]
        %v774 = vld [vmem:[%s3 + $0x8] sm:$0xff]
        %v775 = vld [vmem:[%s3 + $0x10] sm:$0xff]
        %v776 = vld [vmem:[%s3 + $0x18] sm:$0xff]
        %v781 = vunpack.c.l.b16 %v773
        %v782 = vunpack.c.h.b16 %v773
        %v783 = vunpack.c.l.b16 %v774
        %v784 = vunpack.c.h.b16 %v774
        %v785 = vunpack.c.l.b16 %v775
        %v786 = vunpack.c.h.b16 %v775
        %v787 = vunpack.c.l.b16 %v776
        %v788 = vunpack.c.h.b16 %v776
        %v789 = vpack.c.b16 %v783, %v781
        %v790 = vpack.c.b16 %v784, %v782
        %v791 = vpack.c.b16 %v787, %v785
        %v792 = vpack.c.b16 %v788, %v786
        %vm797 = vcmask 261120
        %v799 = vsel %vm797, %v769, 0
        %v802 = vsel %vm797, %v770, 0
        %v805 = vsel %vm797, %v771, 0
        %v808 = vsel %vm797, %v772, 0
        %810 = vmatpush.bf16.msra.mxu0 0
        %811 = vmatpush.bf16.msra.mxu0 0
        %812 = vmatpush.bf16.msra.mxu0 0
        %813 = vmatpush.bf16.msra.mxu0 0
        %814 = vmatpush.bf16.msra.mxu0 0
        %815 = vmatpush.bf16.msra.mxu0 0
        %816 = vmatpush.bf16.msra.mxu0 %v791
        %817 = vmatpush.bf16.msra.mxu0 %v789
        %818 = vmatmul.bf16.gmra.mxu0 %v799
        %v819 = vpop.f32.mrf.mxu0
        %v820 = vadd.f32 0.0, %v819
        %v821 = vpop.f32.mrf.mxu0
        %v822 = vadd.f32 0.0, %v821
        %823 = vmatmul.bf16.gmra.mxu0 %v802
        %v824 = vpop.f32.mrf.mxu0
        %v825 = vadd.f32 0.0, %v824
        %v826 = vpop.f32.mrf.mxu0
        %v827 = vadd.f32 0.0, %v826
        %828 = vmatmul.bf16.gmra.mxu0 %v805
        %v829 = vpop.f32.mrf.mxu0
        %v830 = vadd.f32 0.0, %v829
        %v831 = vpop.f32.mrf.mxu0
        %v832 = vadd.f32 0.0, %v831
        %833 = vmatmul.bf16.gmra.mxu0 %v808
        %v834 = vpop.f32.mrf.mxu0
        %v835 = vadd.f32 0.0, %v834
        %v836 = vpop.f32.mrf.mxu0
        %v837 = vadd.f32 0.0, %v836
        %838 = vdwg.mxu0
        %839 = vmatpush.bf16.msra.mxu0 0
        %840 = vmatpush.bf16.msra.mxu0 0
        %841 = vmatpush.bf16.msra.mxu0 0
        %842 = vmatpush.bf16.msra.mxu0 0
        %843 = vmatpush.bf16.msra.mxu0 0
        %844 = vmatpush.bf16.msra.mxu0 0
        %845 = vmatpush.bf16.msra.mxu0 %v792
        %846 = vmatpush.bf16.msra.mxu0 %v790
        %847 = vmatmul.bf16.gmra.mxu0 %v799
        %v848 = vpop.f32.mrf.mxu0
        %v849 = vadd.f32 0.0, %v848
        %v850 = vpop.f32.mrf.mxu0
        %v851 = vadd.f32 0.0, %v850
        %852 = vmatmul.bf16.gmra.mxu0 %v802
        %v853 = vpop.f32.mrf.mxu0
        %v854 = vadd.f32 0.0, %v853
        %v855 = vpop.f32.mrf.mxu0
        %v856 = vadd.f32 0.0, %v855
        %857 = vmatmul.bf16.gmra.mxu0 %v805
        %v858 = vpop.f32.mrf.mxu0
        %v859 = vadd.f32 0.0, %v858
        %v860 = vpop.f32.mrf.mxu0
        %v861 = vadd.f32 0.0, %v860
        %862 = vmatmul.bf16.gmra.mxu0 %v808
        %v863 = vpop.f32.mrf.mxu0
        %v864 = vadd.f32 0.0, %v863
        %v865 = vpop.f32.mrf.mxu0
        %v866 = vadd.f32 0.0, %v865
        %867 = vdwg.mxu0
        %v876 = vunpack.c.l.b16 %v706
        %v877 = vunpack.c.h.b16 %v706
        %v878 = vunpack.c.l.b16 %v707
        %v879 = vunpack.c.h.b16 %v707
        %v880 = vunpack.c.l.b16 %v708
        %v881 = vunpack.c.h.b16 %v708
        %v882 = vunpack.c.l.b16 %v709
        %v883 = vunpack.c.h.b16 %v709
        %v884 = vunpack.c.l.b16 %v710
        %v885 = vunpack.c.h.b16 %v710
        %v886 = vunpack.c.l.b16 %v711
        %v887 = vunpack.c.h.b16 %v711
        %v888 = vunpack.c.l.b16 %v712
        %v889 = vunpack.c.h.b16 %v712
        %v890 = vunpack.c.l.b16 %v713
        %v891 = vunpack.c.h.b16 %v713
        %v892 = vpack.c.b16 %v878, %v876
        %v893 = vpack.c.b16 %v879, %v877
        %v894 = vpack.c.b16 %v882, %v880
        %v895 = vpack.c.b16 %v883, %v881
        %v896 = vpack.c.b16 %v886, %v884
        %v897 = vpack.c.b16 %v887, %v885
        %v898 = vpack.c.b16 %v890, %v888
        %v899 = vpack.c.b16 %v891, %v889
        %vm908 = vcmask 523264
        %v910 = vsel %vm908, %v702, 0
        %v913 = vsel %vm908, %v703, 0
        %v916 = vsel %vm908, %v704, 0
        %v919 = vsel %vm908, %v705, 0
        %921 = vmatpush.bf16.msra.mxu0 0
        %922 = vmatpush.bf16.msra.mxu0 0
        %923 = vmatpush.bf16.msra.mxu0 0
        %924 = vmatpush.bf16.msra.mxu0 0
        %925 = vmatpush.bf16.msra.mxu0 %v898
        %926 = vmatpush.bf16.msra.mxu0 %v896
        %927 = vmatpush.bf16.msra.mxu0 %v894
        %928 = vmatpush.bf16.msra.mxu0 %v892
        %929 = vmatmul.bf16.gmra.mxu0 %v910
        %v930 = vpop.f32.mrf.mxu0
        %v931 = vadd.f32 %v820, %v930
        %v932 = vpop.f32.mrf.mxu0
        %v933 = vadd.f32 %v822, %v932
        %934 = vmatmul.bf16.gmra.mxu0 %v913
        %v935 = vpop.f32.mrf.mxu0
        %v936 = vadd.f32 %v825, %v935
        %v937 = vpop.f32.mrf.mxu0
        %v938 = vadd.f32 %v827, %v937
        %939 = vmatmul.bf16.gmra.mxu0 %v916
        %v940 = vpop.f32.mrf.mxu0
        %v941 = vadd.f32 %v830, %v940
        %v942 = vpop.f32.mrf.mxu0
        %v943 = vadd.f32 %v832, %v942
        %944 = vmatmul.bf16.gmra.mxu0 %v919
        %v945 = vpop.f32.mrf.mxu0
        %v946 = vadd.f32 %v835, %v945
        %v947 = vpop.f32.mrf.mxu0
        %v948 = vadd.f32 %v837, %v947
        %949 = vdwg.mxu0
        %950 = vmatpush.bf16.msra.mxu0 0
        %951 = vmatpush.bf16.msra.mxu0 0
        %952 = vmatpush.bf16.msra.mxu0 0
        %953 = vmatpush.bf16.msra.mxu0 0
        %954 = vmatpush.bf16.msra.mxu0 %v899
        %955 = vmatpush.bf16.msra.mxu0 %v897
        %956 = vmatpush.bf16.msra.mxu0 %v895
        %957 = vmatpush.bf16.msra.mxu0 %v893
        %958 = vmatmul.bf16.gmra.mxu0 %v910
        %v959 = vpop.f32.mrf.mxu0
        %v960 = vadd.f32 %v849, %v959
        %v961 = vpop.f32.mrf.mxu0
        %v962 = vadd.f32 %v851, %v961
        %963 = vmatmul.bf16.gmra.mxu0 %v913
        %v964 = vpop.f32.mrf.mxu0
        %v965 = vadd.f32 %v854, %v964
        %v966 = vpop.f32.mrf.mxu0
        %v967 = vadd.f32 %v856, %v966
        %968 = vmatmul.bf16.gmra.mxu0 %v916
        %v969 = vpop.f32.mrf.mxu0
        %v970 = vadd.f32 %v859, %v969
        %v971 = vpop.f32.mrf.mxu0
        %v972 = vadd.f32 %v861, %v971
        %973 = vmatmul.bf16.gmra.mxu0 %v919
        %v974 = vpop.f32.mrf.mxu0
        %v975 = vadd.f32 %v864, %v974
        %v976 = vpop.f32.mrf.mxu0
        %v977 = vadd.f32 %v866, %v976
        %978 = vdwg.mxu0
        %v979 = vld [vmem:[%s4] sm:$0x3]
        %v981 = vperm.slane %v979, 0
        %v982 = vperm.slane %v979, 1
        %v985 = vadd.f32 %v931, %v981
        %v986 = vadd.f32 %v960, %v982
        %v987 = vadd.f32 %v933, %v981
        %v988 = vadd.f32 %v962, %v982
        %v989 = vadd.f32 %v936, %v981
        %v990 = vadd.f32 %v965, %v982
        %v991 = vadd.f32 %v938, %v981
        %v992 = vadd.f32 %v967, %v982
        %v993 = vadd.f32 %v941, %v981
        %v994 = vadd.f32 %v970, %v982
        %v995 = vadd.f32 %v943, %v981
        %v996 = vadd.f32 %v972, %v982
        %v997 = vadd.f32 %v946, %v981
        %v998 = vadd.f32 %v975, %v982
        %v999 = vadd.f32 %v948, %v981
        %v1000 = vadd.f32 %v977, %v982
        %v1001 = vpack.c.bf16 %v987, %v985
        %v1002 = vpack.c.bf16 %v991, %v989
        %v1003 = vpack.c.bf16 %v995, %v993
        %v1004 = vpack.c.bf16 %v999, %v997
        %v1005 = vpack.c.bf16 %v988, %v986
        %v1006 = vpack.c.bf16 %v992, %v990
        %v1007 = vpack.c.bf16 %v996, %v994
        %v1008 = vpack.c.bf16 %v1000, %v998
        %v1017 = vrot.slane %v985, 4
        %v1018 = vrot.slane %v987, 4
        %v1019 = vrot.slane %v989, 4
        %v1020 = vrot.slane %v991, 4
        %v1021 = vrot.slane %v993, 4
        %v1022 = vrot.slane %v995, 4
        %v1023 = vrot.slane %v997, 4
        %v1024 = vrot.slane %v999, 4
        %v1033 = vpack.c.bf16 %v985, %v985
        %v1034 = vpack.c.bf16 %v1017, %v1017
        %v1035 = vpack.c.bf16 %v987, %v987
        %v1036 = vpack.c.bf16 %v1018, %v1018
        %v1037 = vpack.c.bf16 %v989, %v989
        %v1038 = vpack.c.bf16 %v1019, %v1019
        %v1039 = vpack.c.bf16 %v991, %v991
        %v1040 = vpack.c.bf16 %v1020, %v1020
        %v1041 = vpack.c.bf16 %v993, %v993
        %v1042 = vpack.c.bf16 %v1021, %v1021
        %v1043 = vpack.c.bf16 %v995, %v995
        %v1044 = vpack.c.bf16 %v1022, %v1022
        %v1045 = vpack.c.bf16 %v997, %v997
        %v1046 = vpack.c.bf16 %v1023, %v1023
        %v1047 = vpack.c.bf16 %v999, %v999
        %v1048 = vpack.c.bf16 %v1024, %v1024
        %v1049 = vld [vmem:[%s6] sm:$0xf]
        %v1050 = vld [vmem:[%s6 + $0x4] sm:$0xf]
        %v1051 = vld [vmem:[%s6 + $0x8] sm:$0xf]
        %v1052 = vld [vmem:[%s6 + $0xc] sm:$0xf]
        %v1053 = vld [vmem:[%s6 + $0x10] sm:$0xf]
        %v1054 = vld [vmem:[%s6 + $0x14] sm:$0xf]
        %v1055 = vld [vmem:[%s6 + $0x18] sm:$0xf]
        %v1056 = vld [vmem:[%s6 + $0x1c] sm:$0xf]
        %v1057 = vld [vmem:[%s6 + $0x20] sm:$0xf]
        %v1058 = vld [vmem:[%s6 + $0x24] sm:$0xf]
        %v1059 = vld [vmem:[%s6 + $0x28] sm:$0xf]
        %v1060 = vld [vmem:[%s6 + $0x2c] sm:$0xf]
        %v1061 = vld [vmem:[%s6 + $0x30] sm:$0xf]
        %v1062 = vld [vmem:[%s6 + $0x34] sm:$0xf]
        %v1063 = vld [vmem:[%s6 + $0x38] sm:$0xf]
        %v1064 = vld [vmem:[%s6 + $0x3c] sm:$0xf]
        %v1065 = vld [vmem:[%s6 + $0x40] sm:$0xf]
        %v1066 = vld [vmem:[%s6 + $0x44] sm:$0xf]
        %v1067 = vld [vmem:[%s6 + $0x48] sm:$0xf]
        %v1068 = vld [vmem:[%s6 + $0x4c] sm:$0xf]
        %v1069 = vld [vmem:[%s6 + $0x50] sm:$0xf]
        %v1070 = vld [vmem:[%s6 + $0x54] sm:$0xf]
        %v1071 = vld [vmem:[%s6 + $0x58] sm:$0xf]
        %v1072 = vld [vmem:[%s6 + $0x5c] sm:$0xf]
        %v1073 = vld [vmem:[%s6 + $0x60] sm:$0xf]
        %v1074 = vld [vmem:[%s6 + $0x64] sm:$0xf]
        %v1075 = vld [vmem:[%s6 + $0x68] sm:$0xf]
        %v1076 = vld [vmem:[%s6 + $0x6c] sm:$0xf]
        %v1077 = vld [vmem:[%s6 + $0x70] sm:$0xf]
        %v1078 = vld [vmem:[%s6 + $0x74] sm:$0xf]
        %v1079 = vld [vmem:[%s6 + $0x78] sm:$0xf]
        %v1080 = vld [vmem:[%s6 + $0x7c] sm:$0xf]
        %v1081 = vld [vmem:[%s6 + $0x80] sm:$0xf]
        %v1082 = vld [vmem:[%s6 + $0x84] sm:$0xf]
        %v1083 = vld [vmem:[%s6 + $0x88] sm:$0xf]
        %v1084 = vld [vmem:[%s6 + $0x8c] sm:$0xf]
        %v1085 = vld [vmem:[%s6 + $0x90] sm:$0xf]
        %v1086 = vld [vmem:[%s6 + $0x94] sm:$0xf]
        %v1087 = vld [vmem:[%s6 + $0x98] sm:$0xf]
        %v1088 = vld [vmem:[%s6 + $0x9c] sm:$0xf]
        %v1089 = vld [vmem:[%s6 + $0xa0] sm:$0xf]
        %v1090 = vld [vmem:[%s6 + $0xa4] sm:$0xf]
        %v1091 = vld [vmem:[%s6 + $0xa8] sm:$0xf]
        %v1092 = vld [vmem:[%s6 + $0xac] sm:$0xf]
        %v1093 = vld [vmem:[%s6 + $0xb0] sm:$0xf]
        %v1094 = vld [vmem:[%s6 + $0xb4] sm:$0xf]
        %v1095 = vld [vmem:[%s6 + $0xb8] sm:$0xf]
        %v1096 = vld [vmem:[%s6 + $0xbc] sm:$0xf]
        %v1097 = vld [vmem:[%s6 + $0xc0] sm:$0xf]
        %v1098 = vld [vmem:[%s6 + $0xc4] sm:$0xf]
        %v1099 = vld [vmem:[%s6 + $0xc8] sm:$0xf]
        %v1100 = vld [vmem:[%s6 + $0xcc] sm:$0xf]
        %v1101 = vld [vmem:[%s6 + $0xd0] sm:$0xf]
        %v1102 = vld [vmem:[%s6 + $0xd4] sm:$0xf]
        %v1103 = vld [vmem:[%s6 + $0xd8] sm:$0xf]
        %v1104 = vld [vmem:[%s6 + $0xdc] sm:$0xf]
        %v1105 = vld [vmem:[%s6 + $0xe0] sm:$0xf]
        %v1106 = vld [vmem:[%s6 + $0xe4] sm:$0xf]
        %v1107 = vld [vmem:[%s6 + $0xe8] sm:$0xf]
        %v1108 = vld [vmem:[%s6 + $0xec] sm:$0xf]
        %v1109 = vld [vmem:[%s6 + $0xf0] sm:$0xf]
        %v1110 = vld [vmem:[%s6 + $0xf4] sm:$0xf]
        %v1111 = vld [vmem:[%s6 + $0xf8] sm:$0xf]
        %v1112 = vld [vmem:[%s6 + $0xfc] sm:$0xf]
        %v1113 = vld [vmem:[%s6 + $0x100] sm:$0xf]
        %v1114 = vld [vmem:[%s6 + $0x104] sm:$0xf]
        %v1115 = vld [vmem:[%s6 + $0x108] sm:$0xf]
        %v1116 = vld [vmem:[%s6 + $0x10c] sm:$0xf]
        %v1117 = vld [vmem:[%s6 + $0x110] sm:$0xf]
        %v1118 = vld [vmem:[%s6 + $0x114] sm:$0xf]
        %v1119 = vld [vmem:[%s6 + $0x118] sm:$0xf]
        %v1120 = vld [vmem:[%s6 + $0x11c] sm:$0xf]
        %v1121 = vld [vmem:[%s6 + $0x120] sm:$0xf]
        %v1122 = vld [vmem:[%s6 + $0x124] sm:$0xf]
        %v1123 = vld [vmem:[%s6 + $0x128] sm:$0xf]
        %v1124 = vld [vmem:[%s6 + $0x12c] sm:$0xf]
        %v1125 = vld [vmem:[%s6 + $0x130] sm:$0xf]
        %v1126 = vld [vmem:[%s6 + $0x134] sm:$0xf]
        %v1127 = vld [vmem:[%s6 + $0x138] sm:$0xf]
        %v1128 = vld [vmem:[%s6 + $0x13c] sm:$0xf]
        %v1129 = vld [vmem:[%s6 + $0x140] sm:$0xf]
        %v1130 = vld [vmem:[%s6 + $0x144] sm:$0xf]
        %v1131 = vld [vmem:[%s6 + $0x148] sm:$0xf]
        %v1132 = vld [vmem:[%s6 + $0x14c] sm:$0xf]
        %v1133 = vld [vmem:[%s6 + $0x150] sm:$0xf]
        %v1134 = vld [vmem:[%s6 + $0x154] sm:$0xf]
        %v1135 = vld [vmem:[%s6 + $0x158] sm:$0xf]
        %v1136 = vld [vmem:[%s6 + $0x15c] sm:$0xf]
        %v1137 = vld [vmem:[%s6 + $0x160] sm:$0xf]
        %v1138 = vld [vmem:[%s6 + $0x164] sm:$0xf]
        %v1139 = vld [vmem:[%s6 + $0x168] sm:$0xf]
        %v1140 = vld [vmem:[%s6 + $0x16c] sm:$0xf]
        %v1141 = vld [vmem:[%s6 + $0x170] sm:$0xf]
        %v1142 = vld [vmem:[%s6 + $0x174] sm:$0xf]
        %v1143 = vld [vmem:[%s6 + $0x178] sm:$0xf]
        %v1144 = vld [vmem:[%s6 + $0x17c] sm:$0xf]
        %v1145 = vld [vmem:[%s6 + $0x180] sm:$0xf]
        %v1146 = vld [vmem:[%s6 + $0x184] sm:$0xf]
        %v1147 = vld [vmem:[%s6 + $0x188] sm:$0xf]
        %v1148 = vld [vmem:[%s6 + $0x18c] sm:$0xf]
        %v1149 = vld [vmem:[%s6 + $0x190] sm:$0xf]
        %v1150 = vld [vmem:[%s6 + $0x194] sm:$0xf]
        %v1151 = vld [vmem:[%s6 + $0x198] sm:$0xf]
        %v1152 = vld [vmem:[%s6 + $0x19c] sm:$0xf]
        %v1153 = vld [vmem:[%s6 + $0x1a0] sm:$0xf]
        %v1154 = vld [vmem:[%s6 + $0x1a4] sm:$0xf]
        %v1155 = vld [vmem:[%s6 + $0x1a8] sm:$0xf]
        %v1156 = vld [vmem:[%s6 + $0x1ac] sm:$0xf]
        %v1157 = vld [vmem:[%s6 + $0x1b0] sm:$0xf]
        %v1158 = vld [vmem:[%s6 + $0x1b4] sm:$0xf]
        %v1159 = vld [vmem:[%s6 + $0x1b8] sm:$0xf]
        %v1160 = vld [vmem:[%s6 + $0x1bc] sm:$0xf]
        %v1161 = vld [vmem:[%s6 + $0x1c0] sm:$0xf]
        %v1162 = vld [vmem:[%s6 + $0x1c4] sm:$0xf]
        %v1163 = vld [vmem:[%s6 + $0x1c8] sm:$0xf]
        %v1164 = vld [vmem:[%s6 + $0x1cc] sm:$0xf]
        %v1165 = vld [vmem:[%s6 + $0x1d0] sm:$0xf]
        %v1166 = vld [vmem:[%s6 + $0x1d4] sm:$0xf]
        %v1167 = vld [vmem:[%s6 + $0x1d8] sm:$0xf]
        %v1168 = vld [vmem:[%s6 + $0x1dc] sm:$0xf]
        %v1169 = vld [vmem:[%s6 + $0x1e0] sm:$0xf]
        %v1170 = vld [vmem:[%s6 + $0x1e4] sm:$0xf]
        %v1171 = vld [vmem:[%s6 + $0x1e8] sm:$0xf]
        %v1172 = vld [vmem:[%s6 + $0x1ec] sm:$0xf]
        %v1173 = vld [vmem:[%s6 + $0x1f0] sm:$0xf]
        %v1174 = vld [vmem:[%s6 + $0x1f4] sm:$0xf]
        %v1175 = vld [vmem:[%s6 + $0x1f8] sm:$0xf]
        %v1176 = vld [vmem:[%s6 + $0x1fc] sm:$0xf]
        %v1177 = vld [vmem:[%s7] sm:$0xff]
        %v1178 = vld [vmem:[%s7 + $0x8] sm:$0xff]
        %v1179 = vld [vmem:[%s7 + $0x10] sm:$0xff]
        %v1180 = vld [vmem:[%s7 + $0x18] sm:$0xff]
        %v1181 = vld [vmem:[%s7 + $0x20] sm:$0xff]
        %v1182 = vld [vmem:[%s7 + $0x28] sm:$0xff]
        %v1183 = vld [vmem:[%s7 + $0x30] sm:$0xff]
        %v1184 = vld [vmem:[%s7 + $0x38] sm:$0xff]
        %v1185 = vld [vmem:[%s7 + $0x40] sm:$0xff]
        %v1186 = vld [vmem:[%s7 + $0x48] sm:$0xff]
        %v1187 = vld [vmem:[%s7 + $0x50] sm:$0xff]
        %v1188 = vld [vmem:[%s7 + $0x58] sm:$0xff]
        %v1189 = vld [vmem:[%s7 + $0x60] sm:$0xff]
        %v1190 = vld [vmem:[%s7 + $0x68] sm:$0xff]
        %v1191 = vld [vmem:[%s7 + $0x70] sm:$0xff]
        %v1192 = vld [vmem:[%s7 + $0x78] sm:$0xff]
        %v1193 = vld [vmem:[%s7 + $0x80] sm:$0xff]
        %v1194 = vld [vmem:[%s7 + $0x88] sm:$0xff]
        %v1195 = vld [vmem:[%s7 + $0x90] sm:$0xff]
        %v1196 = vld [vmem:[%s7 + $0x98] sm:$0xff]
        %v1197 = vld [vmem:[%s7 + $0xa0] sm:$0xff]
        %v1198 = vld [vmem:[%s7 + $0xa8] sm:$0xff]
        %v1199 = vld [vmem:[%s7 + $0xb0] sm:$0xff]
        %v1200 = vld [vmem:[%s7 + $0xb8] sm:$0xff]
        %v1201 = vld [vmem:[%s7 + $0xc0] sm:$0xff]
        %v1202 = vld [vmem:[%s7 + $0xc8] sm:$0xff]
        %v1203 = vld [vmem:[%s7 + $0xd0] sm:$0xff]
        %v1204 = vld [vmem:[%s7 + $0xd8] sm:$0xff]
        %v1205 = vld [vmem:[%s7 + $0xe0] sm:$0xff]
        %v1206 = vld [vmem:[%s7 + $0xe8] sm:$0xff]
        %v1207 = vld [vmem:[%s7 + $0xf0] sm:$0xff]
        %v1208 = vld [vmem:[%s7 + $0xf8] sm:$0xff]
        %v1209 = vld [vmem:[%s7 + $0x100] sm:$0xff]
        %v1210 = vld [vmem:[%s7 + $0x108] sm:$0xff]
        %v1211 = vld [vmem:[%s7 + $0x110] sm:$0xff]
        %v1212 = vld [vmem:[%s7 + $0x118] sm:$0xff]
        %v1213 = vld [vmem:[%s7 + $0x120] sm:$0xff]
        %v1214 = vld [vmem:[%s7 + $0x128] sm:$0xff]
        %v1215 = vld [vmem:[%s7 + $0x130] sm:$0xff]
        %v1216 = vld [vmem:[%s7 + $0x138] sm:$0xff]
        %v1217 = vld [vmem:[%s7 + $0x140] sm:$0xff]
        %v1218 = vld [vmem:[%s7 + $0x148] sm:$0xff]
        %v1219 = vld [vmem:[%s7 + $0x150] sm:$0xff]
        %v1220 = vld [vmem:[%s7 + $0x158] sm:$0xff]
        %v1221 = vld [vmem:[%s7 + $0x160] sm:$0xff]
        %v1222 = vld [vmem:[%s7 + $0x168] sm:$0xff]
        %v1223 = vld [vmem:[%s7 + $0x170] sm:$0xff]
        %v1224 = vld [vmem:[%s7 + $0x178] sm:$0xff]
        %v1225 = vld [vmem:[%s7 + $0x180] sm:$0xff]
        %v1226 = vld [vmem:[%s7 + $0x188] sm:$0xff]
        %v1227 = vld [vmem:[%s7 + $0x190] sm:$0xff]
        %v1228 = vld [vmem:[%s7 + $0x198] sm:$0xff]
        %v1229 = vld [vmem:[%s7 + $0x1a0] sm:$0xff]
        %v1230 = vld [vmem:[%s7 + $0x1a8] sm:$0xff]
        %v1231 = vld [vmem:[%s7 + $0x1b0] sm:$0xff]
        %v1232 = vld [vmem:[%s7 + $0x1b8] sm:$0xff]
        %v1233 = vld [vmem:[%s7 + $0x1c0] sm:$0xff]
        %v1234 = vld [vmem:[%s7 + $0x1c8] sm:$0xff]
        %v1235 = vld [vmem:[%s7 + $0x1d0] sm:$0xff]
        %v1236 = vld [vmem:[%s7 + $0x1d8] sm:$0xff]
        %v1237 = vld [vmem:[%s7 + $0x1e0] sm:$0xff]
        %v1238 = vld [vmem:[%s7 + $0x1e8] sm:$0xff]
        %v1239 = vld [vmem:[%s7 + $0x1f0] sm:$0xff]
        %v1240 = vld [vmem:[%s7 + $0x1f8] sm:$0xff]
        %v1241 = vld [vmem:[%s7 + $0x200] sm:$0xff]
        %v1242 = vld [vmem:[%s7 + $0x208] sm:$0xff]
        %v1243 = vld [vmem:[%s7 + $0x210] sm:$0xff]
        %v1244 = vld [vmem:[%s7 + $0x218] sm:$0xff]
        %v1245 = vld [vmem:[%s7 + $0x220] sm:$0xff]
        %v1246 = vld [vmem:[%s7 + $0x228] sm:$0xff]
        %v1247 = vld [vmem:[%s7 + $0x230] sm:$0xff]
        %v1248 = vld [vmem:[%s7 + $0x238] sm:$0xff]
        %v1249 = vld [vmem:[%s7 + $0x240] sm:$0xff]
        %v1250 = vld [vmem:[%s7 + $0x248] sm:$0xff]
        %v1251 = vld [vmem:[%s7 + $0x250] sm:$0xff]
        %v1252 = vld [vmem:[%s7 + $0x258] sm:$0xff]
        %v1253 = vld [vmem:[%s7 + $0x260] sm:$0xff]
        %v1254 = vld [vmem:[%s7 + $0x268] sm:$0xff]
        %v1255 = vld [vmem:[%s7 + $0x270] sm:$0xff]
        %v1256 = vld [vmem:[%s7 + $0x278] sm:$0xff]
        %v1257 = vld [vmem:[%s7 + $0x280] sm:$0xff]
        %v1258 = vld [vmem:[%s7 + $0x288] sm:$0xff]
        %v1259 = vld [vmem:[%s7 + $0x290] sm:$0xff]
        %v1260 = vld [vmem:[%s7 + $0x298] sm:$0xff]
        %v1261 = vld [vmem:[%s7 + $0x2a0] sm:$0xff]
        %v1262 = vld [vmem:[%s7 + $0x2a8] sm:$0xff]
        %v1263 = vld [vmem:[%s7 + $0x2b0] sm:$0xff]
        %v1264 = vld [vmem:[%s7 + $0x2b8] sm:$0xff]
        %v1265 = vld [vmem:[%s7 + $0x2c0] sm:$0xff]
        %v1266 = vld [vmem:[%s7 + $0x2c8] sm:$0xff]
        %v1267 = vld [vmem:[%s7 + $0x2d0] sm:$0xff]
        %v1268 = vld [vmem:[%s7 + $0x2d8] sm:$0xff]
        %v1269 = vld [vmem:[%s7 + $0x2e0] sm:$0xff]
        %v1270 = vld [vmem:[%s7 + $0x2e8] sm:$0xff]
        %v1271 = vld [vmem:[%s7 + $0x2f0] sm:$0xff]
        %v1272 = vld [vmem:[%s7 + $0x2f8] sm:$0xff]
        %v1273 = vld [vmem:[%s7 + $0x300] sm:$0xff]
        %v1274 = vld [vmem:[%s7 + $0x308] sm:$0xff]
        %v1275 = vld [vmem:[%s7 + $0x310] sm:$0xff]
        %v1276 = vld [vmem:[%s7 + $0x318] sm:$0xff]
        %v1277 = vld [vmem:[%s7 + $0x320] sm:$0xff]
        %v1278 = vld [vmem:[%s7 + $0x328] sm:$0xff]
        %v1279 = vld [vmem:[%s7 + $0x330] sm:$0xff]
        %v1280 = vld [vmem:[%s7 + $0x338] sm:$0xff]
        %v1281 = vld [vmem:[%s7 + $0x340] sm:$0xff]
        %v1282 = vld [vmem:[%s7 + $0x348] sm:$0xff]
        %v1283 = vld [vmem:[%s7 + $0x350] sm:$0xff]
        %v1284 = vld [vmem:[%s7 + $0x358] sm:$0xff]
        %v1285 = vld [vmem:[%s7 + $0x360] sm:$0xff]
        %v1286 = vld [vmem:[%s7 + $0x368] sm:$0xff]
        %v1287 = vld [vmem:[%s7 + $0x370] sm:$0xff]
        %v1288 = vld [vmem:[%s7 + $0x378] sm:$0xff]
        %v1289 = vld [vmem:[%s7 + $0x380] sm:$0xff]
        %v1290 = vld [vmem:[%s7 + $0x388] sm:$0xff]
        %v1291 = vld [vmem:[%s7 + $0x390] sm:$0xff]
        %v1292 = vld [vmem:[%s7 + $0x398] sm:$0xff]
        %v1293 = vld [vmem:[%s7 + $0x3a0] sm:$0xff]
        %v1294 = vld [vmem:[%s7 + $0x3a8] sm:$0xff]
        %v1295 = vld [vmem:[%s7 + $0x3b0] sm:$0xff]
        %v1296 = vld [vmem:[%s7 + $0x3b8] sm:$0xff]
        %v1297 = vld [vmem:[%s7 + $0x3c0] sm:$0xff]
        %v1298 = vld [vmem:[%s7 + $0x3c8] sm:$0xff]
        %v1299 = vld [vmem:[%s7 + $0x3d0] sm:$0xff]
        %v1300 = vld [vmem:[%s7 + $0x3d8] sm:$0xff]
        %v1301 = vld [vmem:[%s7 + $0x3e0] sm:$0xff]
        %v1302 = vld [vmem:[%s7 + $0x3e8] sm:$0xff]
        %v1303 = vld [vmem:[%s7 + $0x3f0] sm:$0xff]
        %v1304 = vld [vmem:[%s7 + $0x3f8] sm:$0xff]
        %1305 = vrot.lane.b32.xlu0 %v985, 64
        %v1306 = vpop.permute.xlu0 %1305
        %1307 = vrot.lane.b32.xlu0 %v987, 64
        %v1308 = vpop.permute.xlu0 %1307
        %1309 = vrot.lane.b32.xlu0 %v989, 64
        %v1310 = vpop.permute.xlu0 %1309
        %1311 = vrot.lane.b32.xlu0 %v991, 64
        %v1312 = vpop.permute.xlu0 %1311
        %1313 = vrot.lane.b32.xlu0 %v993, 64
        %v1314 = vpop.permute.xlu0 %1313
        %1315 = vrot.lane.b32.xlu0 %v995, 64
        %v1316 = vpop.permute.xlu0 %1315
        %1317 = vrot.lane.b32.xlu0 %v997, 64
        %v1318 = vpop.permute.xlu0 %1317
        %1319 = vrot.lane.b32.xlu0 %v999, 64
        %v1320 = vpop.permute.xlu0 %1319
        %v1329 = vmul.f32 %v1177, %v1306
        %v1330 = vmul.f32 %v1178, %v1308
        %v1331 = vmul.f32 %v1179, %v1310
        %v1332 = vmul.f32 %v1180, %v1312
        %v1333 = vmul.f32 %v1181, %v1314
        %v1334 = vmul.f32 %v1182, %v1316
        %v1335 = vmul.f32 %v1183, %v1318
        %v1336 = vmul.f32 %v1184, %v1320
        %v1337 = vmul.f32 %v1185, %v1306
        %v1338 = vmul.f32 %v1186, %v1308
        %v1339 = vmul.f32 %v1187, %v1310
        %v1340 = vmul.f32 %v1188, %v1312
        %v1341 = vmul.f32 %v1189, %v1314
        %v1342 = vmul.f32 %v1190, %v1316
        %v1343 = vmul.f32 %v1191, %v1318
        %v1344 = vmul.f32 %v1192, %v1320
        %v1345 = vmul.f32 %v1193, %v1306
        %v1346 = vmul.f32 %v1194, %v1308
        %v1347 = vmul.f32 %v1195, %v1310
        %v1348 = vmul.f32 %v1196, %v1312
        %v1349 = vmul.f32 %v1197, %v1314
        %v1350 = vmul.f32 %v1198, %v1316
        %v1351 = vmul.f32 %v1199, %v1318
        %v1352 = vmul.f32 %v1200, %v1320
        %v1353 = vmul.f32 %v1201, %v1306
        %v1354 = vmul.f32 %v1202, %v1308
        %v1355 = vmul.f32 %v1203, %v1310
        %v1356 = vmul.f32 %v1204, %v1312
        %v1357 = vmul.f32 %v1205, %v1314
        %v1358 = vmul.f32 %v1206, %v1316
        %v1359 = vmul.f32 %v1207, %v1318
        %v1360 = vmul.f32 %v1208, %v1320
        %v1361 = vmul.f32 %v1209, %v1306
        %v1362 = vmul.f32 %v1210, %v1308
        %v1363 = vmul.f32 %v1211, %v1310
        %v1364 = vmul.f32 %v1212, %v1312
        %v1365 = vmul.f32 %v1213, %v1314
        %v1366 = vmul.f32 %v1214, %v1316
        %v1367 = vmul.f32 %v1215, %v1318
        %v1368 = vmul.f32 %v1216, %v1320
        %v1369 = vmul.f32 %v1217, %v1306
        %v1370 = vmul.f32 %v1218, %v1308
        %v1371 = vmul.f32 %v1219, %v1310
        %v1372 = vmul.f32 %v1220, %v1312
        %v1373 = vmul.f32 %v1221, %v1314
        %v1374 = vmul.f32 %v1222, %v1316
        %v1375 = vmul.f32 %v1223, %v1318
        %v1376 = vmul.f32 %v1224, %v1320
        %v1377 = vmul.f32 %v1225, %v1306
        %v1378 = vmul.f32 %v1226, %v1308
        %v1379 = vmul.f32 %v1227, %v1310
        %v1380 = vmul.f32 %v1228, %v1312
        %v1381 = vmul.f32 %v1229, %v1314
        %v1382 = vmul.f32 %v1230, %v1316
        %v1383 = vmul.f32 %v1231, %v1318
        %v1384 = vmul.f32 %v1232, %v1320
        %v1385 = vmul.f32 %v1233, %v1306
        %v1386 = vmul.f32 %v1234, %v1308
        %v1387 = vmul.f32 %v1235, %v1310
        %v1388 = vmul.f32 %v1236, %v1312
        %v1389 = vmul.f32 %v1237, %v1314
        %v1390 = vmul.f32 %v1238, %v1316
        %v1391 = vmul.f32 %v1239, %v1318
        %v1392 = vmul.f32 %v1240, %v1320
        %v1393 = vmul.f32 %v1241, %v1306
        %v1394 = vmul.f32 %v1242, %v1308
        %v1395 = vmul.f32 %v1243, %v1310
        %v1396 = vmul.f32 %v1244, %v1312
        %v1397 = vmul.f32 %v1245, %v1314
        %v1398 = vmul.f32 %v1246, %v1316
        %v1399 = vmul.f32 %v1247, %v1318
        %v1400 = vmul.f32 %v1248, %v1320
        %v1401 = vmul.f32 %v1249, %v1306
        %v1402 = vmul.f32 %v1250, %v1308
        %v1403 = vmul.f32 %v1251, %v1310
        %v1404 = vmul.f32 %v1252, %v1312
        %v1405 = vmul.f32 %v1253, %v1314
        %v1406 = vmul.f32 %v1254, %v1316
        %v1407 = vmul.f32 %v1255, %v1318
        %v1408 = vmul.f32 %v1256, %v1320
        %v1409 = vmul.f32 %v1257, %v1306
        %v1410 = vmul.f32 %v1258, %v1308
        %v1411 = vmul.f32 %v1259, %v1310
        %v1412 = vmul.f32 %v1260, %v1312
        %v1413 = vmul.f32 %v1261, %v1314
        %v1414 = vmul.f32 %v1262, %v1316
        %v1415 = vmul.f32 %v1263, %v1318
        %v1416 = vmul.f32 %v1264, %v1320
        %v1417 = vmul.f32 %v1265, %v1306
        %v1418 = vmul.f32 %v1266, %v1308
        %v1419 = vmul.f32 %v1267, %v1310
        %v1420 = vmul.f32 %v1268, %v1312
        %v1421 = vmul.f32 %v1269, %v1314
        %v1422 = vmul.f32 %v1270, %v1316
        %v1423 = vmul.f32 %v1271, %v1318
        %v1424 = vmul.f32 %v1272, %v1320
        %v1425 = vmul.f32 %v1273, %v1306
        %v1426 = vmul.f32 %v1274, %v1308
        %v1427 = vmul.f32 %v1275, %v1310
        %v1428 = vmul.f32 %v1276, %v1312
        %v1429 = vmul.f32 %v1277, %v1314
        %v1430 = vmul.f32 %v1278, %v1316
        %v1431 = vmul.f32 %v1279, %v1318
        %v1432 = vmul.f32 %v1280, %v1320
        %v1433 = vmul.f32 %v1281, %v1306
        %v1434 = vmul.f32 %v1282, %v1308
        %v1435 = vmul.f32 %v1283, %v1310
        %v1436 = vmul.f32 %v1284, %v1312
        %v1437 = vmul.f32 %v1285, %v1314
        %v1438 = vmul.f32 %v1286, %v1316
        %v1439 = vmul.f32 %v1287, %v1318
        %v1440 = vmul.f32 %v1288, %v1320
        %v1441 = vmul.f32 %v1289, %v1306
        %v1442 = vmul.f32 %v1290, %v1308
        %v1443 = vmul.f32 %v1291, %v1310
        %v1444 = vmul.f32 %v1292, %v1312
        %v1445 = vmul.f32 %v1293, %v1314
        %v1446 = vmul.f32 %v1294, %v1316
        %v1447 = vmul.f32 %v1295, %v1318
        %v1448 = vmul.f32 %v1296, %v1320
        %v1449 = vmul.f32 %v1297, %v1306
        %v1450 = vmul.f32 %v1298, %v1308
        %v1451 = vmul.f32 %v1299, %v1310
        %v1452 = vmul.f32 %v1300, %v1312
        %v1453 = vmul.f32 %v1301, %v1314
        %v1454 = vmul.f32 %v1302, %v1316
        %v1455 = vmul.f32 %v1303, %v1318
        %v1456 = vmul.f32 %v1304, %v1320
        %v1457 = vsel %vm797, %v1329, 0.0
        %1458 = vadd.xlane.f32.xlu0 %v1457
        %v1459 = vpop.xlane.xlu0 %1458
        %v1460 = vsel %vm797, %v1330, 0.0
        %1461 = vadd.xlane.f32.xlu0 %v1460
        %v1462 = vpop.xlane.xlu0 %1461
        %v1463 = vsel %vm797, %v1331, 0.0
        %1464 = vadd.xlane.f32.xlu0 %v1463
        %v1465 = vpop.xlane.xlu0 %1464
        %v1466 = vsel %vm797, %v1332, 0.0
        %1467 = vadd.xlane.f32.xlu0 %v1466
        %v1468 = vpop.xlane.xlu0 %1467
        %v1469 = vsel %vm797, %v1333, 0.0
        %1470 = vadd.xlane.f32.xlu0 %v1469
        %v1471 = vpop.xlane.xlu0 %1470
        %v1472 = vsel %vm797, %v1334, 0.0
        %1473 = vadd.xlane.f32.xlu0 %v1472
        %v1474 = vpop.xlane.xlu0 %1473
        %v1475 = vsel %vm797, %v1335, 0.0
        %1476 = vadd.xlane.f32.xlu0 %v1475
        %v1477 = vpop.xlane.xlu0 %1476
        %v1478 = vsel %vm797, %v1336, 0.0
        %1479 = vadd.xlane.f32.xlu0 %v1478
        %v1480 = vpop.xlane.xlu0 %1479
        %v1481 = vsel %vm797, %v1337, 0.0
        %1482 = vadd.xlane.f32.xlu0 %v1481
        %v1483 = vpop.xlane.xlu0 %1482
        %v1484 = vsel %vm797, %v1338, 0.0
        %1485 = vadd.xlane.f32.xlu0 %v1484
        %v1486 = vpop.xlane.xlu0 %1485
        %v1487 = vsel %vm797, %v1339, 0.0
        %1488 = vadd.xlane.f32.xlu0 %v1487
        %v1489 = vpop.xlane.xlu0 %1488
        %v1490 = vsel %vm797, %v1340, 0.0
        %1491 = vadd.xlane.f32.xlu0 %v1490
        %v1492 = vpop.xlane.xlu0 %1491
        %v1493 = vsel %vm797, %v1341, 0.0
        %1494 = vadd.xlane.f32.xlu0 %v1493
        %v1495 = vpop.xlane.xlu0 %1494
        %v1496 = vsel %vm797, %v1342, 0.0
        %1497 = vadd.xlane.f32.xlu0 %v1496
        %v1498 = vpop.xlane.xlu0 %1497
        %v1499 = vsel %vm797, %v1343, 0.0
        %1500 = vadd.xlane.f32.xlu0 %v1499
        %v1501 = vpop.xlane.xlu0 %1500
        %v1502 = vsel %vm797, %v1344, 0.0
        %1503 = vadd.xlane.f32.xlu0 %v1502
        %v1504 = vpop.xlane.xlu0 %1503
        %v1505 = vsel %vm797, %v1345, 0.0
        %1506 = vadd.xlane.f32.xlu0 %v1505
        %v1507 = vpop.xlane.xlu0 %1506
        %v1508 = vsel %vm797, %v1346, 0.0
        %1509 = vadd.xlane.f32.xlu0 %v1508
        %v1510 = vpop.xlane.xlu0 %1509
        %v1511 = vsel %vm797, %v1347, 0.0
        %1512 = vadd.xlane.f32.xlu0 %v1511
        %v1513 = vpop.xlane.xlu0 %1512
        %v1514 = vsel %vm797, %v1348, 0.0
        %1515 = vadd.xlane.f32.xlu0 %v1514
        %v1516 = vpop.xlane.xlu0 %1515
        %v1517 = vsel %vm797, %v1349, 0.0
        %1518 = vadd.xlane.f32.xlu0 %v1517
        %v1519 = vpop.xlane.xlu0 %1518
        %v1520 = vsel %vm797, %v1350, 0.0
        %1521 = vadd.xlane.f32.xlu0 %v1520
        %v1522 = vpop.xlane.xlu0 %1521
        %v1523 = vsel %vm797, %v1351, 0.0
        %1524 = vadd.xlane.f32.xlu0 %v1523
        %v1525 = vpop.xlane.xlu0 %1524
        %v1526 = vsel %vm797, %v1352, 0.0
        %1527 = vadd.xlane.f32.xlu0 %v1526
        %v1528 = vpop.xlane.xlu0 %1527
        %v1529 = vsel %vm797, %v1353, 0.0
        %1530 = vadd.xlane.f32.xlu0 %v1529
        %v1531 = vpop.xlane.xlu0 %1530
        %v1532 = vsel %vm797, %v1354, 0.0
        %1533 = vadd.xlane.f32.xlu0 %v1532
        %v1534 = vpop.xlane.xlu0 %1533
        %v1535 = vsel %vm797, %v1355, 0.0
        %1536 = vadd.xlane.f32.xlu0 %v1535
        %v1537 = vpop.xlane.xlu0 %1536
        %v1538 = vsel %vm797, %v1356, 0.0
        %1539 = vadd.xlane.f32.xlu0 %v1538
        %v1540 = vpop.xlane.xlu0 %1539
        %v1541 = vsel %vm797, %v1357, 0.0
        %1542 = vadd.xlane.f32.xlu0 %v1541
        %v1543 = vpop.xlane.xlu0 %1542
        %v1544 = vsel %vm797, %v1358, 0.0
        %1545 = vadd.xlane.f32.xlu0 %v1544
        %v1546 = vpop.xlane.xlu0 %1545
        %v1547 = vsel %vm797, %v1359, 0.0
        %1548 = vadd.xlane.f32.xlu0 %v1547
        %v1549 = vpop.xlane.xlu0 %1548
        %v1550 = vsel %vm797, %v1360, 0.0
        %1551 = vadd.xlane.f32.xlu0 %v1550
        %v1552 = vpop.xlane.xlu0 %1551
        %v1553 = vsel %vm797, %v1361, 0.0
        %1554 = vadd.xlane.f32.xlu0 %v1553
        %v1555 = vpop.xlane.xlu0 %1554
        %v1556 = vsel %vm797, %v1362, 0.0
        %1557 = vadd.xlane.f32.xlu0 %v1556
        %v1558 = vpop.xlane.xlu0 %1557
        %v1559 = vsel %vm797, %v1363, 0.0
        %1560 = vadd.xlane.f32.xlu0 %v1559
        %v1561 = vpop.xlane.xlu0 %1560
        %v1562 = vsel %vm797, %v1364, 0.0
        %1563 = vadd.xlane.f32.xlu0 %v1562
        %v1564 = vpop.xlane.xlu0 %1563
        %v1565 = vsel %vm797, %v1365, 0.0
        %1566 = vadd.xlane.f32.xlu0 %v1565
        %v1567 = vpop.xlane.xlu0 %1566
        %v1568 = vsel %vm797, %v1366, 0.0
        %1569 = vadd.xlane.f32.xlu0 %v1568
        %v1570 = vpop.xlane.xlu0 %1569
        %v1571 = vsel %vm797, %v1367, 0.0
        %1572 = vadd.xlane.f32.xlu0 %v1571
        %v1573 = vpop.xlane.xlu0 %1572
        %v1574 = vsel %vm797, %v1368, 0.0
        %1575 = vadd.xlane.f32.xlu0 %v1574
        %v1576 = vpop.xlane.xlu0 %1575
        %v1577 = vsel %vm797, %v1369, 0.0
        %1578 = vadd.xlane.f32.xlu0 %v1577
        %v1579 = vpop.xlane.xlu0 %1578
        %v1580 = vsel %vm797, %v1370, 0.0
        %1581 = vadd.xlane.f32.xlu0 %v1580
        %v1582 = vpop.xlane.xlu0 %1581
        %v1583 = vsel %vm797, %v1371, 0.0
        %1584 = vadd.xlane.f32.xlu0 %v1583
        %v1585 = vpop.xlane.xlu0 %1584
        %v1586 = vsel %vm797, %v1372, 0.0
        %1587 = vadd.xlane.f32.xlu0 %v1586
        %v1588 = vpop.xlane.xlu0 %1587
        %v1589 = vsel %vm797, %v1373, 0.0
        %1590 = vadd.xlane.f32.xlu0 %v1589
        %v1591 = vpop.xlane.xlu0 %1590
        %v1592 = vsel %vm797, %v1374, 0.0
        %1593 = vadd.xlane.f32.xlu0 %v1592
        %v1594 = vpop.xlane.xlu0 %1593
        %v1595 = vsel %vm797, %v1375, 0.0
        %1596 = vadd.xlane.f32.xlu0 %v1595
        %v1597 = vpop.xlane.xlu0 %1596
        %v1598 = vsel %vm797, %v1376, 0.0
        %1599 = vadd.xlane.f32.xlu0 %v1598
        %v1600 = vpop.xlane.xlu0 %1599
        %v1601 = vsel %vm797, %v1377, 0.0
        %1602 = vadd.xlane.f32.xlu0 %v1601
        %v1603 = vpop.xlane.xlu0 %1602
        %v1604 = vsel %vm797, %v1378, 0.0
        %1605 = vadd.xlane.f32.xlu0 %v1604
        %v1606 = vpop.xlane.xlu0 %1605
        %v1607 = vsel %vm797, %v1379, 0.0
        %1608 = vadd.xlane.f32.xlu0 %v1607
        %v1609 = vpop.xlane.xlu0 %1608
        %v1610 = vsel %vm797, %v1380, 0.0
        %1611 = vadd.xlane.f32.xlu0 %v1610
        %v1612 = vpop.xlane.xlu0 %1611
        %v1613 = vsel %vm797, %v1381, 0.0
        %1614 = vadd.xlane.f32.xlu0 %v1613
        %v1615 = vpop.xlane.xlu0 %1614
        %v1616 = vsel %vm797, %v1382, 0.0
        %1617 = vadd.xlane.f32.xlu0 %v1616
        %v1618 = vpop.xlane.xlu0 %1617
        %v1619 = vsel %vm797, %v1383, 0.0
        %1620 = vadd.xlane.f32.xlu0 %v1619
        %v1621 = vpop.xlane.xlu0 %1620
        %v1622 = vsel %vm797, %v1384, 0.0
        %1623 = vadd.xlane.f32.xlu0 %v1622
        %v1624 = vpop.xlane.xlu0 %1623
        %v1625 = vsel %vm797, %v1385, 0.0
        %1626 = vadd.xlane.f32.xlu0 %v1625
        %v1627 = vpop.xlane.xlu0 %1626
        %v1628 = vsel %vm797, %v1386, 0.0
        %1629 = vadd.xlane.f32.xlu0 %v1628
        %v1630 = vpop.xlane.xlu0 %1629
        %v1631 = vsel %vm797, %v1387, 0.0
        %1632 = vadd.xlane.f32.xlu0 %v1631
        %v1633 = vpop.xlane.xlu0 %1632
        %v1634 = vsel %vm797, %v1388, 0.0
        %1635 = vadd.xlane.f32.xlu0 %v1634
        %v1636 = vpop.xlane.xlu0 %1635
        %v1637 = vsel %vm797, %v1389, 0.0
        %1638 = vadd.xlane.f32.xlu0 %v1637
        %v1639 = vpop.xlane.xlu0 %1638
        %v1640 = vsel %vm797, %v1390, 0.0
        %1641 = vadd.xlane.f32.xlu0 %v1640
        %v1642 = vpop.xlane.xlu0 %1641
        %v1643 = vsel %vm797, %v1391, 0.0
        %1644 = vadd.xlane.f32.xlu0 %v1643
        %v1645 = vpop.xlane.xlu0 %1644
        %v1646 = vsel %vm797, %v1392, 0.0
        %1647 = vadd.xlane.f32.xlu0 %v1646
        %v1648 = vpop.xlane.xlu0 %1647
        %v1649 = vsel %vm797, %v1393, 0.0
        %1650 = vadd.xlane.f32.xlu0 %v1649
        %v1651 = vpop.xlane.xlu0 %1650
        %v1652 = vsel %vm797, %v1394, 0.0
        %1653 = vadd.xlane.f32.xlu0 %v1652
        %v1654 = vpop.xlane.xlu0 %1653
        %v1655 = vsel %vm797, %v1395, 0.0
        %1656 = vadd.xlane.f32.xlu0 %v1655
        %v1657 = vpop.xlane.xlu0 %1656
        %v1658 = vsel %vm797, %v1396, 0.0
        %1659 = vadd.xlane.f32.xlu0 %v1658
        %v1660 = vpop.xlane.xlu0 %1659
        %v1661 = vsel %vm797, %v1397, 0.0
        %1662 = vadd.xlane.f32.xlu0 %v1661
        %v1663 = vpop.xlane.xlu0 %1662
        %v1664 = vsel %vm797, %v1398, 0.0
        %1665 = vadd.xlane.f32.xlu0 %v1664
        %v1666 = vpop.xlane.xlu0 %1665
        %v1667 = vsel %vm797, %v1399, 0.0
        %1668 = vadd.xlane.f32.xlu0 %v1667
        %v1669 = vpop.xlane.xlu0 %1668
        %v1670 = vsel %vm797, %v1400, 0.0
        %1671 = vadd.xlane.f32.xlu0 %v1670
        %v1672 = vpop.xlane.xlu0 %1671
        %v1673 = vsel %vm797, %v1401, 0.0
        %1674 = vadd.xlane.f32.xlu0 %v1673
        %v1675 = vpop.xlane.xlu0 %1674
        %v1676 = vsel %vm797, %v1402, 0.0
        %1677 = vadd.xlane.f32.xlu0 %v1676
        %v1678 = vpop.xlane.xlu0 %1677
        %v1679 = vsel %vm797, %v1403, 0.0
        %1680 = vadd.xlane.f32.xlu0 %v1679
        %v1681 = vpop.xlane.xlu0 %1680
        %v1682 = vsel %vm797, %v1404, 0.0
        %1683 = vadd.xlane.f32.xlu0 %v1682
        %v1684 = vpop.xlane.xlu0 %1683
        %v1685 = vsel %vm797, %v1405, 0.0
        %1686 = vadd.xlane.f32.xlu0 %v1685
        %v1687 = vpop.xlane.xlu0 %1686
        %v1688 = vsel %vm797, %v1406, 0.0
        %1689 = vadd.xlane.f32.xlu0 %v1688
        %v1690 = vpop.xlane.xlu0 %1689
        %v1691 = vsel %vm797, %v1407, 0.0
        %1692 = vadd.xlane.f32.xlu0 %v1691
        %v1693 = vpop.xlane.xlu0 %1692
        %v1694 = vsel %vm797, %v1408, 0.0
        %1695 = vadd.xlane.f32.xlu0 %v1694
        %v1696 = vpop.xlane.xlu0 %1695
        %v1697 = vsel %vm797, %v1409, 0.0
        %1698 = vadd.xlane.f32.xlu0 %v1697
        %v1699 = vpop.xlane.xlu0 %1698
        %v1700 = vsel %vm797, %v1410, 0.0
        %1701 = vadd.xlane.f32.xlu0 %v1700
        %v1702 = vpop.xlane.xlu0 %1701
        %v1703 = vsel %vm797, %v1411, 0.0
        %1704 = vadd.xlane.f32.xlu0 %v1703
        %v1705 = vpop.xlane.xlu0 %1704
        %v1706 = vsel %vm797, %v1412, 0.0
        %1707 = vadd.xlane.f32.xlu0 %v1706
        %v1708 = vpop.xlane.xlu0 %1707
        %v1709 = vsel %vm797, %v1413, 0.0
        %1710 = vadd.xlane.f32.xlu0 %v1709
        %v1711 = vpop.xlane.xlu0 %1710
        %v1712 = vsel %vm797, %v1414, 0.0
        %1713 = vadd.xlane.f32.xlu0 %v1712
        %v1714 = vpop.xlane.xlu0 %1713
        %v1715 = vsel %vm797, %v1415, 0.0
        %1716 = vadd.xlane.f32.xlu0 %v1715
        %v1717 = vpop.xlane.xlu0 %1716
        %v1718 = vsel %vm797, %v1416, 0.0
        %1719 = vadd.xlane.f32.xlu0 %v1718
        %v1720 = vpop.xlane.xlu0 %1719
        %v1721 = vsel %vm797, %v1417, 0.0
        %1722 = vadd.xlane.f32.xlu0 %v1721
        %v1723 = vpop.xlane.xlu0 %1722
        %v1724 = vsel %vm797, %v1418, 0.0
        %1725 = vadd.xlane.f32.xlu0 %v1724
        %v1726 = vpop.xlane.xlu0 %1725
        %v1727 = vsel %vm797, %v1419, 0.0
        %1728 = vadd.xlane.f32.xlu0 %v1727
        %v1729 = vpop.xlane.xlu0 %1728
        %v1730 = vsel %vm797, %v1420, 0.0
        %1731 = vadd.xlane.f32.xlu0 %v1730
        %v1732 = vpop.xlane.xlu0 %1731
        %v1733 = vsel %vm797, %v1421, 0.0
        %1734 = vadd.xlane.f32.xlu0 %v1733
        %v1735 = vpop.xlane.xlu0 %1734
        %v1736 = vsel %vm797, %v1422, 0.0
        %1737 = vadd.xlane.f32.xlu0 %v1736
        %v1738 = vpop.xlane.xlu0 %1737
        %v1739 = vsel %vm797, %v1423, 0.0
        %1740 = vadd.xlane.f32.xlu0 %v1739
        %v1741 = vpop.xlane.xlu0 %1740
        %v1742 = vsel %vm797, %v1424, 0.0
        %1743 = vadd.xlane.f32.xlu0 %v1742
        %v1744 = vpop.xlane.xlu0 %1743
        %v1745 = vsel %vm797, %v1425, 0.0
        %1746 = vadd.xlane.f32.xlu0 %v1745
        %v1747 = vpop.xlane.xlu0 %1746
        %v1748 = vsel %vm797, %v1426, 0.0
        %1749 = vadd.xlane.f32.xlu0 %v1748
        %v1750 = vpop.xlane.xlu0 %1749
        %v1751 = vsel %vm797, %v1427, 0.0
        %1752 = vadd.xlane.f32.xlu0 %v1751
        %v1753 = vpop.xlane.xlu0 %1752
        %v1754 = vsel %vm797, %v1428, 0.0
        %1755 = vadd.xlane.f32.xlu0 %v1754
        %v1756 = vpop.xlane.xlu0 %1755
        %v1757 = vsel %vm797, %v1429, 0.0
        %1758 = vadd.xlane.f32.xlu0 %v1757
        %v1759 = vpop.xlane.xlu0 %1758
        %v1760 = vsel %vm797, %v1430, 0.0
        %1761 = vadd.xlane.f32.xlu0 %v1760
        %v1762 = vpop.xlane.xlu0 %1761
        %v1763 = vsel %vm797, %v1431, 0.0
        %1764 = vadd.xlane.f32.xlu0 %v1763
        %v1765 = vpop.xlane.xlu0 %1764
        %v1766 = vsel %vm797, %v1432, 0.0
        %1767 = vadd.xlane.f32.xlu0 %v1766
        %v1768 = vpop.xlane.xlu0 %1767
        %v1769 = vsel %vm797, %v1433, 0.0
        %1770 = vadd.xlane.f32.xlu0 %v1769
        %v1771 = vpop.xlane.xlu0 %1770
        %v1772 = vsel %vm797, %v1434, 0.0
        %1773 = vadd.xlane.f32.xlu0 %v1772
        %v1774 = vpop.xlane.xlu0 %1773
        %v1775 = vsel %vm797, %v1435, 0.0
        %1776 = vadd.xlane.f32.xlu0 %v1775
        %v1777 = vpop.xlane.xlu0 %1776
        %v1778 = vsel %vm797, %v1436, 0.0
        %1779 = vadd.xlane.f32.xlu0 %v1778
        %v1780 = vpop.xlane.xlu0 %1779
        %v1781 = vsel %vm797, %v1437, 0.0
        %1782 = vadd.xlane.f32.xlu0 %v1781
        %v1783 = vpop.xlane.xlu0 %1782
        %v1784 = vsel %vm797, %v1438, 0.0
        %1785 = vadd.xlane.f32.xlu0 %v1784
        %v1786 = vpop.xlane.xlu0 %1785
        %v1787 = vsel %vm797, %v1439, 0.0
        %1788 = vadd.xlane.f32.xlu0 %v1787
        %v1789 = vpop.xlane.xlu0 %1788
        %v1790 = vsel %vm797, %v1440, 0.0
        %1791 = vadd.xlane.f32.xlu0 %v1790
        %v1792 = vpop.xlane.xlu0 %1791
        %v1793 = vsel %vm797, %v1441, 0.0
        %1794 = vadd.xlane.f32.xlu0 %v1793
        %v1795 = vpop.xlane.xlu0 %1794
        %v1796 = vsel %vm797, %v1442, 0.0
        %1797 = vadd.xlane.f32.xlu0 %v1796
        %v1798 = vpop.xlane.xlu0 %1797
        %v1799 = vsel %vm797, %v1443, 0.0
        %1800 = vadd.xlane.f32.xlu0 %v1799
        %v1801 = vpop.xlane.xlu0 %1800
        %v1802 = vsel %vm797, %v1444, 0.0
        %1803 = vadd.xlane.f32.xlu0 %v1802
        %v1804 = vpop.xlane.xlu0 %1803
        %v1805 = vsel %vm797, %v1445, 0.0
        %1806 = vadd.xlane.f32.xlu0 %v1805
        %v1807 = vpop.xlane.xlu0 %1806
        %v1808 = vsel %vm797, %v1446, 0.0
        %1809 = vadd.xlane.f32.xlu0 %v1808
        %v1810 = vpop.xlane.xlu0 %1809
        %v1811 = vsel %vm797, %v1447, 0.0
        %1812 = vadd.xlane.f32.xlu0 %v1811
        %v1813 = vpop.xlane.xlu0 %1812
        %v1814 = vsel %vm797, %v1448, 0.0
        %1815 = vadd.xlane.f32.xlu0 %v1814
        %v1816 = vpop.xlane.xlu0 %1815
        %v1817 = vsel %vm797, %v1449, 0.0
        %1818 = vadd.xlane.f32.xlu0 %v1817
        %v1819 = vpop.xlane.xlu0 %1818
        %v1820 = vsel %vm797, %v1450, 0.0
        %1821 = vadd.xlane.f32.xlu0 %v1820
        %v1822 = vpop.xlane.xlu0 %1821
        %v1823 = vsel %vm797, %v1451, 0.0
        %1824 = vadd.xlane.f32.xlu0 %v1823
        %v1825 = vpop.xlane.xlu0 %1824
        %v1826 = vsel %vm797, %v1452, 0.0
        %1827 = vadd.xlane.f32.xlu0 %v1826
        %v1828 = vpop.xlane.xlu0 %1827
        %v1829 = vsel %vm797, %v1453, 0.0
        %1830 = vadd.xlane.f32.xlu0 %v1829
        %v1831 = vpop.xlane.xlu0 %1830
        %v1832 = vsel %vm797, %v1454, 0.0
        %1833 = vadd.xlane.f32.xlu0 %v1832
        %v1834 = vpop.xlane.xlu0 %1833
        %v1835 = vsel %vm797, %v1455, 0.0
        %1836 = vadd.xlane.f32.xlu0 %v1835
        %v1837 = vpop.xlane.xlu0 %1836
        %v1838 = vsel %vm797, %v1456, 0.0
        %1839 = vadd.xlane.f32.xlu0 %v1838
        %v1840 = vpop.xlane.xlu0 %1839
        %v1849 = vunpack.c.l.b16 %v1049
        %v1850 = vunpack.c.l.b16 %v1050
        %v1851 = vunpack.c.l.b16 %v1051
        %v1852 = vunpack.c.l.b16 %v1052
        %v1853 = vunpack.c.l.b16 %v1053
        %v1854 = vunpack.c.l.b16 %v1054
        %v1855 = vunpack.c.l.b16 %v1055
        %v1856 = vunpack.c.l.b16 %v1056
        %v1857 = vpack.c.b16 %v1850, %v1849
        %v1858 = vpack.c.b16 %v1852, %v1851
        %v1859 = vpack.c.b16 %v1854, %v1853
        %v1860 = vpack.c.b16 %v1856, %v1855
        %v1869 = vlaneseq
        %v1870 = vand.u32 %v1869, 127
        %v1871 = vperm.slane %v1459, %v1870
        %v1872 = vadd.s32 %v1870, 4294967288
        %v1873 = vperm.slane %v1462, %v1872
        %vm1874 = vcmask 130112
        %v1875 = vsel %vm1874, %v1873, %v1871
        %v1876 = vadd.s32 %v1870, 4294967280
        %v1877 = vperm.slane %v1465, %v1876
        %vm1878 = vcmask 195712
        %v1879 = vsel %vm1878, %v1877, %v1875
        %v1880 = vadd.s32 %v1870, 4294967272
        %v1881 = vperm.slane %v1468, %v1880
        %vm1882 = vcmask 261312
        %v1883 = vsel %vm1882, %v1881, %v1879
        %v1884 = vadd.s32 %v1870, 4294967264
        %v1885 = vperm.slane %v1471, %v1884
        %vm1886 = vcmask 326912
        %v1887 = vsel %vm1886, %v1885, %v1883
        %v1888 = vadd.s32 %v1870, 4294967256
        %v1889 = vperm.slane %v1474, %v1888
        %vm1890 = vcmask 392512
        %v1891 = vsel %vm1890, %v1889, %v1887
        %v1892 = vadd.s32 %v1870, 4294967248
        %v1893 = vperm.slane %v1477, %v1892
        %vm1894 = vcmask 458112
        %v1895 = vsel %vm1894, %v1893, %v1891
        %v1896 = vadd.s32 %v1870, 4294967240
        %v1897 = vperm.slane %v1480, %v1896
        %vm1898 = vcmask 523712
        %v1899 = vsel %vm1898, %v1897, %v1895
        %vm1900 = vcmask 1042434
        %v1901 = vsel %vm1900, %v1899, %v1899
        %vm1902 = vcmask 1043459
        %v1903 = vsel %vm1902, %v1899, %v1901
        %v1906 = vsel %vm797, %v1033, 0
        %v1909 = vsel %vm797, %v1857, 0
        %v1912 = vsel %vm797, %v1858, 0
        %v1915 = vsel %vm797, %v1859, 0
        %v1918 = vsel %vm797, %v1860, 0
        %1920 = vmatpush.bf16.xpose.msra.mxu0 0
        %1921 = vmatpush.bf16.xpose.msra.mxu0 0
        %1922 = vmatpush.bf16.xpose.msra.mxu0 0
        %1923 = vmatpush.bf16.xpose.msra.mxu0 0
        %1924 = vmatpush.bf16.xpose.msra.mxu0 %v1918
        %1925 = vmatpush.bf16.xpose.msra.mxu0 %v1915
        %1926 = vmatpush.bf16.xpose.msra.mxu0 %v1912
        %1927 = vmatpush.bf16.xpose.msra.mxu0 %v1909
        %1928 = vmatmul.bf16.gmra.mxu0 %v1906
        %v1929 = vpop.f32.mrf.mxu0
        %v1930 = vadd.f32 %v1903, %v1929
        %v1931 = vpop.f32.mrf.mxu0
        %1932 = vdwg.mxu0
        %v1941 = vunpack.c.l.b16 %v1057
        %v1942 = vunpack.c.l.b16 %v1058
        %v1943 = vunpack.c.l.b16 %v1059
        %v1944 = vunpack.c.l.b16 %v1060
        %v1945 = vunpack.c.l.b16 %v1061
        %v1946 = vunpack.c.l.b16 %v1062
        %v1947 = vunpack.c.l.b16 %v1063
        %v1948 = vunpack.c.l.b16 %v1064
        %v1949 = vpack.c.b16 %v1942, %v1941
        %v1950 = vpack.c.b16 %v1944, %v1943
        %v1951 = vpack.c.b16 %v1946, %v1945
        %v1952 = vpack.c.b16 %v1948, %v1947
        %v1961 = vperm.slane %v1483, %v1870
        %v1962 = vperm.slane %v1486, %v1872
        %v1963 = vsel %vm1874, %v1962, %v1961
        %v1964 = vperm.slane %v1489, %v1876
        %v1965 = vsel %vm1878, %v1964, %v1963
        %v1966 = vperm.slane %v1492, %v1880
        %v1967 = vsel %vm1882, %v1966, %v1965
        %v1968 = vperm.slane %v1495, %v1884
        %v1969 = vsel %vm1886, %v1968, %v1967
        %v1970 = vperm.slane %v1498, %v1888
        %v1971 = vsel %vm1890, %v1970, %v1969
        %v1972 = vperm.slane %v1501, %v1892
        %v1973 = vsel %vm1894, %v1972, %v1971
        %v1974 = vperm.slane %v1504, %v1896
        %v1975 = vsel %vm1898, %v1974, %v1973
        %v1976 = vsel %vm1900, %v1975, %v1975
        %v1977 = vsel %vm1902, %v1975, %v1976
        %v1980 = vsel %vm797, %v1034, 0
        %v1983 = vsel %vm797, %v1949, 0
        %v1986 = vsel %vm797, %v1950, 0
        %v1989 = vsel %vm797, %v1951, 0
        %v1992 = vsel %vm797, %v1952, 0
        %1994 = vmatpush.bf16.xpose.msra.mxu0 0
        %1995 = vmatpush.bf16.xpose.msra.mxu0 0
        %1996 = vmatpush.bf16.xpose.msra.mxu0 0
        %1997 = vmatpush.bf16.xpose.msra.mxu0 0
        %1998 = vmatpush.bf16.xpose.msra.mxu0 %v1992
        %1999 = vmatpush.bf16.xpose.msra.mxu0 %v1989
        %2000 = vmatpush.bf16.xpose.msra.mxu0 %v1986
        %2001 = vmatpush.bf16.xpose.msra.mxu0 %v1983
        %2002 = vmatmul.bf16.gmra.mxu0 %v1980
        %v2003 = vpop.f32.mrf.mxu0
        %v2004 = vadd.f32 %v1977, %v2003
        %v2005 = vpop.f32.mrf.mxu0
        %2006 = vdwg.mxu0
        %v2015 = vunpack.c.l.b16 %v1065
        %v2016 = vunpack.c.l.b16 %v1066
        %v2017 = vunpack.c.l.b16 %v1067
        %v2018 = vunpack.c.l.b16 %v1068
        %v2019 = vunpack.c.l.b16 %v1069
        %v2020 = vunpack.c.l.b16 %v1070
        %v2021 = vunpack.c.l.b16 %v1071
        %v2022 = vunpack.c.l.b16 %v1072
        %v2023 = vpack.c.b16 %v2016, %v2015
        %v2024 = vpack.c.b16 %v2018, %v2017
        %v2025 = vpack.c.b16 %v2020, %v2019
        %v2026 = vpack.c.b16 %v2022, %v2021
        %v2035 = vperm.slane %v1507, %v1870
        %v2036 = vperm.slane %v1510, %v1872
        %v2037 = vsel %vm1874, %v2036, %v2035
        %v2038 = vperm.slane %v1513, %v1876
        %v2039 = vsel %vm1878, %v2038, %v2037
        %v2040 = vperm.slane %v1516, %v1880
        %v2041 = vsel %vm1882, %v2040, %v2039
        %v2042 = vperm.slane %v1519, %v1884
        %v2043 = vsel %vm1886, %v2042, %v2041
        %v2044 = vperm.slane %v1522, %v1888
        %v2045 = vsel %vm1890, %v2044, %v2043
        %v2046 = vperm.slane %v1525, %v1892
        %v2047 = vsel %vm1894, %v2046, %v2045
        %v2048 = vperm.slane %v1528, %v1896
        %v2049 = vsel %vm1898, %v2048, %v2047
        %v2050 = vsel %vm1900, %v2049, %v2049
        %v2051 = vsel %vm1902, %v2049, %v2050
        %v2054 = vsel %vm797, %v1035, 0
        %v2057 = vsel %vm797, %v2023, 0
        %v2060 = vsel %vm797, %v2024, 0
        %v2063 = vsel %vm797, %v2025, 0
        %v2066 = vsel %vm797, %v2026, 0
        %2068 = vmatpush.bf16.xpose.msra.mxu0 0
        %2069 = vmatpush.bf16.xpose.msra.mxu0 0
        %2070 = vmatpush.bf16.xpose.msra.mxu0 0
        %2071 = vmatpush.bf16.xpose.msra.mxu0 0
        %2072 = vmatpush.bf16.xpose.msra.mxu0 %v2066
        %2073 = vmatpush.bf16.xpose.msra.mxu0 %v2063
        %2074 = vmatpush.bf16.xpose.msra.mxu0 %v2060
        %2075 = vmatpush.bf16.xpose.msra.mxu0 %v2057
        %2076 = vmatmul.bf16.gmra.mxu0 %v2054
        %v2077 = vpop.f32.mrf.mxu0
        %v2078 = vadd.f32 %v2051, %v2077
        %v2079 = vpop.f32.mrf.mxu0
        %2080 = vdwg.mxu0
        %v2089 = vunpack.c.l.b16 %v1073
        %v2090 = vunpack.c.l.b16 %v1074
        %v2091 = vunpack.c.l.b16 %v1075
        %v2092 = vunpack.c.l.b16 %v1076
        %v2093 = vunpack.c.l.b16 %v1077
        %v2094 = vunpack.c.l.b16 %v1078
        %v2095 = vunpack.c.l.b16 %v1079
        %v2096 = vunpack.c.l.b16 %v1080
        %v2097 = vpack.c.b16 %v2090, %v2089
        %v2098 = vpack.c.b16 %v2092, %v2091
        %v2099 = vpack.c.b16 %v2094, %v2093
        %v2100 = vpack.c.b16 %v2096, %v2095
        %v2109 = vperm.slane %v1531, %v1870
        %v2110 = vperm.slane %v1534, %v1872
        %v2111 = vsel %vm1874, %v2110, %v2109
        %v2112 = vperm.slane %v1537, %v1876
        %v2113 = vsel %vm1878, %v2112, %v2111
        %v2114 = vperm.slane %v1540, %v1880
        %v2115 = vsel %vm1882, %v2114, %v2113
        %v2116 = vperm.slane %v1543, %v1884
        %v2117 = vsel %vm1886, %v2116, %v2115
        %v2118 = vperm.slane %v1546, %v1888
        %v2119 = vsel %vm1890, %v2118, %v2117
        %v2120 = vperm.slane %v1549, %v1892
        %v2121 = vsel %vm1894, %v2120, %v2119
        %v2122 = vperm.slane %v1552, %v1896
        %v2123 = vsel %vm1898, %v2122, %v2121
        %v2124 = vsel %vm1900, %v2123, %v2123
        %v2125 = vsel %vm1902, %v2123, %v2124
        %v2128 = vsel %vm797, %v1036, 0
        %v2131 = vsel %vm797, %v2097, 0
        %v2134 = vsel %vm797, %v2098, 0
        %v2137 = vsel %vm797, %v2099, 0
        %v2140 = vsel %vm797, %v2100, 0
        %2142 = vmatpush.bf16.xpose.msra.mxu0 0
        %2143 = vmatpush.bf16.xpose.msra.mxu0 0
        %2144 = vmatpush.bf16.xpose.msra.mxu0 0
        %2145 = vmatpush.bf16.xpose.msra.mxu0 0
        %2146 = vmatpush.bf16.xpose.msra.mxu0 %v2140
        %2147 = vmatpush.bf16.xpose.msra.mxu0 %v2137
        %2148 = vmatpush.bf16.xpose.msra.mxu0 %v2134
        %2149 = vmatpush.bf16.xpose.msra.mxu0 %v2131
        %2150 = vmatmul.bf16.gmra.mxu0 %v2128
        %v2151 = vpop.f32.mrf.mxu0
        %v2152 = vadd.f32 %v2125, %v2151
        %v2153 = vpop.f32.mrf.mxu0
        %2154 = vdwg.mxu0
        %v2163 = vunpack.c.l.b16 %v1081
        %v2164 = vunpack.c.l.b16 %v1082
        %v2165 = vunpack.c.l.b16 %v1083
        %v2166 = vunpack.c.l.b16 %v1084
        %v2167 = vunpack.c.l.b16 %v1085
        %v2168 = vunpack.c.l.b16 %v1086
        %v2169 = vunpack.c.l.b16 %v1087
        %v2170 = vunpack.c.l.b16 %v1088
        %v2171 = vpack.c.b16 %v2164, %v2163
        %v2172 = vpack.c.b16 %v2166, %v2165
        %v2173 = vpack.c.b16 %v2168, %v2167
        %v2174 = vpack.c.b16 %v2170, %v2169
        %v2183 = vperm.slane %v1555, %v1870
        %v2184 = vperm.slane %v1558, %v1872
        %v2185 = vsel %vm1874, %v2184, %v2183
        %v2186 = vperm.slane %v1561, %v1876
        %v2187 = vsel %vm1878, %v2186, %v2185
        %v2188 = vperm.slane %v1564, %v1880
        %v2189 = vsel %vm1882, %v2188, %v2187
        %v2190 = vperm.slane %v1567, %v1884
        %v2191 = vsel %vm1886, %v2190, %v2189
        %v2192 = vperm.slane %v1570, %v1888
        %v2193 = vsel %vm1890, %v2192, %v2191
        %v2194 = vperm.slane %v1573, %v1892
        %v2195 = vsel %vm1894, %v2194, %v2193
        %v2196 = vperm.slane %v1576, %v1896
        %v2197 = vsel %vm1898, %v2196, %v2195
        %v2198 = vsel %vm1900, %v2197, %v2197
        %v2199 = vsel %vm1902, %v2197, %v2198
        %v2202 = vsel %vm797, %v1037, 0
        %v2205 = vsel %vm797, %v2171, 0
        %v2208 = vsel %vm797, %v2172, 0
        %v2211 = vsel %vm797, %v2173, 0
        %v2214 = vsel %vm797, %v2174, 0
        %2216 = vmatpush.bf16.xpose.msra.mxu0 0
        %2217 = vmatpush.bf16.xpose.msra.mxu0 0
        %2218 = vmatpush.bf16.xpose.msra.mxu0 0
        %2219 = vmatpush.bf16.xpose.msra.mxu0 0
        %2220 = vmatpush.bf16.xpose.msra.mxu0 %v2214
        %2221 = vmatpush.bf16.xpose.msra.mxu0 %v2211
        %2222 = vmatpush.bf16.xpose.msra.mxu0 %v2208
        %2223 = vmatpush.bf16.xpose.msra.mxu0 %v2205
        %2224 = vmatmul.bf16.gmra.mxu0 %v2202
        %v2225 = vpop.f32.mrf.mxu0
        %v2226 = vadd.f32 %v2199, %v2225
        %v2227 = vpop.f32.mrf.mxu0
        %2228 = vdwg.mxu0
        %v2237 = vunpack.c.l.b16 %v1089
        %v2238 = vunpack.c.l.b16 %v1090
        %v2239 = vunpack.c.l.b16 %v1091
        %v2240 = vunpack.c.l.b16 %v1092
        %v2241 = vunpack.c.l.b16 %v1093
        %v2242 = vunpack.c.l.b16 %v1094
        %v2243 = vunpack.c.l.b16 %v1095
        %v2244 = vunpack.c.l.b16 %v1096
        %v2245 = vpack.c.b16 %v2238, %v2237
        %v2246 = vpack.c.b16 %v2240, %v2239
        %v2247 = vpack.c.b16 %v2242, %v2241
        %v2248 = vpack.c.b16 %v2244, %v2243
        %v2257 = vperm.slane %v1579, %v1870
        %v2258 = vperm.slane %v1582, %v1872
        %v2259 = vsel %vm1874, %v2258, %v2257
        %v2260 = vperm.slane %v1585, %v1876
        %v2261 = vsel %vm1878, %v2260, %v2259
        %v2262 = vperm.slane %v1588, %v1880
        %v2263 = vsel %vm1882, %v2262, %v2261
        %v2264 = vperm.slane %v1591, %v1884
        %v2265 = vsel %vm1886, %v2264, %v2263
        %v2266 = vperm.slane %v1594, %v1888
        %v2267 = vsel %vm1890, %v2266, %v2265
        %v2268 = vperm.slane %v1597, %v1892
        %v2269 = vsel %vm1894, %v2268, %v2267
        %v2270 = vperm.slane %v1600, %v1896
        %v2271 = vsel %vm1898, %v2270, %v2269
        %v2272 = vsel %vm1900, %v2271, %v2271
        %v2273 = vsel %vm1902, %v2271, %v2272
        %v2276 = vsel %vm797, %v1038, 0
        %v2279 = vsel %vm797, %v2245, 0
        %v2282 = vsel %vm797, %v2246, 0
        %v2285 = vsel %vm797, %v2247, 0
        %v2288 = vsel %vm797, %v2248, 0
        %2290 = vmatpush.bf16.xpose.msra.mxu0 0
        %2291 = vmatpush.bf16.xpose.msra.mxu0 0
        %2292 = vmatpush.bf16.xpose.msra.mxu0 0
        %2293 = vmatpush.bf16.xpose.msra.mxu0 0
        %2294 = vmatpush.bf16.xpose.msra.mxu0 %v2288
        %2295 = vmatpush.bf16.xpose.msra.mxu0 %v2285
        %2296 = vmatpush.bf16.xpose.msra.mxu0 %v2282
        %2297 = vmatpush.bf16.xpose.msra.mxu0 %v2279
        %2298 = vmatmul.bf16.gmra.mxu0 %v2276
        %v2299 = vpop.f32.mrf.mxu0
        %v2300 = vadd.f32 %v2273, %v2299
        %v2301 = vpop.f32.mrf.mxu0
        %2302 = vdwg.mxu0
        %v2311 = vunpack.c.l.b16 %v1097
        %v2312 = vunpack.c.l.b16 %v1098
        %v2313 = vunpack.c.l.b16 %v1099
        %v2314 = vunpack.c.l.b16 %v1100
        %v2315 = vunpack.c.l.b16 %v1101
        %v2316 = vunpack.c.l.b16 %v1102
        %v2317 = vunpack.c.l.b16 %v1103
        %v2318 = vunpack.c.l.b16 %v1104
        %v2319 = vpack.c.b16 %v2312, %v2311
        %v2320 = vpack.c.b16 %v2314, %v2313
        %v2321 = vpack.c.b16 %v2316, %v2315
        %v2322 = vpack.c.b16 %v2318, %v2317
        %v2331 = vperm.slane %v1603, %v1870
        %v2332 = vperm.slane %v1606, %v1872
        %v2333 = vsel %vm1874, %v2332, %v2331
        %v2334 = vperm.slane %v1609, %v1876
        %v2335 = vsel %vm1878, %v2334, %v2333
        %v2336 = vperm.slane %v1612, %v1880
        %v2337 = vsel %vm1882, %v2336, %v2335
        %v2338 = vperm.slane %v1615, %v1884
        %v2339 = vsel %vm1886, %v2338, %v2337
        %v2340 = vperm.slane %v1618, %v1888
        %v2341 = vsel %vm1890, %v2340, %v2339
        %v2342 = vperm.slane %v1621, %v1892
        %v2343 = vsel %vm1894, %v2342, %v2341
        %v2344 = vperm.slane %v1624, %v1896
        %v2345 = vsel %vm1898, %v2344, %v2343
        %v2346 = vsel %vm1900, %v2345, %v2345
        %v2347 = vsel %vm1902, %v2345, %v2346
        %v2350 = vsel %vm797, %v1039, 0
        %v2353 = vsel %vm797, %v2319, 0
        %v2356 = vsel %vm797, %v2320, 0
        %v2359 = vsel %vm797, %v2321, 0
        %v2362 = vsel %vm797, %v2322, 0
        %2364 = vmatpush.bf16.xpose.msra.mxu0 0
        %2365 = vmatpush.bf16.xpose.msra.mxu0 0
        %2366 = vmatpush.bf16.xpose.msra.mxu0 0
        %2367 = vmatpush.bf16.xpose.msra.mxu0 0
        %2368 = vmatpush.bf16.xpose.msra.mxu0 %v2362
        %2369 = vmatpush.bf16.xpose.msra.mxu0 %v2359
        %2370 = vmatpush.bf16.xpose.msra.mxu0 %v2356
        %2371 = vmatpush.bf16.xpose.msra.mxu0 %v2353
        %2372 = vmatmul.bf16.gmra.mxu0 %v2350
        %v2373 = vpop.f32.mrf.mxu0
        %v2374 = vadd.f32 %v2347, %v2373
        %v2375 = vpop.f32.mrf.mxu0
        %2376 = vdwg.mxu0
        %v2385 = vunpack.c.l.b16 %v1105
        %v2386 = vunpack.c.l.b16 %v1106
        %v2387 = vunpack.c.l.b16 %v1107
        %v2388 = vunpack.c.l.b16 %v1108
        %v2389 = vunpack.c.l.b16 %v1109
        %v2390 = vunpack.c.l.b16 %v1110
        %v2391 = vunpack.c.l.b16 %v1111
        %v2392 = vunpack.c.l.b16 %v1112
        %v2393 = vpack.c.b16 %v2386, %v2385
        %v2394 = vpack.c.b16 %v2388, %v2387
        %v2395 = vpack.c.b16 %v2390, %v2389
        %v2396 = vpack.c.b16 %v2392, %v2391
        %v2405 = vperm.slane %v1627, %v1870
        %v2406 = vperm.slane %v1630, %v1872
        %v2407 = vsel %vm1874, %v2406, %v2405
        %v2408 = vperm.slane %v1633, %v1876
        %v2409 = vsel %vm1878, %v2408, %v2407
        %v2410 = vperm.slane %v1636, %v1880
        %v2411 = vsel %vm1882, %v2410, %v2409
        %v2412 = vperm.slane %v1639, %v1884
        %v2413 = vsel %vm1886, %v2412, %v2411
        %v2414 = vperm.slane %v1642, %v1888
        %v2415 = vsel %vm1890, %v2414, %v2413
        %v2416 = vperm.slane %v1645, %v1892
        %v2417 = vsel %vm1894, %v2416, %v2415
        %v2418 = vperm.slane %v1648, %v1896
        %v2419 = vsel %vm1898, %v2418, %v2417
        %v2420 = vsel %vm1900, %v2419, %v2419
        %v2421 = vsel %vm1902, %v2419, %v2420
        %v2424 = vsel %vm797, %v1040, 0
        %v2427 = vsel %vm797, %v2393, 0
        %v2430 = vsel %vm797, %v2394, 0
        %v2433 = vsel %vm797, %v2395, 0
        %v2436 = vsel %vm797, %v2396, 0
        %2438 = vmatpush.bf16.xpose.msra.mxu0 0
        %2439 = vmatpush.bf16.xpose.msra.mxu0 0
        %2440 = vmatpush.bf16.xpose.msra.mxu0 0
        %2441 = vmatpush.bf16.xpose.msra.mxu0 0
        %2442 = vmatpush.bf16.xpose.msra.mxu0 %v2436
        %2443 = vmatpush.bf16.xpose.msra.mxu0 %v2433
        %2444 = vmatpush.bf16.xpose.msra.mxu0 %v2430
        %2445 = vmatpush.bf16.xpose.msra.mxu0 %v2427
        %2446 = vmatmul.bf16.gmra.mxu0 %v2424
        %v2447 = vpop.f32.mrf.mxu0
        %v2448 = vadd.f32 %v2421, %v2447
        %v2449 = vpop.f32.mrf.mxu0
        %2450 = vdwg.mxu0
        %v2459 = vunpack.c.l.b16 %v1113
        %v2460 = vunpack.c.l.b16 %v1114
        %v2461 = vunpack.c.l.b16 %v1115
        %v2462 = vunpack.c.l.b16 %v1116
        %v2463 = vunpack.c.l.b16 %v1117
        %v2464 = vunpack.c.l.b16 %v1118
        %v2465 = vunpack.c.l.b16 %v1119
        %v2466 = vunpack.c.l.b16 %v1120
        %v2467 = vpack.c.b16 %v2460, %v2459
        %v2468 = vpack.c.b16 %v2462, %v2461
        %v2469 = vpack.c.b16 %v2464, %v2463
        %v2470 = vpack.c.b16 %v2466, %v2465
        %v2479 = vperm.slane %v1651, %v1870
        %v2480 = vperm.slane %v1654, %v1872
        %v2481 = vsel %vm1874, %v2480, %v2479
        %v2482 = vperm.slane %v1657, %v1876
        %v2483 = vsel %vm1878, %v2482, %v2481
        %v2484 = vperm.slane %v1660, %v1880
        %v2485 = vsel %vm1882, %v2484, %v2483
        %v2486 = vperm.slane %v1663, %v1884
        %v2487 = vsel %vm1886, %v2486, %v2485
        %v2488 = vperm.slane %v1666, %v1888
        %v2489 = vsel %vm1890, %v2488, %v2487
        %v2490 = vperm.slane %v1669, %v1892
        %v2491 = vsel %vm1894, %v2490, %v2489
        %v2492 = vperm.slane %v1672, %v1896
        %v2493 = vsel %vm1898, %v2492, %v2491
        %v2494 = vsel %vm1900, %v2493, %v2493
        %v2495 = vsel %vm1902, %v2493, %v2494
        %v2498 = vsel %vm797, %v1041, 0
        %v2501 = vsel %vm797, %v2467, 0
        %v2504 = vsel %vm797, %v2468, 0
        %v2507 = vsel %vm797, %v2469, 0
        %v2510 = vsel %vm797, %v2470, 0
        %2512 = vmatpush.bf16.xpose.msra.mxu0 0
        %2513 = vmatpush.bf16.xpose.msra.mxu0 0
        %2514 = vmatpush.bf16.xpose.msra.mxu0 0
        %2515 = vmatpush.bf16.xpose.msra.mxu0 0
        %2516 = vmatpush.bf16.xpose.msra.mxu0 %v2510
        %2517 = vmatpush.bf16.xpose.msra.mxu0 %v2507
        %2518 = vmatpush.bf16.xpose.msra.mxu0 %v2504
        %2519 = vmatpush.bf16.xpose.msra.mxu0 %v2501
        %2520 = vmatmul.bf16.gmra.mxu0 %v2498
        %v2521 = vpop.f32.mrf.mxu0
        %v2522 = vadd.f32 %v2495, %v2521
        %v2523 = vpop.f32.mrf.mxu0
        %2524 = vdwg.mxu0
        %v2533 = vunpack.c.l.b16 %v1121
        %v2534 = vunpack.c.l.b16 %v1122
        %v2535 = vunpack.c.l.b16 %v1123
        %v2536 = vunpack.c.l.b16 %v1124
        %v2537 = vunpack.c.l.b16 %v1125
        %v2538 = vunpack.c.l.b16 %v1126
        %v2539 = vunpack.c.l.b16 %v1127
        %v2540 = vunpack.c.l.b16 %v1128
        %v2541 = vpack.c.b16 %v2534, %v2533
        %v2542 = vpack.c.b16 %v2536, %v2535
        %v2543 = vpack.c.b16 %v2538, %v2537
        %v2544 = vpack.c.b16 %v2540, %v2539
        %v2553 = vperm.slane %v1675, %v1870
        %v2554 = vperm.slane %v1678, %v1872
        %v2555 = vsel %vm1874, %v2554, %v2553
        %v2556 = vperm.slane %v1681, %v1876
        %v2557 = vsel %vm1878, %v2556, %v2555
        %v2558 = vperm.slane %v1684, %v1880
        %v2559 = vsel %vm1882, %v2558, %v2557
        %v2560 = vperm.slane %v1687, %v1884
        %v2561 = vsel %vm1886, %v2560, %v2559
        %v2562 = vperm.slane %v1690, %v1888
        %v2563 = vsel %vm1890, %v2562, %v2561
        %v2564 = vperm.slane %v1693, %v1892
        %v2565 = vsel %vm1894, %v2564, %v2563
        %v2566 = vperm.slane %v1696, %v1896
        %v2567 = vsel %vm1898, %v2566, %v2565
        %v2568 = vsel %vm1900, %v2567, %v2567
        %v2569 = vsel %vm1902, %v2567, %v2568
        %v2572 = vsel %vm797, %v1042, 0
        %v2575 = vsel %vm797, %v2541, 0
        %v2578 = vsel %vm797, %v2542, 0
        %v2581 = vsel %vm797, %v2543, 0
        %v2584 = vsel %vm797, %v2544, 0
        %2586 = vmatpush.bf16.xpose.msra.mxu0 0
        %2587 = vmatpush.bf16.xpose.msra.mxu0 0
        %2588 = vmatpush.bf16.xpose.msra.mxu0 0
        %2589 = vmatpush.bf16.xpose.msra.mxu0 0
        %2590 = vmatpush.bf16.xpose.msra.mxu0 %v2584
        %2591 = vmatpush.bf16.xpose.msra.mxu0 %v2581
        %2592 = vmatpush.bf16.xpose.msra.mxu0 %v2578
        %2593 = vmatpush.bf16.xpose.msra.mxu0 %v2575
        %2594 = vmatmul.bf16.gmra.mxu0 %v2572
        %v2595 = vpop.f32.mrf.mxu0
        %v2596 = vadd.f32 %v2569, %v2595
        %v2597 = vpop.f32.mrf.mxu0
        %2598 = vdwg.mxu0
        %v2607 = vunpack.c.l.b16 %v1129
        %v2608 = vunpack.c.l.b16 %v1130
        %v2609 = vunpack.c.l.b16 %v1131
        %v2610 = vunpack.c.l.b16 %v1132
        %v2611 = vunpack.c.l.b16 %v1133
        %v2612 = vunpack.c.l.b16 %v1134
        %v2613 = vunpack.c.l.b16 %v1135
        %v2614 = vunpack.c.l.b16 %v1136
        %v2615 = vpack.c.b16 %v2608, %v2607
        %v2616 = vpack.c.b16 %v2610, %v2609
        %v2617 = vpack.c.b16 %v2612, %v2611
        %v2618 = vpack.c.b16 %v2614, %v2613
        %v2627 = vperm.slane %v1699, %v1870
        %v2628 = vperm.slane %v1702, %v1872
        %v2629 = vsel %vm1874, %v2628, %v2627
        %v2630 = vperm.slane %v1705, %v1876
        %v2631 = vsel %vm1878, %v2630, %v2629
        %v2632 = vperm.slane %v1708, %v1880
        %v2633 = vsel %vm1882, %v2632, %v2631
        %v2634 = vperm.slane %v1711, %v1884
        %v2635 = vsel %vm1886, %v2634, %v2633
        %v2636 = vperm.slane %v1714, %v1888
        %v2637 = vsel %vm1890, %v2636, %v2635
        %v2638 = vperm.slane %v1717, %v1892
        %v2639 = vsel %vm1894, %v2638, %v2637
        %v2640 = vperm.slane %v1720, %v1896
        %v2641 = vsel %vm1898, %v2640, %v2639
        %v2642 = vsel %vm1900, %v2641, %v2641
        %v2643 = vsel %vm1902, %v2641, %v2642
        %v2646 = vsel %vm797, %v1043, 0
        %v2649 = vsel %vm797, %v2615, 0
        %v2652 = vsel %vm797, %v2616, 0
        %v2655 = vsel %vm797, %v2617, 0
        %v2658 = vsel %vm797, %v2618, 0
        %2660 = vmatpush.bf16.xpose.msra.mxu0 0
        %2661 = vmatpush.bf16.xpose.msra.mxu0 0
        %2662 = vmatpush.bf16.xpose.msra.mxu0 0
        %2663 = vmatpush.bf16.xpose.msra.mxu0 0
        %2664 = vmatpush.bf16.xpose.msra.mxu0 %v2658
        %2665 = vmatpush.bf16.xpose.msra.mxu0 %v2655
        %2666 = vmatpush.bf16.xpose.msra.mxu0 %v2652
        %2667 = vmatpush.bf16.xpose.msra.mxu0 %v2649
        %2668 = vmatmul.bf16.gmra.mxu0 %v2646
        %v2669 = vpop.f32.mrf.mxu0
        %v2670 = vadd.f32 %v2643, %v2669
        %v2671 = vpop.f32.mrf.mxu0
        %2672 = vdwg.mxu0
        %v2681 = vunpack.c.l.b16 %v1137
        %v2682 = vunpack.c.l.b16 %v1138
        %v2683 = vunpack.c.l.b16 %v1139
        %v2684 = vunpack.c.l.b16 %v1140
        %v2685 = vunpack.c.l.b16 %v1141
        %v2686 = vunpack.c.l.b16 %v1142
        %v2687 = vunpack.c.l.b16 %v1143
        %v2688 = vunpack.c.l.b16 %v1144
        %v2689 = vpack.c.b16 %v2682, %v2681
        %v2690 = vpack.c.b16 %v2684, %v2683
        %v2691 = vpack.c.b16 %v2686, %v2685
        %v2692 = vpack.c.b16 %v2688, %v2687
        %v2701 = vperm.slane %v1723, %v1870
        %v2702 = vperm.slane %v1726, %v1872
        %v2703 = vsel %vm1874, %v2702, %v2701
        %v2704 = vperm.slane %v1729, %v1876
        %v2705 = vsel %vm1878, %v2704, %v2703
        %v2706 = vperm.slane %v1732, %v1880
        %v2707 = vsel %vm1882, %v2706, %v2705
        %v2708 = vperm.slane %v1735, %v1884
        %v2709 = vsel %vm1886, %v2708, %v2707
        %v2710 = vperm.slane %v1738, %v1888
        %v2711 = vsel %vm1890, %v2710, %v2709
        %v2712 = vperm.slane %v1741, %v1892
        %v2713 = vsel %vm1894, %v2712, %v2711
        %v2714 = vperm.slane %v1744, %v1896
        %v2715 = vsel %vm1898, %v2714, %v2713
        %v2716 = vsel %vm1900, %v2715, %v2715
        %v2717 = vsel %vm1902, %v2715, %v2716
        %v2720 = vsel %vm797, %v1044, 0
        %v2723 = vsel %vm797, %v2689, 0
        %v2726 = vsel %vm797, %v2690, 0
        %v2729 = vsel %vm797, %v2691, 0
        %v2732 = vsel %vm797, %v2692, 0
        %2734 = vmatpush.bf16.xpose.msra.mxu0 0
        %2735 = vmatpush.bf16.xpose.msra.mxu0 0
        %2736 = vmatpush.bf16.xpose.msra.mxu0 0
        %2737 = vmatpush.bf16.xpose.msra.mxu0 0
        %2738 = vmatpush.bf16.xpose.msra.mxu0 %v2732
        %2739 = vmatpush.bf16.xpose.msra.mxu0 %v2729
        %2740 = vmatpush.bf16.xpose.msra.mxu0 %v2726
        %2741 = vmatpush.bf16.xpose.msra.mxu0 %v2723
        %2742 = vmatmul.bf16.gmra.mxu0 %v2720
        %v2743 = vpop.f32.mrf.mxu0
        %v2744 = vadd.f32 %v2717, %v2743
        %v2745 = vpop.f32.mrf.mxu0
        %2746 = vdwg.mxu0
        %v2755 = vunpack.c.l.b16 %v1145
        %v2756 = vunpack.c.l.b16 %v1146
        %v2757 = vunpack.c.l.b16 %v1147
        %v2758 = vunpack.c.l.b16 %v1148
        %v2759 = vunpack.c.l.b16 %v1149
        %v2760 = vunpack.c.l.b16 %v1150
        %v2761 = vunpack.c.l.b16 %v1151
        %v2762 = vunpack.c.l.b16 %v1152
        %v2763 = vpack.c.b16 %v2756, %v2755
        %v2764 = vpack.c.b16 %v2758, %v2757
        %v2765 = vpack.c.b16 %v2760, %v2759
        %v2766 = vpack.c.b16 %v2762, %v2761
        %v2775 = vperm.slane %v1747, %v1870
        %v2776 = vperm.slane %v1750, %v1872
        %v2777 = vsel %vm1874, %v2776, %v2775
        %v2778 = vperm.slane %v1753, %v1876
        %v2779 = vsel %vm1878, %v2778, %v2777
        %v2780 = vperm.slane %v1756, %v1880
        %v2781 = vsel %vm1882, %v2780, %v2779
        %v2782 = vperm.slane %v1759, %v1884
        %v2783 = vsel %vm1886, %v2782, %v2781
        %v2784 = vperm.slane %v1762, %v1888
        %v2785 = vsel %vm1890, %v2784, %v2783
        %v2786 = vperm.slane %v1765, %v1892
        %v2787 = vsel %vm1894, %v2786, %v2785
        %v2788 = vperm.slane %v1768, %v1896
        %v2789 = vsel %vm1898, %v2788, %v2787
        %v2790 = vsel %vm1900, %v2789, %v2789
        %v2791 = vsel %vm1902, %v2789, %v2790
        %v2794 = vsel %vm797, %v1045, 0
        %v2797 = vsel %vm797, %v2763, 0
        %v2800 = vsel %vm797, %v2764, 0
        %v2803 = vsel %vm797, %v2765, 0
        %v2806 = vsel %vm797, %v2766, 0
        %2808 = vmatpush.bf16.xpose.msra.mxu0 0
        %2809 = vmatpush.bf16.xpose.msra.mxu0 0
        %2810 = vmatpush.bf16.xpose.msra.mxu0 0
        %2811 = vmatpush.bf16.xpose.msra.mxu0 0
        %2812 = vmatpush.bf16.xpose.msra.mxu0 %v2806
        %2813 = vmatpush.bf16.xpose.msra.mxu0 %v2803
        %2814 = vmatpush.bf16.xpose.msra.mxu0 %v2800
        %2815 = vmatpush.bf16.xpose.msra.mxu0 %v2797
        %2816 = vmatmul.bf16.gmra.mxu0 %v2794
        %v2817 = vpop.f32.mrf.mxu0
        %v2818 = vadd.f32 %v2791, %v2817
        %v2819 = vpop.f32.mrf.mxu0
        %2820 = vdwg.mxu0
        %v2829 = vunpack.c.l.b16 %v1153
        %v2830 = vunpack.c.l.b16 %v1154
        %v2831 = vunpack.c.l.b16 %v1155
        %v2832 = vunpack.c.l.b16 %v1156
        %v2833 = vunpack.c.l.b16 %v1157
        %v2834 = vunpack.c.l.b16 %v1158
        %v2835 = vunpack.c.l.b16 %v1159
        %v2836 = vunpack.c.l.b16 %v1160
        %v2837 = vpack.c.b16 %v2830, %v2829
        %v2838 = vpack.c.b16 %v2832, %v2831
        %v2839 = vpack.c.b16 %v2834, %v2833
        %v2840 = vpack.c.b16 %v2836, %v2835
        %v2849 = vperm.slane %v1771, %v1870
        %v2850 = vperm.slane %v1774, %v1872
        %v2851 = vsel %vm1874, %v2850, %v2849
        %v2852 = vperm.slane %v1777, %v1876
        %v2853 = vsel %vm1878, %v2852, %v2851
        %v2854 = vperm.slane %v1780, %v1880
        %v2855 = vsel %vm1882, %v2854, %v2853
        %v2856 = vperm.slane %v1783, %v1884
        %v2857 = vsel %vm1886, %v2856, %v2855
        %v2858 = vperm.slane %v1786, %v1888
        %v2859 = vsel %vm1890, %v2858, %v2857
        %v2860 = vperm.slane %v1789, %v1892
        %v2861 = vsel %vm1894, %v2860, %v2859
        %v2862 = vperm.slane %v1792, %v1896
        %v2863 = vsel %vm1898, %v2862, %v2861
        %v2864 = vsel %vm1900, %v2863, %v2863
        %v2865 = vsel %vm1902, %v2863, %v2864
        %v2868 = vsel %vm797, %v1046, 0
        %v2871 = vsel %vm797, %v2837, 0
        %v2874 = vsel %vm797, %v2838, 0
        %v2877 = vsel %vm797, %v2839, 0
        %v2880 = vsel %vm797, %v2840, 0
        %2882 = vmatpush.bf16.xpose.msra.mxu0 0
        %2883 = vmatpush.bf16.xpose.msra.mxu0 0
        %2884 = vmatpush.bf16.xpose.msra.mxu0 0
        %2885 = vmatpush.bf16.xpose.msra.mxu0 0
        %2886 = vmatpush.bf16.xpose.msra.mxu0 %v2880
        %2887 = vmatpush.bf16.xpose.msra.mxu0 %v2877
        %2888 = vmatpush.bf16.xpose.msra.mxu0 %v2874
        %2889 = vmatpush.bf16.xpose.msra.mxu0 %v2871
        %2890 = vmatmul.bf16.gmra.mxu0 %v2868
        %v2891 = vpop.f32.mrf.mxu0
        %v2892 = vadd.f32 %v2865, %v2891
        %v2893 = vpop.f32.mrf.mxu0
        %2894 = vdwg.mxu0
        %v2903 = vunpack.c.l.b16 %v1161
        %v2904 = vunpack.c.l.b16 %v1162
        %v2905 = vunpack.c.l.b16 %v1163
        %v2906 = vunpack.c.l.b16 %v1164
        %v2907 = vunpack.c.l.b16 %v1165
        %v2908 = vunpack.c.l.b16 %v1166
        %v2909 = vunpack.c.l.b16 %v1167
        %v2910 = vunpack.c.l.b16 %v1168
        %v2911 = vpack.c.b16 %v2904, %v2903
        %v2912 = vpack.c.b16 %v2906, %v2905
        %v2913 = vpack.c.b16 %v2908, %v2907
        %v2914 = vpack.c.b16 %v2910, %v2909
        %v2923 = vperm.slane %v1795, %v1870
        %v2924 = vperm.slane %v1798, %v1872
        %v2925 = vsel %vm1874, %v2924, %v2923
        %v2926 = vperm.slane %v1801, %v1876
        %v2927 = vsel %vm1878, %v2926, %v2925
        %v2928 = vperm.slane %v1804, %v1880
        %v2929 = vsel %vm1882, %v2928, %v2927
        %v2930 = vperm.slane %v1807, %v1884
        %v2931 = vsel %vm1886, %v2930, %v2929
        %v2932 = vperm.slane %v1810, %v1888
        %v2933 = vsel %vm1890, %v2932, %v2931
        %v2934 = vperm.slane %v1813, %v1892
        %v2935 = vsel %vm1894, %v2934, %v2933
        %v2936 = vperm.slane %v1816, %v1896
        %v2937 = vsel %vm1898, %v2936, %v2935
        %v2938 = vsel %vm1900, %v2937, %v2937
        %v2939 = vsel %vm1902, %v2937, %v2938
        %v2942 = vsel %vm797, %v1047, 0
        %v2945 = vsel %vm797, %v2911, 0
        %v2948 = vsel %vm797, %v2912, 0
        %v2951 = vsel %vm797, %v2913, 0
        %v2954 = vsel %vm797, %v2914, 0
        %2956 = vmatpush.bf16.xpose.msra.mxu0 0
        %2957 = vmatpush.bf16.xpose.msra.mxu0 0
        %2958 = vmatpush.bf16.xpose.msra.mxu0 0
        %2959 = vmatpush.bf16.xpose.msra.mxu0 0
        %2960 = vmatpush.bf16.xpose.msra.mxu0 %v2954
        %2961 = vmatpush.bf16.xpose.msra.mxu0 %v2951
        %2962 = vmatpush.bf16.xpose.msra.mxu0 %v2948
        %2963 = vmatpush.bf16.xpose.msra.mxu0 %v2945
        %2964 = vmatmul.bf16.gmra.mxu0 %v2942
        %v2965 = vpop.f32.mrf.mxu0
        %v2966 = vadd.f32 %v2939, %v2965
        %v2967 = vpop.f32.mrf.mxu0
        %2968 = vdwg.mxu0
        %v2977 = vunpack.c.l.b16 %v1169
        %v2978 = vunpack.c.l.b16 %v1170
        %v2979 = vunpack.c.l.b16 %v1171
        %v2980 = vunpack.c.l.b16 %v1172
        %v2981 = vunpack.c.l.b16 %v1173
        %v2982 = vunpack.c.l.b16 %v1174
        %v2983 = vunpack.c.l.b16 %v1175
        %v2984 = vunpack.c.l.b16 %v1176
        %v2985 = vpack.c.b16 %v2978, %v2977
        %v2986 = vpack.c.b16 %v2980, %v2979
        %v2987 = vpack.c.b16 %v2982, %v2981
        %v2988 = vpack.c.b16 %v2984, %v2983
        %v2997 = vperm.slane %v1819, %v1870
        %v2998 = vperm.slane %v1822, %v1872
        %v2999 = vsel %vm1874, %v2998, %v2997
        %v3000 = vperm.slane %v1825, %v1876
        %v3001 = vsel %vm1878, %v3000, %v2999
        %v3002 = vperm.slane %v1828, %v1880
        %v3003 = vsel %vm1882, %v3002, %v3001
        %v3004 = vperm.slane %v1831, %v1884
        %v3005 = vsel %vm1886, %v3004, %v3003
        %v3006 = vperm.slane %v1834, %v1888
        %v3007 = vsel %vm1890, %v3006, %v3005
        %v3008 = vperm.slane %v1837, %v1892
        %v3009 = vsel %vm1894, %v3008, %v3007
        %v3010 = vperm.slane %v1840, %v1896
        %v3011 = vsel %vm1898, %v3010, %v3009
        %v3012 = vsel %vm1900, %v3011, %v3011
        %v3013 = vsel %vm1902, %v3011, %v3012
        %v3016 = vsel %vm797, %v1048, 0
        %v3019 = vsel %vm797, %v2985, 0
        %v3022 = vsel %vm797, %v2986, 0
        %v3025 = vsel %vm797, %v2987, 0
        %v3028 = vsel %vm797, %v2988, 0
        %3030 = vmatpush.bf16.xpose.msra.mxu0 0
        %3031 = vmatpush.bf16.xpose.msra.mxu0 0
        %3032 = vmatpush.bf16.xpose.msra.mxu0 0
        %3033 = vmatpush.bf16.xpose.msra.mxu0 0
        %3034 = vmatpush.bf16.xpose.msra.mxu0 %v3028
        %3035 = vmatpush.bf16.xpose.msra.mxu0 %v3025
        %3036 = vmatpush.bf16.xpose.msra.mxu0 %v3022
        %3037 = vmatpush.bf16.xpose.msra.mxu0 %v3019
        %3038 = vmatmul.bf16.gmra.mxu0 %v3016
        %v3039 = vpop.f32.mrf.mxu0
        %v3040 = vadd.f32 %v3013, %v3039
        %v3041 = vpop.f32.mrf.mxu0
        %3042 = vdwg.mxu0
        %3047 = vrot.lane.b32.xlu0 %v1001, 64
        %v3048 = vpop.permute.xlu0 %3047
        %3049 = vrot.lane.b32.xlu0 %v1002, 64
        %v3050 = vpop.permute.xlu0 %3049
        %3051 = vrot.lane.b32.xlu0 %v1003, 64
        %v3052 = vpop.permute.xlu0 %3051
        %3053 = vrot.lane.b32.xlu0 %v1004, 64
        %v3054 = vpop.permute.xlu0 %3053
        %3071 = vst [vmem:[#allocation1] ss:$2 sm:$0xff] %v1930
        %s3072 = scalar_lea.vmem [#allocation1], 1
        %3073 = vst [vmem:[%s3072] ss:$2 sm:$0xff] %v2004
        %s3074 = scalar_lea.vmem [#allocation1], 16
        %3075 = vst [vmem:[%s3074] ss:$2 sm:$0xff] %v2078
        %s3076 = scalar_lea.vmem [#allocation1], 17
        %3077 = vst [vmem:[%s3076] ss:$2 sm:$0xff] %v2152
        %s3078 = scalar_lea.vmem [#allocation1], 32
        %3079 = vst [vmem:[%s3078] ss:$2 sm:$0xff] %v2226
        %s3080 = scalar_lea.vmem [#allocation1], 33
        %3081 = vst [vmem:[%s3080] ss:$2 sm:$0xff] %v2300
        %s3082 = scalar_lea.vmem [#allocation1], 48
        %3083 = vst [vmem:[%s3082] ss:$2 sm:$0xff] %v2374
        %s3084 = scalar_lea.vmem [#allocation1], 49
        %3085 = vst [vmem:[%s3084] ss:$2 sm:$0xff] %v2448
        %v3086 = vld.sshfl [vmem:[#allocation1] sm:$0xff pattern:$0x75316420]
        %v3087 = vld.sshfl [vmem:[#allocation1 + $0x10] sm:$0xff pattern:$0x75316420]
        %v3088 = vld.sshfl [vmem:[#allocation1 + $0x20] sm:$0xff pattern:$0x75316420]
        %v3089 = vld.sshfl [vmem:[#allocation1 + $0x30] sm:$0xff pattern:$0x75316420]
        %3090 = vst [vmem:[#allocation1] ss:$2 sm:$0xff] %v2522
        %3091 = vst [vmem:[%s3072] ss:$2 sm:$0xff] %v2596
        %3092 = vst [vmem:[%s3074] ss:$2 sm:$0xff] %v2670
        %3093 = vst [vmem:[%s3076] ss:$2 sm:$0xff] %v2744
        %3094 = vst [vmem:[%s3078] ss:$2 sm:$0xff] %v2818
        %3095 = vst [vmem:[%s3080] ss:$2 sm:$0xff] %v2892
        %3096 = vst [vmem:[%s3082] ss:$2 sm:$0xff] %v2966
        %3097 = vst [vmem:[%s3084] ss:$2 sm:$0xff] %v3040
        %v3098 = vld.sshfl [vmem:[#allocation1] sm:$0xff pattern:$0x75316420]
        %v3099 = vld.sshfl [vmem:[#allocation1 + $0x10] sm:$0xff pattern:$0x75316420]
        %v3100 = vld.sshfl [vmem:[#allocation1 + $0x20] sm:$0xff pattern:$0x75316420]
        %v3101 = vld.sshfl [vmem:[#allocation1 + $0x30] sm:$0xff pattern:$0x75316420]
        %v3111 = vsel %vm797, %v1001, 0
        %v3114 = vsel %vm797, %v1002, 0
        %v3117 = vsel %vm797, %v1003, 0
        %v3120 = vsel %vm797, %v1004, 0
        %v3123 = vsel %vm797, %v3048, 0
        %v3126 = vsel %vm797, %v3050, 0
        %v3129 = vsel %vm797, %v3052, 0
        %v3132 = vsel %vm797, %v3054, 0
        %3134 = vmatpush.bf16.xpose.msra.mxu0 0
        %3135 = vmatpush.bf16.xpose.msra.mxu0 0
        %3136 = vmatpush.bf16.xpose.msra.mxu0 0
        %3137 = vmatpush.bf16.xpose.msra.mxu0 0
        %3138 = vmatpush.bf16.xpose.msra.mxu0 %v3132
        %3139 = vmatpush.bf16.xpose.msra.mxu0 %v3129
        %3140 = vmatpush.bf16.xpose.msra.mxu0 %v3126
        %3141 = vmatpush.bf16.xpose.msra.mxu0 %v3123
        %3142 = vmatmul.bf16.gmra.mxu0 %v3111
        %v3143 = vpop.f32.mrf.mxu0
        %v3144 = vadd.f32 %v3086, %v3143
        %v3145 = vpop.f32.mrf.mxu0
        %v3146 = vadd.f32 %v3087, %v3145
        %3147 = vmatmul.bf16.gmra.mxu0 %v3114
        %v3148 = vpop.f32.mrf.mxu0
        %v3149 = vadd.f32 %v3088, %v3148
        %v3150 = vpop.f32.mrf.mxu0
        %v3151 = vadd.f32 %v3089, %v3150
        %3152 = vmatmul.bf16.gmra.mxu0 %v3117
        %v3153 = vpop.f32.mrf.mxu0
        %v3154 = vadd.f32 %v3098, %v3153
        %v3155 = vpop.f32.mrf.mxu0
        %v3156 = vadd.f32 %v3099, %v3155
        %3157 = vmatmul.bf16.gmra.mxu0 %v3120
        %v3158 = vpop.f32.mrf.mxu0
        %v3159 = vadd.f32 %v3100, %v3158
        %v3160 = vpop.f32.mrf.mxu0
        %v3161 = vadd.f32 %v3101, %v3160
        %3162 = vdwg.mxu0
        %v3163 = vmul.f32 %v3144, 0.17677669
        %v3164 = vmul.f32 %v3146, 0.17677669
        %v3165 = vmul.f32 %v3149, 0.17677669
        %v3166 = vmul.f32 %v3151, 0.17677669
        %v3167 = vmul.f32 %v3154, 0.17677669
        %v3168 = vmul.f32 %v3156, 0.17677669
        %v3169 = vmul.f32 %v3159, 0.17677669
        %v3170 = vmul.f32 %v3161, 0.17677669
        %v3171 = vadd.f32 %v3163, %v639
        %v3172 = vadd.f32 %v3164, %v640
        %v3173 = vadd.f32 %v3165, %v641
        %v3174 = vadd.f32 %v3166, %v642
        %v3175 = vadd.f32 %v3167, %v643
        %v3176 = vadd.f32 %v3168, %v644
        %v3177 = vadd.f32 %v3169, %v645
        %v3178 = vadd.f32 %v3170, %v646
        %v3179 = vsel %vm908, %v3171, -inf
        %3180 = vmax.xlane.f32.xlu0 %v3179
        %v3181 = vpop.xlane.xlu0 %3180
        %v3182 = vsel %vm908, %v3172, -inf
        %3183 = vmax.xlane.f32.xlu0 %v3182
        %v3184 = vpop.xlane.xlu0 %3183
        %v3185 = vsel %vm908, %v3173, -inf
        %3186 = vmax.xlane.f32.xlu0 %v3185
        %v3187 = vpop.xlane.xlu0 %3186
        %v3188 = vsel %vm908, %v3174, -inf
        %3189 = vmax.xlane.f32.xlu0 %v3188
        %v3190 = vpop.xlane.xlu0 %3189
        %v3191 = vsel %vm908, %v3175, -inf
        %3192 = vmax.xlane.f32.xlu0 %v3191
        %v3193 = vpop.xlane.xlu0 %3192
        %v3194 = vsel %vm908, %v3176, -inf
        %3195 = vmax.xlane.f32.xlu0 %v3194
        %v3196 = vpop.xlane.xlu0 %3195
        %v3197 = vsel %vm908, %v3177, -inf
        %3198 = vmax.xlane.f32.xlu0 %v3197
        %v3199 = vpop.xlane.xlu0 %3198
        %v3200 = vsel %vm908, %v3178, -inf
        %3201 = vmax.xlane.f32.xlu0 %v3200
        %v3202 = vpop.xlane.xlu0 %3201
        %v3203 = vsub.f32 %v3171, %v3181
        %v3204 = vsub.f32 %v3172, %v3184
        %v3205 = vsub.f32 %v3173, %v3187
        %v3206 = vsub.f32 %v3174, %v3190
        %v3207 = vsub.f32 %v3175, %v3193
        %v3208 = vsub.f32 %v3176, %v3196
        %v3209 = vsub.f32 %v3177, %v3199
        %v3210 = vsub.f32 %v3178, %v3202
        %v3211 = vmul.f32 %v3203, 1.442695
        %v3212 = vpow.pop %v3211
        %v3213 = vmul.f32 %v3204, 1.442695
        %v3214 = vpow.pop %v3213
        %v3215 = vmul.f32 %v3205, 1.442695
        %v3216 = vpow.pop %v3215
        %v3217 = vmul.f32 %v3206, 1.442695
        %v3218 = vpow.pop %v3217
        %v3219 = vmul.f32 %v3207, 1.442695
        %v3220 = vpow.pop %v3219
        %v3221 = vmul.f32 %v3208, 1.442695
        %v3222 = vpow.pop %v3221
        %v3223 = vmul.f32 %v3209, 1.442695
        %v3224 = vpow.pop %v3223
        %v3225 = vmul.f32 %v3210, 1.442695
        %v3226 = vpow.pop %v3225
        %v3227 = vsel %vm908, %v3212, 0.0
        %3228 = vadd.xlane.f32.xlu0 %v3227
        %v3229 = vpop.xlane.xlu0 %3228
        %v3230 = vsel %vm908, %v3214, 0.0
        %3231 = vadd.xlane.f32.xlu0 %v3230
        %v3232 = vpop.xlane.xlu0 %3231
        %v3233 = vsel %vm908, %v3216, 0.0
        %3234 = vadd.xlane.f32.xlu0 %v3233
        %v3235 = vpop.xlane.xlu0 %3234
        %v3236 = vsel %vm908, %v3218, 0.0
        %3237 = vadd.xlane.f32.xlu0 %v3236
        %v3238 = vpop.xlane.xlu0 %3237
        %v3239 = vsel %vm908, %v3220, 0.0
        %3240 = vadd.xlane.f32.xlu0 %v3239
        %v3241 = vpop.xlane.xlu0 %3240
        %v3242 = vsel %vm908, %v3222, 0.0
        %3243 = vadd.xlane.f32.xlu0 %v3242
        %v3244 = vpop.xlane.xlu0 %3243
        %v3245 = vsel %vm908, %v3224, 0.0
        %3246 = vadd.xlane.f32.xlu0 %v3245
        %v3247 = vpop.xlane.xlu0 %3246
        %v3248 = vsel %vm908, %v3226, 0.0
        %3249 = vadd.xlane.f32.xlu0 %v3248
        %v3250 = vpop.xlane.xlu0 %3249
        %v3251 = vrcp.pop %v3229
        %v3252 = vrcp.pop %v3232
        %v3253 = vrcp.pop %v3235
        %v3254 = vrcp.pop %v3238
        %v3255 = vrcp.pop %v3241
        %v3256 = vrcp.pop %v3244
        %v3257 = vrcp.pop %v3247
        %v3258 = vrcp.pop %v3250
        %v3259 = vmul.f32 %v3212, %v3251
        %v3260 = vmul.f32 %v3214, %v3252
        %v3261 = vmul.f32 %v3216, %v3253
        %v3262 = vmul.f32 %v3218, %v3254
        %v3263 = vmul.f32 %v3220, %v3255
        %v3264 = vmul.f32 %v3222, %v3256
        %v3265 = vmul.f32 %v3224, %v3257
        %v3266 = vmul.f32 %v3226, %v3258
        %v3267 = vpack.c.bf16 %v3260, %v3259
        %v3268 = vpack.c.bf16 %v3262, %v3261
        %v3269 = vpack.c.bf16 %v3264, %v3263
        %v3270 = vpack.c.bf16 %v3266, %v3265
        %v3279 = vrot.slane %v3259, 4
        %v3280 = vrot.slane %v3260, 4
        %v3281 = vrot.slane %v3261, 4
        %v3282 = vrot.slane %v3262, 4
        %v3283 = vrot.slane %v3263, 4
        %v3284 = vrot.slane %v3264, 4
        %v3285 = vrot.slane %v3265, 4
        %v3286 = vrot.slane %v3266, 4
        %v3295 = vpack.c.bf16 %v3259, %v3259
        %v3296 = vpack.c.bf16 %v3279, %v3279
        %v3297 = vpack.c.bf16 %v3260, %v3260
        %v3298 = vpack.c.bf16 %v3280, %v3280
        %v3299 = vpack.c.bf16 %v3261, %v3261
        %v3300 = vpack.c.bf16 %v3281, %v3281
        %v3301 = vpack.c.bf16 %v3262, %v3262
        %v3302 = vpack.c.bf16 %v3282, %v3282
        %v3303 = vpack.c.bf16 %v3263, %v3263
        %v3304 = vpack.c.bf16 %v3283, %v3283
        %v3305 = vpack.c.bf16 %v3264, %v3264
        %v3306 = vpack.c.bf16 %v3284, %v3284
        %v3307 = vpack.c.bf16 %v3265, %v3265
        %v3308 = vpack.c.bf16 %v3285, %v3285
        %v3309 = vpack.c.bf16 %v3266, %v3266
        %v3310 = vpack.c.bf16 %v3286, %v3286
        %v3311 = vld [vmem:[%s8] sm:$0xf]
        %v3312 = vld [vmem:[%s8 + $0x4] sm:$0xf]
        %v3313 = vld [vmem:[%s8 + $0x8] sm:$0xf]
        %v3314 = vld [vmem:[%s8 + $0xc] sm:$0xf]
        %v3315 = vld [vmem:[%s8 + $0x10] sm:$0xf]
        %v3316 = vld [vmem:[%s8 + $0x14] sm:$0xf]
        %v3317 = vld [vmem:[%s8 + $0x18] sm:$0xf]
        %v3318 = vld [vmem:[%s8 + $0x1c] sm:$0xf]
        %v3319 = vld [vmem:[%s8 + $0x20] sm:$0xf]
        %v3320 = vld [vmem:[%s8 + $0x24] sm:$0xf]
        %v3321 = vld [vmem:[%s8 + $0x28] sm:$0xf]
        %v3322 = vld [vmem:[%s8 + $0x2c] sm:$0xf]
        %v3323 = vld [vmem:[%s8 + $0x30] sm:$0xf]
        %v3324 = vld [vmem:[%s8 + $0x34] sm:$0xf]
        %v3325 = vld [vmem:[%s8 + $0x38] sm:$0xf]
        %v3326 = vld [vmem:[%s8 + $0x3c] sm:$0xf]
        %v3327 = vld [vmem:[%s8 + $0x40] sm:$0xf]
        %v3328 = vld [vmem:[%s8 + $0x44] sm:$0xf]
        %v3329 = vld [vmem:[%s8 + $0x48] sm:$0xf]
        %v3330 = vld [vmem:[%s8 + $0x4c] sm:$0xf]
        %v3331 = vld [vmem:[%s8 + $0x50] sm:$0xf]
        %v3332 = vld [vmem:[%s8 + $0x54] sm:$0xf]
        %v3333 = vld [vmem:[%s8 + $0x58] sm:$0xf]
        %v3334 = vld [vmem:[%s8 + $0x5c] sm:$0xf]
        %v3335 = vld [vmem:[%s8 + $0x60] sm:$0xf]
        %v3336 = vld [vmem:[%s8 + $0x64] sm:$0xf]
        %v3337 = vld [vmem:[%s8 + $0x68] sm:$0xf]
        %v3338 = vld [vmem:[%s8 + $0x6c] sm:$0xf]
        %v3339 = vld [vmem:[%s8 + $0x70] sm:$0xf]
        %v3340 = vld [vmem:[%s8 + $0x74] sm:$0xf]
        %v3341 = vld [vmem:[%s8 + $0x78] sm:$0xf]
        %v3342 = vld [vmem:[%s8 + $0x7c] sm:$0xf]
        %v3343 = vld [vmem:[%s8 + $0x80] sm:$0xf]
        %v3344 = vld [vmem:[%s8 + $0x84] sm:$0xf]
        %v3345 = vld [vmem:[%s8 + $0x88] sm:$0xf]
        %v3346 = vld [vmem:[%s8 + $0x8c] sm:$0xf]
        %v3347 = vld [vmem:[%s8 + $0x90] sm:$0xf]
        %v3348 = vld [vmem:[%s8 + $0x94] sm:$0xf]
        %v3349 = vld [vmem:[%s8 + $0x98] sm:$0xf]
        %v3350 = vld [vmem:[%s8 + $0x9c] sm:$0xf]
        %v3351 = vld [vmem:[%s8 + $0xa0] sm:$0xf]
        %v3352 = vld [vmem:[%s8 + $0xa4] sm:$0xf]
        %v3353 = vld [vmem:[%s8 + $0xa8] sm:$0xf]
        %v3354 = vld [vmem:[%s8 + $0xac] sm:$0xf]
        %v3355 = vld [vmem:[%s8 + $0xb0] sm:$0xf]
        %v3356 = vld [vmem:[%s8 + $0xb4] sm:$0xf]
        %v3357 = vld [vmem:[%s8 + $0xb8] sm:$0xf]
        %v3358 = vld [vmem:[%s8 + $0xbc] sm:$0xf]
        %v3359 = vld [vmem:[%s8 + $0xc0] sm:$0xf]
        %v3360 = vld [vmem:[%s8 + $0xc4] sm:$0xf]
        %v3361 = vld [vmem:[%s8 + $0xc8] sm:$0xf]
        %v3362 = vld [vmem:[%s8 + $0xcc] sm:$0xf]
        %v3363 = vld [vmem:[%s8 + $0xd0] sm:$0xf]
        %v3364 = vld [vmem:[%s8 + $0xd4] sm:$0xf]
        %v3365 = vld [vmem:[%s8 + $0xd8] sm:$0xf]
        %v3366 = vld [vmem:[%s8 + $0xdc] sm:$0xf]
        %v3367 = vld [vmem:[%s8 + $0xe0] sm:$0xf]
        %v3368 = vld [vmem:[%s8 + $0xe4] sm:$0xf]
        %v3369 = vld [vmem:[%s8 + $0xe8] sm:$0xf]
        %v3370 = vld [vmem:[%s8 + $0xec] sm:$0xf]
        %v3371 = vld [vmem:[%s8 + $0xf0] sm:$0xf]
        %v3372 = vld [vmem:[%s8 + $0xf4] sm:$0xf]
        %v3373 = vld [vmem:[%s8 + $0xf8] sm:$0xf]
        %v3374 = vld [vmem:[%s8 + $0xfc] sm:$0xf]
        %v3375 = vld [vmem:[%s8 + $0x100] sm:$0xf]
        %v3376 = vld [vmem:[%s8 + $0x104] sm:$0xf]
        %v3377 = vld [vmem:[%s8 + $0x108] sm:$0xf]
        %v3378 = vld [vmem:[%s8 + $0x10c] sm:$0xf]
        %v3379 = vld [vmem:[%s8 + $0x110] sm:$0xf]
        %v3380 = vld [vmem:[%s8 + $0x114] sm:$0xf]
        %v3381 = vld [vmem:[%s8 + $0x118] sm:$0xf]
        %v3382 = vld [vmem:[%s8 + $0x11c] sm:$0xf]
        %v3383 = vld [vmem:[%s8 + $0x120] sm:$0xf]
        %v3384 = vld [vmem:[%s8 + $0x124] sm:$0xf]
        %v3385 = vld [vmem:[%s8 + $0x128] sm:$0xf]
        %v3386 = vld [vmem:[%s8 + $0x12c] sm:$0xf]
        %v3387 = vld [vmem:[%s8 + $0x130] sm:$0xf]
        %v3388 = vld [vmem:[%s8 + $0x134] sm:$0xf]
        %v3389 = vld [vmem:[%s8 + $0x138] sm:$0xf]
        %v3390 = vld [vmem:[%s8 + $0x13c] sm:$0xf]
        %v3391 = vld [vmem:[%s8 + $0x140] sm:$0xf]
        %v3392 = vld [vmem:[%s8 + $0x144] sm:$0xf]
        %v3393 = vld [vmem:[%s8 + $0x148] sm:$0xf]
        %v3394 = vld [vmem:[%s8 + $0x14c] sm:$0xf]
        %v3395 = vld [vmem:[%s8 + $0x150] sm:$0xf]
        %v3396 = vld [vmem:[%s8 + $0x154] sm:$0xf]
        %v3397 = vld [vmem:[%s8 + $0x158] sm:$0xf]
        %v3398 = vld [vmem:[%s8 + $0x15c] sm:$0xf]
        %v3399 = vld [vmem:[%s8 + $0x160] sm:$0xf]
        %v3400 = vld [vmem:[%s8 + $0x164] sm:$0xf]
        %v3401 = vld [vmem:[%s8 + $0x168] sm:$0xf]
        %v3402 = vld [vmem:[%s8 + $0x16c] sm:$0xf]
        %v3403 = vld [vmem:[%s8 + $0x170] sm:$0xf]
        %v3404 = vld [vmem:[%s8 + $0x174] sm:$0xf]
        %v3405 = vld [vmem:[%s8 + $0x178] sm:$0xf]
        %v3406 = vld [vmem:[%s8 + $0x17c] sm:$0xf]
        %v3407 = vld [vmem:[%s8 + $0x180] sm:$0xf]
        %v3408 = vld [vmem:[%s8 + $0x184] sm:$0xf]
        %v3409 = vld [vmem:[%s8 + $0x188] sm:$0xf]
        %v3410 = vld [vmem:[%s8 + $0x18c] sm:$0xf]
        %v3411 = vld [vmem:[%s8 + $0x190] sm:$0xf]
        %v3412 = vld [vmem:[%s8 + $0x194] sm:$0xf]
        %v3413 = vld [vmem:[%s8 + $0x198] sm:$0xf]
        %v3414 = vld [vmem:[%s8 + $0x19c] sm:$0xf]
        %v3415 = vld [vmem:[%s8 + $0x1a0] sm:$0xf]
        %v3416 = vld [vmem:[%s8 + $0x1a4] sm:$0xf]
        %v3417 = vld [vmem:[%s8 + $0x1a8] sm:$0xf]
        %v3418 = vld [vmem:[%s8 + $0x1ac] sm:$0xf]
        %v3419 = vld [vmem:[%s8 + $0x1b0] sm:$0xf]
        %v3420 = vld [vmem:[%s8 + $0x1b4] sm:$0xf]
        %v3421 = vld [vmem:[%s8 + $0x1b8] sm:$0xf]
        %v3422 = vld [vmem:[%s8 + $0x1bc] sm:$0xf]
        %v3423 = vld [vmem:[%s8 + $0x1c0] sm:$0xf]
        %v3424 = vld [vmem:[%s8 + $0x1c4] sm:$0xf]
        %v3425 = vld [vmem:[%s8 + $0x1c8] sm:$0xf]
        %v3426 = vld [vmem:[%s8 + $0x1cc] sm:$0xf]
        %v3427 = vld [vmem:[%s8 + $0x1d0] sm:$0xf]
        %v3428 = vld [vmem:[%s8 + $0x1d4] sm:$0xf]
        %v3429 = vld [vmem:[%s8 + $0x1d8] sm:$0xf]
        %v3430 = vld [vmem:[%s8 + $0x1dc] sm:$0xf]
        %v3431 = vld [vmem:[%s8 + $0x1e0] sm:$0xf]
        %v3432 = vld [vmem:[%s8 + $0x1e4] sm:$0xf]
        %v3433 = vld [vmem:[%s8 + $0x1e8] sm:$0xf]
        %v3434 = vld [vmem:[%s8 + $0x1ec] sm:$0xf]
        %v3435 = vld [vmem:[%s8 + $0x1f0] sm:$0xf]
        %v3436 = vld [vmem:[%s8 + $0x1f4] sm:$0xf]
        %v3437 = vld [vmem:[%s8 + $0x1f8] sm:$0xf]
        %v3438 = vld [vmem:[%s8 + $0x1fc] sm:$0xf]
        %v3447 = vunpack.c.l.b16 %v3311
        %v3448 = vunpack.c.l.b16 %v3312
        %v3449 = vunpack.c.l.b16 %v3313
        %v3450 = vunpack.c.l.b16 %v3314
        %v3451 = vunpack.c.l.b16 %v3315
        %v3452 = vunpack.c.l.b16 %v3316
        %v3453 = vunpack.c.l.b16 %v3317
        %v3454 = vunpack.c.l.b16 %v3318
        %v3455 = vpack.c.b16 %v3448, %v3447
        %v3456 = vpack.c.b16 %v3450, %v3449
        %v3457 = vpack.c.b16 %v3452, %v3451
        %v3458 = vpack.c.b16 %v3454, %v3453
        %v3464 = vsel %vm908, %v3295, 0
        %3466 = vmatpush.bf16.msra.mxu0 0
        %3467 = vmatpush.bf16.msra.mxu0 0
        %3468 = vmatpush.bf16.msra.mxu0 0
        %3469 = vmatpush.bf16.msra.mxu0 0
        %3470 = vmatpush.bf16.msra.mxu0 %v3458
        %3471 = vmatpush.bf16.msra.mxu0 %v3457
        %3472 = vmatpush.bf16.msra.mxu0 %v3456
        %3473 = vmatpush.bf16.msra.mxu0 %v3455
        %3474 = vmatmul.bf16.gmra.mxu0 %v3464
        %v3475 = vpop.f32.mrf.mxu0
        %v3476 = vadd.f32 0.0, %v3475
        %v3477 = vpop.f32.mrf.mxu0
        %3478 = vdwg.mxu0
        %v3487 = vunpack.c.l.b16 %v3319
        %v3488 = vunpack.c.l.b16 %v3320
        %v3489 = vunpack.c.l.b16 %v3321
        %v3490 = vunpack.c.l.b16 %v3322
        %v3491 = vunpack.c.l.b16 %v3323
        %v3492 = vunpack.c.l.b16 %v3324
        %v3493 = vunpack.c.l.b16 %v3325
        %v3494 = vunpack.c.l.b16 %v3326
        %v3495 = vpack.c.b16 %v3488, %v3487
        %v3496 = vpack.c.b16 %v3490, %v3489
        %v3497 = vpack.c.b16 %v3492, %v3491
        %v3498 = vpack.c.b16 %v3494, %v3493
        %v3504 = vsel %vm908, %v3296, 0
        %3506 = vmatpush.bf16.msra.mxu0 0
        %3507 = vmatpush.bf16.msra.mxu0 0
        %3508 = vmatpush.bf16.msra.mxu0 0
        %3509 = vmatpush.bf16.msra.mxu0 0
        %3510 = vmatpush.bf16.msra.mxu0 %v3498
        %3511 = vmatpush.bf16.msra.mxu0 %v3497
        %3512 = vmatpush.bf16.msra.mxu0 %v3496
        %3513 = vmatpush.bf16.msra.mxu0 %v3495
        %3514 = vmatmul.bf16.gmra.mxu0 %v3504
        %v3515 = vpop.f32.mrf.mxu0
        %v3516 = vadd.f32 0.0, %v3515
        %v3517 = vpop.f32.mrf.mxu0
        %3518 = vdwg.mxu0
        %v3527 = vunpack.c.l.b16 %v3327
        %v3528 = vunpack.c.l.b16 %v3328
        %v3529 = vunpack.c.l.b16 %v3329
        %v3530 = vunpack.c.l.b16 %v3330
        %v3531 = vunpack.c.l.b16 %v3331
        %v3532 = vunpack.c.l.b16 %v3332
        %v3533 = vunpack.c.l.b16 %v3333
        %v3534 = vunpack.c.l.b16 %v3334
        %v3535 = vpack.c.b16 %v3528, %v3527
        %v3536 = vpack.c.b16 %v3530, %v3529
        %v3537 = vpack.c.b16 %v3532, %v3531
        %v3538 = vpack.c.b16 %v3534, %v3533
        %v3544 = vsel %vm908, %v3297, 0
        %3546 = vmatpush.bf16.msra.mxu0 0
        %3547 = vmatpush.bf16.msra.mxu0 0
        %3548 = vmatpush.bf16.msra.mxu0 0
        %3549 = vmatpush.bf16.msra.mxu0 0
        %3550 = vmatpush.bf16.msra.mxu0 %v3538
        %3551 = vmatpush.bf16.msra.mxu0 %v3537
        %3552 = vmatpush.bf16.msra.mxu0 %v3536
        %3553 = vmatpush.bf16.msra.mxu0 %v3535
        %3554 = vmatmul.bf16.gmra.mxu0 %v3544
        %v3555 = vpop.f32.mrf.mxu0
        %v3556 = vadd.f32 0.0, %v3555
        %v3557 = vpop.f32.mrf.mxu0
        %3558 = vdwg.mxu0
        %v3567 = vunpack.c.l.b16 %v3335
        %v3568 = vunpack.c.l.b16 %v3336
        %v3569 = vunpack.c.l.b16 %v3337
        %v3570 = vunpack.c.l.b16 %v3338
        %v3571 = vunpack.c.l.b16 %v3339
        %v3572 = vunpack.c.l.b16 %v3340
        %v3573 = vunpack.c.l.b16 %v3341
        %v3574 = vunpack.c.l.b16 %v3342
        %v3575 = vpack.c.b16 %v3568, %v3567
        %v3576 = vpack.c.b16 %v3570, %v3569
        %v3577 = vpack.c.b16 %v3572, %v3571
        %v3578 = vpack.c.b16 %v3574, %v3573
        %v3584 = vsel %vm908, %v3298, 0
        %3586 = vmatpush.bf16.msra.mxu0 0
        %3587 = vmatpush.bf16.msra.mxu0 0
        %3588 = vmatpush.bf16.msra.mxu0 0
        %3589 = vmatpush.bf16.msra.mxu0 0
        %3590 = vmatpush.bf16.msra.mxu0 %v3578
        %3591 = vmatpush.bf16.msra.mxu0 %v3577
        %3592 = vmatpush.bf16.msra.mxu0 %v3576
        %3593 = vmatpush.bf16.msra.mxu0 %v3575
        %3594 = vmatmul.bf16.gmra.mxu0 %v3584
        %v3595 = vpop.f32.mrf.mxu0
        %v3596 = vadd.f32 0.0, %v3595
        %v3597 = vpop.f32.mrf.mxu0
        %3598 = vdwg.mxu0
        %v3607 = vunpack.c.l.b16 %v3343
        %v3608 = vunpack.c.l.b16 %v3344
        %v3609 = vunpack.c.l.b16 %v3345
        %v3610 = vunpack.c.l.b16 %v3346
        %v3611 = vunpack.c.l.b16 %v3347
        %v3612 = vunpack.c.l.b16 %v3348
        %v3613 = vunpack.c.l.b16 %v3349
        %v3614 = vunpack.c.l.b16 %v3350
        %v3615 = vpack.c.b16 %v3608, %v3607
        %v3616 = vpack.c.b16 %v3610, %v3609
        %v3617 = vpack.c.b16 %v3612, %v3611
        %v3618 = vpack.c.b16 %v3614, %v3613
        %v3624 = vsel %vm908, %v3299, 0
        %3626 = vmatpush.bf16.msra.mxu0 0
        %3627 = vmatpush.bf16.msra.mxu0 0
        %3628 = vmatpush.bf16.msra.mxu0 0
        %3629 = vmatpush.bf16.msra.mxu0 0
        %3630 = vmatpush.bf16.msra.mxu0 %v3618
        %3631 = vmatpush.bf16.msra.mxu0 %v3617
        %3632 = vmatpush.bf16.msra.mxu0 %v3616
        %3633 = vmatpush.bf16.msra.mxu0 %v3615
        %3634 = vmatmul.bf16.gmra.mxu0 %v3624
        %v3635 = vpop.f32.mrf.mxu0
        %v3636 = vadd.f32 0.0, %v3635
        %v3637 = vpop.f32.mrf.mxu0
        %3638 = vdwg.mxu0
        %v3647 = vunpack.c.l.b16 %v3351
        %v3648 = vunpack.c.l.b16 %v3352
        %v3649 = vunpack.c.l.b16 %v3353
        %v3650 = vunpack.c.l.b16 %v3354
        %v3651 = vunpack.c.l.b16 %v3355
        %v3652 = vunpack.c.l.b16 %v3356
        %v3653 = vunpack.c.l.b16 %v3357
        %v3654 = vunpack.c.l.b16 %v3358
        %v3655 = vpack.c.b16 %v3648, %v3647
        %v3656 = vpack.c.b16 %v3650, %v3649
        %v3657 = vpack.c.b16 %v3652, %v3651
        %v3658 = vpack.c.b16 %v3654, %v3653
        %v3664 = vsel %vm908, %v3300, 0
        %3666 = vmatpush.bf16.msra.mxu0 0
        %3667 = vmatpush.bf16.msra.mxu0 0
        %3668 = vmatpush.bf16.msra.mxu0 0
        %3669 = vmatpush.bf16.msra.mxu0 0
        %3670 = vmatpush.bf16.msra.mxu0 %v3658
        %3671 = vmatpush.bf16.msra.mxu0 %v3657
        %3672 = vmatpush.bf16.msra.mxu0 %v3656
        %3673 = vmatpush.bf16.msra.mxu0 %v3655
        %3674 = vmatmul.bf16.gmra.mxu0 %v3664
        %v3675 = vpop.f32.mrf.mxu0
        %v3676 = vadd.f32 0.0, %v3675
        %v3677 = vpop.f32.mrf.mxu0
        %3678 = vdwg.mxu0
        %v3687 = vunpack.c.l.b16 %v3359
        %v3688 = vunpack.c.l.b16 %v3360
        %v3689 = vunpack.c.l.b16 %v3361
        %v3690 = vunpack.c.l.b16 %v3362
        %v3691 = vunpack.c.l.b16 %v3363
        %v3692 = vunpack.c.l.b16 %v3364
        %v3693 = vunpack.c.l.b16 %v3365
        %v3694 = vunpack.c.l.b16 %v3366
        %v3695 = vpack.c.b16 %v3688, %v3687
        %v3696 = vpack.c.b16 %v3690, %v3689
        %v3697 = vpack.c.b16 %v3692, %v3691
        %v3698 = vpack.c.b16 %v3694, %v3693
        %v3704 = vsel %vm908, %v3301, 0
        %3706 = vmatpush.bf16.msra.mxu0 0
        %3707 = vmatpush.bf16.msra.mxu0 0
        %3708 = vmatpush.bf16.msra.mxu0 0
        %3709 = vmatpush.bf16.msra.mxu0 0
        %3710 = vmatpush.bf16.msra.mxu0 %v3698
        %3711 = vmatpush.bf16.msra.mxu0 %v3697
        %3712 = vmatpush.bf16.msra.mxu0 %v3696
        %3713 = vmatpush.bf16.msra.mxu0 %v3695
        %3714 = vmatmul.bf16.gmra.mxu0 %v3704
        %v3715 = vpop.f32.mrf.mxu0
        %v3716 = vadd.f32 0.0, %v3715
        %v3717 = vpop.f32.mrf.mxu0
        %3718 = vdwg.mxu0
        %v3727 = vunpack.c.l.b16 %v3367
        %v3728 = vunpack.c.l.b16 %v3368
        %v3729 = vunpack.c.l.b16 %v3369
        %v3730 = vunpack.c.l.b16 %v3370
        %v3731 = vunpack.c.l.b16 %v3371
        %v3732 = vunpack.c.l.b16 %v3372
        %v3733 = vunpack.c.l.b16 %v3373
        %v3734 = vunpack.c.l.b16 %v3374
        %v3735 = vpack.c.b16 %v3728, %v3727
        %v3736 = vpack.c.b16 %v3730, %v3729
        %v3737 = vpack.c.b16 %v3732, %v3731
        %v3738 = vpack.c.b16 %v3734, %v3733
        %v3744 = vsel %vm908, %v3302, 0
        %3746 = vmatpush.bf16.msra.mxu0 0
        %3747 = vmatpush.bf16.msra.mxu0 0
        %3748 = vmatpush.bf16.msra.mxu0 0
        %3749 = vmatpush.bf16.msra.mxu0 0
        %3750 = vmatpush.bf16.msra.mxu0 %v3738
        %3751 = vmatpush.bf16.msra.mxu0 %v3737
        %3752 = vmatpush.bf16.msra.mxu0 %v3736
        %3753 = vmatpush.bf16.msra.mxu0 %v3735
        %3754 = vmatmul.bf16.gmra.mxu0 %v3744
        %v3755 = vpop.f32.mrf.mxu0
        %v3756 = vadd.f32 0.0, %v3755
        %v3757 = vpop.f32.mrf.mxu0
        %3758 = vdwg.mxu0
        %v3767 = vunpack.c.l.b16 %v3375
        %v3768 = vunpack.c.l.b16 %v3376
        %v3769 = vunpack.c.l.b16 %v3377
        %v3770 = vunpack.c.l.b16 %v3378
        %v3771 = vunpack.c.l.b16 %v3379
        %v3772 = vunpack.c.l.b16 %v3380
        %v3773 = vunpack.c.l.b16 %v3381
        %v3774 = vunpack.c.l.b16 %v3382
        %v3775 = vpack.c.b16 %v3768, %v3767
        %v3776 = vpack.c.b16 %v3770, %v3769
        %v3777 = vpack.c.b16 %v3772, %v3771
        %v3778 = vpack.c.b16 %v3774, %v3773
        %v3784 = vsel %vm908, %v3303, 0
        %3786 = vmatpush.bf16.msra.mxu0 0
        %3787 = vmatpush.bf16.msra.mxu0 0
        %3788 = vmatpush.bf16.msra.mxu0 0
        %3789 = vmatpush.bf16.msra.mxu0 0
        %3790 = vmatpush.bf16.msra.mxu0 %v3778
        %3791 = vmatpush.bf16.msra.mxu0 %v3777
        %3792 = vmatpush.bf16.msra.mxu0 %v3776
        %3793 = vmatpush.bf16.msra.mxu0 %v3775
        %3794 = vmatmul.bf16.gmra.mxu0 %v3784
        %v3795 = vpop.f32.mrf.mxu0
        %v3796 = vadd.f32 0.0, %v3795
        %v3797 = vpop.f32.mrf.mxu0
        %3798 = vdwg.mxu0
        %v3807 = vunpack.c.l.b16 %v3383
        %v3808 = vunpack.c.l.b16 %v3384
        %v3809 = vunpack.c.l.b16 %v3385
        %v3810 = vunpack.c.l.b16 %v3386
        %v3811 = vunpack.c.l.b16 %v3387
        %v3812 = vunpack.c.l.b16 %v3388
        %v3813 = vunpack.c.l.b16 %v3389
        %v3814 = vunpack.c.l.b16 %v3390
        %v3815 = vpack.c.b16 %v3808, %v3807
        %v3816 = vpack.c.b16 %v3810, %v3809
        %v3817 = vpack.c.b16 %v3812, %v3811
        %v3818 = vpack.c.b16 %v3814, %v3813
        %v3824 = vsel %vm908, %v3304, 0
        %3826 = vmatpush.bf16.msra.mxu0 0
        %3827 = vmatpush.bf16.msra.mxu0 0
        %3828 = vmatpush.bf16.msra.mxu0 0
        %3829 = vmatpush.bf16.msra.mxu0 0
        %3830 = vmatpush.bf16.msra.mxu0 %v3818
        %3831 = vmatpush.bf16.msra.mxu0 %v3817
        %3832 = vmatpush.bf16.msra.mxu0 %v3816
        %3833 = vmatpush.bf16.msra.mxu0 %v3815
        %3834 = vmatmul.bf16.gmra.mxu0 %v3824
        %v3835 = vpop.f32.mrf.mxu0
        %v3836 = vadd.f32 0.0, %v3835
        %v3837 = vpop.f32.mrf.mxu0
        %3838 = vdwg.mxu0
        %v3847 = vunpack.c.l.b16 %v3391
        %v3848 = vunpack.c.l.b16 %v3392
        %v3849 = vunpack.c.l.b16 %v3393
        %v3850 = vunpack.c.l.b16 %v3394
        %v3851 = vunpack.c.l.b16 %v3395
        %v3852 = vunpack.c.l.b16 %v3396
        %v3853 = vunpack.c.l.b16 %v3397
        %v3854 = vunpack.c.l.b16 %v3398
        %v3855 = vpack.c.b16 %v3848, %v3847
        %v3856 = vpack.c.b16 %v3850, %v3849
        %v3857 = vpack.c.b16 %v3852, %v3851
        %v3858 = vpack.c.b16 %v3854, %v3853
        %v3864 = vsel %vm908, %v3305, 0
        %3866 = vmatpush.bf16.msra.mxu0 0
        %3867 = vmatpush.bf16.msra.mxu0 0
        %3868 = vmatpush.bf16.msra.mxu0 0
        %3869 = vmatpush.bf16.msra.mxu0 0
        %3870 = vmatpush.bf16.msra.mxu0 %v3858
        %3871 = vmatpush.bf16.msra.mxu0 %v3857
        %3872 = vmatpush.bf16.msra.mxu0 %v3856
        %3873 = vmatpush.bf16.msra.mxu0 %v3855
        %3874 = vmatmul.bf16.gmra.mxu0 %v3864
        %v3875 = vpop.f32.mrf.mxu0
        %v3876 = vadd.f32 0.0, %v3875
        %v3877 = vpop.f32.mrf.mxu0
        %3878 = vdwg.mxu0
        %v3887 = vunpack.c.l.b16 %v3399
        %v3888 = vunpack.c.l.b16 %v3400
        %v3889 = vunpack.c.l.b16 %v3401
        %v3890 = vunpack.c.l.b16 %v3402
        %v3891 = vunpack.c.l.b16 %v3403
        %v3892 = vunpack.c.l.b16 %v3404
        %v3893 = vunpack.c.l.b16 %v3405
        %v3894 = vunpack.c.l.b16 %v3406
        %v3895 = vpack.c.b16 %v3888, %v3887
        %v3896 = vpack.c.b16 %v3890, %v3889
        %v3897 = vpack.c.b16 %v3892, %v3891
        %v3898 = vpack.c.b16 %v3894, %v3893
        %v3904 = vsel %vm908, %v3306, 0
        %3906 = vmatpush.bf16.msra.mxu0 0
        %3907 = vmatpush.bf16.msra.mxu0 0
        %3908 = vmatpush.bf16.msra.mxu0 0
        %3909 = vmatpush.bf16.msra.mxu0 0
        %3910 = vmatpush.bf16.msra.mxu0 %v3898
        %3911 = vmatpush.bf16.msra.mxu0 %v3897
        %3912 = vmatpush.bf16.msra.mxu0 %v3896
        %3913 = vmatpush.bf16.msra.mxu0 %v3895
        %3914 = vmatmul.bf16.gmra.mxu0 %v3904
        %v3915 = vpop.f32.mrf.mxu0
        %v3916 = vadd.f32 0.0, %v3915
        %v3917 = vpop.f32.mrf.mxu0
        %3918 = vdwg.mxu0
        %v3927 = vunpack.c.l.b16 %v3407
        %v3928 = vunpack.c.l.b16 %v3408
        %v3929 = vunpack.c.l.b16 %v3409
        %v3930 = vunpack.c.l.b16 %v3410
        %v3931 = vunpack.c.l.b16 %v3411
        %v3932 = vunpack.c.l.b16 %v3412
        %v3933 = vunpack.c.l.b16 %v3413
        %v3934 = vunpack.c.l.b16 %v3414
        %v3935 = vpack.c.b16 %v3928, %v3927
        %v3936 = vpack.c.b16 %v3930, %v3929
        %v3937 = vpack.c.b16 %v3932, %v3931
        %v3938 = vpack.c.b16 %v3934, %v3933
        %v3944 = vsel %vm908, %v3307, 0
        %3946 = vmatpush.bf16.msra.mxu0 0
        %3947 = vmatpush.bf16.msra.mxu0 0
        %3948 = vmatpush.bf16.msra.mxu0 0
        %3949 = vmatpush.bf16.msra.mxu0 0
        %3950 = vmatpush.bf16.msra.mxu0 %v3938
        %3951 = vmatpush.bf16.msra.mxu0 %v3937
        %3952 = vmatpush.bf16.msra.mxu0 %v3936
        %3953 = vmatpush.bf16.msra.mxu0 %v3935
        %3954 = vmatmul.bf16.gmra.mxu0 %v3944
        %v3955 = vpop.f32.mrf.mxu0
        %v3956 = vadd.f32 0.0, %v3955
        %v3957 = vpop.f32.mrf.mxu0
        %3958 = vdwg.mxu0
        %v3967 = vunpack.c.l.b16 %v3415
        %v3968 = vunpack.c.l.b16 %v3416
        %v3969 = vunpack.c.l.b16 %v3417
        %v3970 = vunpack.c.l.b16 %v3418
        %v3971 = vunpack.c.l.b16 %v3419
        %v3972 = vunpack.c.l.b16 %v3420
        %v3973 = vunpack.c.l.b16 %v3421
        %v3974 = vunpack.c.l.b16 %v3422
        %v3975 = vpack.c.b16 %v3968, %v3967
        %v3976 = vpack.c.b16 %v3970, %v3969
        %v3977 = vpack.c.b16 %v3972, %v3971
        %v3978 = vpack.c.b16 %v3974, %v3973
        %v3984 = vsel %vm908, %v3308, 0
        %3986 = vmatpush.bf16.msra.mxu0 0
        %3987 = vmatpush.bf16.msra.mxu0 0
        %3988 = vmatpush.bf16.msra.mxu0 0
        %3989 = vmatpush.bf16.msra.mxu0 0
        %3990 = vmatpush.bf16.msra.mxu0 %v3978
        %3991 = vmatpush.bf16.msra.mxu0 %v3977
        %3992 = vmatpush.bf16.msra.mxu0 %v3976
        %3993 = vmatpush.bf16.msra.mxu0 %v3975
        %3994 = vmatmul.bf16.gmra.mxu0 %v3984
        %v3995 = vpop.f32.mrf.mxu0
        %v3996 = vadd.f32 0.0, %v3995
        %v3997 = vpop.f32.mrf.mxu0
        %3998 = vdwg.mxu0
        %v4007 = vunpack.c.l.b16 %v3423
        %v4008 = vunpack.c.l.b16 %v3424
        %v4009 = vunpack.c.l.b16 %v3425
        %v4010 = vunpack.c.l.b16 %v3426
        %v4011 = vunpack.c.l.b16 %v3427
        %v4012 = vunpack.c.l.b16 %v3428
        %v4013 = vunpack.c.l.b16 %v3429
        %v4014 = vunpack.c.l.b16 %v3430
        %v4015 = vpack.c.b16 %v4008, %v4007
        %v4016 = vpack.c.b16 %v4010, %v4009
        %v4017 = vpack.c.b16 %v4012, %v4011
        %v4018 = vpack.c.b16 %v4014, %v4013
        %v4024 = vsel %vm908, %v3309, 0
        %4026 = vmatpush.bf16.msra.mxu0 0
        %4027 = vmatpush.bf16.msra.mxu0 0
        %4028 = vmatpush.bf16.msra.mxu0 0
        %4029 = vmatpush.bf16.msra.mxu0 0
        %4030 = vmatpush.bf16.msra.mxu0 %v4018
        %4031 = vmatpush.bf16.msra.mxu0 %v4017
        %4032 = vmatpush.bf16.msra.mxu0 %v4016
        %4033 = vmatpush.bf16.msra.mxu0 %v4015
        %4034 = vmatmul.bf16.gmra.mxu0 %v4024
        %v4035 = vpop.f32.mrf.mxu0
        %v4036 = vadd.f32 0.0, %v4035
        %v4037 = vpop.f32.mrf.mxu0
        %4038 = vdwg.mxu0
        %v4047 = vunpack.c.l.b16 %v3431
        %v4048 = vunpack.c.l.b16 %v3432
        %v4049 = vunpack.c.l.b16 %v3433
        %v4050 = vunpack.c.l.b16 %v3434
        %v4051 = vunpack.c.l.b16 %v3435
        %v4052 = vunpack.c.l.b16 %v3436
        %v4053 = vunpack.c.l.b16 %v3437
        %v4054 = vunpack.c.l.b16 %v3438
        %v4055 = vpack.c.b16 %v4048, %v4047
        %v4056 = vpack.c.b16 %v4050, %v4049
        %v4057 = vpack.c.b16 %v4052, %v4051
        %v4058 = vpack.c.b16 %v4054, %v4053
        %v4064 = vsel %vm908, %v3310, 0
        %4066 = vmatpush.bf16.msra.mxu0 0
        %4067 = vmatpush.bf16.msra.mxu0 0
        %4068 = vmatpush.bf16.msra.mxu0 0
        %4069 = vmatpush.bf16.msra.mxu0 0
        %4070 = vmatpush.bf16.msra.mxu0 %v4058
        %4071 = vmatpush.bf16.msra.mxu0 %v4057
        %4072 = vmatpush.bf16.msra.mxu0 %v4056
        %4073 = vmatpush.bf16.msra.mxu0 %v4055
        %4074 = vmatmul.bf16.gmra.mxu0 %v4064
        %v4075 = vpop.f32.mrf.mxu0
        %v4076 = vadd.f32 0.0, %v4075
        %v4077 = vpop.f32.mrf.mxu0
        %4078 = vdwg.mxu0
        %4095 = vst [vmem:[#allocation1] ss:$2 sm:$0xff] %v3476
        %s4096 = scalar_lea.vmem [#allocation1], 1
        %4097 = vst [vmem:[%s4096] ss:$2 sm:$0xff] %v3516
        %s4098 = scalar_lea.vmem [#allocation1], 16
        %4099 = vst [vmem:[%s4098] ss:$2 sm:$0xff] %v3556
        %s4100 = scalar_lea.vmem [#allocation1], 17
        %4101 = vst [vmem:[%s4100] ss:$2 sm:$0xff] %v3596
        %s4102 = scalar_lea.vmem [#allocation1], 32
        %4103 = vst [vmem:[%s4102] ss:$2 sm:$0xff] %v3636
        %s4104 = scalar_lea.vmem [#allocation1], 33
        %4105 = vst [vmem:[%s4104] ss:$2 sm:$0xff] %v3676
        %s4106 = scalar_lea.vmem [#allocation1], 48
        %4107 = vst [vmem:[%s4106] ss:$2 sm:$0xff] %v3716
        %s4108 = scalar_lea.vmem [#allocation1], 49
        %4109 = vst [vmem:[%s4108] ss:$2 sm:$0xff] %v3756
        %v4110 = vld.sshfl [vmem:[#allocation1] sm:$0xff pattern:$0x75316420]
        %v4111 = vld.sshfl [vmem:[#allocation1 + $0x10] sm:$0xff pattern:$0x75316420]
        %v4112 = vld.sshfl [vmem:[#allocation1 + $0x20] sm:$0xff pattern:$0x75316420]
        %v4113 = vld.sshfl [vmem:[#allocation1 + $0x30] sm:$0xff pattern:$0x75316420]
        %4114 = vst [vmem:[#allocation1] ss:$2 sm:$0xff] %v3796
        %4115 = vst [vmem:[%s4096] ss:$2 sm:$0xff] %v3836
        %4116 = vst [vmem:[%s4098] ss:$2 sm:$0xff] %v3876
        %4117 = vst [vmem:[%s4100] ss:$2 sm:$0xff] %v3916
        %4118 = vst [vmem:[%s4102] ss:$2 sm:$0xff] %v3956
        %4119 = vst [vmem:[%s4104] ss:$2 sm:$0xff] %v3996
        %4120 = vst [vmem:[%s4106] ss:$2 sm:$0xff] %v4036
        %4121 = vst [vmem:[%s4108] ss:$2 sm:$0xff] %v4076
        %v4122 = vld.sshfl [vmem:[#allocation1] sm:$0xff pattern:$0x75316420]
        %v4123 = vld.sshfl [vmem:[#allocation1 + $0x10] sm:$0xff pattern:$0x75316420]
        %v4124 = vld.sshfl [vmem:[#allocation1 + $0x20] sm:$0xff pattern:$0x75316420]
        %v4125 = vld.sshfl [vmem:[#allocation1 + $0x30] sm:$0xff pattern:$0x75316420]
        %v4135 = vsel %vm908, %v3267, 0
        %v4138 = vsel %vm908, %v3268, 0
        %v4141 = vsel %vm908, %v3269, 0
        %v4144 = vsel %vm908, %v3270, 0
        %4146 = vmatpush.bf16.msra.mxu0 0
        %4147 = vmatpush.bf16.msra.mxu0 0
        %4148 = vmatpush.bf16.msra.mxu0 0
        %4149 = vmatpush.bf16.msra.mxu0 0
        %4150 = vmatpush.bf16.msra.mxu0 %v1008
        %4151 = vmatpush.bf16.msra.mxu0 %v1007
        %4152 = vmatpush.bf16.msra.mxu0 %v1006
        %4153 = vmatpush.bf16.msra.mxu0 %v1005
        %4154 = vmatmul.bf16.gmra.mxu0 %v4135
        %v4155 = vpop.f32.mrf.mxu0
        %v4156 = vadd.f32 %v4110, %v4155
        %v4157 = vpop.f32.mrf.mxu0
        %v4158 = vadd.f32 %v4111, %v4157
        %4159 = vmatmul.bf16.gmra.mxu0 %v4138
        %v4160 = vpop.f32.mrf.mxu0
        %v4161 = vadd.f32 %v4112, %v4160
        %v4162 = vpop.f32.mrf.mxu0
        %v4163 = vadd.f32 %v4113, %v4162
        %4164 = vmatmul.bf16.gmra.mxu0 %v4141
        %v4165 = vpop.f32.mrf.mxu0
        %v4166 = vadd.f32 %v4122, %v4165
        %v4167 = vpop.f32.mrf.mxu0
        %v4168 = vadd.f32 %v4123, %v4167
        %4169 = vmatmul.bf16.gmra.mxu0 %v4144
        %v4170 = vpop.f32.mrf.mxu0
        %v4171 = vadd.f32 %v4124, %v4170
        %v4172 = vpop.f32.mrf.mxu0
        %v4173 = vadd.f32 %v4125, %v4172
        %4174 = vdwg.mxu0
        %s4175 = scalar_lea.vmem %s6, 512
        %v4176 = vld [vmem:[%s4175] sm:$0xf]
        %v4177 = vld [vmem:[%s4175 + $0x4] sm:$0xf]
        %v4178 = vld [vmem:[%s4175 + $0x8] sm:$0xf]
        %v4179 = vld [vmem:[%s4175 + $0xc] sm:$0xf]
        %v4180 = vld [vmem:[%s4175 + $0x10] sm:$0xf]
        %v4181 = vld [vmem:[%s4175 + $0x14] sm:$0xf]
        %v4182 = vld [vmem:[%s4175 + $0x18] sm:$0xf]
        %v4183 = vld [vmem:[%s4175 + $0x1c] sm:$0xf]
        %v4184 = vld [vmem:[%s4175 + $0x20] sm:$0xf]
        %v4185 = vld [vmem:[%s4175 + $0x24] sm:$0xf]
        %v4186 = vld [vmem:[%s4175 + $0x28] sm:$0xf]
        %v4187 = vld [vmem:[%s4175 + $0x2c] sm:$0xf]
        %v4188 = vld [vmem:[%s4175 + $0x30] sm:$0xf]
        %v4189 = vld [vmem:[%s4175 + $0x34] sm:$0xf]
        %v4190 = vld [vmem:[%s4175 + $0x38] sm:$0xf]
        %v4191 = vld [vmem:[%s4175 + $0x3c] sm:$0xf]
        %v4192 = vld [vmem:[%s4175 + $0x40] sm:$0xf]
        %v4193 = vld [vmem:[%s4175 + $0x44] sm:$0xf]
        %v4194 = vld [vmem:[%s4175 + $0x48] sm:$0xf]
        %v4195 = vld [vmem:[%s4175 + $0x4c] sm:$0xf]
        %v4196 = vld [vmem:[%s4175 + $0x50] sm:$0xf]
        %v4197 = vld [vmem:[%s4175 + $0x54] sm:$0xf]
        %v4198 = vld [vmem:[%s4175 + $0x58] sm:$0xf]
        %v4199 = vld [vmem:[%s4175 + $0x5c] sm:$0xf]
        %v4200 = vld [vmem:[%s4175 + $0x60] sm:$0xf]
        %v4201 = vld [vmem:[%s4175 + $0x64] sm:$0xf]
        %v4202 = vld [vmem:[%s4175 + $0x68] sm:$0xf]
        %v4203 = vld [vmem:[%s4175 + $0x6c] sm:$0xf]
        %v4204 = vld [vmem:[%s4175 + $0x70] sm:$0xf]
        %v4205 = vld [vmem:[%s4175 + $0x74] sm:$0xf]
        %v4206 = vld [vmem:[%s4175 + $0x78] sm:$0xf]
        %v4207 = vld [vmem:[%s4175 + $0x7c] sm:$0xf]
        %v4208 = vld [vmem:[%s4175 + $0x80] sm:$0xf]
        %v4209 = vld [vmem:[%s4175 + $0x84] sm:$0xf]
        %v4210 = vld [vmem:[%s4175 + $0x88] sm:$0xf]
        %v4211 = vld [vmem:[%s4175 + $0x8c] sm:$0xf]
        %v4212 = vld [vmem:[%s4175 + $0x90] sm:$0xf]
        %v4213 = vld [vmem:[%s4175 + $0x94] sm:$0xf]
        %v4214 = vld [vmem:[%s4175 + $0x98] sm:$0xf]
        %v4215 = vld [vmem:[%s4175 + $0x9c] sm:$0xf]
        %v4216 = vld [vmem:[%s4175 + $0xa0] sm:$0xf]
        %v4217 = vld [vmem:[%s4175 + $0xa4] sm:$0xf]
        %v4218 = vld [vmem:[%s4175 + $0xa8] sm:$0xf]
        %v4219 = vld [vmem:[%s4175 + $0xac] sm:$0xf]
        %v4220 = vld [vmem:[%s4175 + $0xb0] sm:$0xf]
        %v4221 = vld [vmem:[%s4175 + $0xb4] sm:$0xf]
        %v4222 = vld [vmem:[%s4175 + $0xb8] sm:$0xf]
        %v4223 = vld [vmem:[%s4175 + $0xbc] sm:$0xf]
        %v4224 = vld [vmem:[%s4175 + $0xc0] sm:$0xf]
        %v4225 = vld [vmem:[%s4175 + $0xc4] sm:$0xf]
        %v4226 = vld [vmem:[%s4175 + $0xc8] sm:$0xf]
        %v4227 = vld [vmem:[%s4175 + $0xcc] sm:$0xf]
        %v4228 = vld [vmem:[%s4175 + $0xd0] sm:$0xf]
        %v4229 = vld [vmem:[%s4175 + $0xd4] sm:$0xf]
        %v4230 = vld [vmem:[%s4175 + $0xd8] sm:$0xf]
        %v4231 = vld [vmem:[%s4175 + $0xdc] sm:$0xf]
        %v4232 = vld [vmem:[%s4175 + $0xe0] sm:$0xf]
        %v4233 = vld [vmem:[%s4175 + $0xe4] sm:$0xf]
        %v4234 = vld [vmem:[%s4175 + $0xe8] sm:$0xf]
        %v4235 = vld [vmem:[%s4175 + $0xec] sm:$0xf]
        %v4236 = vld [vmem:[%s4175 + $0xf0] sm:$0xf]
        %v4237 = vld [vmem:[%s4175 + $0xf4] sm:$0xf]
        %v4238 = vld [vmem:[%s4175 + $0xf8] sm:$0xf]
        %v4239 = vld [vmem:[%s4175 + $0xfc] sm:$0xf]
        %v4240 = vld [vmem:[%s4175 + $0x100] sm:$0xf]
        %v4241 = vld [vmem:[%s4175 + $0x104] sm:$0xf]
        %v4242 = vld [vmem:[%s4175 + $0x108] sm:$0xf]
        %v4243 = vld [vmem:[%s4175 + $0x10c] sm:$0xf]
        %v4244 = vld [vmem:[%s4175 + $0x110] sm:$0xf]
        %v4245 = vld [vmem:[%s4175 + $0x114] sm:$0xf]
        %v4246 = vld [vmem:[%s4175 + $0x118] sm:$0xf]
        %v4247 = vld [vmem:[%s4175 + $0x11c] sm:$0xf]
        %v4248 = vld [vmem:[%s4175 + $0x120] sm:$0xf]
        %v4249 = vld [vmem:[%s4175 + $0x124] sm:$0xf]
        %v4250 = vld [vmem:[%s4175 + $0x128] sm:$0xf]
        %v4251 = vld [vmem:[%s4175 + $0x12c] sm:$0xf]
        %v4252 = vld [vmem:[%s4175 + $0x130] sm:$0xf]
        %v4253 = vld [vmem:[%s4175 + $0x134] sm:$0xf]
        %v4254 = vld [vmem:[%s4175 + $0x138] sm:$0xf]
        %v4255 = vld [vmem:[%s4175 + $0x13c] sm:$0xf]
        %v4256 = vld [vmem:[%s4175 + $0x140] sm:$0xf]
        %v4257 = vld [vmem:[%s4175 + $0x144] sm:$0xf]
        %v4258 = vld [vmem:[%s4175 + $0x148] sm:$0xf]
        %v4259 = vld [vmem:[%s4175 + $0x14c] sm:$0xf]
        %v4260 = vld [vmem:[%s4175 + $0x150] sm:$0xf]
        %v4261 = vld [vmem:[%s4175 + $0x154] sm:$0xf]
        %v4262 = vld [vmem:[%s4175 + $0x158] sm:$0xf]
        %v4263 = vld [vmem:[%s4175 + $0x15c] sm:$0xf]
        %v4264 = vld [vmem:[%s4175 + $0x160] sm:$0xf]
        %v4265 = vld [vmem:[%s4175 + $0x164] sm:$0xf]
        %v4266 = vld [vmem:[%s4175 + $0x168] sm:$0xf]
        %v4267 = vld [vmem:[%s4175 + $0x16c] sm:$0xf]
        %v4268 = vld [vmem:[%s4175 + $0x170] sm:$0xf]
        %v4269 = vld [vmem:[%s4175 + $0x174] sm:$0xf]
        %v4270 = vld [vmem:[%s4175 + $0x178] sm:$0xf]
        %v4271 = vld [vmem:[%s4175 + $0x17c] sm:$0xf]
        %v4272 = vld [vmem:[%s4175 + $0x180] sm:$0xf]
        %v4273 = vld [vmem:[%s4175 + $0x184] sm:$0xf]
        %v4274 = vld [vmem:[%s4175 + $0x188] sm:$0xf]
        %v4275 = vld [vmem:[%s4175 + $0x18c] sm:$0xf]
        %v4276 = vld [vmem:[%s4175 + $0x190] sm:$0xf]
        %v4277 = vld [vmem:[%s4175 + $0x194] sm:$0xf]
        %v4278 = vld [vmem:[%s4175 + $0x198] sm:$0xf]
        %v4279 = vld [vmem:[%s4175 + $0x19c] sm:$0xf]
        %v4280 = vld [vmem:[%s4175 + $0x1a0] sm:$0xf]
        %v4281 = vld [vmem:[%s4175 + $0x1a4] sm:$0xf]
        %v4282 = vld [vmem:[%s4175 + $0x1a8] sm:$0xf]
        %v4283 = vld [vmem:[%s4175 + $0x1ac] sm:$0xf]
        %v4284 = vld [vmem:[%s4175 + $0x1b0] sm:$0xf]
        %v4285 = vld [vmem:[%s4175 + $0x1b4] sm:$0xf]
        %v4286 = vld [vmem:[%s4175 + $0x1b8] sm:$0xf]
        %v4287 = vld [vmem:[%s4175 + $0x1bc] sm:$0xf]
        %v4288 = vld [vmem:[%s4175 + $0x1c0] sm:$0xf]
        %v4289 = vld [vmem:[%s4175 + $0x1c4] sm:$0xf]
        %v4290 = vld [vmem:[%s4175 + $0x1c8] sm:$0xf]
        %v4291 = vld [vmem:[%s4175 + $0x1cc] sm:$0xf]
        %v4292 = vld [vmem:[%s4175 + $0x1d0] sm:$0xf]
        %v4293 = vld [vmem:[%s4175 + $0x1d4] sm:$0xf]
        %v4294 = vld [vmem:[%s4175 + $0x1d8] sm:$0xf]
        %v4295 = vld [vmem:[%s4175 + $0x1dc] sm:$0xf]
        %v4296 = vld [vmem:[%s4175 + $0x1e0] sm:$0xf]
        %v4297 = vld [vmem:[%s4175 + $0x1e4] sm:$0xf]
        %v4298 = vld [vmem:[%s4175 + $0x1e8] sm:$0xf]
        %v4299 = vld [vmem:[%s4175 + $0x1ec] sm:$0xf]
        %v4300 = vld [vmem:[%s4175 + $0x1f0] sm:$0xf]
        %v4301 = vld [vmem:[%s4175 + $0x1f4] sm:$0xf]
        %v4302 = vld [vmem:[%s4175 + $0x1f8] sm:$0xf]
        %v4303 = vld [vmem:[%s4175 + $0x1fc] sm:$0xf]
        %s4304 = scalar_lea.vmem %s7, 1024
        %v4305 = vld [vmem:[%s4304] sm:$0xff]
        %v4306 = vld [vmem:[%s4304 + $0x8] sm:$0xff]
        %v4307 = vld [vmem:[%s4304 + $0x10] sm:$0xff]
        %v4308 = vld [vmem:[%s4304 + $0x18] sm:$0xff]
        %v4309 = vld [vmem:[%s4304 + $0x20] sm:$0xff]
        %v4310 = vld [vmem:[%s4304 + $0x28] sm:$0xff]
        %v4311 = vld [vmem:[%s4304 + $0x30] sm:$0xff]
        %v4312 = vld [vmem:[%s4304 + $0x38] sm:$0xff]
        %v4313 = vld [vmem:[%s4304 + $0x40] sm:$0xff]
        %v4314 = vld [vmem:[%s4304 + $0x48] sm:$0xff]
        %v4315 = vld [vmem:[%s4304 + $0x50] sm:$0xff]
        %v4316 = vld [vmem:[%s4304 + $0x58] sm:$0xff]
        %v4317 = vld [vmem:[%s4304 + $0x60] sm:$0xff]
        %v4318 = vld [vmem:[%s4304 + $0x68] sm:$0xff]
        %v4319 = vld [vmem:[%s4304 + $0x70] sm:$0xff]
        %v4320 = vld [vmem:[%s4304 + $0x78] sm:$0xff]
        %v4321 = vld [vmem:[%s4304 + $0x80] sm:$0xff]
        %v4322 = vld [vmem:[%s4304 + $0x88] sm:$0xff]
        %v4323 = vld [vmem:[%s4304 + $0x90] sm:$0xff]
        %v4324 = vld [vmem:[%s4304 + $0x98] sm:$0xff]
        %v4325 = vld [vmem:[%s4304 + $0xa0] sm:$0xff]
        %v4326 = vld [vmem:[%s4304 + $0xa8] sm:$0xff]
        %v4327 = vld [vmem:[%s4304 + $0xb0] sm:$0xff]
        %v4328 = vld [vmem:[%s4304 + $0xb8] sm:$0xff]
        %v4329 = vld [vmem:[%s4304 + $0xc0] sm:$0xff]
        %v4330 = vld [vmem:[%s4304 + $0xc8] sm:$0xff]
        %v4331 = vld [vmem:[%s4304 + $0xd0] sm:$0xff]
        %v4332 = vld [vmem:[%s4304 + $0xd8] sm:$0xff]
        %v4333 = vld [vmem:[%s4304 + $0xe0] sm:$0xff]
        %v4334 = vld [vmem:[%s4304 + $0xe8] sm:$0xff]
        %v4335 = vld [vmem:[%s4304 + $0xf0] sm:$0xff]
        %v4336 = vld [vmem:[%s4304 + $0xf8] sm:$0xff]
        %v4337 = vld [vmem:[%s4304 + $0x100] sm:$0xff]
        %v4338 = vld [vmem:[%s4304 + $0x108] sm:$0xff]
        %v4339 = vld [vmem:[%s4304 + $0x110] sm:$0xff]
        %v4340 = vld [vmem:[%s4304 + $0x118] sm:$0xff]
        %v4341 = vld [vmem:[%s4304 + $0x120] sm:$0xff]
        %v4342 = vld [vmem:[%s4304 + $0x128] sm:$0xff]
        %v4343 = vld [vmem:[%s4304 + $0x130] sm:$0xff]
        %v4344 = vld [vmem:[%s4304 + $0x138] sm:$0xff]
        %v4345 = vld [vmem:[%s4304 + $0x140] sm:$0xff]
        %v4346 = vld [vmem:[%s4304 + $0x148] sm:$0xff]
        %v4347 = vld [vmem:[%s4304 + $0x150] sm:$0xff]
        %v4348 = vld [vmem:[%s4304 + $0x158] sm:$0xff]
        %v4349 = vld [vmem:[%s4304 + $0x160] sm:$0xff]
        %v4350 = vld [vmem:[%s4304 + $0x168] sm:$0xff]
        %v4351 = vld [vmem:[%s4304 + $0x170] sm:$0xff]
        %v4352 = vld [vmem:[%s4304 + $0x178] sm:$0xff]
        %v4353 = vld [vmem:[%s4304 + $0x180] sm:$0xff]
        %v4354 = vld [vmem:[%s4304 + $0x188] sm:$0xff]
        %v4355 = vld [vmem:[%s4304 + $0x190] sm:$0xff]
        %v4356 = vld [vmem:[%s4304 + $0x198] sm:$0xff]
        %v4357 = vld [vmem:[%s4304 + $0x1a0] sm:$0xff]
        %v4358 = vld [vmem:[%s4304 + $0x1a8] sm:$0xff]
        %v4359 = vld [vmem:[%s4304 + $0x1b0] sm:$0xff]
        %v4360 = vld [vmem:[%s4304 + $0x1b8] sm:$0xff]
        %v4361 = vld [vmem:[%s4304 + $0x1c0] sm:$0xff]
        %v4362 = vld [vmem:[%s4304 + $0x1c8] sm:$0xff]
        %v4363 = vld [vmem:[%s4304 + $0x1d0] sm:$0xff]
        %v4364 = vld [vmem:[%s4304 + $0x1d8] sm:$0xff]
        %v4365 = vld [vmem:[%s4304 + $0x1e0] sm:$0xff]
        %v4366 = vld [vmem:[%s4304 + $0x1e8] sm:$0xff]
        %v4367 = vld [vmem:[%s4304 + $0x1f0] sm:$0xff]
        %v4368 = vld [vmem:[%s4304 + $0x1f8] sm:$0xff]
        %v4369 = vld [vmem:[%s4304 + $0x200] sm:$0xff]
        %v4370 = vld [vmem:[%s4304 + $0x208] sm:$0xff]
        %v4371 = vld [vmem:[%s4304 + $0x210] sm:$0xff]
        %v4372 = vld [vmem:[%s4304 + $0x218] sm:$0xff]
        %v4373 = vld [vmem:[%s4304 + $0x220] sm:$0xff]
        %v4374 = vld [vmem:[%s4304 + $0x228] sm:$0xff]
        %v4375 = vld [vmem:[%s4304 + $0x230] sm:$0xff]
        %v4376 = vld [vmem:[%s4304 + $0x238] sm:$0xff]
        %v4377 = vld [vmem:[%s4304 + $0x240] sm:$0xff]
        %v4378 = vld [vmem:[%s4304 + $0x248] sm:$0xff]
        %v4379 = vld [vmem:[%s4304 + $0x250] sm:$0xff]
        %v4380 = vld [vmem:[%s4304 + $0x258] sm:$0xff]
        %v4381 = vld [vmem:[%s4304 + $0x260] sm:$0xff]
        %v4382 = vld [vmem:[%s4304 + $0x268] sm:$0xff]
        %v4383 = vld [vmem:[%s4304 + $0x270] sm:$0xff]
        %v4384 = vld [vmem:[%s4304 + $0x278] sm:$0xff]
        %v4385 = vld [vmem:[%s4304 + $0x280] sm:$0xff]
        %v4386 = vld [vmem:[%s4304 + $0x288] sm:$0xff]
        %v4387 = vld [vmem:[%s4304 + $0x290] sm:$0xff]
        %v4388 = vld [vmem:[%s4304 + $0x298] sm:$0xff]
        %v4389 = vld [vmem:[%s4304 + $0x2a0] sm:$0xff]
        %v4390 = vld [vmem:[%s4304 + $0x2a8] sm:$0xff]
        %v4391 = vld [vmem:[%s4304 + $0x2b0] sm:$0xff]
        %v4392 = vld [vmem:[%s4304 + $0x2b8] sm:$0xff]
        %v4393 = vld [vmem:[%s4304 + $0x2c0] sm:$0xff]
        %v4394 = vld [vmem:[%s4304 + $0x2c8] sm:$0xff]
        %v4395 = vld [vmem:[%s4304 + $0x2d0] sm:$0xff]
        %v4396 = vld [vmem:[%s4304 + $0x2d8] sm:$0xff]
        %v4397 = vld [vmem:[%s4304 + $0x2e0] sm:$0xff]
        %v4398 = vld [vmem:[%s4304 + $0x2e8] sm:$0xff]
        %v4399 = vld [vmem:[%s4304 + $0x2f0] sm:$0xff]
        %v4400 = vld [vmem:[%s4304 + $0x2f8] sm:$0xff]
        %v4401 = vld [vmem:[%s4304 + $0x300] sm:$0xff]
        %v4402 = vld [vmem:[%s4304 + $0x308] sm:$0xff]
        %v4403 = vld [vmem:[%s4304 + $0x310] sm:$0xff]
        %v4404 = vld [vmem:[%s4304 + $0x318] sm:$0xff]
        %v4405 = vld [vmem:[%s4304 + $0x320] sm:$0xff]
        %v4406 = vld [vmem:[%s4304 + $0x328] sm:$0xff]
        %v4407 = vld [vmem:[%s4304 + $0x330] sm:$0xff]
        %v4408 = vld [vmem:[%s4304 + $0x338] sm:$0xff]
        %v4409 = vld [vmem:[%s4304 + $0x340] sm:$0xff]
        %v4410 = vld [vmem:[%s4304 + $0x348] sm:$0xff]
        %v4411 = vld [vmem:[%s4304 + $0x350] sm:$0xff]
        %v4412 = vld [vmem:[%s4304 + $0x358] sm:$0xff]
        %v4413 = vld [vmem:[%s4304 + $0x360] sm:$0xff]
        %v4414 = vld [vmem:[%s4304 + $0x368] sm:$0xff]
        %v4415 = vld [vmem:[%s4304 + $0x370] sm:$0xff]
        %v4416 = vld [vmem:[%s4304 + $0x378] sm:$0xff]
        %v4417 = vld [vmem:[%s4304 + $0x380] sm:$0xff]
        %v4418 = vld [vmem:[%s4304 + $0x388] sm:$0xff]
        %v4419 = vld [vmem:[%s4304 + $0x390] sm:$0xff]
        %v4420 = vld [vmem:[%s4304 + $0x398] sm:$0xff]
        %v4421 = vld [vmem:[%s4304 + $0x3a0] sm:$0xff]
        %v4422 = vld [vmem:[%s4304 + $0x3a8] sm:$0xff]
        %v4423 = vld [vmem:[%s4304 + $0x3b0] sm:$0xff]
        %v4424 = vld [vmem:[%s4304 + $0x3b8] sm:$0xff]
        %v4425 = vld [vmem:[%s4304 + $0x3c0] sm:$0xff]
        %v4426 = vld [vmem:[%s4304 + $0x3c8] sm:$0xff]
        %v4427 = vld [vmem:[%s4304 + $0x3d0] sm:$0xff]
        %v4428 = vld [vmem:[%s4304 + $0x3d8] sm:$0xff]
        %v4429 = vld [vmem:[%s4304 + $0x3e0] sm:$0xff]
        %v4430 = vld [vmem:[%s4304 + $0x3e8] sm:$0xff]
        %v4431 = vld [vmem:[%s4304 + $0x3f0] sm:$0xff]
        %v4432 = vld [vmem:[%s4304 + $0x3f8] sm:$0xff]
        %4433 = vrot.lane.b32.xlu0 %v985, 32
        %v4434 = vpop.permute.xlu0 %4433
        %4435 = vrot.lane.b32.xlu0 %v987, 32
        %v4436 = vpop.permute.xlu0 %4435
        %4437 = vrot.lane.b32.xlu0 %v989, 32
        %v4438 = vpop.permute.xlu0 %4437
        %4439 = vrot.lane.b32.xlu0 %v991, 32
        %v4440 = vpop.permute.xlu0 %4439
        %4441 = vrot.lane.b32.xlu0 %v993, 32
        %v4442 = vpop.permute.xlu0 %4441
        %4443 = vrot.lane.b32.xlu0 %v995, 32
        %v4444 = vpop.permute.xlu0 %4443
        %4445 = vrot.lane.b32.xlu0 %v997, 32
        %v4446 = vpop.permute.xlu0 %4445
        %4447 = vrot.lane.b32.xlu0 %v999, 32
        %v4448 = vpop.permute.xlu0 %4447
        %v4457 = vmul.f32 %v4305, %v4434
        %v4458 = vmul.f32 %v4306, %v4436
        %v4459 = vmul.f32 %v4307, %v4438
        %v4460 = vmul.f32 %v4308, %v4440
        %v4461 = vmul.f32 %v4309, %v4442
        %v4462 = vmul.f32 %v4310, %v4444
        %v4463 = vmul.f32 %v4311, %v4446
        %v4464 = vmul.f32 %v4312, %v4448
        %v4465 = vmul.f32 %v4313, %v4434
        %v4466 = vmul.f32 %v4314, %v4436
        %v4467 = vmul.f32 %v4315, %v4438
        %v4468 = vmul.f32 %v4316, %v4440
        %v4469 = vmul.f32 %v4317, %v4442
        %v4470 = vmul.f32 %v4318, %v4444
        %v4471 = vmul.f32 %v4319, %v4446
        %v4472 = vmul.f32 %v4320, %v4448
        %v4473 = vmul.f32 %v4321, %v4434
        %v4474 = vmul.f32 %v4322, %v4436
        %v4475 = vmul.f32 %v4323, %v4438
        %v4476 = vmul.f32 %v4324, %v4440
        %v4477 = vmul.f32 %v4325, %v4442
        %v4478 = vmul.f32 %v4326, %v4444
        %v4479 = vmul.f32 %v4327, %v4446
        %v4480 = vmul.f32 %v4328, %v4448
        %v4481 = vmul.f32 %v4329, %v4434
        %v4482 = vmul.f32 %v4330, %v4436
        %v4483 = vmul.f32 %v4331, %v4438
        %v4484 = vmul.f32 %v4332, %v4440
        %v4485 = vmul.f32 %v4333, %v4442
        %v4486 = vmul.f32 %v4334, %v4444
        %v4487 = vmul.f32 %v4335, %v4446
        %v4488 = vmul.f32 %v4336, %v4448
        %v4489 = vmul.f32 %v4337, %v4434
        %v4490 = vmul.f32 %v4338, %v4436
        %v4491 = vmul.f32 %v4339, %v4438
        %v4492 = vmul.f32 %v4340, %v4440
        %v4493 = vmul.f32 %v4341, %v4442
        %v4494 = vmul.f32 %v4342, %v4444
        %v4495 = vmul.f32 %v4343, %v4446
        %v4496 = vmul.f32 %v4344, %v4448
        %v4497 = vmul.f32 %v4345, %v4434
        %v4498 = vmul.f32 %v4346, %v4436
        %v4499 = vmul.f32 %v4347, %v4438
        %v4500 = vmul.f32 %v4348, %v4440
        %v4501 = vmul.f32 %v4349, %v4442
        %v4502 = vmul.f32 %v4350, %v4444
        %v4503 = vmul.f32 %v4351, %v4446
        %v4504 = vmul.f32 %v4352, %v4448
        %v4505 = vmul.f32 %v4353, %v4434
        %v4506 = vmul.f32 %v4354, %v4436
        %v4507 = vmul.f32 %v4355, %v4438
        %v4508 = vmul.f32 %v4356, %v4440
        %v4509 = vmul.f32 %v4357, %v4442
        %v4510 = vmul.f32 %v4358, %v4444
        %v4511 = vmul.f32 %v4359, %v4446
        %v4512 = vmul.f32 %v4360, %v4448
        %v4513 = vmul.f32 %v4361, %v4434
        %v4514 = vmul.f32 %v4362, %v4436
        %v4515 = vmul.f32 %v4363, %v4438
        %v4516 = vmul.f32 %v4364, %v4440
        %v4517 = vmul.f32 %v4365, %v4442
        %v4518 = vmul.f32 %v4366, %v4444
        %v4519 = vmul.f32 %v4367, %v4446
        %v4520 = vmul.f32 %v4368, %v4448
        %v4521 = vmul.f32 %v4369, %v4434
        %v4522 = vmul.f32 %v4370, %v4436
        %v4523 = vmul.f32 %v4371, %v4438
        %v4524 = vmul.f32 %v4372, %v4440
        %v4525 = vmul.f32 %v4373, %v4442
        %v4526 = vmul.f32 %v4374, %v4444
        %v4527 = vmul.f32 %v4375, %v4446
        %v4528 = vmul.f32 %v4376, %v4448
        %v4529 = vmul.f32 %v4377, %v4434
        %v4530 = vmul.f32 %v4378, %v4436
        %v4531 = vmul.f32 %v4379, %v4438
        %v4532 = vmul.f32 %v4380, %v4440
        %v4533 = vmul.f32 %v4381, %v4442
        %v4534 = vmul.f32 %v4382, %v4444
        %v4535 = vmul.f32 %v4383, %v4446
        %v4536 = vmul.f32 %v4384, %v4448
        %v4537 = vmul.f32 %v4385, %v4434
        %v4538 = vmul.f32 %v4386, %v4436
        %v4539 = vmul.f32 %v4387, %v4438
        %v4540 = vmul.f32 %v4388, %v4440
        %v4541 = vmul.f32 %v4389, %v4442
        %v4542 = vmul.f32 %v4390, %v4444
        %v4543 = vmul.f32 %v4391, %v4446
        %v4544 = vmul.f32 %v4392, %v4448
        %v4545 = vmul.f32 %v4393, %v4434
        %v4546 = vmul.f32 %v4394, %v4436
        %v4547 = vmul.f32 %v4395, %v4438
        %v4548 = vmul.f32 %v4396, %v4440
        %v4549 = vmul.f32 %v4397, %v4442
        %v4550 = vmul.f32 %v4398, %v4444
        %v4551 = vmul.f32 %v4399, %v4446
        %v4552 = vmul.f32 %v4400, %v4448
        %v4553 = vmul.f32 %v4401, %v4434
        %v4554 = vmul.f32 %v4402, %v4436
        %v4555 = vmul.f32 %v4403, %v4438
        %v4556 = vmul.f32 %v4404, %v4440
        %v4557 = vmul.f32 %v4405, %v4442
        %v4558 = vmul.f32 %v4406, %v4444
        %v4559 = vmul.f32 %v4407, %v4446
        %v4560 = vmul.f32 %v4408, %v4448
        %v4561 = vmul.f32 %v4409, %v4434
        %v4562 = vmul.f32 %v4410, %v4436
        %v4563 = vmul.f32 %v4411, %v4438
        %v4564 = vmul.f32 %v4412, %v4440
        %v4565 = vmul.f32 %v4413, %v4442
        %v4566 = vmul.f32 %v4414, %v4444
        %v4567 = vmul.f32 %v4415, %v4446
        %v4568 = vmul.f32 %v4416, %v4448
        %v4569 = vmul.f32 %v4417, %v4434
        %v4570 = vmul.f32 %v4418, %v4436
        %v4571 = vmul.f32 %v4419, %v4438
        %v4572 = vmul.f32 %v4420, %v4440
        %v4573 = vmul.f32 %v4421, %v4442
        %v4574 = vmul.f32 %v4422, %v4444
        %v4575 = vmul.f32 %v4423, %v4446
        %v4576 = vmul.f32 %v4424, %v4448
        %v4577 = vmul.f32 %v4425, %v4434
        %v4578 = vmul.f32 %v4426, %v4436
        %v4579 = vmul.f32 %v4427, %v4438
        %v4580 = vmul.f32 %v4428, %v4440
        %v4581 = vmul.f32 %v4429, %v4442
        %v4582 = vmul.f32 %v4430, %v4444
        %v4583 = vmul.f32 %v4431, %v4446
        %v4584 = vmul.f32 %v4432, %v4448
        %v4585 = vsel %vm797, %v4457, 0.0
        %4586 = vadd.xlane.f32.xlu0 %v4585
        %v4587 = vpop.xlane.xlu0 %4586
        %v4588 = vsel %vm797, %v4458, 0.0
        %4589 = vadd.xlane.f32.xlu0 %v4588
        %v4590 = vpop.xlane.xlu0 %4589
        %v4591 = vsel %vm797, %v4459, 0.0
        %4592 = vadd.xlane.f32.xlu0 %v4591
        %v4593 = vpop.xlane.xlu0 %4592
        %v4594 = vsel %vm797, %v4460, 0.0
        %4595 = vadd.xlane.f32.xlu0 %v4594
        %v4596 = vpop.xlane.xlu0 %4595
        %v4597 = vsel %vm797, %v4461, 0.0
        %4598 = vadd.xlane.f32.xlu0 %v4597
        %v4599 = vpop.xlane.xlu0 %4598
        %v4600 = vsel %vm797, %v4462, 0.0
        %4601 = vadd.xlane.f32.xlu0 %v4600
        %v4602 = vpop.xlane.xlu0 %4601
        %v4603 = vsel %vm797, %v4463, 0.0
        %4604 = vadd.xlane.f32.xlu0 %v4603
        %v4605 = vpop.xlane.xlu0 %4604
        %v4606 = vsel %vm797, %v4464, 0.0
        %4607 = vadd.xlane.f32.xlu0 %v4606
        %v4608 = vpop.xlane.xlu0 %4607
        %v4609 = vsel %vm797, %v4465, 0.0
        %4610 = vadd.xlane.f32.xlu0 %v4609
        %v4611 = vpop.xlane.xlu0 %4610
        %v4612 = vsel %vm797, %v4466, 0.0
        %4613 = vadd.xlane.f32.xlu0 %v4612
        %v4614 = vpop.xlane.xlu0 %4613
        %v4615 = vsel %vm797, %v4467, 0.0
        %4616 = vadd.xlane.f32.xlu0 %v4615
        %v4617 = vpop.xlane.xlu0 %4616
        %v4618 = vsel %vm797, %v4468, 0.0
        %4619 = vadd.xlane.f32.xlu0 %v4618
        %v4620 = vpop.xlane.xlu0 %4619
        %v4621 = vsel %vm797, %v4469, 0.0
        %4622 = vadd.xlane.f32.xlu0 %v4621
        %v4623 = vpop.xlane.xlu0 %4622
        %v4624 = vsel %vm797, %v4470, 0.0
        %4625 = vadd.xlane.f32.xlu0 %v4624
        %v4626 = vpop.xlane.xlu0 %4625
        %v4627 = vsel %vm797, %v4471, 0.0
        %4628 = vadd.xlane.f32.xlu0 %v4627
        %v4629 = vpop.xlane.xlu0 %4628
        %v4630 = vsel %vm797, %v4472, 0.0
        %4631 = vadd.xlane.f32.xlu0 %v4630
        %v4632 = vpop.xlane.xlu0 %4631
        %v4633 = vsel %vm797, %v4473, 0.0
        %4634 = vadd.xlane.f32.xlu0 %v4633
        %v4635 = vpop.xlane.xlu0 %4634
        %v4636 = vsel %vm797, %v4474, 0.0
        %4637 = vadd.xlane.f32.xlu0 %v4636
        %v4638 = vpop.xlane.xlu0 %4637
        %v4639 = vsel %vm797, %v4475, 0.0
        %4640 = vadd.xlane.f32.xlu0 %v4639
        %v4641 = vpop.xlane.xlu0 %4640
        %v4642 = vsel %vm797, %v4476, 0.0
        %4643 = vadd.xlane.f32.xlu0 %v4642
        %v4644 = vpop.xlane.xlu0 %4643
        %v4645 = vsel %vm797, %v4477, 0.0
        %4646 = vadd.xlane.f32.xlu0 %v4645
        %v4647 = vpop.xlane.xlu0 %4646
        %v4648 = vsel %vm797, %v4478, 0.0
        %4649 = vadd.xlane.f32.xlu0 %v4648
        %v4650 = vpop.xlane.xlu0 %4649
        %v4651 = vsel %vm797, %v4479, 0.0
        %4652 = vadd.xlane.f32.xlu0 %v4651
        %v4653 = vpop.xlane.xlu0 %4652
        %v4654 = vsel %vm797, %v4480, 0.0
        %4655 = vadd.xlane.f32.xlu0 %v4654
        %v4656 = vpop.xlane.xlu0 %4655
        %v4657 = vsel %vm797, %v4481, 0.0
        %4658 = vadd.xlane.f32.xlu0 %v4657
        %v4659 = vpop.xlane.xlu0 %4658
        %v4660 = vsel %vm797, %v4482, 0.0
        %4661 = vadd.xlane.f32.xlu0 %v4660
        %v4662 = vpop.xlane.xlu0 %4661
        %v4663 = vsel %vm797, %v4483, 0.0
        %4664 = vadd.xlane.f32.xlu0 %v4663
        %v4665 = vpop.xlane.xlu0 %4664
        %v4666 = vsel %vm797, %v4484, 0.0
        %4667 = vadd.xlane.f32.xlu0 %v4666
        %v4668 = vpop.xlane.xlu0 %4667
        %v4669 = vsel %vm797, %v4485, 0.0
        %4670 = vadd.xlane.f32.xlu0 %v4669
        %v4671 = vpop.xlane.xlu0 %4670
        %v4672 = vsel %vm797, %v4486, 0.0
        %4673 = vadd.xlane.f32.xlu0 %v4672
        %v4674 = vpop.xlane.xlu0 %4673
        %v4675 = vsel %vm797, %v4487, 0.0
        %4676 = vadd.xlane.f32.xlu0 %v4675
        %v4677 = vpop.xlane.xlu0 %4676
        %v4678 = vsel %vm797, %v4488, 0.0
        %4679 = vadd.xlane.f32.xlu0 %v4678
        %v4680 = vpop.xlane.xlu0 %4679
        %v4681 = vsel %vm797, %v4489, 0.0
        %4682 = vadd.xlane.f32.xlu0 %v4681
        %v4683 = vpop.xlane.xlu0 %4682
        %v4684 = vsel %vm797, %v4490, 0.0
        %4685 = vadd.xlane.f32.xlu0 %v4684
        %v4686 = vpop.xlane.xlu0 %4685
        %v4687 = vsel %vm797, %v4491, 0.0
        %4688 = vadd.xlane.f32.xlu0 %v4687
        %v4689 = vpop.xlane.xlu0 %4688
        %v4690 = vsel %vm797, %v4492, 0.0
        %4691 = vadd.xlane.f32.xlu0 %v4690
        %v4692 = vpop.xlane.xlu0 %4691
        %v4693 = vsel %vm797, %v4493, 0.0
        %4694 = vadd.xlane.f32.xlu0 %v4693
        %v4695 = vpop.xlane.xlu0 %4694
        %v4696 = vsel %vm797, %v4494, 0.0
        %4697 = vadd.xlane.f32.xlu0 %v4696
        %v4698 = vpop.xlane.xlu0 %4697
        %v4699 = vsel %vm797, %v4495, 0.0
        %4700 = vadd.xlane.f32.xlu0 %v4699
        %v4701 = vpop.xlane.xlu0 %4700
        %v4702 = vsel %vm797, %v4496, 0.0
        %4703 = vadd.xlane.f32.xlu0 %v4702
        %v4704 = vpop.xlane.xlu0 %4703
        %v4705 = vsel %vm797, %v4497, 0.0
        %4706 = vadd.xlane.f32.xlu0 %v4705
        %v4707 = vpop.xlane.xlu0 %4706
        %v4708 = vsel %vm797, %v4498, 0.0
        %4709 = vadd.xlane.f32.xlu0 %v4708
        %v4710 = vpop.xlane.xlu0 %4709
        %v4711 = vsel %vm797, %v4499, 0.0
        %4712 = vadd.xlane.f32.xlu0 %v4711
        %v4713 = vpop.xlane.xlu0 %4712
        %v4714 = vsel %vm797, %v4500, 0.0
        %4715 = vadd.xlane.f32.xlu0 %v4714
        %v4716 = vpop.xlane.xlu0 %4715
        %v4717 = vsel %vm797, %v4501, 0.0
        %4718 = vadd.xlane.f32.xlu0 %v4717
        %v4719 = vpop.xlane.xlu0 %4718
        %v4720 = vsel %vm797, %v4502, 0.0
        %4721 = vadd.xlane.f32.xlu0 %v4720
        %v4722 = vpop.xlane.xlu0 %4721
        %v4723 = vsel %vm797, %v4503, 0.0
        %4724 = vadd.xlane.f32.xlu0 %v4723
        %v4725 = vpop.xlane.xlu0 %4724
        %v4726 = vsel %vm797, %v4504, 0.0
        %4727 = vadd.xlane.f32.xlu0 %v4726
        %v4728 = vpop.xlane.xlu0 %4727
        %v4729 = vsel %vm797, %v4505, 0.0
        %4730 = vadd.xlane.f32.xlu0 %v4729
        %v4731 = vpop.xlane.xlu0 %4730
        %v4732 = vsel %vm797, %v4506, 0.0
        %4733 = vadd.xlane.f32.xlu0 %v4732
        %v4734 = vpop.xlane.xlu0 %4733
        %v4735 = vsel %vm797, %v4507, 0.0
        %4736 = vadd.xlane.f32.xlu0 %v4735
        %v4737 = vpop.xlane.xlu0 %4736
        %v4738 = vsel %vm797, %v4508, 0.0
        %4739 = vadd.xlane.f32.xlu0 %v4738
        %v4740 = vpop.xlane.xlu0 %4739
        %v4741 = vsel %vm797, %v4509, 0.0
        %4742 = vadd.xlane.f32.xlu0 %v4741
        %v4743 = vpop.xlane.xlu0 %4742
        %v4744 = vsel %vm797, %v4510, 0.0
        %4745 = vadd.xlane.f32.xlu0 %v4744
        %v4746 = vpop.xlane.xlu0 %4745
        %v4747 = vsel %vm797, %v4511, 0.0
        %4748 = vadd.xlane.f32.xlu0 %v4747
        %v4749 = vpop.xlane.xlu0 %4748
        %v4750 = vsel %vm797, %v4512, 0.0
        %4751 = vadd.xlane.f32.xlu0 %v4750
        %v4752 = vpop.xlane.xlu0 %4751
        %v4753 = vsel %vm797, %v4513, 0.0
        %4754 = vadd.xlane.f32.xlu0 %v4753
        %v4755 = vpop.xlane.xlu0 %4754
        %v4756 = vsel %vm797, %v4514, 0.0
        %4757 = vadd.xlane.f32.xlu0 %v4756
        %v4758 = vpop.xlane.xlu0 %4757
        %v4759 = vsel %vm797, %v4515, 0.0
        %4760 = vadd.xlane.f32.xlu0 %v4759
        %v4761 = vpop.xlane.xlu0 %4760
        %v4762 = vsel %vm797, %v4516, 0.0
        %4763 = vadd.xlane.f32.xlu0 %v4762
        %v4764 = vpop.xlane.xlu0 %4763
        %v4765 = vsel %vm797, %v4517, 0.0
        %4766 = vadd.xlane.f32.xlu0 %v4765
        %v4767 = vpop.xlane.xlu0 %4766
        %v4768 = vsel %vm797, %v4518, 0.0
        %4769 = vadd.xlane.f32.xlu0 %v4768
        %v4770 = vpop.xlane.xlu0 %4769
        %v4771 = vsel %vm797, %v4519, 0.0
        %4772 = vadd.xlane.f32.xlu0 %v4771
        %v4773 = vpop.xlane.xlu0 %4772
        %v4774 = vsel %vm797, %v4520, 0.0
        %4775 = vadd.xlane.f32.xlu0 %v4774
        %v4776 = vpop.xlane.xlu0 %4775
        %v4777 = vsel %vm797, %v4521, 0.0
        %4778 = vadd.xlane.f32.xlu0 %v4777
        %v4779 = vpop.xlane.xlu0 %4778
        %v4780 = vsel %vm797, %v4522, 0.0
        %4781 = vadd.xlane.f32.xlu0 %v4780
        %v4782 = vpop.xlane.xlu0 %4781
        %v4783 = vsel %vm797, %v4523, 0.0
        %4784 = vadd.xlane.f32.xlu0 %v4783
        %v4785 = vpop.xlane.xlu0 %4784
        %v4786 = vsel %vm797, %v4524, 0.0
        %4787 = vadd.xlane.f32.xlu0 %v4786
        %v4788 = vpop.xlane.xlu0 %4787
        %v4789 = vsel %vm797, %v4525, 0.0
        %4790 = vadd.xlane.f32.xlu0 %v4789
        %v4791 = vpop.xlane.xlu0 %4790
        %v4792 = vsel %vm797, %v4526, 0.0
        %4793 = vadd.xlane.f32.xlu0 %v4792
        %v4794 = vpop.xlane.xlu0 %4793
        %v4795 = vsel %vm797, %v4527, 0.0
        %4796 = vadd.xlane.f32.xlu0 %v4795
        %v4797 = vpop.xlane.xlu0 %4796
        %v4798 = vsel %vm797, %v4528, 0.0
        %4799 = vadd.xlane.f32.xlu0 %v4798
        %v4800 = vpop.xlane.xlu0 %4799
        %v4801 = vsel %vm797, %v4529, 0.0
        %4802 = vadd.xlane.f32.xlu0 %v4801
        %v4803 = vpop.xlane.xlu0 %4802
        %v4804 = vsel %vm797, %v4530, 0.0
        %4805 = vadd.xlane.f32.xlu0 %v4804
        %v4806 = vpop.xlane.xlu0 %4805
        %v4807 = vsel %vm797, %v4531, 0.0
        %4808 = vadd.xlane.f32.xlu0 %v4807
        %v4809 = vpop.xlane.xlu0 %4808
        %v4810 = vsel %vm797, %v4532, 0.0
        %4811 = vadd.xlane.f32.xlu0 %v4810
        %v4812 = vpop.xlane.xlu0 %4811
        %v4813 = vsel %vm797, %v4533, 0.0
        %4814 = vadd.xlane.f32.xlu0 %v4813
        %v4815 = vpop.xlane.xlu0 %4814
        %v4816 = vsel %vm797, %v4534, 0.0
        %4817 = vadd.xlane.f32.xlu0 %v4816
        %v4818 = vpop.xlane.xlu0 %4817
        %v4819 = vsel %vm797, %v4535, 0.0
        %4820 = vadd.xlane.f32.xlu0 %v4819
        %v4821 = vpop.xlane.xlu0 %4820
        %v4822 = vsel %vm797, %v4536, 0.0
        %4823 = vadd.xlane.f32.xlu0 %v4822
        %v4824 = vpop.xlane.xlu0 %4823
        %v4825 = vsel %vm797, %v4537, 0.0
        %4826 = vadd.xlane.f32.xlu0 %v4825
        %v4827 = vpop.xlane.xlu0 %4826
        %v4828 = vsel %vm797, %v4538, 0.0
        %4829 = vadd.xlane.f32.xlu0 %v4828
        %v4830 = vpop.xlane.xlu0 %4829
        %v4831 = vsel %vm797, %v4539, 0.0
        %4832 = vadd.xlane.f32.xlu0 %v4831
        %v4833 = vpop.xlane.xlu0 %4832
        %v4834 = vsel %vm797, %v4540, 0.0
        %4835 = vadd.xlane.f32.xlu0 %v4834
        %v4836 = vpop.xlane.xlu0 %4835
        %v4837 = vsel %vm797, %v4541, 0.0
        %4838 = vadd.xlane.f32.xlu0 %v4837
        %v4839 = vpop.xlane.xlu0 %4838
        %v4840 = vsel %vm797, %v4542, 0.0
        %4841 = vadd.xlane.f32.xlu0 %v4840
        %v4842 = vpop.xlane.xlu0 %4841
        %v4843 = vsel %vm797, %v4543, 0.0
        %4844 = vadd.xlane.f32.xlu0 %v4843
        %v4845 = vpop.xlane.xlu0 %4844
        %v4846 = vsel %vm797, %v4544, 0.0
        %4847 = vadd.xlane.f32.xlu0 %v4846
        %v4848 = vpop.xlane.xlu0 %4847
        %v4849 = vsel %vm797, %v4545, 0.0
        %4850 = vadd.xlane.f32.xlu0 %v4849
        %v4851 = vpop.xlane.xlu0 %4850
        %v4852 = vsel %vm797, %v4546, 0.0
        %4853 = vadd.xlane.f32.xlu0 %v4852
        %v4854 = vpop.xlane.xlu0 %4853
        %v4855 = vsel %vm797, %v4547, 0.0
        %4856 = vadd.xlane.f32.xlu0 %v4855
        %v4857 = vpop.xlane.xlu0 %4856
        %v4858 = vsel %vm797, %v4548, 0.0
        %4859 = vadd.xlane.f32.xlu0 %v4858
        %v4860 = vpop.xlane.xlu0 %4859
        %v4861 = vsel %vm797, %v4549, 0.0
        %4862 = vadd.xlane.f32.xlu0 %v4861
        %v4863 = vpop.xlane.xlu0 %4862
        %v4864 = vsel %vm797, %v4550, 0.0
        %4865 = vadd.xlane.f32.xlu0 %v4864
        %v4866 = vpop.xlane.xlu0 %4865
        %v4867 = vsel %vm797, %v4551, 0.0
        %4868 = vadd.xlane.f32.xlu0 %v4867
        %v4869 = vpop.xlane.xlu0 %4868
        %v4870 = vsel %vm797, %v4552, 0.0
        %4871 = vadd.xlane.f32.xlu0 %v4870
        %v4872 = vpop.xlane.xlu0 %4871
        %v4873 = vsel %vm797, %v4553, 0.0
        %4874 = vadd.xlane.f32.xlu0 %v4873
        %v4875 = vpop.xlane.xlu0 %4874
        %v4876 = vsel %vm797, %v4554, 0.0
        %4877 = vadd.xlane.f32.xlu0 %v4876
        %v4878 = vpop.xlane.xlu0 %4877
        %v4879 = vsel %vm797, %v4555, 0.0
        %4880 = vadd.xlane.f32.xlu0 %v4879
        %v4881 = vpop.xlane.xlu0 %4880
        %v4882 = vsel %vm797, %v4556, 0.0
        %4883 = vadd.xlane.f32.xlu0 %v4882
        %v4884 = vpop.xlane.xlu0 %4883
        %v4885 = vsel %vm797, %v4557, 0.0
        %4886 = vadd.xlane.f32.xlu0 %v4885
        %v4887 = vpop.xlane.xlu0 %4886
        %v4888 = vsel %vm797, %v4558, 0.0
        %4889 = vadd.xlane.f32.xlu0 %v4888
        %v4890 = vpop.xlane.xlu0 %4889
        %v4891 = vsel %vm797, %v4559, 0.0
        %4892 = vadd.xlane.f32.xlu0 %v4891
        %v4893 = vpop.xlane.xlu0 %4892
        %v4894 = vsel %vm797, %v4560, 0.0
        %4895 = vadd.xlane.f32.xlu0 %v4894
        %v4896 = vpop.xlane.xlu0 %4895
        %v4897 = vsel %vm797, %v4561, 0.0
        %4898 = vadd.xlane.f32.xlu0 %v4897
        %v4899 = vpop.xlane.xlu0 %4898
        %v4900 = vsel %vm797, %v4562, 0.0
        %4901 = vadd.xlane.f32.xlu0 %v4900
        %v4902 = vpop.xlane.xlu0 %4901
        %v4903 = vsel %vm797, %v4563, 0.0
        %4904 = vadd.xlane.f32.xlu0 %v4903
        %v4905 = vpop.xlane.xlu0 %4904
        %v4906 = vsel %vm797, %v4564, 0.0
        %4907 = vadd.xlane.f32.xlu0 %v4906
        %v4908 = vpop.xlane.xlu0 %4907
        %v4909 = vsel %vm797, %v4565, 0.0
        %4910 = vadd.xlane.f32.xlu0 %v4909
        %v4911 = vpop.xlane.xlu0 %4910
        %v4912 = vsel %vm797, %v4566, 0.0
        %4913 = vadd.xlane.f32.xlu0 %v4912
        %v4914 = vpop.xlane.xlu0 %4913
        %v4915 = vsel %vm797, %v4567, 0.0
        %4916 = vadd.xlane.f32.xlu0 %v4915
        %v4917 = vpop.xlane.xlu0 %4916
        %v4918 = vsel %vm797, %v4568, 0.0
        %4919 = vadd.xlane.f32.xlu0 %v4918
        %v4920 = vpop.xlane.xlu0 %4919
        %v4921 = vsel %vm797, %v4569, 0.0
        %4922 = vadd.xlane.f32.xlu0 %v4921
        %v4923 = vpop.xlane.xlu0 %4922
        %v4924 = vsel %vm797, %v4570, 0.0
        %4925 = vadd.xlane.f32.xlu0 %v4924
        %v4926 = vpop.xlane.xlu0 %4925
        %v4927 = vsel %vm797, %v4571, 0.0
        %4928 = vadd.xlane.f32.xlu0 %v4927
        %v4929 = vpop.xlane.xlu0 %4928
        %v4930 = vsel %vm797, %v4572, 0.0
        %4931 = vadd.xlane.f32.xlu0 %v4930
        %v4932 = vpop.xlane.xlu0 %4931
        %v4933 = vsel %vm797, %v4573, 0.0
        %4934 = vadd.xlane.f32.xlu0 %v4933
        %v4935 = vpop.xlane.xlu0 %4934
        %v4936 = vsel %vm797, %v4574, 0.0
        %4937 = vadd.xlane.f32.xlu0 %v4936
        %v4938 = vpop.xlane.xlu0 %4937
        %v4939 = vsel %vm797, %v4575, 0.0
        %4940 = vadd.xlane.f32.xlu0 %v4939
        %v4941 = vpop.xlane.xlu0 %4940
        %v4942 = vsel %vm797, %v4576, 0.0
        %4943 = vadd.xlane.f32.xlu0 %v4942
        %v4944 = vpop.xlane.xlu0 %4943
        %v4945 = vsel %vm797, %v4577, 0.0
        %4946 = vadd.xlane.f32.xlu0 %v4945
        %v4947 = vpop.xlane.xlu0 %4946
        %v4948 = vsel %vm797, %v4578, 0.0
        %4949 = vadd.xlane.f32.xlu0 %v4948
        %v4950 = vpop.xlane.xlu0 %4949
        %v4951 = vsel %vm797, %v4579, 0.0
        %4952 = vadd.xlane.f32.xlu0 %v4951
        %v4953 = vpop.xlane.xlu0 %4952
        %v4954 = vsel %vm797, %v4580, 0.0
        %4955 = vadd.xlane.f32.xlu0 %v4954
        %v4956 = vpop.xlane.xlu0 %4955
        %v4957 = vsel %vm797, %v4581, 0.0
        %4958 = vadd.xlane.f32.xlu0 %v4957
        %v4959 = vpop.xlane.xlu0 %4958
        %v4960 = vsel %vm797, %v4582, 0.0
        %4961 = vadd.xlane.f32.xlu0 %v4960
        %v4962 = vpop.xlane.xlu0 %4961
        %v4963 = vsel %vm797, %v4583, 0.0
        %4964 = vadd.xlane.f32.xlu0 %v4963
        %v4965 = vpop.xlane.xlu0 %4964
        %v4966 = vsel %vm797, %v4584, 0.0
        %4967 = vadd.xlane.f32.xlu0 %v4966
        %v4968 = vpop.xlane.xlu0 %4967
        %v4970 = vunpack.c.l.b16 %v1033
        %v4971 = vpack.c.b16 %v4970, %v4970
        %4972 = vrot.lane.b32.xlu0 %v4971, 96
        %v4973 = vpop.permute.xlu0 %4972
        %v4982 = vunpack.c.l.b16 %v4176
        %v4983 = vunpack.c.l.b16 %v4177
        %v4984 = vunpack.c.l.b16 %v4178
        %v4985 = vunpack.c.l.b16 %v4179
        %v4986 = vunpack.c.l.b16 %v4180
        %v4987 = vunpack.c.l.b16 %v4181
        %v4988 = vunpack.c.l.b16 %v4182
        %v4989 = vunpack.c.l.b16 %v4183
        %v4990 = vpack.c.b16 %v4983, %v4982
        %v4991 = vpack.c.b16 %v4985, %v4984
        %v4992 = vpack.c.b16 %v4987, %v4986
        %v4993 = vpack.c.b16 %v4989, %v4988
        %v5002 = vperm.slane %v4587, %v1870
        %v5003 = vperm.slane %v4590, %v1872
        %v5004 = vsel %vm1874, %v5003, %v5002
        %v5005 = vperm.slane %v4593, %v1876
        %v5006 = vsel %vm1878, %v5005, %v5004
        %v5007 = vperm.slane %v4596, %v1880
        %v5008 = vsel %vm1882, %v5007, %v5006
        %v5009 = vperm.slane %v4599, %v1884
        %v5010 = vsel %vm1886, %v5009, %v5008
        %v5011 = vperm.slane %v4602, %v1888
        %v5012 = vsel %vm1890, %v5011, %v5010
        %v5013 = vperm.slane %v4605, %v1892
        %v5014 = vsel %vm1894, %v5013, %v5012
        %v5015 = vperm.slane %v4608, %v1896
        %v5016 = vsel %vm1898, %v5015, %v5014
        %v5017 = vsel %vm1900, %v5016, %v5016
        %v5018 = vsel %vm1902, %v5016, %v5017
        %v5021 = vsel %vm797, %v4973, 0
        %v5024 = vsel %vm797, %v4990, 0
        %v5027 = vsel %vm797, %v4991, 0
        %v5030 = vsel %vm797, %v4992, 0
        %v5033 = vsel %vm797, %v4993, 0
        %5035 = vmatpush.bf16.xpose.msra.mxu0 0
        %5036 = vmatpush.bf16.xpose.msra.mxu0 0
        %5037 = vmatpush.bf16.xpose.msra.mxu0 0
        %5038 = vmatpush.bf16.xpose.msra.mxu0 0
        %5039 = vmatpush.bf16.xpose.msra.mxu0 %v5033
        %5040 = vmatpush.bf16.xpose.msra.mxu0 %v5030
        %5041 = vmatpush.bf16.xpose.msra.mxu0 %v5027
        %5042 = vmatpush.bf16.xpose.msra.mxu0 %v5024
        %5043 = vmatmul.bf16.gmra.mxu0 %v5021
        %v5044 = vpop.f32.mrf.mxu0
        %v5045 = vadd.f32 %v5018, %v5044
        %v5046 = vpop.f32.mrf.mxu0
        %5047 = vdwg.mxu0
        %v5049 = vunpack.c.l.b16 %v1034
        %v5050 = vpack.c.b16 %v5049, %v5049
        %5051 = vrot.lane.b32.xlu0 %v5050, 96
        %v5052 = vpop.permute.xlu0 %5051
        %v5061 = vunpack.c.l.b16 %v4184
        %v5062 = vunpack.c.l.b16 %v4185
        %v5063 = vunpack.c.l.b16 %v4186
        %v5064 = vunpack.c.l.b16 %v4187
        %v5065 = vunpack.c.l.b16 %v4188
        %v5066 = vunpack.c.l.b16 %v4189
        %v5067 = vunpack.c.l.b16 %v4190
        %v5068 = vunpack.c.l.b16 %v4191
        %v5069 = vpack.c.b16 %v5062, %v5061
        %v5070 = vpack.c.b16 %v5064, %v5063
        %v5071 = vpack.c.b16 %v5066, %v5065
        %v5072 = vpack.c.b16 %v5068, %v5067
        %v5081 = vperm.slane %v4611, %v1870
        %v5082 = vperm.slane %v4614, %v1872
        %v5083 = vsel %vm1874, %v5082, %v5081
        %v5084 = vperm.slane %v4617, %v1876
        %v5085 = vsel %vm1878, %v5084, %v5083
        %v5086 = vperm.slane %v4620, %v1880
        %v5087 = vsel %vm1882, %v5086, %v5085
        %v5088 = vperm.slane %v4623, %v1884
        %v5089 = vsel %vm1886, %v5088, %v5087
        %v5090 = vperm.slane %v4626, %v1888
        %v5091 = vsel %vm1890, %v5090, %v5089
        %v5092 = vperm.slane %v4629, %v1892
        %v5093 = vsel %vm1894, %v5092, %v5091
        %v5094 = vperm.slane %v4632, %v1896
        %v5095 = vsel %vm1898, %v5094, %v5093
        %v5096 = vsel %vm1900, %v5095, %v5095
        %v5097 = vsel %vm1902, %v5095, %v5096
        %v5100 = vsel %vm797, %v5052, 0
        %v5103 = vsel %vm797, %v5069, 0
        %v5106 = vsel %vm797, %v5070, 0
        %v5109 = vsel %vm797, %v5071, 0
        %v5112 = vsel %vm797, %v5072, 0
        %5114 = vmatpush.bf16.xpose.msra.mxu0 0
        %5115 = vmatpush.bf16.xpose.msra.mxu0 0
        %5116 = vmatpush.bf16.xpose.msra.mxu0 0
        %5117 = vmatpush.bf16.xpose.msra.mxu0 0
        %5118 = vmatpush.bf16.xpose.msra.mxu0 %v5112
        %5119 = vmatpush.bf16.xpose.msra.mxu0 %v5109
        %5120 = vmatpush.bf16.xpose.msra.mxu0 %v5106
        %5121 = vmatpush.bf16.xpose.msra.mxu0 %v5103
        %5122 = vmatmul.bf16.gmra.mxu0 %v5100
        %v5123 = vpop.f32.mrf.mxu0
        %v5124 = vadd.f32 %v5097, %v5123
        %v5125 = vpop.f32.mrf.mxu0
        %5126 = vdwg.mxu0
        %v5128 = vunpack.c.l.b16 %v1035
        %v5129 = vpack.c.b16 %v5128, %v5128
        %5130 = vrot.lane.b32.xlu0 %v5129, 96
        %v5131 = vpop.permute.xlu0 %5130
        %v5140 = vunpack.c.l.b16 %v4192
        %v5141 = vunpack.c.l.b16 %v4193
        %v5142 = vunpack.c.l.b16 %v4194
        %v5143 = vunpack.c.l.b16 %v4195
        %v5144 = vunpack.c.l.b16 %v4196
        %v5145 = vunpack.c.l.b16 %v4197
        %v5146 = vunpack.c.l.b16 %v4198
        %v5147 = vunpack.c.l.b16 %v4199
        %v5148 = vpack.c.b16 %v5141, %v5140
        %v5149 = vpack.c.b16 %v5143, %v5142
        %v5150 = vpack.c.b16 %v5145, %v5144
        %v5151 = vpack.c.b16 %v5147, %v5146
        %v5160 = vperm.slane %v4635, %v1870
        %v5161 = vperm.slane %v4638, %v1872
        %v5162 = vsel %vm1874, %v5161, %v5160
        %v5163 = vperm.slane %v4641, %v1876
        %v5164 = vsel %vm1878, %v5163, %v5162
        %v5165 = vperm.slane %v4644, %v1880
        %v5166 = vsel %vm1882, %v5165, %v5164
        %v5167 = vperm.slane %v4647, %v1884
        %v5168 = vsel %vm1886, %v5167, %v5166
        %v5169 = vperm.slane %v4650, %v1888
        %v5170 = vsel %vm1890, %v5169, %v5168
        %v5171 = vperm.slane %v4653, %v1892
        %v5172 = vsel %vm1894, %v5171, %v5170
        %v5173 = vperm.slane %v4656, %v1896
        %v5174 = vsel %vm1898, %v5173, %v5172
        %v5175 = vsel %vm1900, %v5174, %v5174
        %v5176 = vsel %vm1902, %v5174, %v5175
        %v5179 = vsel %vm797, %v5131, 0
        %v5182 = vsel %vm797, %v5148, 0
        %v5185 = vsel %vm797, %v5149, 0
        %v5188 = vsel %vm797, %v5150, 0
        %v5191 = vsel %vm797, %v5151, 0
        %5193 = vmatpush.bf16.xpose.msra.mxu0 0
        %5194 = vmatpush.bf16.xpose.msra.mxu0 0
        %5195 = vmatpush.bf16.xpose.msra.mxu0 0
        %5196 = vmatpush.bf16.xpose.msra.mxu0 0
        %5197 = vmatpush.bf16.xpose.msra.mxu0 %v5191
        %5198 = vmatpush.bf16.xpose.msra.mxu0 %v5188
        %5199 = vmatpush.bf16.xpose.msra.mxu0 %v5185
        %5200 = vmatpush.bf16.xpose.msra.mxu0 %v5182
        %5201 = vmatmul.bf16.gmra.mxu0 %v5179
        %v5202 = vpop.f32.mrf.mxu0
        %v5203 = vadd.f32 %v5176, %v5202
        %v5204 = vpop.f32.mrf.mxu0
        %5205 = vdwg.mxu0
        %v5207 = vunpack.c.l.b16 %v1036
        %v5208 = vpack.c.b16 %v5207, %v5207
        %5209 = vrot.lane.b32.xlu0 %v5208, 96
        %v5210 = vpop.permute.xlu0 %5209
        %v5219 = vunpack.c.l.b16 %v4200
        %v5220 = vunpack.c.l.b16 %v4201
        %v5221 = vunpack.c.l.b16 %v4202
        %v5222 = vunpack.c.l.b16 %v4203
        %v5223 = vunpack.c.l.b16 %v4204
        %v5224 = vunpack.c.l.b16 %v4205
        %v5225 = vunpack.c.l.b16 %v4206
        %v5226 = vunpack.c.l.b16 %v4207
        %v5227 = vpack.c.b16 %v5220, %v5219
        %v5228 = vpack.c.b16 %v5222, %v5221
        %v5229 = vpack.c.b16 %v5224, %v5223
        %v5230 = vpack.c.b16 %v5226, %v5225
        %v5239 = vperm.slane %v4659, %v1870
        %v5240 = vperm.slane %v4662, %v1872
        %v5241 = vsel %vm1874, %v5240, %v5239
        %v5242 = vperm.slane %v4665, %v1876
        %v5243 = vsel %vm1878, %v5242, %v5241
        %v5244 = vperm.slane %v4668, %v1880
        %v5245 = vsel %vm1882, %v5244, %v5243
        %v5246 = vperm.slane %v4671, %v1884
        %v5247 = vsel %vm1886, %v5246, %v5245
        %v5248 = vperm.slane %v4674, %v1888
        %v5249 = vsel %vm1890, %v5248, %v5247
        %v5250 = vperm.slane %v4677, %v1892
        %v5251 = vsel %vm1894, %v5250, %v5249
        %v5252 = vperm.slane %v4680, %v1896
        %v5253 = vsel %vm1898, %v5252, %v5251
        %v5254 = vsel %vm1900, %v5253, %v5253
        %v5255 = vsel %vm1902, %v5253, %v5254
        %v5258 = vsel %vm797, %v5210, 0
        %v5261 = vsel %vm797, %v5227, 0
        %v5264 = vsel %vm797, %v5228, 0
        %v5267 = vsel %vm797, %v5229, 0
        %v5270 = vsel %vm797, %v5230, 0
        %5272 = vmatpush.bf16.xpose.msra.mxu0 0
        %5273 = vmatpush.bf16.xpose.msra.mxu0 0
        %5274 = vmatpush.bf16.xpose.msra.mxu0 0
        %5275 = vmatpush.bf16.xpose.msra.mxu0 0
        %5276 = vmatpush.bf16.xpose.msra.mxu0 %v5270
        %5277 = vmatpush.bf16.xpose.msra.mxu0 %v5267
        %5278 = vmatpush.bf16.xpose.msra.mxu0 %v5264
        %5279 = vmatpush.bf16.xpose.msra.mxu0 %v5261
        %5280 = vmatmul.bf16.gmra.mxu0 %v5258
        %v5281 = vpop.f32.mrf.mxu0
        %v5282 = vadd.f32 %v5255, %v5281
        %v5283 = vpop.f32.mrf.mxu0
        %5284 = vdwg.mxu0
        %v5286 = vunpack.c.l.b16 %v1037
        %v5287 = vpack.c.b16 %v5286, %v5286
        %5288 = vrot.lane.b32.xlu0 %v5287, 96
        %v5289 = vpop.permute.xlu0 %5288
        %v5298 = vunpack.c.l.b16 %v4208
        %v5299 = vunpack.c.l.b16 %v4209
        %v5300 = vunpack.c.l.b16 %v4210
        %v5301 = vunpack.c.l.b16 %v4211
        %v5302 = vunpack.c.l.b16 %v4212
        %v5303 = vunpack.c.l.b16 %v4213
        %v5304 = vunpack.c.l.b16 %v4214
        %v5305 = vunpack.c.l.b16 %v4215
        %v5306 = vpack.c.b16 %v5299, %v5298
        %v5307 = vpack.c.b16 %v5301, %v5300
        %v5308 = vpack.c.b16 %v5303, %v5302
        %v5309 = vpack.c.b16 %v5305, %v5304
        %v5318 = vperm.slane %v4683, %v1870
        %v5319 = vperm.slane %v4686, %v1872
        %v5320 = vsel %vm1874, %v5319, %v5318
        %v5321 = vperm.slane %v4689, %v1876
        %v5322 = vsel %vm1878, %v5321, %v5320
        %v5323 = vperm.slane %v4692, %v1880
        %v5324 = vsel %vm1882, %v5323, %v5322
        %v5325 = vperm.slane %v4695, %v1884
        %v5326 = vsel %vm1886, %v5325, %v5324
        %v5327 = vperm.slane %v4698, %v1888
        %v5328 = vsel %vm1890, %v5327, %v5326
        %v5329 = vperm.slane %v4701, %v1892
        %v5330 = vsel %vm1894, %v5329, %v5328
        %v5331 = vperm.slane %v4704, %v1896
        %v5332 = vsel %vm1898, %v5331, %v5330
        %v5333 = vsel %vm1900, %v5332, %v5332
        %v5334 = vsel %vm1902, %v5332, %v5333
        %v5337 = vsel %vm797, %v5289, 0
        %v5340 = vsel %vm797, %v5306, 0
        %v5343 = vsel %vm797, %v5307, 0
        %v5346 = vsel %vm797, %v5308, 0
        %v5349 = vsel %vm797, %v5309, 0
        %5351 = vmatpush.bf16.xpose.msra.mxu0 0
        %5352 = vmatpush.bf16.xpose.msra.mxu0 0
        %5353 = vmatpush.bf16.xpose.msra.mxu0 0
        %5354 = vmatpush.bf16.xpose.msra.mxu0 0
        %5355 = vmatpush.bf16.xpose.msra.mxu0 %v5349
        %5356 = vmatpush.bf16.xpose.msra.mxu0 %v5346
        %5357 = vmatpush.bf16.xpose.msra.mxu0 %v5343
        %5358 = vmatpush.bf16.xpose.msra.mxu0 %v5340
        %5359 = vmatmul.bf16.gmra.mxu0 %v5337
        %v5360 = vpop.f32.mrf.mxu0
        %v5361 = vadd.f32 %v5334, %v5360
        %v5362 = vpop.f32.mrf.mxu0
        %5363 = vdwg.mxu0
        %v5365 = vunpack.c.l.b16 %v1038
        %v5366 = vpack.c.b16 %v5365, %v5365
        %5367 = vrot.lane.b32.xlu0 %v5366, 96
        %v5368 = vpop.permute.xlu0 %5367
        %v5377 = vunpack.c.l.b16 %v4216
        %v5378 = vunpack.c.l.b16 %v4217
        %v5379 = vunpack.c.l.b16 %v4218
        %v5380 = vunpack.c.l.b16 %v4219
        %v5381 = vunpack.c.l.b16 %v4220
        %v5382 = vunpack.c.l.b16 %v4221
        %v5383 = vunpack.c.l.b16 %v4222
        %v5384 = vunpack.c.l.b16 %v4223
        %v5385 = vpack.c.b16 %v5378, %v5377
        %v5386 = vpack.c.b16 %v5380, %v5379
        %v5387 = vpack.c.b16 %v5382, %v5381
        %v5388 = vpack.c.b16 %v5384, %v5383
        %v5397 = vperm.slane %v4707, %v1870
        %v5398 = vperm.slane %v4710, %v1872
        %v5399 = vsel %vm1874, %v5398, %v5397
        %v5400 = vperm.slane %v4713, %v1876
        %v5401 = vsel %vm1878, %v5400, %v5399
        %v5402 = vperm.slane %v4716, %v1880
        %v5403 = vsel %vm1882, %v5402, %v5401
        %v5404 = vperm.slane %v4719, %v1884
        %v5405 = vsel %vm1886, %v5404, %v5403
        %v5406 = vperm.slane %v4722, %v1888
        %v5407 = vsel %vm1890, %v5406, %v5405
        %v5408 = vperm.slane %v4725, %v1892
        %v5409 = vsel %vm1894, %v5408, %v5407
        %v5410 = vperm.slane %v4728, %v1896
        %v5411 = vsel %vm1898, %v5410, %v5409
        %v5412 = vsel %vm1900, %v5411, %v5411
        %v5413 = vsel %vm1902, %v5411, %v5412
        %v5416 = vsel %vm797, %v5368, 0
        %v5419 = vsel %vm797, %v5385, 0
        %v5422 = vsel %vm797, %v5386, 0
        %v5425 = vsel %vm797, %v5387, 0
        %v5428 = vsel %vm797, %v5388, 0
        %5430 = vmatpush.bf16.xpose.msra.mxu0 0
        %5431 = vmatpush.bf16.xpose.msra.mxu0 0
        %5432 = vmatpush.bf16.xpose.msra.mxu0 0
        %5433 = vmatpush.bf16.xpose.msra.mxu0 0
        %5434 = vmatpush.bf16.xpose.msra.mxu0 %v5428
        %5435 = vmatpush.bf16.xpose.msra.mxu0 %v5425
        %5436 = vmatpush.bf16.xpose.msra.mxu0 %v5422
        %5437 = vmatpush.bf16.xpose.msra.mxu0 %v5419
        %5438 = vmatmul.bf16.gmra.mxu0 %v5416
        %v5439 = vpop.f32.mrf.mxu0
        %v5440 = vadd.f32 %v5413, %v5439
        %v5441 = vpop.f32.mrf.mxu0
        %5442 = vdwg.mxu0
        %v5444 = vunpack.c.l.b16 %v1039
        %v5445 = vpack.c.b16 %v5444, %v5444
        %5446 = vrot.lane.b32.xlu0 %v5445, 96
        %v5447 = vpop.permute.xlu0 %5446
        %v5456 = vunpack.c.l.b16 %v4224
        %v5457 = vunpack.c.l.b16 %v4225
        %v5458 = vunpack.c.l.b16 %v4226
        %v5459 = vunpack.c.l.b16 %v4227
        %v5460 = vunpack.c.l.b16 %v4228
        %v5461 = vunpack.c.l.b16 %v4229
        %v5462 = vunpack.c.l.b16 %v4230
        %v5463 = vunpack.c.l.b16 %v4231
        %v5464 = vpack.c.b16 %v5457, %v5456
        %v5465 = vpack.c.b16 %v5459, %v5458
        %v5466 = vpack.c.b16 %v5461, %v5460
        %v5467 = vpack.c.b16 %v5463, %v5462
        %v5476 = vperm.slane %v4731, %v1870
        %v5477 = vperm.slane %v4734, %v1872
        %v5478 = vsel %vm1874, %v5477, %v5476
        %v5479 = vperm.slane %v4737, %v1876
        %v5480 = vsel %vm1878, %v5479, %v5478
        %v5481 = vperm.slane %v4740, %v1880
        %v5482 = vsel %vm1882, %v5481, %v5480
        %v5483 = vperm.slane %v4743, %v1884
        %v5484 = vsel %vm1886, %v5483, %v5482
        %v5485 = vperm.slane %v4746, %v1888
        %v5486 = vsel %vm1890, %v5485, %v5484
        %v5487 = vperm.slane %v4749, %v1892
        %v5488 = vsel %vm1894, %v5487, %v5486
        %v5489 = vperm.slane %v4752, %v1896
        %v5490 = vsel %vm1898, %v5489, %v5488
        %v5491 = vsel %vm1900, %v5490, %v5490
        %v5492 = vsel %vm1902, %v5490, %v5491
        %v5495 = vsel %vm797, %v5447, 0
        %v5498 = vsel %vm797, %v5464, 0
        %v5501 = vsel %vm797, %v5465, 0
        %v5504 = vsel %vm797, %v5466, 0
        %v5507 = vsel %vm797, %v5467, 0
        %5509 = vmatpush.bf16.xpose.msra.mxu0 0
        %5510 = vmatpush.bf16.xpose.msra.mxu0 0
        %5511 = vmatpush.bf16.xpose.msra.mxu0 0
        %5512 = vmatpush.bf16.xpose.msra.mxu0 0
        %5513 = vmatpush.bf16.xpose.msra.mxu0 %v5507
        %5514 = vmatpush.bf16.xpose.msra.mxu0 %v5504
        %5515 = vmatpush.bf16.xpose.msra.mxu0 %v5501
        %5516 = vmatpush.bf16.xpose.msra.mxu0 %v5498
        %5517 = vmatmul.bf16.gmra.mxu0 %v5495
        %v5518 = vpop.f32.mrf.mxu0
        %v5519 = vadd.f32 %v5492, %v5518
        %v5520 = vpop.f32.mrf.mxu0
        %5521 = vdwg.mxu0
        %v5523 = vunpack.c.l.b16 %v1040
        %v5524 = vpack.c.b16 %v5523, %v5523
        %5525 = vrot.lane.b32.xlu0 %v5524, 96
        %v5526 = vpop.permute.xlu0 %5525
        %v5535 = vunpack.c.l.b16 %v4232
        %v5536 = vunpack.c.l.b16 %v4233
        %v5537 = vunpack.c.l.b16 %v4234
        %v5538 = vunpack.c.l.b16 %v4235
        %v5539 = vunpack.c.l.b16 %v4236
        %v5540 = vunpack.c.l.b16 %v4237
        %v5541 = vunpack.c.l.b16 %v4238
        %v5542 = vunpack.c.l.b16 %v4239
        %v5543 = vpack.c.b16 %v5536, %v5535
        %v5544 = vpack.c.b16 %v5538, %v5537
        %v5545 = vpack.c.b16 %v5540, %v5539
        %v5546 = vpack.c.b16 %v5542, %v5541
        %v5555 = vperm.slane %v4755, %v1870
        %v5556 = vperm.slane %v4758, %v1872
        %v5557 = vsel %vm1874, %v5556, %v5555
        %v5558 = vperm.slane %v4761, %v1876
        %v5559 = vsel %vm1878, %v5558, %v5557
        %v5560 = vperm.slane %v4764, %v1880
        %v5561 = vsel %vm1882, %v5560, %v5559
        %v5562 = vperm.slane %v4767, %v1884
        %v5563 = vsel %vm1886, %v5562, %v5561
        %v5564 = vperm.slane %v4770, %v1888
        %v5565 = vsel %vm1890, %v5564, %v5563
        %v5566 = vperm.slane %v4773, %v1892
        %v5567 = vsel %vm1894, %v5566, %v5565
        %v5568 = vperm.slane %v4776, %v1896
        %v5569 = vsel %vm1898, %v5568, %v5567
        %v5570 = vsel %vm1900, %v5569, %v5569
        %v5571 = vsel %vm1902, %v5569, %v5570
        %v5574 = vsel %vm797, %v5526, 0
        %v5577 = vsel %vm797, %v5543, 0
        %v5580 = vsel %vm797, %v5544, 0
        %v5583 = vsel %vm797, %v5545, 0
        %v5586 = vsel %vm797, %v5546, 0
        %5588 = vmatpush.bf16.xpose.msra.mxu0 0
        %5589 = vmatpush.bf16.xpose.msra.mxu0 0
        %5590 = vmatpush.bf16.xpose.msra.mxu0 0
        %5591 = vmatpush.bf16.xpose.msra.mxu0 0
        %5592 = vmatpush.bf16.xpose.msra.mxu0 %v5586
        %5593 = vmatpush.bf16.xpose.msra.mxu0 %v5583
        %5594 = vmatpush.bf16.xpose.msra.mxu0 %v5580
        %5595 = vmatpush.bf16.xpose.msra.mxu0 %v5577
        %5596 = vmatmul.bf16.gmra.mxu0 %v5574
        %v5597 = vpop.f32.mrf.mxu0
        %v5598 = vadd.f32 %v5571, %v5597
        %v5599 = vpop.f32.mrf.mxu0
        %5600 = vdwg.mxu0
        %v5602 = vunpack.c.l.b16 %v1041
        %v5603 = vpack.c.b16 %v5602, %v5602
        %5604 = vrot.lane.b32.xlu0 %v5603, 96
        %v5605 = vpop.permute.xlu0 %5604
        %v5614 = vunpack.c.l.b16 %v4240
        %v5615 = vunpack.c.l.b16 %v4241
        %v5616 = vunpack.c.l.b16 %v4242
        %v5617 = vunpack.c.l.b16 %v4243
        %v5618 = vunpack.c.l.b16 %v4244
        %v5619 = vunpack.c.l.b16 %v4245
        %v5620 = vunpack.c.l.b16 %v4246
        %v5621 = vunpack.c.l.b16 %v4247
        %v5622 = vpack.c.b16 %v5615, %v5614
        %v5623 = vpack.c.b16 %v5617, %v5616
        %v5624 = vpack.c.b16 %v5619, %v5618
        %v5625 = vpack.c.b16 %v5621, %v5620
        %v5634 = vperm.slane %v4779, %v1870
        %v5635 = vperm.slane %v4782, %v1872
        %v5636 = vsel %vm1874, %v5635, %v5634
        %v5637 = vperm.slane %v4785, %v1876
        %v5638 = vsel %vm1878, %v5637, %v5636
        %v5639 = vperm.slane %v4788, %v1880
        %v5640 = vsel %vm1882, %v5639, %v5638
        %v5641 = vperm.slane %v4791, %v1884
        %v5642 = vsel %vm1886, %v5641, %v5640
        %v5643 = vperm.slane %v4794, %v1888
        %v5644 = vsel %vm1890, %v5643, %v5642
        %v5645 = vperm.slane %v4797, %v1892
        %v5646 = vsel %vm1894, %v5645, %v5644
        %v5647 = vperm.slane %v4800, %v1896
        %v5648 = vsel %vm1898, %v5647, %v5646
        %v5649 = vsel %vm1900, %v5648, %v5648
        %v5650 = vsel %vm1902, %v5648, %v5649
        %v5653 = vsel %vm797, %v5605, 0
        %v5656 = vsel %vm797, %v5622, 0
        %v5659 = vsel %vm797, %v5623, 0
        %v5662 = vsel %vm797, %v5624, 0
        %v5665 = vsel %vm797, %v5625, 0
        %5667 = vmatpush.bf16.xpose.msra.mxu0 0
        %5668 = vmatpush.bf16.xpose.msra.mxu0 0
        %5669 = vmatpush.bf16.xpose.msra.mxu0 0
        %5670 = vmatpush.bf16.xpose.msra.mxu0 0
        %5671 = vmatpush.bf16.xpose.msra.mxu0 %v5665
        %5672 = vmatpush.bf16.xpose.msra.mxu0 %v5662
        %5673 = vmatpush.bf16.xpose.msra.mxu0 %v5659
        %5674 = vmatpush.bf16.xpose.msra.mxu0 %v5656
        %5675 = vmatmul.bf16.gmra.mxu0 %v5653
        %v5676 = vpop.f32.mrf.mxu0
        %v5677 = vadd.f32 %v5650, %v5676
        %v5678 = vpop.f32.mrf.mxu0
        %5679 = vdwg.mxu0
        %v5681 = vunpack.c.l.b16 %v1042
        %v5682 = vpack.c.b16 %v5681, %v5681
        %5683 = vrot.lane.b32.xlu0 %v5682, 96
        %v5684 = vpop.permute.xlu0 %5683
        %v5693 = vunpack.c.l.b16 %v4248
        %v5694 = vunpack.c.l.b16 %v4249
        %v5695 = vunpack.c.l.b16 %v4250
        %v5696 = vunpack.c.l.b16 %v4251
        %v5697 = vunpack.c.l.b16 %v4252
        %v5698 = vunpack.c.l.b16 %v4253
        %v5699 = vunpack.c.l.b16 %v4254
        %v5700 = vunpack.c.l.b16 %v4255
        %v5701 = vpack.c.b16 %v5694, %v5693
        %v5702 = vpack.c.b16 %v5696, %v5695
        %v5703 = vpack.c.b16 %v5698, %v5697
        %v5704 = vpack.c.b16 %v5700, %v5699
        %v5713 = vperm.slane %v4803, %v1870
        %v5714 = vperm.slane %v4806, %v1872
        %v5715 = vsel %vm1874, %v5714, %v5713
        %v5716 = vperm.slane %v4809, %v1876
        %v5717 = vsel %vm1878, %v5716, %v5715
        %v5718 = vperm.slane %v4812, %v1880
        %v5719 = vsel %vm1882, %v5718, %v5717
        %v5720 = vperm.slane %v4815, %v1884
        %v5721 = vsel %vm1886, %v5720, %v5719
        %v5722 = vperm.slane %v4818, %v1888
        %v5723 = vsel %vm1890, %v5722, %v5721
        %v5724 = vperm.slane %v4821, %v1892
        %v5725 = vsel %vm1894, %v5724, %v5723
        %v5726 = vperm.slane %v4824, %v1896
        %v5727 = vsel %vm1898, %v5726, %v5725
        %v5728 = vsel %vm1900, %v5727, %v5727
        %v5729 = vsel %vm1902, %v5727, %v5728
        %v5732 = vsel %vm797, %v5684, 0
        %v5735 = vsel %vm797, %v5701, 0
        %v5738 = vsel %vm797, %v5702, 0
        %v5741 = vsel %vm797, %v5703, 0
        %v5744 = vsel %vm797, %v5704, 0
        %5746 = vmatpush.bf16.xpose.msra.mxu0 0
        %5747 = vmatpush.bf16.xpose.msra.mxu0 0
        %5748 = vmatpush.bf16.xpose.msra.mxu0 0
        %5749 = vmatpush.bf16.xpose.msra.mxu0 0
        %5750 = vmatpush.bf16.xpose.msra.mxu0 %v5744
        %5751 = vmatpush.bf16.xpose.msra.mxu0 %v5741
        %5752 = vmatpush.bf16.xpose.msra.mxu0 %v5738
        %5753 = vmatpush.bf16.xpose.msra.mxu0 %v5735
        %5754 = vmatmul.bf16.gmra.mxu0 %v5732
        %v5755 = vpop.f32.mrf.mxu0
        %v5756 = vadd.f32 %v5729, %v5755
        %v5757 = vpop.f32.mrf.mxu0
        %5758 = vdwg.mxu0
        %v5760 = vunpack.c.l.b16 %v1043
        %v5761 = vpack.c.b16 %v5760, %v5760
        %5762 = vrot.lane.b32.xlu0 %v5761, 96
        %v5763 = vpop.permute.xlu0 %5762
        %v5772 = vunpack.c.l.b16 %v4256
        %v5773 = vunpack.c.l.b16 %v4257
        %v5774 = vunpack.c.l.b16 %v4258
        %v5775 = vunpack.c.l.b16 %v4259
        %v5776 = vunpack.c.l.b16 %v4260
        %v5777 = vunpack.c.l.b16 %v4261
        %v5778 = vunpack.c.l.b16 %v4262
        %v5779 = vunpack.c.l.b16 %v4263
        %v5780 = vpack.c.b16 %v5773, %v5772
        %v5781 = vpack.c.b16 %v5775, %v5774
        %v5782 = vpack.c.b16 %v5777, %v5776
        %v5783 = vpack.c.b16 %v5779, %v5778
        %v5792 = vperm.slane %v4827, %v1870
        %v5793 = vperm.slane %v4830, %v1872
        %v5794 = vsel %vm1874, %v5793, %v5792
        %v5795 = vperm.slane %v4833, %v1876
        %v5796 = vsel %vm1878, %v5795, %v5794
        %v5797 = vperm.slane %v4836, %v1880
        %v5798 = vsel %vm1882, %v5797, %v5796
        %v5799 = vperm.slane %v4839, %v1884
        %v5800 = vsel %vm1886, %v5799, %v5798
        %v5801 = vperm.slane %v4842, %v1888
        %v5802 = vsel %vm1890, %v5801, %v5800
        %v5803 = vperm.slane %v4845, %v1892
        %v5804 = vsel %vm1894, %v5803, %v5802
        %v5805 = vperm.slane %v4848, %v1896
        %v5806 = vsel %vm1898, %v5805, %v5804
        %v5807 = vsel %vm1900, %v5806, %v5806
        %v5808 = vsel %vm1902, %v5806, %v5807
        %v5811 = vsel %vm797, %v5763, 0
        %v5814 = vsel %vm797, %v5780, 0
        %v5817 = vsel %vm797, %v5781, 0
        %v5820 = vsel %vm797, %v5782, 0
        %v5823 = vsel %vm797, %v5783, 0
        %5825 = vmatpush.bf16.xpose.msra.mxu0 0
        %5826 = vmatpush.bf16.xpose.msra.mxu0 0
        %5827 = vmatpush.bf16.xpose.msra.mxu0 0
        %5828 = vmatpush.bf16.xpose.msra.mxu0 0
        %5829 = vmatpush.bf16.xpose.msra.mxu0 %v5823
        %5830 = vmatpush.bf16.xpose.msra.mxu0 %v5820
        %5831 = vmatpush.bf16.xpose.msra.mxu0 %v5817
        %5832 = vmatpush.bf16.xpose.msra.mxu0 %v5814
        %5833 = vmatmul.bf16.gmra.mxu0 %v5811
        %v5834 = vpop.f32.mrf.mxu0
        %v5835 = vadd.f32 %v5808, %v5834
        %v5836 = vpop.f32.mrf.mxu0
        %5837 = vdwg.mxu0
        %v5839 = vunpack.c.l.b16 %v1044
        %v5840 = vpack.c.b16 %v5839, %v5839
        %5841 = vrot.lane.b32.xlu0 %v5840, 96
        %v5842 = vpop.permute.xlu0 %5841
        %v5851 = vunpack.c.l.b16 %v4264
        %v5852 = vunpack.c.l.b16 %v4265
        %v5853 = vunpack.c.l.b16 %v4266
        %v5854 = vunpack.c.l.b16 %v4267
        %v5855 = vunpack.c.l.b16 %v4268
        %v5856 = vunpack.c.l.b16 %v4269
        %v5857 = vunpack.c.l.b16 %v4270
        %v5858 = vunpack.c.l.b16 %v4271
        %v5859 = vpack.c.b16 %v5852, %v5851
        %v5860 = vpack.c.b16 %v5854, %v5853
        %v5861 = vpack.c.b16 %v5856, %v5855
        %v5862 = vpack.c.b16 %v5858, %v5857
        %v5871 = vperm.slane %v4851, %v1870
        %v5872 = vperm.slane %v4854, %v1872
        %v5873 = vsel %vm1874, %v5872, %v5871
        %v5874 = vperm.slane %v4857, %v1876
        %v5875 = vsel %vm1878, %v5874, %v5873
        %v5876 = vperm.slane %v4860, %v1880
        %v5877 = vsel %vm1882, %v5876, %v5875
        %v5878 = vperm.slane %v4863, %v1884
        %v5879 = vsel %vm1886, %v5878, %v5877
        %v5880 = vperm.slane %v4866, %v1888
        %v5881 = vsel %vm1890, %v5880, %v5879
        %v5882 = vperm.slane %v4869, %v1892
        %v5883 = vsel %vm1894, %v5882, %v5881
        %v5884 = vperm.slane %v4872, %v1896
        %v5885 = vsel %vm1898, %v5884, %v5883
        %v5886 = vsel %vm1900, %v5885, %v5885
        %v5887 = vsel %vm1902, %v5885, %v5886
        %v5890 = vsel %vm797, %v5842, 0
        %v5893 = vsel %vm797, %v5859, 0
        %v5896 = vsel %vm797, %v5860, 0
        %v5899 = vsel %vm797, %v5861, 0
        %v5902 = vsel %vm797, %v5862, 0
        %5904 = vmatpush.bf16.xpose.msra.mxu0 0
        %5905 = vmatpush.bf16.xpose.msra.mxu0 0
        %5906 = vmatpush.bf16.xpose.msra.mxu0 0
        %5907 = vmatpush.bf16.xpose.msra.mxu0 0
        %5908 = vmatpush.bf16.xpose.msra.mxu0 %v5902
        %5909 = vmatpush.bf16.xpose.msra.mxu0 %v5899
        %5910 = vmatpush.bf16.xpose.msra.mxu0 %v5896
        %5911 = vmatpush.bf16.xpose.msra.mxu0 %v5893
        %5912 = vmatmul.bf16.gmra.mxu0 %v5890
        %v5913 = vpop.f32.mrf.mxu0
        %v5914 = vadd.f32 %v5887, %v5913
        %v5915 = vpop.f32.mrf.mxu0
        %5916 = vdwg.mxu0
        %v5918 = vunpack.c.l.b16 %v1045
        %v5919 = vpack.c.b16 %v5918, %v5918
        %5920 = vrot.lane.b32.xlu0 %v5919, 96
        %v5921 = vpop.permute.xlu0 %5920
        %v5930 = vunpack.c.l.b16 %v4272
        %v5931 = vunpack.c.l.b16 %v4273
        %v5932 = vunpack.c.l.b16 %v4274
        %v5933 = vunpack.c.l.b16 %v4275
        %v5934 = vunpack.c.l.b16 %v4276
        %v5935 = vunpack.c.l.b16 %v4277
        %v5936 = vunpack.c.l.b16 %v4278
        %v5937 = vunpack.c.l.b16 %v4279
        %v5938 = vpack.c.b16 %v5931, %v5930
        %v5939 = vpack.c.b16 %v5933, %v5932
        %v5940 = vpack.c.b16 %v5935, %v5934
        %v5941 = vpack.c.b16 %v5937, %v5936
        %v5950 = vperm.slane %v4875, %v1870
        %v5951 = vperm.slane %v4878, %v1872
        %v5952 = vsel %vm1874, %v5951, %v5950
        %v5953 = vperm.slane %v4881, %v1876
        %v5954 = vsel %vm1878, %v5953, %v5952
        %v5955 = vperm.slane %v4884, %v1880
        %v5956 = vsel %vm1882, %v5955, %v5954
        %v5957 = vperm.slane %v4887, %v1884
        %v5958 = vsel %vm1886, %v5957, %v5956
        %v5959 = vperm.slane %v4890, %v1888
        %v5960 = vsel %vm1890, %v5959, %v5958
        %v5961 = vperm.slane %v4893, %v1892
        %v5962 = vsel %vm1894, %v5961, %v5960
        %v5963 = vperm.slane %v4896, %v1896
        %v5964 = vsel %vm1898, %v5963, %v5962
        %v5965 = vsel %vm1900, %v5964, %v5964
        %v5966 = vsel %vm1902, %v5964, %v5965
        %v5969 = vsel %vm797, %v5921, 0
        %v5972 = vsel %vm797, %v5938, 0
        %v5975 = vsel %vm797, %v5939, 0
        %v5978 = vsel %vm797, %v5940, 0
        %v5981 = vsel %vm797, %v5941, 0
        %5983 = vmatpush.bf16.xpose.msra.mxu0 0
        %5984 = vmatpush.bf16.xpose.msra.mxu0 0
        %5985 = vmatpush.bf16.xpose.msra.mxu0 0
        %5986 = vmatpush.bf16.xpose.msra.mxu0 0
        %5987 = vmatpush.bf16.xpose.msra.mxu0 %v5981
        %5988 = vmatpush.bf16.xpose.msra.mxu0 %v5978
        %5989 = vmatpush.bf16.xpose.msra.mxu0 %v5975
        %5990 = vmatpush.bf16.xpose.msra.mxu0 %v5972
        %5991 = vmatmul.bf16.gmra.mxu0 %v5969
        %v5992 = vpop.f32.mrf.mxu0
        %v5993 = vadd.f32 %v5966, %v5992
        %v5994 = vpop.f32.mrf.mxu0
        %5995 = vdwg.mxu0
        %v5997 = vunpack.c.l.b16 %v1046
        %v5998 = vpack.c.b16 %v5997, %v5997
        %5999 = vrot.lane.b32.xlu0 %v5998, 96
        %v6000 = vpop.permute.xlu0 %5999
        %v6009 = vunpack.c.l.b16 %v4280
        %v6010 = vunpack.c.l.b16 %v4281
        %v6011 = vunpack.c.l.b16 %v4282
        %v6012 = vunpack.c.l.b16 %v4283
        %v6013 = vunpack.c.l.b16 %v4284
        %v6014 = vunpack.c.l.b16 %v4285
        %v6015 = vunpack.c.l.b16 %v4286
        %v6016 = vunpack.c.l.b16 %v4287
        %v6017 = vpack.c.b16 %v6010, %v6009
        %v6018 = vpack.c.b16 %v6012, %v6011
        %v6019 = vpack.c.b16 %v6014, %v6013
        %v6020 = vpack.c.b16 %v6016, %v6015
        %v6029 = vperm.slane %v4899, %v1870
        %v6030 = vperm.slane %v4902, %v1872
        %v6031 = vsel %vm1874, %v6030, %v6029
        %v6032 = vperm.slane %v4905, %v1876
        %v6033 = vsel %vm1878, %v6032, %v6031
        %v6034 = vperm.slane %v4908, %v1880
        %v6035 = vsel %vm1882, %v6034, %v6033
        %v6036 = vperm.slane %v4911, %v1884
        %v6037 = vsel %vm1886, %v6036, %v6035
        %v6038 = vperm.slane %v4914, %v1888
        %v6039 = vsel %vm1890, %v6038, %v6037
        %v6040 = vperm.slane %v4917, %v1892
        %v6041 = vsel %vm1894, %v6040, %v6039
        %v6042 = vperm.slane %v4920, %v1896
        %v6043 = vsel %vm1898, %v6042, %v6041
        %v6044 = vsel %vm1900, %v6043, %v6043
        %v6045 = vsel %vm1902, %v6043, %v6044
        %v6048 = vsel %vm797, %v6000, 0
        %v6051 = vsel %vm797, %v6017, 0
        %v6054 = vsel %vm797, %v6018, 0
        %v6057 = vsel %vm797, %v6019, 0
        %v6060 = vsel %vm797, %v6020, 0
        %6062 = vmatpush.bf16.xpose.msra.mxu0 0
        %6063 = vmatpush.bf16.xpose.msra.mxu0 0
        %6064 = vmatpush.bf16.xpose.msra.mxu0 0
        %6065 = vmatpush.bf16.xpose.msra.mxu0 0
        %6066 = vmatpush.bf16.xpose.msra.mxu0 %v6060
        %6067 = vmatpush.bf16.xpose.msra.mxu0 %v6057
        %6068 = vmatpush.bf16.xpose.msra.mxu0 %v6054
        %6069 = vmatpush.bf16.xpose.msra.mxu0 %v6051
        %6070 = vmatmul.bf16.gmra.mxu0 %v6048
        %v6071 = vpop.f32.mrf.mxu0
        %v6072 = vadd.f32 %v6045, %v6071
        %v6073 = vpop.f32.mrf.mxu0
        %6074 = vdwg.mxu0
        %v6076 = vunpack.c.l.b16 %v1047
        %v6077 = vpack.c.b16 %v6076, %v6076
        %6078 = vrot.lane.b32.xlu0 %v6077, 96
        %v6079 = vpop.permute.xlu0 %6078
        %v6088 = vunpack.c.l.b16 %v4288
        %v6089 = vunpack.c.l.b16 %v4289
        %v6090 = vunpack.c.l.b16 %v4290
        %v6091 = vunpack.c.l.b16 %v4291
        %v6092 = vunpack.c.l.b16 %v4292
        %v6093 = vunpack.c.l.b16 %v4293
        %v6094 = vunpack.c.l.b16 %v4294
        %v6095 = vunpack.c.l.b16 %v4295
        %v6096 = vpack.c.b16 %v6089, %v6088
        %v6097 = vpack.c.b16 %v6091, %v6090
        %v6098 = vpack.c.b16 %v6093, %v6092
        %v6099 = vpack.c.b16 %v6095, %v6094
        %v6108 = vperm.slane %v4923, %v1870
        %v6109 = vperm.slane %v4926, %v1872
        %v6110 = vsel %vm1874, %v6109, %v6108
        %v6111 = vperm.slane %v4929, %v1876
        %v6112 = vsel %vm1878, %v6111, %v6110
        %v6113 = vperm.slane %v4932, %v1880
        %v6114 = vsel %vm1882, %v6113, %v6112
        %v6115 = vperm.slane %v4935, %v1884
        %v6116 = vsel %vm1886, %v6115, %v6114
        %v6117 = vperm.slane %v4938, %v1888
        %v6118 = vsel %vm1890, %v6117, %v6116
        %v6119 = vperm.slane %v4941, %v1892
        %v6120 = vsel %vm1894, %v6119, %v6118
        %v6121 = vperm.slane %v4944, %v1896
        %v6122 = vsel %vm1898, %v6121, %v6120
        %v6123 = vsel %vm1900, %v6122, %v6122
        %v6124 = vsel %vm1902, %v6122, %v6123
        %v6127 = vsel %vm797, %v6079, 0
        %v6130 = vsel %vm797, %v6096, 0
        %v6133 = vsel %vm797, %v6097, 0
        %v6136 = vsel %vm797, %v6098, 0
        %v6139 = vsel %vm797, %v6099, 0
        %6141 = vmatpush.bf16.xpose.msra.mxu0 0
        %6142 = vmatpush.bf16.xpose.msra.mxu0 0
        %6143 = vmatpush.bf16.xpose.msra.mxu0 0
        %6144 = vmatpush.bf16.xpose.msra.mxu0 0
        %6145 = vmatpush.bf16.xpose.msra.mxu0 %v6139
        %6146 = vmatpush.bf16.xpose.msra.mxu0 %v6136
        %6147 = vmatpush.bf16.xpose.msra.mxu0 %v6133
        %6148 = vmatpush.bf16.xpose.msra.mxu0 %v6130
        %6149 = vmatmul.bf16.gmra.mxu0 %v6127
        %v6150 = vpop.f32.mrf.mxu0
        %v6151 = vadd.f32 %v6124, %v6150
        %v6152 = vpop.f32.mrf.mxu0
        %6153 = vdwg.mxu0
        %v6155 = vunpack.c.l.b16 %v1048
        %v6156 = vpack.c.b16 %v6155, %v6155
        %6157 = vrot.lane.b32.xlu0 %v6156, 96
        %v6158 = vpop.permute.xlu0 %6157
        %v6167 = vunpack.c.l.b16 %v4296
        %v6168 = vunpack.c.l.b16 %v4297
        %v6169 = vunpack.c.l.b16 %v4298
        %v6170 = vunpack.c.l.b16 %v4299
        %v6171 = vunpack.c.l.b16 %v4300
        %v6172 = vunpack.c.l.b16 %v4301
        %v6173 = vunpack.c.l.b16 %v4302
        %v6174 = vunpack.c.l.b16 %v4303
        %v6175 = vpack.c.b16 %v6168, %v6167
        %v6176 = vpack.c.b16 %v6170, %v6169
        %v6177 = vpack.c.b16 %v6172, %v6171
        %v6178 = vpack.c.b16 %v6174, %v6173
        %v6187 = vperm.slane %v4947, %v1870
        %v6188 = vperm.slane %v4950, %v1872
        %v6189 = vsel %vm1874, %v6188, %v6187
        %v6190 = vperm.slane %v4953, %v1876
        %v6191 = vsel %vm1878, %v6190, %v6189
        %v6192 = vperm.slane %v4956, %v1880
        %v6193 = vsel %vm1882, %v6192, %v6191
        %v6194 = vperm.slane %v4959, %v1884
        %v6195 = vsel %vm1886, %v6194, %v6193
        %v6196 = vperm.slane %v4962, %v1888
        %v6197 = vsel %vm1890, %v6196, %v6195
        %v6198 = vperm.slane %v4965, %v1892
        %v6199 = vsel %vm1894, %v6198, %v6197
        %v6200 = vperm.slane %v4968, %v1896
        %v6201 = vsel %vm1898, %v6200, %v6199
        %v6202 = vsel %vm1900, %v6201, %v6201
        %v6203 = vsel %vm1902, %v6201, %v6202
        %v6206 = vsel %vm797, %v6158, 0
        %v6209 = vsel %vm797, %v6175, 0
        %v6212 = vsel %vm797, %v6176, 0
        %v6215 = vsel %vm797, %v6177, 0
        %v6218 = vsel %vm797, %v6178, 0
        %6220 = vmatpush.bf16.xpose.msra.mxu0 0
        %6221 = vmatpush.bf16.xpose.msra.mxu0 0
        %6222 = vmatpush.bf16.xpose.msra.mxu0 0
        %6223 = vmatpush.bf16.xpose.msra.mxu0 0
        %6224 = vmatpush.bf16.xpose.msra.mxu0 %v6218
        %6225 = vmatpush.bf16.xpose.msra.mxu0 %v6215
        %6226 = vmatpush.bf16.xpose.msra.mxu0 %v6212
        %6227 = vmatpush.bf16.xpose.msra.mxu0 %v6209
        %6228 = vmatmul.bf16.gmra.mxu0 %v6206
        %v6229 = vpop.f32.mrf.mxu0
        %v6230 = vadd.f32 %v6203, %v6229
        %v6231 = vpop.f32.mrf.mxu0
        %6232 = vdwg.mxu0
        %6233 = vrot.lane.b32.xlu0 %v1001, 96
        %v6234 = vpop.permute.xlu0 %6233
        %6235 = vrot.lane.b32.xlu0 %v1002, 96
        %v6236 = vpop.permute.xlu0 %6235
        %6237 = vrot.lane.b32.xlu0 %v1003, 96
        %v6238 = vpop.permute.xlu0 %6237
        %6239 = vrot.lane.b32.xlu0 %v1004, 96
        %v6240 = vpop.permute.xlu0 %6239
        %6241 = vrot.lane.b32.xlu0 %v1001, 32
        %v6242 = vpop.permute.xlu0 %6241
        %6243 = vrot.lane.b32.xlu0 %v1002, 32
        %v6244 = vpop.permute.xlu0 %6243
        %6245 = vrot.lane.b32.xlu0 %v1003, 32
        %v6246 = vpop.permute.xlu0 %6245
        %6247 = vrot.lane.b32.xlu0 %v1004, 32
        %v6248 = vpop.permute.xlu0 %6247
        %6265 = vst [vmem:[#allocation1] ss:$2 sm:$0xff] %v5045
        %s6266 = scalar_lea.vmem [#allocation1], 1
        %6267 = vst [vmem:[%s6266] ss:$2 sm:$0xff] %v5124
        %s6268 = scalar_lea.vmem [#allocation1], 16
        %6269 = vst [vmem:[%s6268] ss:$2 sm:$0xff] %v5203
        %s6270 = scalar_lea.vmem [#allocation1], 17
        %6271 = vst [vmem:[%s6270] ss:$2 sm:$0xff] %v5282
        %s6272 = scalar_lea.vmem [#allocation1], 32
        %6273 = vst [vmem:[%s6272] ss:$2 sm:$0xff] %v5361
        %s6274 = scalar_lea.vmem [#allocation1], 33
        %6275 = vst [vmem:[%s6274] ss:$2 sm:$0xff] %v5440
        %s6276 = scalar_lea.vmem [#allocation1], 48
        %6277 = vst [vmem:[%s6276] ss:$2 sm:$0xff] %v5519
        %s6278 = scalar_lea.vmem [#allocation1], 49
        %6279 = vst [vmem:[%s6278] ss:$2 sm:$0xff] %v5598
        %v6280 = vld.sshfl [vmem:[#allocation1] sm:$0xff pattern:$0x75316420]
        %v6281 = vld.sshfl [vmem:[#allocation1 + $0x10] sm:$0xff pattern:$0x75316420]
        %v6282 = vld.sshfl [vmem:[#allocation1 + $0x20] sm:$0xff pattern:$0x75316420]
        %v6283 = vld.sshfl [vmem:[#allocation1 + $0x30] sm:$0xff pattern:$0x75316420]
        %6284 = vst [vmem:[#allocation1] ss:$2 sm:$0xff] %v5677
        %6285 = vst [vmem:[%s6266] ss:$2 sm:$0xff] %v5756
        %6286 = vst [vmem:[%s6268] ss:$2 sm:$0xff] %v5835
        %6287 = vst [vmem:[%s6270] ss:$2 sm:$0xff] %v5914
        %6288 = vst [vmem:[%s6272] ss:$2 sm:$0xff] %v5993
        %6289 = vst [vmem:[%s6274] ss:$2 sm:$0xff] %v6072
        %6290 = vst [vmem:[%s6276] ss:$2 sm:$0xff] %v6151
        %6291 = vst [vmem:[%s6278] ss:$2 sm:$0xff] %v6230
        %v6292 = vld.sshfl [vmem:[#allocation1] sm:$0xff pattern:$0x75316420]
        %v6293 = vld.sshfl [vmem:[#allocation1 + $0x10] sm:$0xff pattern:$0x75316420]
        %v6294 = vld.sshfl [vmem:[#allocation1 + $0x20] sm:$0xff pattern:$0x75316420]
        %v6295 = vld.sshfl [vmem:[#allocation1 + $0x30] sm:$0xff pattern:$0x75316420]
        %v6305 = vsel %vm797, %v6234, 0
        %v6308 = vsel %vm797, %v6236, 0
        %v6311 = vsel %vm797, %v6238, 0
        %v6314 = vsel %vm797, %v6240, 0
        %v6317 = vsel %vm797, %v6242, 0
        %v6320 = vsel %vm797, %v6244, 0
        %v6323 = vsel %vm797, %v6246, 0
        %v6326 = vsel %vm797, %v6248, 0
        %6328 = vmatpush.bf16.xpose.msra.mxu0 0
        %6329 = vmatpush.bf16.xpose.msra.mxu0 0
        %6330 = vmatpush.bf16.xpose.msra.mxu0 0
        %6331 = vmatpush.bf16.xpose.msra.mxu0 0
        %6332 = vmatpush.bf16.xpose.msra.mxu0 %v6326
        %6333 = vmatpush.bf16.xpose.msra.mxu0 %v6323
        %6334 = vmatpush.bf16.xpose.msra.mxu0 %v6320
        %6335 = vmatpush.bf16.xpose.msra.mxu0 %v6317
        %6336 = vmatmul.bf16.gmra.mxu0 %v6305
        %v6337 = vpop.f32.mrf.mxu0
        %v6338 = vadd.f32 %v6280, %v6337
        %v6339 = vpop.f32.mrf.mxu0
        %v6340 = vadd.f32 %v6281, %v6339
        %6341 = vmatmul.bf16.gmra.mxu0 %v6308
        %v6342 = vpop.f32.mrf.mxu0
        %v6343 = vadd.f32 %v6282, %v6342
        %v6344 = vpop.f32.mrf.mxu0
        %v6345 = vadd.f32 %v6283, %v6344
        %6346 = vmatmul.bf16.gmra.mxu0 %v6311
        %v6347 = vpop.f32.mrf.mxu0
        %v6348 = vadd.f32 %v6292, %v6347
        %v6349 = vpop.f32.mrf.mxu0
        %v6350 = vadd.f32 %v6293, %v6349
        %6351 = vmatmul.bf16.gmra.mxu0 %v6314
        %v6352 = vpop.f32.mrf.mxu0
        %v6353 = vadd.f32 %v6294, %v6352
        %v6354 = vpop.f32.mrf.mxu0
        %v6355 = vadd.f32 %v6295, %v6354
        %6356 = vdwg.mxu0
        %v6357 = vmul.f32 %v6338, 0.17677669
        %v6358 = vmul.f32 %v6340, 0.17677669
        %v6359 = vmul.f32 %v6343, 0.17677669
        %v6360 = vmul.f32 %v6345, 0.17677669
        %v6361 = vmul.f32 %v6348, 0.17677669
        %v6362 = vmul.f32 %v6350, 0.17677669
        %v6363 = vmul.f32 %v6353, 0.17677669
        %v6364 = vmul.f32 %v6355, 0.17677669
        %v6365 = vadd.f32 %v6357, %v639
        %v6366 = vadd.f32 %v6358, %v640
        %v6367 = vadd.f32 %v6359, %v641
        %v6368 = vadd.f32 %v6360, %v642
        %v6369 = vadd.f32 %v6361, %v643
        %v6370 = vadd.f32 %v6362, %v644
        %v6371 = vadd.f32 %v6363, %v645
        %v6372 = vadd.f32 %v6364, %v646
        %v6373 = vsel %vm908, %v6365, -inf
        %6374 = vmax.xlane.f32.xlu0 %v6373
        %v6375 = vpop.xlane.xlu0 %6374
        %v6376 = vsel %vm908, %v6366, -inf
        %6377 = vmax.xlane.f32.xlu0 %v6376
        %v6378 = vpop.xlane.xlu0 %6377
        %v6379 = vsel %vm908, %v6367, -inf
        %6380 = vmax.xlane.f32.xlu0 %v6379
        %v6381 = vpop.xlane.xlu0 %6380
        %v6382 = vsel %vm908, %v6368, -inf
        %6383 = vmax.xlane.f32.xlu0 %v6382
        %v6384 = vpop.xlane.xlu0 %6383
        %v6385 = vsel %vm908, %v6369, -inf
        %6386 = vmax.xlane.f32.xlu0 %v6385
        %v6387 = vpop.xlane.xlu0 %6386
        %v6388 = vsel %vm908, %v6370, -inf
        %6389 = vmax.xlane.f32.xlu0 %v6388
        %v6390 = vpop.xlane.xlu0 %6389
        %v6391 = vsel %vm908, %v6371, -inf
        %6392 = vmax.xlane.f32.xlu0 %v6391
        %v6393 = vpop.xlane.xlu0 %6392
        %v6394 = vsel %vm908, %v6372, -inf
        %6395 = vmax.xlane.f32.xlu0 %v6394
        %v6396 = vpop.xlane.xlu0 %6395
        %v6397 = vsub.f32 %v6365, %v6375
        %v6398 = vsub.f32 %v6366, %v6378
        %v6399 = vsub.f32 %v6367, %v6381
        %v6400 = vsub.f32 %v6368, %v6384
        %v6401 = vsub.f32 %v6369, %v6387
        %v6402 = vsub.f32 %v6370, %v6390
        %v6403 = vsub.f32 %v6371, %v6393
        %v6404 = vsub.f32 %v6372, %v6396
        %v6405 = vmul.f32 %v6397, 1.442695
        %v6406 = vpow.pop %v6405
        %v6407 = vmul.f32 %v6398, 1.442695
        %v6408 = vpow.pop %v6407
        %v6409 = vmul.f32 %v6399, 1.442695
        %v6410 = vpow.pop %v6409
        %v6411 = vmul.f32 %v6400, 1.442695
        %v6412 = vpow.pop %v6411
        %v6413 = vmul.f32 %v6401, 1.442695
        %v6414 = vpow.pop %v6413
        %v6415 = vmul.f32 %v6402, 1.442695
        %v6416 = vpow.pop %v6415
        %v6417 = vmul.f32 %v6403, 1.442695
        %v6418 = vpow.pop %v6417
        %v6419 = vmul.f32 %v6404, 1.442695
        %v6420 = vpow.pop %v6419
        %v6421 = vsel %vm908, %v6406, 0.0
        %6422 = vadd.xlane.f32.xlu0 %v6421
        %v6423 = vpop.xlane.xlu0 %6422
        %v6424 = vsel %vm908, %v6408, 0.0
        %6425 = vadd.xlane.f32.xlu0 %v6424
        %v6426 = vpop.xlane.xlu0 %6425
        %v6427 = vsel %vm908, %v6410, 0.0
        %6428 = vadd.xlane.f32.xlu0 %v6427
        %v6429 = vpop.xlane.xlu0 %6428
        %v6430 = vsel %vm908, %v6412, 0.0
        %6431 = vadd.xlane.f32.xlu0 %v6430
        %v6432 = vpop.xlane.xlu0 %6431
        %v6433 = vsel %vm908, %v6414, 0.0
        %6434 = vadd.xlane.f32.xlu0 %v6433
        %v6435 = vpop.xlane.xlu0 %6434
        %v6436 = vsel %vm908, %v6416, 0.0
        %6437 = vadd.xlane.f32.xlu0 %v6436
        %v6438 = vpop.xlane.xlu0 %6437
        %v6439 = vsel %vm908, %v6418, 0.0
        %6440 = vadd.xlane.f32.xlu0 %v6439
        %v6441 = vpop.xlane.xlu0 %6440
        %v6442 = vsel %vm908, %v6420, 0.0
        %6443 = vadd.xlane.f32.xlu0 %v6442
        %v6444 = vpop.xlane.xlu0 %6443
        %v6445 = vrcp.pop %v6423
        %v6446 = vrcp.pop %v6426
        %v6447 = vrcp.pop %v6429
        %v6448 = vrcp.pop %v6432
        %v6449 = vrcp.pop %v6435
        %v6450 = vrcp.pop %v6438
        %v6451 = vrcp.pop %v6441
        %v6452 = vrcp.pop %v6444
        %v6453 = vmul.f32 %v6406, %v6445
        %v6454 = vmul.f32 %v6408, %v6446
        %v6455 = vmul.f32 %v6410, %v6447
        %v6456 = vmul.f32 %v6412, %v6448
        %v6457 = vmul.f32 %v6414, %v6449
        %v6458 = vmul.f32 %v6416, %v6450
        %v6459 = vmul.f32 %v6418, %v6451
        %v6460 = vmul.f32 %v6420, %v6452
        %v6461 = vpack.c.bf16 %v6454, %v6453
        %v6462 = vpack.c.bf16 %v6456, %v6455
        %v6463 = vpack.c.bf16 %v6458, %v6457
        %v6464 = vpack.c.bf16 %v6460, %v6459
        %v6473 = vrot.slane %v6453, 4
        %v6474 = vrot.slane %v6454, 4
        %v6475 = vrot.slane %v6455, 4
        %v6476 = vrot.slane %v6456, 4
        %v6477 = vrot.slane %v6457, 4
        %v6478 = vrot.slane %v6458, 4
        %v6479 = vrot.slane %v6459, 4
        %v6480 = vrot.slane %v6460, 4
        %v6489 = vpack.c.bf16 %v6453, %v6453
        %v6490 = vpack.c.bf16 %v6473, %v6473
        %v6491 = vpack.c.bf16 %v6454, %v6454
        %v6492 = vpack.c.bf16 %v6474, %v6474
        %v6493 = vpack.c.bf16 %v6455, %v6455
        %v6494 = vpack.c.bf16 %v6475, %v6475
        %v6495 = vpack.c.bf16 %v6456, %v6456
        %v6496 = vpack.c.bf16 %v6476, %v6476
        %v6497 = vpack.c.bf16 %v6457, %v6457
        %v6498 = vpack.c.bf16 %v6477, %v6477
        %v6499 = vpack.c.bf16 %v6458, %v6458
        %v6500 = vpack.c.bf16 %v6478, %v6478
        %v6501 = vpack.c.bf16 %v6459, %v6459
        %v6502 = vpack.c.bf16 %v6479, %v6479
        %v6503 = vpack.c.bf16 %v6460, %v6460
        %v6504 = vpack.c.bf16 %v6480, %v6480
        %s6505 = scalar_lea.vmem %s8, 512
        %v6506 = vld [vmem:[%s6505] sm:$0xf]
        %v6507 = vld [vmem:[%s6505 + $0x4] sm:$0xf]
        %v6508 = vld [vmem:[%s6505 + $0x8] sm:$0xf]
        %v6509 = vld [vmem:[%s6505 + $0xc] sm:$0xf]
        %v6510 = vld [vmem:[%s6505 + $0x10] sm:$0xf]
        %v6511 = vld [vmem:[%s6505 + $0x14] sm:$0xf]
        %v6512 = vld [vmem:[%s6505 + $0x18] sm:$0xf]
        %v6513 = vld [vmem:[%s6505 + $0x1c] sm:$0xf]
        %v6514 = vld [vmem:[%s6505 + $0x20] sm:$0xf]
        %v6515 = vld [vmem:[%s6505 + $0x24] sm:$0xf]
        %v6516 = vld [vmem:[%s6505 + $0x28] sm:$0xf]
        %v6517 = vld [vmem:[%s6505 + $0x2c] sm:$0xf]
        %v6518 = vld [vmem:[%s6505 + $0x30] sm:$0xf]
        %v6519 = vld [vmem:[%s6505 + $0x34] sm:$0xf]
        %v6520 = vld [vmem:[%s6505 + $0x38] sm:$0xf]
        %v6521 = vld [vmem:[%s6505 + $0x3c] sm:$0xf]
        %v6522 = vld [vmem:[%s6505 + $0x40] sm:$0xf]
        %v6523 = vld [vmem:[%s6505 + $0x44] sm:$0xf]
        %v6524 = vld [vmem:[%s6505 + $0x48] sm:$0xf]
        %v6525 = vld [vmem:[%s6505 + $0x4c] sm:$0xf]
        %v6526 = vld [vmem:[%s6505 + $0x50] sm:$0xf]
        %v6527 = vld [vmem:[%s6505 + $0x54] sm:$0xf]
        %v6528 = vld [vmem:[%s6505 + $0x58] sm:$0xf]
        %v6529 = vld [vmem:[%s6505 + $0x5c] sm:$0xf]
        %v6530 = vld [vmem:[%s6505 + $0x60] sm:$0xf]
        %v6531 = vld [vmem:[%s6505 + $0x64] sm:$0xf]
        %v6532 = vld [vmem:[%s6505 + $0x68] sm:$0xf]
        %v6533 = vld [vmem:[%s6505 + $0x6c] sm:$0xf]
        %v6534 = vld [vmem:[%s6505 + $0x70] sm:$0xf]
        %v6535 = vld [vmem:[%s6505 + $0x74] sm:$0xf]
        %v6536 = vld [vmem:[%s6505 + $0x78] sm:$0xf]
        %v6537 = vld [vmem:[%s6505 + $0x7c] sm:$0xf]
        %v6538 = vld [vmem:[%s6505 + $0x80] sm:$0xf]
        %v6539 = vld [vmem:[%s6505 + $0x84] sm:$0xf]
        %v6540 = vld [vmem:[%s6505 + $0x88] sm:$0xf]
        %v6541 = vld [vmem:[%s6505 + $0x8c] sm:$0xf]
        %v6542 = vld [vmem:[%s6505 + $0x90] sm:$0xf]
        %v6543 = vld [vmem:[%s6505 + $0x94] sm:$0xf]
        %v6544 = vld [vmem:[%s6505 + $0x98] sm:$0xf]
        %v6545 = vld [vmem:[%s6505 + $0x9c] sm:$0xf]
        %v6546 = vld [vmem:[%s6505 + $0xa0] sm:$0xf]
        %v6547 = vld [vmem:[%s6505 + $0xa4] sm:$0xf]
        %v6548 = vld [vmem:[%s6505 + $0xa8] sm:$0xf]
        %v6549 = vld [vmem:[%s6505 + $0xac] sm:$0xf]
        %v6550 = vld [vmem:[%s6505 + $0xb0] sm:$0xf]
        %v6551 = vld [vmem:[%s6505 + $0xb4] sm:$0xf]
        %v6552 = vld [vmem:[%s6505 + $0xb8] sm:$0xf]
        %v6553 = vld [vmem:[%s6505 + $0xbc] sm:$0xf]
        %v6554 = vld [vmem:[%s6505 + $0xc0] sm:$0xf]
        %v6555 = vld [vmem:[%s6505 + $0xc4] sm:$0xf]
        %v6556 = vld [vmem:[%s6505 + $0xc8] sm:$0xf]
        %v6557 = vld [vmem:[%s6505 + $0xcc] sm:$0xf]
        %v6558 = vld [vmem:[%s6505 + $0xd0] sm:$0xf]
        %v6559 = vld [vmem:[%s6505 + $0xd4] sm:$0xf]
        %v6560 = vld [vmem:[%s6505 + $0xd8] sm:$0xf]
        %v6561 = vld [vmem:[%s6505 + $0xdc] sm:$0xf]
        %v6562 = vld [vmem:[%s6505 + $0xe0] sm:$0xf]
        %v6563 = vld [vmem:[%s6505 + $0xe4] sm:$0xf]
        %v6564 = vld [vmem:[%s6505 + $0xe8] sm:$0xf]
        %v6565 = vld [vmem:[%s6505 + $0xec] sm:$0xf]
        %v6566 = vld [vmem:[%s6505 + $0xf0] sm:$0xf]
        %v6567 = vld [vmem:[%s6505 + $0xf4] sm:$0xf]
        %v6568 = vld [vmem:[%s6505 + $0xf8] sm:$0xf]
        %v6569 = vld [vmem:[%s6505 + $0xfc] sm:$0xf]
        %v6570 = vld [vmem:[%s6505 + $0x100] sm:$0xf]
        %v6571 = vld [vmem:[%s6505 + $0x104] sm:$0xf]
        %v6572 = vld [vmem:[%s6505 + $0x108] sm:$0xf]
        %v6573 = vld [vmem:[%s6505 + $0x10c] sm:$0xf]
        %v6574 = vld [vmem:[%s6505 + $0x110] sm:$0xf]
        %v6575 = vld [vmem:[%s6505 + $0x114] sm:$0xf]
        %v6576 = vld [vmem:[%s6505 + $0x118] sm:$0xf]
        %v6577 = vld [vmem:[%s6505 + $0x11c] sm:$0xf]
        %v6578 = vld [vmem:[%s6505 + $0x120] sm:$0xf]
        %v6579 = vld [vmem:[%s6505 + $0x124] sm:$0xf]
        %v6580 = vld [vmem:[%s6505 + $0x128] sm:$0xf]
        %v6581 = vld [vmem:[%s6505 + $0x12c] sm:$0xf]
        %v6582 = vld [vmem:[%s6505 + $0x130] sm:$0xf]
        %v6583 = vld [vmem:[%s6505 + $0x134] sm:$0xf]
        %v6584 = vld [vmem:[%s6505 + $0x138] sm:$0xf]
        %v6585 = vld [vmem:[%s6505 + $0x13c] sm:$0xf]
        %v6586 = vld [vmem:[%s6505 + $0x140] sm:$0xf]
        %v6587 = vld [vmem:[%s6505 + $0x144] sm:$0xf]
        %v6588 = vld [vmem:[%s6505 + $0x148] sm:$0xf]
        %v6589 = vld [vmem:[%s6505 + $0x14c] sm:$0xf]
        %v6590 = vld [vmem:[%s6505 + $0x150] sm:$0xf]
        %v6591 = vld [vmem:[%s6505 + $0x154] sm:$0xf]
        %v6592 = vld [vmem:[%s6505 + $0x158] sm:$0xf]
        %v6593 = vld [vmem:[%s6505 + $0x15c] sm:$0xf]
        %v6594 = vld [vmem:[%s6505 + $0x160] sm:$0xf]
        %v6595 = vld [vmem:[%s6505 + $0x164] sm:$0xf]
        %v6596 = vld [vmem:[%s6505 + $0x168] sm:$0xf]
        %v6597 = vld [vmem:[%s6505 + $0x16c] sm:$0xf]
        %v6598 = vld [vmem:[%s6505 + $0x170] sm:$0xf]
        %v6599 = vld [vmem:[%s6505 + $0x174] sm:$0xf]
        %v6600 = vld [vmem:[%s6505 + $0x178] sm:$0xf]
        %v6601 = vld [vmem:[%s6505 + $0x17c] sm:$0xf]
        %v6602 = vld [vmem:[%s6505 + $0x180] sm:$0xf]
        %v6603 = vld [vmem:[%s6505 + $0x184] sm:$0xf]
        %v6604 = vld [vmem:[%s6505 + $0x188] sm:$0xf]
        %v6605 = vld [vmem:[%s6505 + $0x18c] sm:$0xf]
        %v6606 = vld [vmem:[%s6505 + $0x190] sm:$0xf]
        %v6607 = vld [vmem:[%s6505 + $0x194] sm:$0xf]
        %v6608 = vld [vmem:[%s6505 + $0x198] sm:$0xf]
        %v6609 = vld [vmem:[%s6505 + $0x19c] sm:$0xf]
        %v6610 = vld [vmem:[%s6505 + $0x1a0] sm:$0xf]
        %v6611 = vld [vmem:[%s6505 + $0x1a4] sm:$0xf]
        %v6612 = vld [vmem:[%s6505 + $0x1a8] sm:$0xf]
        %v6613 = vld [vmem:[%s6505 + $0x1ac] sm:$0xf]
        %v6614 = vld [vmem:[%s6505 + $0x1b0] sm:$0xf]
        %v6615 = vld [vmem:[%s6505 + $0x1b4] sm:$0xf]
        %v6616 = vld [vmem:[%s6505 + $0x1b8] sm:$0xf]
        %v6617 = vld [vmem:[%s6505 + $0x1bc] sm:$0xf]
        %v6618 = vld [vmem:[%s6505 + $0x1c0] sm:$0xf]
        %v6619 = vld [vmem:[%s6505 + $0x1c4] sm:$0xf]
        %v6620 = vld [vmem:[%s6505 + $0x1c8] sm:$0xf]
        %v6621 = vld [vmem:[%s6505 + $0x1cc] sm:$0xf]
        %v6622 = vld [vmem:[%s6505 + $0x1d0] sm:$0xf]
        %v6623 = vld [vmem:[%s6505 + $0x1d4] sm:$0xf]
        %v6624 = vld [vmem:[%s6505 + $0x1d8] sm:$0xf]
        %v6625 = vld [vmem:[%s6505 + $0x1dc] sm:$0xf]
        %v6626 = vld [vmem:[%s6505 + $0x1e0] sm:$0xf]
        %v6627 = vld [vmem:[%s6505 + $0x1e4] sm:$0xf]
        %v6628 = vld [vmem:[%s6505 + $0x1e8] sm:$0xf]
        %v6629 = vld [vmem:[%s6505 + $0x1ec] sm:$0xf]
        %v6630 = vld [vmem:[%s6505 + $0x1f0] sm:$0xf]
        %v6631 = vld [vmem:[%s6505 + $0x1f4] sm:$0xf]
        %v6632 = vld [vmem:[%s6505 + $0x1f8] sm:$0xf]
        %v6633 = vld [vmem:[%s6505 + $0x1fc] sm:$0xf]
        %v6642 = vunpack.c.l.b16 %v6506
        %v6643 = vunpack.c.l.b16 %v6507
        %v6644 = vunpack.c.l.b16 %v6508
        %v6645 = vunpack.c.l.b16 %v6509
        %v6646 = vunpack.c.l.b16 %v6510
        %v6647 = vunpack.c.l.b16 %v6511
        %v6648 = vunpack.c.l.b16 %v6512
        %v6649 = vunpack.c.l.b16 %v6513
        %v6650 = vpack.c.b16 %v6643, %v6642
        %v6651 = vpack.c.b16 %v6645, %v6644
        %v6652 = vpack.c.b16 %v6647, %v6646
        %v6653 = vpack.c.b16 %v6649, %v6648
        %v6659 = vsel %vm908, %v6489, 0
        %6661 = vmatpush.bf16.msra.mxu0 0
        %6662 = vmatpush.bf16.msra.mxu0 0
        %6663 = vmatpush.bf16.msra.mxu0 0
        %6664 = vmatpush.bf16.msra.mxu0 0
        %6665 = vmatpush.bf16.msra.mxu0 %v6653
        %6666 = vmatpush.bf16.msra.mxu0 %v6652
        %6667 = vmatpush.bf16.msra.mxu0 %v6651
        %6668 = vmatpush.bf16.msra.mxu0 %v6650
        %6669 = vmatmul.bf16.gmra.mxu0 %v6659
        %v6670 = vpop.f32.mrf.mxu0
        %v6671 = vadd.f32 0.0, %v6670
        %v6672 = vpop.f32.mrf.mxu0
        %6673 = vdwg.mxu0
        %v6682 = vunpack.c.l.b16 %v6514
        %v6683 = vunpack.c.l.b16 %v6515
        %v6684 = vunpack.c.l.b16 %v6516
        %v6685 = vunpack.c.l.b16 %v6517
        %v6686 = vunpack.c.l.b16 %v6518
        %v6687 = vunpack.c.l.b16 %v6519
        %v6688 = vunpack.c.l.b16 %v6520
        %v6689 = vunpack.c.l.b16 %v6521
        %v6690 = vpack.c.b16 %v6683, %v6682
        %v6691 = vpack.c.b16 %v6685, %v6684
        %v6692 = vpack.c.b16 %v6687, %v6686
        %v6693 = vpack.c.b16 %v6689, %v6688
        %v6699 = vsel %vm908, %v6490, 0
        %6701 = vmatpush.bf16.msra.mxu0 0
        %6702 = vmatpush.bf16.msra.mxu0 0
        %6703 = vmatpush.bf16.msra.mxu0 0
        %6704 = vmatpush.bf16.msra.mxu0 0
        %6705 = vmatpush.bf16.msra.mxu0 %v6693
        %6706 = vmatpush.bf16.msra.mxu0 %v6692
        %6707 = vmatpush.bf16.msra.mxu0 %v6691
        %6708 = vmatpush.bf16.msra.mxu0 %v6690
        %6709 = vmatmul.bf16.gmra.mxu0 %v6699
        %v6710 = vpop.f32.mrf.mxu0
        %v6711 = vadd.f32 0.0, %v6710
        %v6712 = vpop.f32.mrf.mxu0
        %6713 = vdwg.mxu0
        %v6722 = vunpack.c.l.b16 %v6522
        %v6723 = vunpack.c.l.b16 %v6523
        %v6724 = vunpack.c.l.b16 %v6524
        %v6725 = vunpack.c.l.b16 %v6525
        %v6726 = vunpack.c.l.b16 %v6526
        %v6727 = vunpack.c.l.b16 %v6527
        %v6728 = vunpack.c.l.b16 %v6528
        %v6729 = vunpack.c.l.b16 %v6529
        %v6730 = vpack.c.b16 %v6723, %v6722
        %v6731 = vpack.c.b16 %v6725, %v6724
        %v6732 = vpack.c.b16 %v6727, %v6726
        %v6733 = vpack.c.b16 %v6729, %v6728
        %v6739 = vsel %vm908, %v6491, 0
        %6741 = vmatpush.bf16.msra.mxu0 0
        %6742 = vmatpush.bf16.msra.mxu0 0
        %6743 = vmatpush.bf16.msra.mxu0 0
        %6744 = vmatpush.bf16.msra.mxu0 0
        %6745 = vmatpush.bf16.msra.mxu0 %v6733
        %6746 = vmatpush.bf16.msra.mxu0 %v6732
        %6747 = vmatpush.bf16.msra.mxu0 %v6731
        %6748 = vmatpush.bf16.msra.mxu0 %v6730
        %6749 = vmatmul.bf16.gmra.mxu0 %v6739
        %v6750 = vpop.f32.mrf.mxu0
        %v6751 = vadd.f32 0.0, %v6750
        %v6752 = vpop.f32.mrf.mxu0
        %6753 = vdwg.mxu0
        %v6762 = vunpack.c.l.b16 %v6530
        %v6763 = vunpack.c.l.b16 %v6531
        %v6764 = vunpack.c.l.b16 %v6532
        %v6765 = vunpack.c.l.b16 %v6533
        %v6766 = vunpack.c.l.b16 %v6534
        %v6767 = vunpack.c.l.b16 %v6535
        %v6768 = vunpack.c.l.b16 %v6536
        %v6769 = vunpack.c.l.b16 %v6537
        %v6770 = vpack.c.b16 %v6763, %v6762
        %v6771 = vpack.c.b16 %v6765, %v6764
        %v6772 = vpack.c.b16 %v6767, %v6766
        %v6773 = vpack.c.b16 %v6769, %v6768
        %v6779 = vsel %vm908, %v6492, 0
        %6781 = vmatpush.bf16.msra.mxu0 0
        %6782 = vmatpush.bf16.msra.mxu0 0
        %6783 = vmatpush.bf16.msra.mxu0 0
        %6784 = vmatpush.bf16.msra.mxu0 0
        %6785 = vmatpush.bf16.msra.mxu0 %v6773
        %6786 = vmatpush.bf16.msra.mxu0 %v6772
        %6787 = vmatpush.bf16.msra.mxu0 %v6771
        %6788 = vmatpush.bf16.msra.mxu0 %v6770
        %6789 = vmatmul.bf16.gmra.mxu0 %v6779
        %v6790 = vpop.f32.mrf.mxu0
        %v6791 = vadd.f32 0.0, %v6790
        %v6792 = vpop.f32.mrf.mxu0
        %6793 = vdwg.mxu0
        %v6802 = vunpack.c.l.b16 %v6538
        %v6803 = vunpack.c.l.b16 %v6539
        %v6804 = vunpack.c.l.b16 %v6540
        %v6805 = vunpack.c.l.b16 %v6541
        %v6806 = vunpack.c.l.b16 %v6542
        %v6807 = vunpack.c.l.b16 %v6543
        %v6808 = vunpack.c.l.b16 %v6544
        %v6809 = vunpack.c.l.b16 %v6545
        %v6810 = vpack.c.b16 %v6803, %v6802
        %v6811 = vpack.c.b16 %v6805, %v6804
        %v6812 = vpack.c.b16 %v6807, %v6806
        %v6813 = vpack.c.b16 %v6809, %v6808
        %v6819 = vsel %vm908, %v6493, 0
        %6821 = vmatpush.bf16.msra.mxu0 0
        %6822 = vmatpush.bf16.msra.mxu0 0
        %6823 = vmatpush.bf16.msra.mxu0 0
        %6824 = vmatpush.bf16.msra.mxu0 0
        %6825 = vmatpush.bf16.msra.mxu0 %v6813
        %6826 = vmatpush.bf16.msra.mxu0 %v6812
        %6827 = vmatpush.bf16.msra.mxu0 %v6811
        %6828 = vmatpush.bf16.msra.mxu0 %v6810
        %6829 = vmatmul.bf16.gmra.mxu0 %v6819
        %v6830 = vpop.f32.mrf.mxu0
        %v6831 = vadd.f32 0.0, %v6830
        %v6832 = vpop.f32.mrf.mxu0
        %6833 = vdwg.mxu0
        %v6842 = vunpack.c.l.b16 %v6546
        %v6843 = vunpack.c.l.b16 %v6547
        %v6844 = vunpack.c.l.b16 %v6548
        %v6845 = vunpack.c.l.b16 %v6549
        %v6846 = vunpack.c.l.b16 %v6550
        %v6847 = vunpack.c.l.b16 %v6551
        %v6848 = vunpack.c.l.b16 %v6552
        %v6849 = vunpack.c.l.b16 %v6553
        %v6850 = vpack.c.b16 %v6843, %v6842
        %v6851 = vpack.c.b16 %v6845, %v6844
        %v6852 = vpack.c.b16 %v6847, %v6846
        %v6853 = vpack.c.b16 %v6849, %v6848
        %v6859 = vsel %vm908, %v6494, 0
        %6861 = vmatpush.bf16.msra.mxu0 0
        %6862 = vmatpush.bf16.msra.mxu0 0
        %6863 = vmatpush.bf16.msra.mxu0 0
        %6864 = vmatpush.bf16.msra.mxu0 0
        %6865 = vmatpush.bf16.msra.mxu0 %v6853
        %6866 = vmatpush.bf16.msra.mxu0 %v6852
        %6867 = vmatpush.bf16.msra.mxu0 %v6851
        %6868 = vmatpush.bf16.msra.mxu0 %v6850
        %6869 = vmatmul.bf16.gmra.mxu0 %v6859
        %v6870 = vpop.f32.mrf.mxu0
        %v6871 = vadd.f32 0.0, %v6870
        %v6872 = vpop.f32.mrf.mxu0
        %6873 = vdwg.mxu0
        %v6882 = vunpack.c.l.b16 %v6554
        %v6883 = vunpack.c.l.b16 %v6555
        %v6884 = vunpack.c.l.b16 %v6556
        %v6885 = vunpack.c.l.b16 %v6557
        %v6886 = vunpack.c.l.b16 %v6558
        %v6887 = vunpack.c.l.b16 %v6559
        %v6888 = vunpack.c.l.b16 %v6560
        %v6889 = vunpack.c.l.b16 %v6561
        %v6890 = vpack.c.b16 %v6883, %v6882
        %v6891 = vpack.c.b16 %v6885, %v6884
        %v6892 = vpack.c.b16 %v6887, %v6886
        %v6893 = vpack.c.b16 %v6889, %v6888
        %v6899 = vsel %vm908, %v6495, 0
        %6901 = vmatpush.bf16.msra.mxu0 0
        %6902 = vmatpush.bf16.msra.mxu0 0
        %6903 = vmatpush.bf16.msra.mxu0 0
        %6904 = vmatpush.bf16.msra.mxu0 0
        %6905 = vmatpush.bf16.msra.mxu0 %v6893
        %6906 = vmatpush.bf16.msra.mxu0 %v6892
        %6907 = vmatpush.bf16.msra.mxu0 %v6891
        %6908 = vmatpush.bf16.msra.mxu0 %v6890
        %6909 = vmatmul.bf16.gmra.mxu0 %v6899
        %v6910 = vpop.f32.mrf.mxu0
        %v6911 = vadd.f32 0.0, %v6910
        %v6912 = vpop.f32.mrf.mxu0
        %6913 = vdwg.mxu0
        %v6922 = vunpack.c.l.b16 %v6562
        %v6923 = vunpack.c.l.b16 %v6563
        %v6924 = vunpack.c.l.b16 %v6564
        %v6925 = vunpack.c.l.b16 %v6565
        %v6926 = vunpack.c.l.b16 %v6566
        %v6927 = vunpack.c.l.b16 %v6567
        %v6928 = vunpack.c.l.b16 %v6568
        %v6929 = vunpack.c.l.b16 %v6569
        %v6930 = vpack.c.b16 %v6923, %v6922
        %v6931 = vpack.c.b16 %v6925, %v6924
        %v6932 = vpack.c.b16 %v6927, %v6926
        %v6933 = vpack.c.b16 %v6929, %v6928
        %v6939 = vsel %vm908, %v6496, 0
        %6941 = vmatpush.bf16.msra.mxu0 0
        %6942 = vmatpush.bf16.msra.mxu0 0
        %6943 = vmatpush.bf16.msra.mxu0 0
        %6944 = vmatpush.bf16.msra.mxu0 0
        %6945 = vmatpush.bf16.msra.mxu0 %v6933
        %6946 = vmatpush.bf16.msra.mxu0 %v6932
        %6947 = vmatpush.bf16.msra.mxu0 %v6931
        %6948 = vmatpush.bf16.msra.mxu0 %v6930
        %6949 = vmatmul.bf16.gmra.mxu0 %v6939
        %v6950 = vpop.f32.mrf.mxu0
        %v6951 = vadd.f32 0.0, %v6950
        %v6952 = vpop.f32.mrf.mxu0
        %6953 = vdwg.mxu0
        %v6962 = vunpack.c.l.b16 %v6570
        %v6963 = vunpack.c.l.b16 %v6571
        %v6964 = vunpack.c.l.b16 %v6572
        %v6965 = vunpack.c.l.b16 %v6573
        %v6966 = vunpack.c.l.b16 %v6574
        %v6967 = vunpack.c.l.b16 %v6575
        %v6968 = vunpack.c.l.b16 %v6576
        %v6969 = vunpack.c.l.b16 %v6577
        %v6970 = vpack.c.b16 %v6963, %v6962
        %v6971 = vpack.c.b16 %v6965, %v6964
        %v6972 = vpack.c.b16 %v6967, %v6966
        %v6973 = vpack.c.b16 %v6969, %v6968
        %v6979 = vsel %vm908, %v6497, 0
        %6981 = vmatpush.bf16.msra.mxu0 0
        %6982 = vmatpush.bf16.msra.mxu0 0
        %6983 = vmatpush.bf16.msra.mxu0 0
        %6984 = vmatpush.bf16.msra.mxu0 0
        %6985 = vmatpush.bf16.msra.mxu0 %v6973
        %6986 = vmatpush.bf16.msra.mxu0 %v6972
        %6987 = vmatpush.bf16.msra.mxu0 %v6971
        %6988 = vmatpush.bf16.msra.mxu0 %v6970
        %6989 = vmatmul.bf16.gmra.mxu0 %v6979
        %v6990 = vpop.f32.mrf.mxu0
        %v6991 = vadd.f32 0.0, %v6990
        %v6992 = vpop.f32.mrf.mxu0
        %6993 = vdwg.mxu0
        %v7002 = vunpack.c.l.b16 %v6578
        %v7003 = vunpack.c.l.b16 %v6579
        %v7004 = vunpack.c.l.b16 %v6580
        %v7005 = vunpack.c.l.b16 %v6581
        %v7006 = vunpack.c.l.b16 %v6582
        %v7007 = vunpack.c.l.b16 %v6583
        %v7008 = vunpack.c.l.b16 %v6584
        %v7009 = vunpack.c.l.b16 %v6585
        %v7010 = vpack.c.b16 %v7003, %v7002
        %v7011 = vpack.c.b16 %v7005, %v7004
        %v7012 = vpack.c.b16 %v7007, %v7006
        %v7013 = vpack.c.b16 %v7009, %v7008
        %v7019 = vsel %vm908, %v6498, 0
        %7021 = vmatpush.bf16.msra.mxu0 0
        %7022 = vmatpush.bf16.msra.mxu0 0
        %7023 = vmatpush.bf16.msra.mxu0 0
        %7024 = vmatpush.bf16.msra.mxu0 0
        %7025 = vmatpush.bf16.msra.mxu0 %v7013
        %7026 = vmatpush.bf16.msra.mxu0 %v7012
        %7027 = vmatpush.bf16.msra.mxu0 %v7011
        %7028 = vmatpush.bf16.msra.mxu0 %v7010
        %7029 = vmatmul.bf16.gmra.mxu0 %v7019
        %v7030 = vpop.f32.mrf.mxu0
        %v7031 = vadd.f32 0.0, %v7030
        %v7032 = vpop.f32.mrf.mxu0
        %7033 = vdwg.mxu0
        %v7042 = vunpack.c.l.b16 %v6586
        %v7043 = vunpack.c.l.b16 %v6587
        %v7044 = vunpack.c.l.b16 %v6588
        %v7045 = vunpack.c.l.b16 %v6589
        %v7046 = vunpack.c.l.b16 %v6590
        %v7047 = vunpack.c.l.b16 %v6591
        %v7048 = vunpack.c.l.b16 %v6592
        %v7049 = vunpack.c.l.b16 %v6593
        %v7050 = vpack.c.b16 %v7043, %v7042
        %v7051 = vpack.c.b16 %v7045, %v7044
        %v7052 = vpack.c.b16 %v7047, %v7046
        %v7053 = vpack.c.b16 %v7049, %v7048
        %v7059 = vsel %vm908, %v6499, 0
        %7061 = vmatpush.bf16.msra.mxu0 0
        %7062 = vmatpush.bf16.msra.mxu0 0
        %7063 = vmatpush.bf16.msra.mxu0 0
        %7064 = vmatpush.bf16.msra.mxu0 0
        %7065 = vmatpush.bf16.msra.mxu0 %v7053
        %7066 = vmatpush.bf16.msra.mxu0 %v7052
        %7067 = vmatpush.bf16.msra.mxu0 %v7051
        %7068 = vmatpush.bf16.msra.mxu0 %v7050
        %7069 = vmatmul.bf16.gmra.mxu0 %v7059
        %v7070 = vpop.f32.mrf.mxu0
        %v7071 = vadd.f32 0.0, %v7070
        %v7072 = vpop.f32.mrf.mxu0
        %7073 = vdwg.mxu0
        %v7082 = vunpack.c.l.b16 %v6594
        %v7083 = vunpack.c.l.b16 %v6595
        %v7084 = vunpack.c.l.b16 %v6596
        %v7085 = vunpack.c.l.b16 %v6597
        %v7086 = vunpack.c.l.b16 %v6598
        %v7087 = vunpack.c.l.b16 %v6599
        %v7088 = vunpack.c.l.b16 %v6600
        %v7089 = vunpack.c.l.b16 %v6601
        %v7090 = vpack.c.b16 %v7083, %v7082
        %v7091 = vpack.c.b16 %v7085, %v7084
        %v7092 = vpack.c.b16 %v7087, %v7086
        %v7093 = vpack.c.b16 %v7089, %v7088
        %v7099 = vsel %vm908, %v6500, 0
        %7101 = vmatpush.bf16.msra.mxu0 0
        %7102 = vmatpush.bf16.msra.mxu0 0
        %7103 = vmatpush.bf16.msra.mxu0 0
        %7104 = vmatpush.bf16.msra.mxu0 0
        %7105 = vmatpush.bf16.msra.mxu0 %v7093
        %7106 = vmatpush.bf16.msra.mxu0 %v7092
        %7107 = vmatpush.bf16.msra.mxu0 %v7091
        %7108 = vmatpush.bf16.msra.mxu0 %v7090
        %7109 = vmatmul.bf16.gmra.mxu0 %v7099
        %v7110 = vpop.f32.mrf.mxu0
        %v7111 = vadd.f32 0.0, %v7110
        %v7112 = vpop.f32.mrf.mxu0
        %7113 = vdwg.mxu0
        %v7122 = vunpack.c.l.b16 %v6602
        %v7123 = vunpack.c.l.b16 %v6603
        %v7124 = vunpack.c.l.b16 %v6604
        %v7125 = vunpack.c.l.b16 %v6605
        %v7126 = vunpack.c.l.b16 %v6606
        %v7127 = vunpack.c.l.b16 %v6607
        %v7128 = vunpack.c.l.b16 %v6608
        %v7129 = vunpack.c.l.b16 %v6609
        %v7130 = vpack.c.b16 %v7123, %v7122
        %v7131 = vpack.c.b16 %v7125, %v7124
        %v7132 = vpack.c.b16 %v7127, %v7126
        %v7133 = vpack.c.b16 %v7129, %v7128
        %v7139 = vsel %vm908, %v6501, 0
        %7141 = vmatpush.bf16.msra.mxu0 0
        %7142 = vmatpush.bf16.msra.mxu0 0
        %7143 = vmatpush.bf16.msra.mxu0 0
        %7144 = vmatpush.bf16.msra.mxu0 0
        %7145 = vmatpush.bf16.msra.mxu0 %v7133
        %7146 = vmatpush.bf16.msra.mxu0 %v7132
        %7147 = vmatpush.bf16.msra.mxu0 %v7131
        %7148 = vmatpush.bf16.msra.mxu0 %v7130
        %7149 = vmatmul.bf16.gmra.mxu0 %v7139
        %v7150 = vpop.f32.mrf.mxu0
        %v7151 = vadd.f32 0.0, %v7150
        %v7152 = vpop.f32.mrf.mxu0
        %7153 = vdwg.mxu0
        %v7162 = vunpack.c.l.b16 %v6610
        %v7163 = vunpack.c.l.b16 %v6611
        %v7164 = vunpack.c.l.b16 %v6612
        %v7165 = vunpack.c.l.b16 %v6613
        %v7166 = vunpack.c.l.b16 %v6614
        %v7167 = vunpack.c.l.b16 %v6615
        %v7168 = vunpack.c.l.b16 %v6616
        %v7169 = vunpack.c.l.b16 %v6617
        %v7170 = vpack.c.b16 %v7163, %v7162
        %v7171 = vpack.c.b16 %v7165, %v7164
        %v7172 = vpack.c.b16 %v7167, %v7166
        %v7173 = vpack.c.b16 %v7169, %v7168
        %v7179 = vsel %vm908, %v6502, 0
        %7181 = vmatpush.bf16.msra.mxu0 0
        %7182 = vmatpush.bf16.msra.mxu0 0
        %7183 = vmatpush.bf16.msra.mxu0 0
        %7184 = vmatpush.bf16.msra.mxu0 0
        %7185 = vmatpush.bf16.msra.mxu0 %v7173
        %7186 = vmatpush.bf16.msra.mxu0 %v7172
        %7187 = vmatpush.bf16.msra.mxu0 %v7171
        %7188 = vmatpush.bf16.msra.mxu0 %v7170
        %7189 = vmatmul.bf16.gmra.mxu0 %v7179
        %v7190 = vpop.f32.mrf.mxu0
        %v7191 = vadd.f32 0.0, %v7190
        %v7192 = vpop.f32.mrf.mxu0
        %7193 = vdwg.mxu0
        %v7202 = vunpack.c.l.b16 %v6618
        %v7203 = vunpack.c.l.b16 %v6619
        %v7204 = vunpack.c.l.b16 %v6620
        %v7205 = vunpack.c.l.b16 %v6621
        %v7206 = vunpack.c.l.b16 %v6622
        %v7207 = vunpack.c.l.b16 %v6623
        %v7208 = vunpack.c.l.b16 %v6624
        %v7209 = vunpack.c.l.b16 %v6625
        %v7210 = vpack.c.b16 %v7203, %v7202
        %v7211 = vpack.c.b16 %v7205, %v7204
        %v7212 = vpack.c.b16 %v7207, %v7206
        %v7213 = vpack.c.b16 %v7209, %v7208
        %v7219 = vsel %vm908, %v6503, 0
        %7221 = vmatpush.bf16.msra.mxu0 0
        %7222 = vmatpush.bf16.msra.mxu0 0
        %7223 = vmatpush.bf16.msra.mxu0 0
        %7224 = vmatpush.bf16.msra.mxu0 0
        %7225 = vmatpush.bf16.msra.mxu0 %v7213
        %7226 = vmatpush.bf16.msra.mxu0 %v7212
        %7227 = vmatpush.bf16.msra.mxu0 %v7211
        %7228 = vmatpush.bf16.msra.mxu0 %v7210
        %7229 = vmatmul.bf16.gmra.mxu0 %v7219
        %v7230 = vpop.f32.mrf.mxu0
        %v7231 = vadd.f32 0.0, %v7230
        %v7232 = vpop.f32.mrf.mxu0
        %7233 = vdwg.mxu0
        %v7242 = vunpack.c.l.b16 %v6626
        %v7243 = vunpack.c.l.b16 %v6627
        %v7244 = vunpack.c.l.b16 %v6628
        %v7245 = vunpack.c.l.b16 %v6629
        %v7246 = vunpack.c.l.b16 %v6630
        %v7247 = vunpack.c.l.b16 %v6631
        %v7248 = vunpack.c.l.b16 %v6632
        %v7249 = vunpack.c.l.b16 %v6633
        %v7250 = vpack.c.b16 %v7243, %v7242
        %v7251 = vpack.c.b16 %v7245, %v7244
        %v7252 = vpack.c.b16 %v7247, %v7246
        %v7253 = vpack.c.b16 %v7249, %v7248
        %v7259 = vsel %vm908, %v6504, 0
        %7261 = vmatpush.bf16.msra.mxu0 0
        %7262 = vmatpush.bf16.msra.mxu0 0
        %7263 = vmatpush.bf16.msra.mxu0 0
        %7264 = vmatpush.bf16.msra.mxu0 0
        %7265 = vmatpush.bf16.msra.mxu0 %v7253
        %7266 = vmatpush.bf16.msra.mxu0 %v7252
        %7267 = vmatpush.bf16.msra.mxu0 %v7251
        %7268 = vmatpush.bf16.msra.mxu0 %v7250
        %7269 = vmatmul.bf16.gmra.mxu0 %v7259
        %v7270 = vpop.f32.mrf.mxu0
        %v7271 = vadd.f32 0.0, %v7270
        %v7272 = vpop.f32.mrf.mxu0
        %7273 = vdwg.mxu0
        %7278 = vrot.lane.b32.xlu0 %v1005, 96
        %v7279 = vpop.permute.xlu0 %7278
        %7280 = vrot.lane.b32.xlu0 %v1006, 96
        %v7281 = vpop.permute.xlu0 %7280
        %7282 = vrot.lane.b32.xlu0 %v1007, 96
        %v7283 = vpop.permute.xlu0 %7282
        %7284 = vrot.lane.b32.xlu0 %v1008, 96
        %v7285 = vpop.permute.xlu0 %7284
        %7306 = vst [vmem:[#allocation1] ss:$2 sm:$0xff] %v6671
        %s7307 = scalar_lea.vmem [#allocation1], 1
        %7308 = vst [vmem:[%s7307] ss:$2 sm:$0xff] %v6711
        %s7309 = scalar_lea.vmem [#allocation1], 16
        %7310 = vst [vmem:[%s7309] ss:$2 sm:$0xff] %v6751
        %s7311 = scalar_lea.vmem [#allocation1], 17
        %7312 = vst [vmem:[%s7311] ss:$2 sm:$0xff] %v6791
        %s7313 = scalar_lea.vmem [#allocation1], 32
        %7314 = vst [vmem:[%s7313] ss:$2 sm:$0xff] %v6831
        %s7315 = scalar_lea.vmem [#allocation1], 33
        %7316 = vst [vmem:[%s7315] ss:$2 sm:$0xff] %v6871
        %s7317 = scalar_lea.vmem [#allocation1], 48
        %7318 = vst [vmem:[%s7317] ss:$2 sm:$0xff] %v6911
        %s7319 = scalar_lea.vmem [#allocation1], 49
        %7320 = vst [vmem:[%s7319] ss:$2 sm:$0xff] %v6951
        %v7321 = vld.sshfl [vmem:[#allocation1] sm:$0xff pattern:$0x75316420]
        %v7322 = vld.sshfl [vmem:[#allocation1 + $0x10] sm:$0xff pattern:$0x75316420]
        %v7323 = vld.sshfl [vmem:[#allocation1 + $0x20] sm:$0xff pattern:$0x75316420]
        %v7324 = vld.sshfl [vmem:[#allocation1 + $0x30] sm:$0xff pattern:$0x75316420]
        %7325 = vst [vmem:[#allocation1] ss:$2 sm:$0xff] %v6991
        %7326 = vst [vmem:[%s7307] ss:$2 sm:$0xff] %v7031
        %7327 = vst [vmem:[%s7309] ss:$2 sm:$0xff] %v7071
        %7328 = vst [vmem:[%s7311] ss:$2 sm:$0xff] %v7111
        %7329 = vst [vmem:[%s7313] ss:$2 sm:$0xff] %v7151
        %7330 = vst [vmem:[%s7315] ss:$2 sm:$0xff] %v7191
        %7331 = vst [vmem:[%s7317] ss:$2 sm:$0xff] %v7231
        %7332 = vst [vmem:[%s7319] ss:$2 sm:$0xff] %v7271
        %v7333 = vld.sshfl [vmem:[#allocation1] sm:$0xff pattern:$0x75316420]
        %v7334 = vld.sshfl [vmem:[#allocation1 + $0x10] sm:$0xff pattern:$0x75316420]
        %v7335 = vld.sshfl [vmem:[#allocation1 + $0x20] sm:$0xff pattern:$0x75316420]
        %v7336 = vld.sshfl [vmem:[#allocation1 + $0x30] sm:$0xff pattern:$0x75316420]
        %v7346 = vsel %vm908, %v6461, 0
        %v7349 = vsel %vm908, %v6462, 0
        %v7352 = vsel %vm908, %v6463, 0
        %v7355 = vsel %vm908, %v6464, 0
        %7357 = vmatpush.bf16.msra.mxu0 0
        %7358 = vmatpush.bf16.msra.mxu0 0
        %7359 = vmatpush.bf16.msra.mxu0 0
        %7360 = vmatpush.bf16.msra.mxu0 0
        %7361 = vmatpush.bf16.msra.mxu0 %v7285
        %7362 = vmatpush.bf16.msra.mxu0 %v7283
        %7363 = vmatpush.bf16.msra.mxu0 %v7281
        %7364 = vmatpush.bf16.msra.mxu0 %v7279
        %7365 = vmatmul.bf16.gmra.mxu0 %v7346
        %v7366 = vpop.f32.mrf.mxu0
        %v7367 = vadd.f32 %v7321, %v7366
        %v7368 = vpop.f32.mrf.mxu0
        %v7369 = vadd.f32 %v7322, %v7368
        %7370 = vmatmul.bf16.gmra.mxu0 %v7349
        %v7371 = vpop.f32.mrf.mxu0
        %v7372 = vadd.f32 %v7323, %v7371
        %v7373 = vpop.f32.mrf.mxu0
        %v7374 = vadd.f32 %v7324, %v7373
        %7375 = vmatmul.bf16.gmra.mxu0 %v7352
        %v7376 = vpop.f32.mrf.mxu0
        %v7377 = vadd.f32 %v7333, %v7376
        %v7378 = vpop.f32.mrf.mxu0
        %v7379 = vadd.f32 %v7334, %v7378
        %7380 = vmatmul.bf16.gmra.mxu0 %v7355
        %v7381 = vpop.f32.mrf.mxu0
        %v7382 = vadd.f32 %v7335, %v7381
        %v7383 = vpop.f32.mrf.mxu0
        %v7384 = vadd.f32 %v7336, %v7383
        %7385 = vdwg.mxu0
        %7394 = vrot.lane.b32.xlu0 %v7367, 32
        %v7395 = vpop.permute.xlu0 %7394
        %7396 = vrot.lane.b32.xlu0 %v7369, 32
        %v7397 = vpop.permute.xlu0 %7396
        %7398 = vrot.lane.b32.xlu0 %v7372, 32
        %v7399 = vpop.permute.xlu0 %7398
        %7400 = vrot.lane.b32.xlu0 %v7374, 32
        %v7401 = vpop.permute.xlu0 %7400
        %7402 = vrot.lane.b32.xlu0 %v7377, 32
        %v7403 = vpop.permute.xlu0 %7402
        %7404 = vrot.lane.b32.xlu0 %v7379, 32
        %v7405 = vpop.permute.xlu0 %7404
        %7406 = vrot.lane.b32.xlu0 %v7382, 32
        %v7407 = vpop.permute.xlu0 %7406
        %7408 = vrot.lane.b32.xlu0 %v7384, 32
        %v7409 = vpop.permute.xlu0 %7408
        %v7418 = vsel %vm797, %v4156, %v7395
        %v7419 = vsel %vm797, %v4158, %v7397
        %v7420 = vsel %vm797, %v4161, %v7399
        %v7421 = vsel %vm797, %v4163, %v7401
        %v7422 = vsel %vm797, %v4166, %v7403
        %v7423 = vsel %vm797, %v4168, %v7405
        %v7424 = vsel %vm797, %v4171, %v7407
        %v7425 = vsel %vm797, %v4173, %v7409
        %v7434 = vrot.slane %v7418, 4
        %v7435 = vrot.slane %v7419, 4
        %v7436 = vrot.slane %v7420, 4
        %v7437 = vrot.slane %v7421, 4
        %v7438 = vrot.slane %v7422, 4
        %v7439 = vrot.slane %v7423, 4
        %v7440 = vrot.slane %v7424, 4
        %v7441 = vrot.slane %v7425, 4
        %vm7450 = vcmask 519168
        %7451 = vst.msk [vmem:[%s599] sm:$0xf] %vm7450, %v7418
        %7452 = vst.msk [vmem:[%s599 + $0x4] sm:$0xf] %vm7450, %v7434
        %7453 = vst.msk [vmem:[%s599 + $0x8] sm:$0xf] %vm7450, %v7419
        %7454 = vst.msk [vmem:[%s599 + $0xc] sm:$0xf] %vm7450, %v7435
        %7455 = vst.msk [vmem:[%s599 + $0x10] sm:$0xf] %vm7450, %v7420
        %7456 = vst.msk [vmem:[%s599 + $0x14] sm:$0xf] %vm7450, %v7436
        %7457 = vst.msk [vmem:[%s599 + $0x18] sm:$0xf] %vm7450, %v7421
        %7458 = vst.msk [vmem:[%s599 + $0x1c] sm:$0xf] %vm7450, %v7437
        %7459 = vst.msk [vmem:[%s599 + $0x20] sm:$0xf] %vm7450, %v7422
        %7460 = vst.msk [vmem:[%s599 + $0x24] sm:$0xf] %vm7450, %v7438
        %7461 = vst.msk [vmem:[%s599 + $0x28] sm:$0xf] %vm7450, %v7423
        %7462 = vst.msk [vmem:[%s599 + $0x2c] sm:$0xf] %vm7450, %v7439
        %7463 = vst.msk [vmem:[%s599 + $0x30] sm:$0xf] %vm7450, %v7424
        %7464 = vst.msk [vmem:[%s599 + $0x34] sm:$0xf] %vm7450, %v7440
        %7465 = vst.msk [vmem:[%s599 + $0x38] sm:$0xf] %vm7450, %v7425
        %7466 = vst.msk [vmem:[%s599 + $0x3c] sm:$0xf] %vm7450, %v7441
        %s7467 = sand.u32 %s261, 1
        %s7468 = scalar_lea.sflag [#allocation5], %s7467
        %s7469 = sand.u32 %s261, 1
        %s7470 = smul.addr %s7469, 64
        %s7471 = scalar_lea.vmem [#allocation4], %s7470
        // Predicated region
        $region139: #{tpu_custom_call.1} parent=129 // pred_check
          %p7472 = pneg %p271
        $region140: #{tpu_custom_call.1} parent=129 // pred_check_branch
          %7474 = sbr.rel (%p7472) target = $region142
        $region141: #{tpu_custom_call.1} parent=129 // pred_region
          #allocation7 [shape = 'u32[6]{0}', space=smem, size = 0x18, scoped, tag = 'DMA stride descriptor']
          %s7475 = smul.u32 4, %s29
          %s7476 = smul.u32 4, %s30
          %7478 = vsyncadd %s7468, 0
          %s7479 = smul.addr %s7475, 8
          %s7480 = sadd.s32 %s7476, %s7479
          %s7481 = smul.addr %s28, 64
          %s7482 = sadd.s32 %s7480, %s7481
          %s7483 = smul.addr %s7482, 4
          %s7484 = scalar_lea.hbm %s9, %s7483
          %s7486 = sshll.u32 1, 14
          %s7487 = sxor.u32 4294967295, %s7486
          %s7490 = sshll.u32 7, 18
          %s7491 = sxor.u32 4294967295, %s7490
          %s7492 = sand.u32 0, %s7491
          %s7494 = sor.u32 %s7492, 0
          %s7495 = sshll.u32 %s7471, 4
          %s7496 = int_to_ptr.vmem [resolvable:$true] %s7495
          %s7497 = sshll.u32 %s7484, 4
          %s7498 = int_to_ptr.hbm [resolvable:$true] %s7497
          %7504 = sst [smem:[#allocation7]] 256
          %s7505 = scalar_lea.smem [#allocation7], 1
          %7506 = sst [smem:[%s7505]] 512
          %s7507 = scalar_lea.smem [#allocation7], 2
          %7508 = sst [smem:[%s7507]] 4
          %s7509 = scalar_lea.smem [#allocation7], 3
          %7510 = sst [smem:[%s7509]] 64
          %s7511 = scalar_lea.smem [#allocation7], 4
          %7512 = sst [smem:[%s7511]] 64
          %s7513 = scalar_lea.smem [#allocation7], 5
          %7514 = sst [smem:[%s7513]] 4
          %7516 = dma.general %s7496, 1024, %s7498, %s7468, [#allocation6], [#allocation7], %s7494, 0
        $region142: #{tpu_custom_call.1} parent=129 // pred_fallthru
          _
      $region130: #{tpu_custom_call.1} parent=5 // pred_fallthru
        _
      %p7517 = scmp.le.s32.totalorder 2, %s18
      // Predicated region
      $region143: #{tpu_custom_call.1} parent=5 // pred_check
        %p7518 = pneg %p7517
      $region144: #{tpu_custom_call.1} parent=5 // pred_check_branch
        %7520 = sbr.rel (%p7518) target = $region146
      $region145: #{tpu_custom_call.1} parent=5 // pred_region
        %s7521 = ssub.s32 %s18, 2
        // Predicated region
        $region147: #{tpu_custom_call.1} parent=145 // pred_check
          %p7522 = pneg %p277
        $region148: #{tpu_custom_call.1} parent=145 // pred_check_branch
          %7524 = sbr.rel (%p7522) target = $region150
        $region149: #{tpu_custom_call.1} parent=145 // pred_region
          %s7525 = sand.u32 %s262, 1
          %s7526 = scalar_lea.sflag [#allocation5], %s7525
          %s7527 = sand.u32 %s262, 1
          %s7528 = smul.addr %s7527, 64
          %s7529 = scalar_lea.vmem [#allocation4], %s7528
          %7531 = dma.done %s7526, 1024
        $region150: #{tpu_custom_call.1} parent=145 // pred_fallthru
          _
      $region146: #{tpu_custom_call.1} parent=5 // pred_fallthru
        _
    $region6: #{tpu_custom_call.1} parent=1 // loop_footer
      %s22 = sadd.s32 1, %s18
    $region7: #{tpu_custom_call.1} parent=1 // loop_footer_branch
      %17 = sbr.rel target = $region3
    $region8: #{tpu_custom_call.1} parent=1 // loop_exit
      _
    %7532 = vsyncpa [#allocation5], 1
    %s7533 = scalar_lea.sflag [#allocation5], 1
    %7534 = vsyncpa %s7533, 1

</llo_original>
